<compile_context>
chip_gen: v6e
topology: v6e:2x2x1
jax: 0.10.0
libtpu: 0.0.40
codegen_flags: <defaults>
</compile_context>

<pallas_src>
import functools

import jax
import jax.numpy as jnp
from jax.experimental import pallas as pl
from jax.experimental.pallas import tpu as pltpu


_HEAD = 8              # zero-halo rows before/after the conv-scratch data region
_ROWS_PER_STEP = 1024  # target MXU M-dimension (rows) per grid step


def _round_up(x, m):
    return (x + m - 1) // m * m


# ----------------------------------------------------------------------------
# Pallas kernel
# ----------------------------------------------------------------------------
def model_kernel(xemb_ref,
                 w12, w3, w4, w5, bconv,
                 l1w_h, l1w_d, l2w, bhead,
                 out_ref, pad_ref, *, L):
    Bt, Lp, cin_p = xemb_ref.shape
    ncp = out_ref.shape[-1]
    l1o_p = l1w_h.shape[-1]
    R = Bt * Lp
    cpad = pad_ref.shape[-1]

    # Zero the halo rows of the persistent conv scratch.  Done every step (cheap) so the
    # kernel stays correct when the "parallel" grid axis is split across TensorCores.
    pad_ref[0:_HEAD, :] = jnp.zeros((_HEAD, cpad), jnp.bfloat16)
    pad_ref[_HEAD + R:_HEAD + R + _HEAD, :] = jnp.zeros((_HEAD, cpad), jnp.bfloat16)

    pad_zeros = jnp.zeros((Lp - L, 256), jnp.bfloat16)

    def store_conv_input(h):
        # Store the next conv layer's input, then re-zero the per-sequence padded rows
        # so folded sequences never contaminate each other through the conv taps.
        pad_ref[_HEAD:_HEAD + R, :256] = h.astype(jnp.bfloat16)
        for b in range(Bt):                           # static slices, (Lp-L) rows each
            pad_ref[_HEAD + b * Lp + L:_HEAD + (b + 1) * Lp, :256] = pad_zeros

    def conv_k5(w_ref, bias_row, width):              # 'same' k=5 conv from the scratch
        # TODO(synk): if the bundle dump shows materialized copies for the sublane-
        # unaligned tap slices, stage the shifts via pltpu.roll instead (XLU slot).
        acc = jnp.dot(pad_ref[_HEAD - 2:_HEAD - 2 + R, :width], w_ref[0],
                      preferred_element_type=jnp.float32)
        for k in range(1, 5):                         # static unrolled taps
            acc = acc + jnp.dot(pad_ref[_HEAD - 2 + k:_HEAD - 2 + k + R, :width],
                                w_ref[k], preferred_element_type=jnp.float32)
        return acc + bconv[bias_row:bias_row + 1, :]  # bias added once, after the taps

    # ---- layer 1: fused conv1(k=5) || conv2(k=3)  (dropout == identity in eval) ----
    xemb_flat = xemb_ref[...].reshape(R, cin_p)       # padded rows already zero (wrapper)
    pad_ref[_HEAD:_HEAD + R, :cin_p] = xemb_flat
    if cin_p < cpad:                                  # clear stale columns from prev step
        pad_ref[_HEAD:_HEAD + R, cin_p:cpad] = jnp.zeros((R, cpad - cin_p), jnp.bfloat16)

    # Domain-embedding part of linear_ae1, computed while xemb is still live: columns
    # gen_dim:cin of xemb ARE the domain embedding, and l1w_d is zero on all other rows.
    zdom = jnp.dot(xemb_flat, l1w_d[...], preferred_element_type=jnp.float32)  # (R,l1o_p)

    h = jnp.maximum(conv_k5(w12, 0, cin_p), 0.0)      # (R, 256) f32

    # conv3 / conv4 (their outputs feed another conv -> padded rows re-zeroed on store)
    for bias_row, w_ref in ((1, w3), (2, w4)):
        store_conv_input(h)
        h = jnp.maximum(conv_k5(w_ref, bias_row, 256), 0.0)

    # conv5 (output only feeds the per-row linear head -> no re-masking of h needed)
    store_conv_input(h)
    h = jnp.maximum(conv_k5(w5, 3, 256), 0.0)         # (R, 256) f32

    # linear_ae1(cat(x_conv, x_tag(empty), domain_emb)) as a split-weight sum of dots,
    # then relu, then linear_ae2.
    z = (jnp.dot(h.astype(jnp.bfloat16), l1w_h[...], preferred_element_type=jnp.float32)
         + zdom + bhead[0:1, :l1o_p])
    z = jnp.maximum(z, 0.0)                           # (R, l1o_p) f32
    logits = (jnp.dot(z.astype(jnp.bfloat16), l2w[...],
                      preferred_element_type=jnp.float32) + bhead[1:2, :ncp])  # (R, ncp)

    # testing / no-crf branch:
    #   x_logit.transpose(2,0); log_softmax(dim=1); transpose(2,0)
    # == log_softmax over the *sequence* axis, per class column, per batch element.
    ok = jax.lax.broadcasted_iota(jnp.int32, (Bt, Lp, 1), 1) < L      # lane-broadcast mask
    lg = jnp.where(ok, logits.reshape(Bt, Lp, ncp), -1e30)            # mask padded rows
    m = jnp.max(lg, axis=1, keepdims=True)
    lse = jnp.log(jnp.sum(jnp.exp(lg - m), axis=1, keepdims=True)) + m
    out_ref[...] = (lg - lse).astype(out_ref.dtype)


# ----------------------------------------------------------------------------
# Wrapper (glue: embedding gather, padding, weight packing, pallas_call)
# ----------------------------------------------------------------------------
def model_forward(x_ids, params, gen_tab, dom_tab,
                  x_len=None, x_mask=None, x_tag=None):
    # x_len / x_mask / x_tag are unused on the testing, no-crf, tag=False path.
    # TODO(synk): CRF branch (allennlp ConditionalRandomField) and the
    # pack_padded_sequence + nll_loss training branch are not implemented.
    B, L = x_ids.shape
    gen_dim = gen_tab.shape[1]
    dom_dim = dom_tab.shape[1]
    cin = gen_dim + dom_dim
    nc = params['l2_w'].shape[1]
    l1o = params['l1_w'].shape[1]

    # Padded sizes: channel dims to lane multiples of 128; sequence to a sublane
    # multiple with >= 2 trailing zero rows per sequence (conv halo for batch folding).
    Lp = _round_up(L + 2, 8)
    cin_p = _round_up(cin, 128)
    l1o_p = _round_up(l1o, 128)
    ncp = _round_up(nc, 128)
    cpad = max(cin_p, 256)
    bw = max(l1o_p, ncp)

    # Batch tile: fold up to ~_ROWS_PER_STEP rows per grid step so every MXU dot sees a
    # large M.  The grid only splits once each step already carries a large row block,
    # so single-TC chips (v5e/v6e) see one big step and v7x halves stay MXU-efficient.
    Bt = max(1, min(_ROWS_PER_STEP // Lp, B))
    G = pl.cdiv(B, Bt)
    Bp = G * Bt

    # ---- glue: embedding gather (data-dependent) + padding, in plain JAX ----
    xg = jnp.take(gen_tab, x_ids, axis=0)                    # (B, L, gen_dim)
    xd = jnp.take(dom_tab, x_ids, axis=0)                    # (B, L, dom_dim)
    xemb = jnp.concatenate([xg, xd], axis=-1)                # (B, L, cin)
    xemb_p = (jnp.zeros((Bp, Lp, cin_p), jnp.bfloat16)
              .at[:B, :L, :cin].set(xemb.astype(jnp.bfloat16)))

    # ---- glue: weight packing (bf16 for the MXU, f32 biases) ----
    # conv1 (k=5) and conv2 (k=3) fused into a single k=5 conv with 256 out channels:
    # the k=3 taps land on taps 1..3 of the k=5 window (same 'same'-padding alignment).
    w12 = jnp.zeros((5, cin_p, 256), jnp.bfloat16)
    w12 = w12.at[:, :cin, :128].set(params['conv1_w'].astype(jnp.bfloat16))
    w12 = w12.at[1:4, :cin, 128:].set(params['conv2_w'].astype(jnp.bfloat16))
    w3 = params['conv3_w'].astype(jnp.bfloat16)
    w4 = params['conv4_w'].astype(jnp.bfloat16)
    w5 = params['conv5_w'].astype(jnp.bfloat16)
    bconv = jnp.stack([
        jnp.concatenate([params['conv1_b'], params['conv2_b']]),
        params['conv3_b'], params['conv4_b'], params['conv5_b'],
    ]).astype(jnp.float32)                                   # (4, 256)

    # linear_ae1 weight split into (conv-features part, domain-embedding part).  The
    # domain part is laid out on the xemb columns gen_dim:cin (zero everywhere else) so
    # it can be applied directly to the padded xemb block inside the kernel.
    l1w = params['l1_w']
    l1w_h = (jnp.zeros((256, l1o_p), jnp.bfloat16)
             .at[:, :l1o].set(l1w[:256].astype(jnp.bfloat16)))
    l1w_d = (jnp.zeros((cin_p, l1o_p), jnp.bfloat16)
             .at[gen_dim:cin, :l1o].set(l1w[256:].astype(jnp.bfloat16)))
    l2w = (jnp.zeros((l1o_p, ncp), jnp.bfloat16)
           .at[:l1o, :nc].set(params['l2_w'].astype(jnp.bfloat16)))
    bhead = jnp.zeros((2, bw), jnp.float32)
    bhead = bhead.at[0, :l1o].set(params['l1_b'])
    bhead = bhead.at[1, :nc].set(params['l2_b'])

    kernel = functools.partial(model_kernel, L=L)
    # Weights are grid-invariant: whole-array VMEM operands (no pipelining, single buf).
    vmem = pl.BlockSpec(memory_space=pltpu.MemorySpace.VMEM)

    out = pl.pallas_call(
        kernel,
        out_shape=jax.ShapeDtypeStruct((Bp, Lp, ncp), jnp.bfloat16),
        grid=(G,),
        in_specs=[pl.BlockSpec((Bt, Lp, cin_p), lambda g: (g, 0, 0))] + [vmem] * 9,
        out_specs=pl.BlockSpec((Bt, Lp, ncp), lambda g: (g, 0, 0)),
        scratch_shapes=[pltpu.VMEM((_HEAD + Bt * Lp + _HEAD, cpad), jnp.bfloat16)],
        compiler_params=pltpu.CompilerParams(dimension_semantics=("parallel",)),
    )(xemb_p, w12, w3, w4, w5, bconv, l1w_h, l1w_d, l2w, bhead)

    return out[:B, :L, :nc].astype(jnp.float32)


# ----------------------------------------------------------------------------
# Deterministic parameter init (shapes from Model.__init__; synthetic weights)
# Conv weights stored as (K, Cin, Cout); Linear weights stored as (In, Out).
# ----------------------------------------------------------------------------
def init_params(key, cin, dom_dim, num_classes=3):
    ks = jax.random.split(key, 14)

    def w(k, shape, fan_in):
        return jax.random.normal(k, shape, jnp.float32) / jnp.sqrt(float(fan_in))

    p = {}
    p['conv1_w'] = w(ks[0], (5, cin, 128), 5 * cin)
    p['conv1_b'] = w(ks[1], (128,), 128)
    p['conv2_w'] = w(ks[2], (3, cin, 128), 3 * cin)
    p['conv2_b'] = w(ks[3], (128,), 128)
    p['conv3_w'] = w(ks[4], (5, 256, 256), 5 * 256)
    p['conv3_b'] = w(ks[5], (256,), 256)
    p['conv4_w'] = w(ks[6], (5, 256, 256), 5 * 256)
    p['conv4_b'] = w(ks[7], (256,), 256)
    p['conv5_w'] = w(ks[8], (5, 256, 256), 5 * 256)
    p['conv5_b'] = w(ks[9], (256,), 256)
    p['l1_w'] = w(ks[10], (256 + dom_dim, 50), 256 + dom_dim)  # tag_dim = 0
    p['l1_b'] = w(ks[11], (50,), 50)
    p['l2_w'] = w(ks[12], (50, num_classes), 50)
    p['l2_b'] = w(ks[13], (num_classes,), num_classes)
    return p


# ----------------------------------------------------------------------------
# Pure-JAX reference with the same mixed precision (bf16 matmul inputs, f32 accum,
# f32 bias/relu/log-softmax), built independently via lax.conv_general_dilated.
# ----------------------------------------------------------------------------
def ref_forward(x_ids, params, gen_tab, dom_tab):
    bf16, f32 = jnp.bfloat16, jnp.float32
    xg = jnp.take(gen_tab, x_ids, axis=0)
    xd = jnp.take(dom_tab, x_ids, axis=0)
    xe = jnp.concatenate([xg, xd], axis=-1).astype(bf16)     # (B, L, Cin)
    xt = jnp.transpose(xe, (0, 2, 1))                        # (B, Cin, L)

    def conv(x, w_kio, b, pad):
        w = jnp.transpose(w_kio.astype(bf16), (2, 1, 0))     # (O, I, K)
        y = jax.lax.conv_general_dilated(
            x, w, window_strides=(1,), padding=[(pad, pad)],
            dimension_numbers=('NCH', 'OIH', 'NCH'),
            preferred_element_type=f32)
        return y + b[None, :, None]

    def relu_bf(x):
        return jax.nn.relu(x).astype(bf16)

    c1 = conv(xt, params['conv1_w'], params['conv1_b'], 2)
    c2 = conv(xt, params['conv2_w'], params['conv2_b'], 1)
    h = relu_bf(jnp.concatenate([c1, c2], axis=1))
    h = relu_bf(conv(h, params['conv3_w'], params['conv3_b'], 2))
    h = relu_bf(conv(h, params['conv4_w'], params['conv4_b'], 2))
    h = relu_bf(conv(h, params['conv5_w'], params['conv5_b'], 2))
    h = jnp.transpose(h, (0, 2, 1))                          # (B, L, 256) bf16
    feat = jnp.concatenate([h, xd.astype(bf16)], axis=-1)
    z = jax.nn.relu(jnp.dot(feat, params['l1_w'].astype(bf16),
                            preferred_element_type=f32) + params['l1_b'])
    logit = jnp.dot(z.astype(bf16), params['l2_w'].astype(bf16),
                    preferred_element_type=f32) + params['l2_b']   # (B, L, NC)
    return jax.nn.log_softmax(logit, axis=1)                 # over the sequence axis


# ----------------------------------------------------------------------------
if __name__ == "__main__":
    key = jax.random.PRNGKey(0)
    k_gen, k_dom, k_par, k_ids = jax.random.split(key, 4)

    vocab, gen_dim, dom_dim = 50, 16, 16
    B, L, num_classes = 4, 16, 3

    gen_tab = jax.random.normal(k_gen, (vocab, gen_dim), jnp.float32)
    dom_tab = jax.random.normal(k_dom, (vocab, dom_dim), jnp.float32)
    params = init_params(k_par, gen_dim + dom_dim, dom_dim, num_classes)

    x_ids = jax.random.randint(k_ids, (B, L), 0, vocab)
    x_len = jnp.full((B,), L, jnp.int32)        # unused (testing / no-crf path)
    x_mask = jnp.ones((B, L), jnp.int32)        # unused (no CRF)
    x_tag = jnp.zeros((B, L, 0), jnp.float32)   # tag=False -> tag_dim=0 (empty)

    out = model_forward(x_ids, params, gen_tab, dom_tab, x_len, x_mask, x_tag)
    out = jax.block_until_ready(out)

    ref = ref_forward(x_ids, params, gen_tab, dom_tab)
    assert out.shape == (B, L, num_classes)
    max_err = float(jnp.max(jnp.abs(out - ref)))
    # Kernel emits bf16 (only 3 of 128 output lanes are real); tolerance covers the
    # final bf16 quantization of the log-probabilities on top of the bf16-MXU path.
    assert jnp.allclose(out, ref, atol=2e-2, rtol=2e-2), \
        f"mismatch vs JAX reference, max abs err {max_err}"

    print("KERNEL_OK")
</pallas_src>

<mosaic_0001>
module attributes {stable_mosaic.version = 11 : i64} {
  func.func @model_kernel(%arg0: i32, %arg1: memref<4x24x128xbf16, #tpu.memory_space<vmem>>, %arg2: memref<5x128x256xbf16, #tpu.memory_space<vmem>>, %arg3: memref<5x256x256xbf16, #tpu.memory_space<vmem>>, %arg4: memref<5x256x256xbf16, #tpu.memory_space<vmem>>, %arg5: memref<5x256x256xbf16, #tpu.memory_space<vmem>>, %arg6: memref<4x256xf32, #tpu.memory_space<vmem>>, %arg7: memref<256x128xbf16, #tpu.memory_space<vmem>>, %arg8: memref<128x128xbf16, #tpu.memory_space<vmem>>, %arg9: memref<128x128xbf16, #tpu.memory_space<vmem>>, %arg10: memref<2x128xf32, #tpu.memory_space<vmem>>, %arg11: memref<4x24x128xbf16, #tpu.memory_space<vmem>>, %arg12: memref<112x256xbf16, #tpu.memory_space<vmem>>) attributes {dimension_semantics = [#tpu.dimension_semantics<parallel>], iteration_bounds = array<i64: 1>, scalar_prefetch = 0 : i64, scratch_operands = 1 : i64, tpu.core_type = #tpu.core_type<tc>, window_params = [{transform_indices = @transform_0, window_bounds = array<i64: 4, 24, 128>}, {pipeline_mode = #tpu.pipeline_mode<synchronous>, transform_indices = @transform_1, window_bounds = array<i64: 5, 128, 256>}, {pipeline_mode = #tpu.pipeline_mode<synchronous>, transform_indices = @transform_2, window_bounds = array<i64: 5, 256, 256>}, {pipeline_mode = #tpu.pipeline_mode<synchronous>, transform_indices = @transform_3, window_bounds = array<i64: 5, 256, 256>}, {pipeline_mode = #tpu.pipeline_mode<synchronous>, transform_indices = @transform_4, window_bounds = array<i64: 5, 256, 256>}, {pipeline_mode = #tpu.pipeline_mode<synchronous>, transform_indices = @transform_5, window_bounds = array<i64: 4, 256>}, {pipeline_mode = #tpu.pipeline_mode<synchronous>, transform_indices = @transform_6, window_bounds = array<i64: 256, 128>}, {pipeline_mode = #tpu.pipeline_mode<synchronous>, transform_indices = @transform_7, window_bounds = array<i64: 128, 128>}, {pipeline_mode = #tpu.pipeline_mode<synchronous>, transform_indices = @transform_8, window_bounds = array<i64: 128, 128>}, {pipeline_mode = #tpu.pipeline_mode<synchronous>, transform_indices = @transform_9, window_bounds = array<i64: 2, 128>}, {transform_indices = @transform_10, window_bounds = array<i64: 4, 24, 128>}]} {
    %cst = arith.constant 0.000000e+00 : bf16
    %0 = vector.broadcast %cst : bf16 to vector<8x256xbf16>
    %c0 = arith.constant 0 : index
    %c0_0 = arith.constant 0 : index
    %1 = vector.load %arg12[%c0, %c0_0] : memref<112x256xbf16, #tpu.memory_space<vmem>>, vector<8x256xbf16>
    tpu.vector_store %arg12[%c0, %c0_0], %0 {strides = array<i32>} : memref<112x256xbf16, #tpu.memory_space<vmem>>, vector<8x256xbf16>,
    %cst_1 = arith.constant 0.000000e+00 : bf16
    %2 = vector.broadcast %cst_1 : bf16 to vector<8x256xbf16>
    %c104 = arith.constant 104 : index
    %c0_2 = arith.constant 0 : index
    %3 = vector.load %arg12[%c104, %c0_2] : memref<112x256xbf16, #tpu.memory_space<vmem>>, vector<8x256xbf16>
    tpu.vector_store %arg12[%c104, %c0_2], %2 {strides = array<i32>} : memref<112x256xbf16, #tpu.memory_space<vmem>>, vector<8x256xbf16>,
    %cst_3 = arith.constant 0.000000e+00 : bf16
    %4 = vector.broadcast %cst_3 : bf16 to vector<8x256xbf16>
    %c0_4 = arith.constant 0 : index
    %c0_5 = arith.constant 0 : index
    %c0_6 = arith.constant 0 : index
    %5 = vector.load %arg1[%c0_4, %c0_5, %c0_6] : memref<4x24x128xbf16, #tpu.memory_space<vmem>>, vector<4x24x128xbf16>
    %6 = vector.shape_cast %5 : vector<4x24x128xbf16> to vector<96x128xbf16>
    %c8 = arith.constant 8 : index
    %c0_7 = arith.constant 0 : index
    %7 = vector.load %arg12[%c8, %c0_7] : memref<112x256xbf16, #tpu.memory_space<vmem>>, vector<96x128xbf16>
    tpu.vector_store %arg12[%c8, %c0_7], %6 {strides = array<i32>} : memref<112x256xbf16, #tpu.memory_space<vmem>>, vector<96x128xbf16>,
    %cst_8 = arith.constant 0.000000e+00 : bf16
    %8 = vector.broadcast %cst_8 : bf16 to vector<96x128xbf16>
    %c8_9 = arith.constant 8 : index
    %c128 = arith.constant 128 : index
    %9 = vector.load %arg12[%c8_9, %c128] : memref<112x256xbf16, #tpu.memory_space<vmem>>, vector<96x128xbf16>
    tpu.vector_store %arg12[%c8_9, %c128], %8 {strides = array<i32>} : memref<112x256xbf16, #tpu.memory_space<vmem>>, vector<96x128xbf16>,
    %c0_10 = arith.constant 0 : index
    %c0_11 = arith.constant 0 : index
    %10 = vector.load %arg8[%c0_10, %c0_11] : memref<128x128xbf16, #tpu.memory_space<vmem>>, vector<128x128xbf16>
    %cst_12 = arith.constant dense<0.000000e+00> : vector<96x128xf32>
    %11 = tpu.matmul %6, %10, %cst_12 {dimension_numbers = #tpu.dot_dimension_numbers<[1], [0], [0], [1], [0, 0, 1, 1], [], []>} : vector<96x128xbf16>, vector<128x128xbf16>, vector<96x128xf32> -> vector<96x128xf32>
    %c6 = arith.constant 6 : index
    %c0_13 = arith.constant 0 : index
    %12 = vector.load %arg12[%c6, %c0_13] : memref<112x256xbf16, #tpu.memory_space<vmem>>, vector<96x128xbf16>
    %c0_14 = arith.constant 0 : index
    %c0_15 = arith.constant 0 : index
    %c0_16 = arith.constant 0 : index
    %13 = vector.load %arg2[%c0_14, %c0_15, %c0_16] : memref<5x128x256xbf16, #tpu.memory_space<vmem>>, vector<1x128x256xbf16>
    %14 = vector.shape_cast %13 : vector<1x128x256xbf16> to vector<128x256xbf16>
    %cst_17 = arith.constant dense<0.000000e+00> : vector<96x256xf32>
    %15 = tpu.matmul %12, %14, %cst_17 {dimension_numbers = #tpu.dot_dimension_numbers<[1], [0], [0], [1], [0, 0, 1, 1], [], []>} : vector<96x128xbf16>, vector<128x256xbf16>, vector<96x256xf32> -> vector<96x256xf32>
    %c7 = arith.constant 7 : index
    %c0_18 = arith.constant 0 : index
    %16 = vector.load %arg12[%c7, %c0_18] : memref<112x256xbf16, #tpu.memory_space<vmem>>, vector<96x128xbf16>
    %c1 = arith.constant 1 : index
    %c0_19 = arith.constant 0 : index
    %c0_20 = arith.constant 0 : index
    %17 = vector.load %arg2[%c1, %c0_19, %c0_20] : memref<5x128x256xbf16, #tpu.memory_space<vmem>>, vector<1x128x256xbf16>
    %18 = vector.shape_cast %17 : vector<1x128x256xbf16> to vector<128x256xbf16>
    %cst_21 = arith.constant dense<0.000000e+00> : vector<96x256xf32>
    %19 = tpu.matmul %16, %18, %cst_21 {dimension_numbers = #tpu.dot_dimension_numbers<[1], [0], [0], [1], [0, 0, 1, 1], [], []>} : vector<96x128xbf16>, vector<128x256xbf16>, vector<96x256xf32> -> vector<96x256xf32>
    %20 = arith.addf %15, %19 : vector<96x256xf32>
    %c8_22 = arith.constant 8 : index
    %c0_23 = arith.constant 0 : index
    %21 = vector.load %arg12[%c8_22, %c0_23] : memref<112x256xbf16, #tpu.memory_space<vmem>>, vector<96x128xbf16>
    %c2 = arith.constant 2 : index
    %c0_24 = arith.constant 0 : index
    %c0_25 = arith.constant 0 : index
    %22 = vector.load %arg2[%c2, %c0_24, %c0_25] : memref<5x128x256xbf16, #tpu.memory_space<vmem>>, vector<1x128x256xbf16>
    %23 = vector.shape_cast %22 : vector<1x128x256xbf16> to vector<128x256xbf16>
    %cst_26 = arith.constant dense<0.000000e+00> : vector<96x256xf32>
    %24 = tpu.matmul %21, %23, %cst_26 {dimension_numbers = #tpu.dot_dimension_numbers<[1], [0], [0], [1], [0, 0, 1, 1], [], []>} : vector<96x128xbf16>, vector<128x256xbf16>, vector<96x256xf32> -> vector<96x256xf32>
    %25 = arith.addf %20, %24 : vector<96x256xf32>
    %c9 = arith.constant 9 : index
    %c0_27 = arith.constant 0 : index
    %26 = vector.load %arg12[%c9, %c0_27] : memref<112x256xbf16, #tpu.memory_space<vmem>>, vector<96x128xbf16>
    %c3 = arith.constant 3 : index
    %c0_28 = arith.constant 0 : index
    %c0_29 = arith.constant 0 : index
    %27 = vector.load %arg2[%c3, %c0_28, %c0_29] : memref<5x128x256xbf16, #tpu.memory_space<vmem>>, vector<1x128x256xbf16>
    %28 = vector.shape_cast %27 : vector<1x128x256xbf16> to vector<128x256xbf16>
    %cst_30 = arith.constant dense<0.000000e+00> : vector<96x256xf32>
    %29 = tpu.matmul %26, %28, %cst_30 {dimension_numbers = #tpu.dot_dimension_numbers<[1], [0], [0], [1], [0, 0, 1, 1], [], []>} : vector<96x128xbf16>, vector<128x256xbf16>, vector<96x256xf32> -> vector<96x256xf32>
    %30 = arith.addf %25, %29 : vector<96x256xf32>
    %c10 = arith.constant 10 : index
    %c0_31 = arith.constant 0 : index
    %31 = vector.load %arg12[%c10, %c0_31] : memref<112x256xbf16, #tpu.memory_space<vmem>>, vector<96x128xbf16>
    %c4 = arith.constant 4 : index
    %c0_32 = arith.constant 0 : index
    %c0_33 = arith.constant 0 : index
    %32 = vector.load %arg2[%c4, %c0_32, %c0_33] : memref<5x128x256xbf16, #tpu.memory_space<vmem>>, vector<1x128x256xbf16>
    %33 = vector.shape_cast %32 : vector<1x128x256xbf16> to vector<128x256xbf16>
    %cst_34 = arith.constant dense<0.000000e+00> : vector<96x256xf32>
    %34 = tpu.matmul %31, %33, %cst_34 {dimension_numbers = #tpu.dot_dimension_numbers<[1], [0], [0], [1], [0, 0, 1, 1], [], []>} : vector<96x128xbf16>, vector<128x256xbf16>, vector<96x256xf32> -> vector<96x256xf32>
    %35 = arith.addf %30, %34 : vector<96x256xf32>
    %c0_35 = arith.constant 0 : index
    %c0_36 = arith.constant 0 : index
    %36 = vector.load %arg6[%c0_35, %c0_36] : memref<4x256xf32, #tpu.memory_space<vmem>>, vector<1x256xf32>
    %37 = vector.broadcast %36 : vector<1x256xf32> to vector<96x256xf32>
    %38 = arith.addf %35, %37 : vector<96x256xf32>
    %cst_37 = arith.constant 0.000000e+00 : f32
    %39 = vector.broadcast %cst_37 : f32 to vector<96x256xf32>
    %40 = arith.maximumf %38, %39 : vector<96x256xf32>
    %41 = arith.truncf %40 : vector<96x256xf32> to vector<96x256xbf16>
    %c8_38 = arith.constant 8 : index
    %c0_39 = arith.constant 0 : index
    %42 = vector.load %arg12[%c8_38, %c0_39] : memref<112x256xbf16, #tpu.memory_space<vmem>>, vector<96x256xbf16>
    tpu.vector_store %arg12[%c8_38, %c0_39], %41 {strides = array<i32>} : memref<112x256xbf16, #tpu.memory_space<vmem>>, vector<96x256xbf16>,
    %c24 = arith.constant 24 : index
    %c0_40 = arith.constant 0 : index
    %43 = vector.load %arg12[%c24, %c0_40] : memref<112x256xbf16, #tpu.memory_space<vmem>>, vector<8x256xbf16>
    tpu.vector_store %arg12[%c24, %c0_40], %4 {strides = array<i32>} : memref<112x256xbf16, #tpu.memory_space<vmem>>, vector<8x256xbf16>,
    %c48 = arith.constant 48 : index
    %c0_41 = arith.constant 0 : index
    %44 = vector.load %arg12[%c48, %c0_41] : memref<112x256xbf16, #tpu.memory_space<vmem>>, vector<8x256xbf16>
    tpu.vector_store %arg12[%c48, %c0_41], %4 {strides = array<i32>} : memref<112x256xbf16, #tpu.memory_space<vmem>>, vector<8x256xbf16>,
    %c72 = arith.constant 72 : index
    %c0_42 = arith.constant 0 : index
    %45 = vector.load %arg12[%c72, %c0_42] : memref<112x256xbf16, #tpu.memory_space<vmem>>, vector<8x256xbf16>
    tpu.vector_store %arg12[%c72, %c0_42], %4 {strides = array<i32>} : memref<112x256xbf16, #tpu.memory_space<vmem>>, vector<8x256xbf16>,
    %c96 = arith.constant 96 : index
    %c0_43 = arith.constant 0 : index
    %46 = vector.load %arg12[%c96, %c0_43] : memref<112x256xbf16, #tpu.memory_space<vmem>>, vector<8x256xbf16>
    tpu.vector_store %arg12[%c96, %c0_43], %4 {strides = array<i32>} : memref<112x256xbf16, #tpu.memory_space<vmem>>, vector<8x256xbf16>,
    %c6_44 = arith.constant 6 : index
    %c0_45 = arith.constant 0 : index
    %47 = vector.load %arg12[%c6_44, %c0_45] : memref<112x256xbf16, #tpu.memory_space<vmem>>, vector<96x256xbf16>
    %c0_46 = arith.constant 0 : index
    %c0_47 = arith.constant 0 : index
    %c0_48 = arith.constant 0 : index
    %48 = vector.load %arg3[%c0_46, %c0_47, %c0_48] : memref<5x256x256xbf16, #tpu.memory_space<vmem>>, vector<1x256x256xbf16>
    %49 = vector.shape_cast %48 : vector<1x256x256xbf16> to vector<256x256xbf16>
    %cst_49 = arith.constant dense<0.000000e+00> : vector<96x256xf32>
    %50 = tpu.matmul %47, %49, %cst_49 {dimension_numbers = #tpu.dot_dimension_numbers<[1], [0], [0], [1], [0, 0, 1, 1], [], []>} : vector<96x256xbf16>, vector<256x256xbf16>, vector<96x256xf32> -> vector<96x256xf32>
    %c7_50 = arith.constant 7 : index
    %c0_51 = arith.constant 0 : index
    %51 = vector.load %arg12[%c7_50, %c0_51] : memref<112x256xbf16, #tpu.memory_space<vmem>>, vector<96x256xbf16>
    %c1_52 = arith.constant 1 : index
    %c0_53 = arith.constant 0 : index
    %c0_54 = arith.constant 0 : index
    %52 = vector.load %arg3[%c1_52, %c0_53, %c0_54] : memref<5x256x256xbf16, #tpu.memory_space<vmem>>, vector<1x256x256xbf16>
    %53 = vector.shape_cast %52 : vector<1x256x256xbf16> to vector<256x256xbf16>
    %cst_55 = arith.constant dense<0.000000e+00> : vector<96x256xf32>
    %54 = tpu.matmul %51, %53, %cst_55 {dimension_numbers = #tpu.dot_dimension_numbers<[1], [0], [0], [1], [0, 0, 1, 1], [], []>} : vector<96x256xbf16>, vector<256x256xbf16>, vector<96x256xf32> -> vector<96x256xf32>
    %55 = arith.addf %50, %54 : vector<96x256xf32>
    %c8_56 = arith.constant 8 : index
    %c0_57 = arith.constant 0 : index
    %56 = vector.load %arg12[%c8_56, %c0_57] : memref<112x256xbf16, #tpu.memory_space<vmem>>, vector<96x256xbf16>
    %c2_58 = arith.constant 2 : index
    %c0_59 = arith.constant 0 : index
    %c0_60 = arith.constant 0 : index
    %57 = vector.load %arg3[%c2_58, %c0_59, %c0_60] : memref<5x256x256xbf16, #tpu.memory_space<vmem>>, vector<1x256x256xbf16>
    %58 = vector.shape_cast %57 : vector<1x256x256xbf16> to vector<256x256xbf16>
    %cst_61 = arith.constant dense<0.000000e+00> : vector<96x256xf32>
    %59 = tpu.matmul %56, %58, %cst_61 {dimension_numbers = #tpu.dot_dimension_numbers<[1], [0], [0], [1], [0, 0, 1, 1], [], []>} : vector<96x256xbf16>, vector<256x256xbf16>, vector<96x256xf32> -> vector<96x256xf32>
    %60 = arith.addf %55, %59 : vector<96x256xf32>
    %c9_62 = arith.constant 9 : index
    %c0_63 = arith.constant 0 : index
    %61 = vector.load %arg12[%c9_62, %c0_63] : memref<112x256xbf16, #tpu.memory_space<vmem>>, vector<96x256xbf16>
    %c3_64 = arith.constant 3 : index
    %c0_65 = arith.constant 0 : index
    %c0_66 = arith.constant 0 : index
    %62 = vector.load %arg3[%c3_64, %c0_65, %c0_66] : memref<5x256x256xbf16, #tpu.memory_space<vmem>>, vector<1x256x256xbf16>
    %63 = vector.shape_cast %62 : vector<1x256x256xbf16> to vector<256x256xbf16>
    %cst_67 = arith.constant dense<0.000000e+00> : vector<96x256xf32>
    %64 = tpu.matmul %61, %63, %cst_67 {dimension_numbers = #tpu.dot_dimension_numbers<[1], [0], [0], [1], [0, 0, 1, 1], [], []>} : vector<96x256xbf16>, vector<256x256xbf16>, vector<96x256xf32> -> vector<96x256xf32>
    %65 = arith.addf %60, %64 : vector<96x256xf32>
    %c10_68 = arith.constant 10 : index
    %c0_69 = arith.constant 0 : index
    %66 = vector.load %arg12[%c10_68, %c0_69] : memref<112x256xbf16, #tpu.memory_space<vmem>>, vector<96x256xbf16>
    %c4_70 = arith.constant 4 : index
    %c0_71 = arith.constant 0 : index
    %c0_72 = arith.constant 0 : index
    %67 = vector.load %arg3[%c4_70, %c0_71, %c0_72] : memref<5x256x256xbf16, #tpu.memory_space<vmem>>, vector<1x256x256xbf16>
    %68 = vector.shape_cast %67 : vector<1x256x256xbf16> to vector<256x256xbf16>
    %cst_73 = arith.constant dense<0.000000e+00> : vector<96x256xf32>
    %69 = tpu.matmul %66, %68, %cst_73 {dimension_numbers = #tpu.dot_dimension_numbers<[1], [0], [0], [1], [0, 0, 1, 1], [], []>} : vector<96x256xbf16>, vector<256x256xbf16>, vector<96x256xf32> -> vector<96x256xf32>
    %70 = arith.addf %65, %69 : vector<96x256xf32>
    %c1_74 = arith.constant 1 : index
    %c0_75 = arith.constant 0 : index
    %71 = vector.load %arg6[%c1_74, %c0_75] : memref<4x256xf32, #tpu.memory_space<vmem>>, vector<1x256xf32>
    %72 = vector.broadcast %71 : vector<1x256xf32> to vector<96x256xf32>
    %73 = arith.addf %70, %72 : vector<96x256xf32>
    %cst_76 = arith.constant 0.000000e+00 : f32
    %74 = vector.broadcast %cst_76 : f32 to vector<96x256xf32>
    %75 = arith.maximumf %73, %74 : vector<96x256xf32>
    %76 = arith.truncf %75 : vector<96x256xf32> to vector<96x256xbf16>
    %c8_77 = arith.constant 8 : index
    %c0_78 = arith.constant 0 : index
    %77 = vector.load %arg12[%c8_77, %c0_78] : memref<112x256xbf16, #tpu.memory_space<vmem>>, vector<96x256xbf16>
    tpu.vector_store %arg12[%c8_77, %c0_78], %76 {strides = array<i32>} : memref<112x256xbf16, #tpu.memory_space<vmem>>, vector<96x256xbf16>,
    %c24_79 = arith.constant 24 : index
    %c0_80 = arith.constant 0 : index
    %78 = vector.load %arg12[%c24_79, %c0_80] : memref<112x256xbf16, #tpu.memory_space<vmem>>, vector<8x256xbf16>
    tpu.vector_store %arg12[%c24_79, %c0_80], %4 {strides = array<i32>} : memref<112x256xbf16, #tpu.memory_space<vmem>>, vector<8x256xbf16>,
    %c48_81 = arith.constant 48 : index
    %c0_82 = arith.constant 0 : index
    %79 = vector.load %arg12[%c48_81, %c0_82] : memref<112x256xbf16, #tpu.memory_space<vmem>>, vector<8x256xbf16>
    tpu.vector_store %arg12[%c48_81, %c0_82], %4 {strides = array<i32>} : memref<112x256xbf16, #tpu.memory_space<vmem>>, vector<8x256xbf16>,
    %c72_83 = arith.constant 72 : index
    %c0_84 = arith.constant 0 : index
    %80 = vector.load %arg12[%c72_83, %c0_84] : memref<112x256xbf16, #tpu.memory_space<vmem>>, vector<8x256xbf16>
    tpu.vector_store %arg12[%c72_83, %c0_84], %4 {strides = array<i32>} : memref<112x256xbf16, #tpu.memory_space<vmem>>, vector<8x256xbf16>,
    %c96_85 = arith.constant 96 : index
    %c0_86 = arith.constant 0 : index
    %81 = vector.load %arg12[%c96_85, %c0_86] : memref<112x256xbf16, #tpu.memory_space<vmem>>, vector<8x256xbf16>
    tpu.vector_store %arg12[%c96_85, %c0_86], %4 {strides = array<i32>} : memref<112x256xbf16, #tpu.memory_space<vmem>>, vector<8x256xbf16>,
    %c6_87 = arith.constant 6 : index
    %c0_88 = arith.constant 0 : index
    %82 = vector.load %arg12[%c6_87, %c0_88] : memref<112x256xbf16, #tpu.memory_space<vmem>>, vector<96x256xbf16>
    %c0_89 = arith.constant 0 : index
    %c0_90 = arith.constant 0 : index
    %c0_91 = arith.constant 0 : index
    %83 = vector.load %arg4[%c0_89, %c0_90, %c0_91] : memref<5x256x256xbf16, #tpu.memory_space<vmem>>, vector<1x256x256xbf16>
    %84 = vector.shape_cast %83 : vector<1x256x256xbf16> to vector<256x256xbf16>
    %cst_92 = arith.constant dense<0.000000e+00> : vector<96x256xf32>
    %85 = tpu.matmul %82, %84, %cst_92 {dimension_numbers = #tpu.dot_dimension_numbers<[1], [0], [0], [1], [0, 0, 1, 1], [], []>} : vector<96x256xbf16>, vector<256x256xbf16>, vector<96x256xf32> -> vector<96x256xf32>
    %c7_93 = arith.constant 7 : index
    %c0_94 = arith.constant 0 : index
    %86 = vector.load %arg12[%c7_93, %c0_94] : memref<112x256xbf16, #tpu.memory_space<vmem>>, vector<96x256xbf16>
    %c1_95 = arith.constant 1 : index
    %c0_96 = arith.constant 0 : index
    %c0_97 = arith.constant 0 : index
    %87 = vector.load %arg4[%c1_95, %c0_96, %c0_97] : memref<5x256x256xbf16, #tpu.memory_space<vmem>>, vector<1x256x256xbf16>
    %88 = vector.shape_cast %87 : vector<1x256x256xbf16> to vector<256x256xbf16>
    %cst_98 = arith.constant dense<0.000000e+00> : vector<96x256xf32>
    %89 = tpu.matmul %86, %88, %cst_98 {dimension_numbers = #tpu.dot_dimension_numbers<[1], [0], [0], [1], [0, 0, 1, 1], [], []>} : vector<96x256xbf16>, vector<256x256xbf16>, vector<96x256xf32> -> vector<96x256xf32>
    %90 = arith.addf %85, %89 : vector<96x256xf32>
    %c8_99 = arith.constant 8 : index
    %c0_100 = arith.constant 0 : index
    %91 = vector.load %arg12[%c8_99, %c0_100] : memref<112x256xbf16, #tpu.memory_space<vmem>>, vector<96x256xbf16>
    %c2_101 = arith.constant 2 : index
    %c0_102 = arith.constant 0 : index
    %c0_103 = arith.constant 0 : index
    %92 = vector.load %arg4[%c2_101, %c0_102, %c0_103] : memref<5x256x256xbf16, #tpu.memory_space<vmem>>, vector<1x256x256xbf16>
    %93 = vector.shape_cast %92 : vector<1x256x256xbf16> to vector<256x256xbf16>
    %cst_104 = arith.constant dense<0.000000e+00> : vector<96x256xf32>
    %94 = tpu.matmul %91, %93, %cst_104 {dimension_numbers = #tpu.dot_dimension_numbers<[1], [0], [0], [1], [0, 0, 1, 1], [], []>} : vector<96x256xbf16>, vector<256x256xbf16>, vector<96x256xf32> -> vector<96x256xf32>
    %95 = arith.addf %90, %94 : vector<96x256xf32>
    %c9_105 = arith.constant 9 : index
    %c0_106 = arith.constant 0 : index
    %96 = vector.load %arg12[%c9_105, %c0_106] : memref<112x256xbf16, #tpu.memory_space<vmem>>, vector<96x256xbf16>
    %c3_107 = arith.constant 3 : index
    %c0_108 = arith.constant 0 : index
    %c0_109 = arith.constant 0 : index
    %97 = vector.load %arg4[%c3_107, %c0_108, %c0_109] : memref<5x256x256xbf16, #tpu.memory_space<vmem>>, vector<1x256x256xbf16>
    %98 = vector.shape_cast %97 : vector<1x256x256xbf16> to vector<256x256xbf16>
    %cst_110 = arith.constant dense<0.000000e+00> : vector<96x256xf32>
    %99 = tpu.matmul %96, %98, %cst_110 {dimension_numbers = #tpu.dot_dimension_numbers<[1], [0], [0], [1], [0, 0, 1, 1], [], []>} : vector<96x256xbf16>, vector<256x256xbf16>, vector<96x256xf32> -> vector<96x256xf32>
    %100 = arith.addf %95, %99 : vector<96x256xf32>
    %c10_111 = arith.constant 10 : index
    %c0_112 = arith.constant 0 : index
    %101 = vector.load %arg12[%c10_111, %c0_112] : memref<112x256xbf16, #tpu.memory_space<vmem>>, vector<96x256xbf16>
    %c4_113 = arith.constant 4 : index
    %c0_114 = arith.constant 0 : index
    %c0_115 = arith.constant 0 : index
    %102 = vector.load %arg4[%c4_113, %c0_114, %c0_115] : memref<5x256x256xbf16, #tpu.memory_space<vmem>>, vector<1x256x256xbf16>
    %103 = vector.shape_cast %102 : vector<1x256x256xbf16> to vector<256x256xbf16>
    %cst_116 = arith.constant dense<0.000000e+00> : vector<96x256xf32>
    %104 = tpu.matmul %101, %103, %cst_116 {dimension_numbers = #tpu.dot_dimension_numbers<[1], [0], [0], [1], [0, 0, 1, 1], [], []>} : vector<96x256xbf16>, vector<256x256xbf16>, vector<96x256xf32> -> vector<96x256xf32>
    %105 = arith.addf %100, %104 : vector<96x256xf32>
    %c2_117 = arith.constant 2 : index
    %c0_118 = arith.constant 0 : index
    %106 = vector.load %arg6[%c2_117, %c0_118] : memref<4x256xf32, #tpu.memory_space<vmem>>, vector<1x256xf32>
    %107 = vector.broadcast %106 : vector<1x256xf32> to vector<96x256xf32>
    %108 = arith.addf %105, %107 : vector<96x256xf32>
    %cst_119 = arith.constant 0.000000e+00 : f32
    %109 = vector.broadcast %cst_119 : f32 to vector<96x256xf32>
    %110 = arith.maximumf %108, %109 : vector<96x256xf32>
    %111 = arith.truncf %110 : vector<96x256xf32> to vector<96x256xbf16>
    %c8_120 = arith.constant 8 : index
    %c0_121 = arith.constant 0 : index
    %112 = vector.load %arg12[%c8_120, %c0_121] : memref<112x256xbf16, #tpu.memory_space<vmem>>, vector<96x256xbf16>
    tpu.vector_store %arg12[%c8_120, %c0_121], %111 {strides = array<i32>} : memref<112x256xbf16, #tpu.memory_space<vmem>>, vector<96x256xbf16>,
    %c24_122 = arith.constant 24 : index
    %c0_123 = arith.constant 0 : index
    %113 = vector.load %arg12[%c24_122, %c0_123] : memref<112x256xbf16, #tpu.memory_space<vmem>>, vector<8x256xbf16>
    tpu.vector_store %arg12[%c24_122, %c0_123], %4 {strides = array<i32>} : memref<112x256xbf16, #tpu.memory_space<vmem>>, vector<8x256xbf16>,
    %c48_124 = arith.constant 48 : index
    %c0_125 = arith.constant 0 : index
    %114 = vector.load %arg12[%c48_124, %c0_125] : memref<112x256xbf16, #tpu.memory_space<vmem>>, vector<8x256xbf16>
    tpu.vector_store %arg12[%c48_124, %c0_125], %4 {strides = array<i32>} : memref<112x256xbf16, #tpu.memory_space<vmem>>, vector<8x256xbf16>,
    %c72_126 = arith.constant 72 : index
    %c0_127 = arith.constant 0 : index
    %115 = vector.load %arg12[%c72_126, %c0_127] : memref<112x256xbf16, #tpu.memory_space<vmem>>, vector<8x256xbf16>
    tpu.vector_store %arg12[%c72_126, %c0_127], %4 {strides = array<i32>} : memref<112x256xbf16, #tpu.memory_space<vmem>>, vector<8x256xbf16>,
    %c96_128 = arith.constant 96 : index
    %c0_129 = arith.constant 0 : index
    %116 = vector.load %arg12[%c96_128, %c0_129] : memref<112x256xbf16, #tpu.memory_space<vmem>>, vector<8x256xbf16>
    tpu.vector_store %arg12[%c96_128, %c0_129], %4 {strides = array<i32>} : memref<112x256xbf16, #tpu.memory_space<vmem>>, vector<8x256xbf16>,
    %c6_130 = arith.constant 6 : index
    %c0_131 = arith.constant 0 : index
    %117 = vector.load %arg12[%c6_130, %c0_131] : memref<112x256xbf16, #tpu.memory_space<vmem>>, vector<96x256xbf16>
    %c0_132 = arith.constant 0 : index
    %c0_133 = arith.constant 0 : index
    %c0_134 = arith.constant 0 : index
    %118 = vector.load %arg5[%c0_132, %c0_133, %c0_134] : memref<5x256x256xbf16, #tpu.memory_space<vmem>>, vector<1x256x256xbf16>
    %119 = vector.shape_cast %118 : vector<1x256x256xbf16> to vector<256x256xbf16>
    %cst_135 = arith.constant dense<0.000000e+00> : vector<96x256xf32>
    %120 = tpu.matmul %117, %119, %cst_135 {dimension_numbers = #tpu.dot_dimension_numbers<[1], [0], [0], [1], [0, 0, 1, 1], [], []>} : vector<96x256xbf16>, vector<256x256xbf16>, vector<96x256xf32> -> vector<96x256xf32>
    %c7_136 = arith.constant 7 : index
    %c0_137 = arith.constant 0 : index
    %121 = vector.load %arg12[%c7_136, %c0_137] : memref<112x256xbf16, #tpu.memory_space<vmem>>, vector<96x256xbf16>
    %c1_138 = arith.constant 1 : index
    %c0_139 = arith.constant 0 : index
    %c0_140 = arith.constant 0 : index
    %122 = vector.load %arg5[%c1_138, %c0_139, %c0_140] : memref<5x256x256xbf16, #tpu.memory_space<vmem>>, vector<1x256x256xbf16>
    %123 = vector.shape_cast %122 : vector<1x256x256xbf16> to vector<256x256xbf16>
    %cst_141 = arith.constant dense<0.000000e+00> : vector<96x256xf32>
    %124 = tpu.matmul %121, %123, %cst_141 {dimension_numbers = #tpu.dot_dimension_numbers<[1], [0], [0], [1], [0, 0, 1, 1], [], []>} : vector<96x256xbf16>, vector<256x256xbf16>, vector<96x256xf32> -> vector<96x256xf32>
    %125 = arith.addf %120, %124 : vector<96x256xf32>
    %c8_142 = arith.constant 8 : index
    %c0_143 = arith.constant 0 : index
    %126 = vector.load %arg12[%c8_142, %c0_143] : memref<112x256xbf16, #tpu.memory_space<vmem>>, vector<96x256xbf16>
    %c2_144 = arith.constant 2 : index
    %c0_145 = arith.constant 0 : index
    %c0_146 = arith.constant 0 : index
    %127 = vector.load %arg5[%c2_144, %c0_145, %c0_146] : memref<5x256x256xbf16, #tpu.memory_space<vmem>>, vector<1x256x256xbf16>
    %128 = vector.shape_cast %127 : vector<1x256x256xbf16> to vector<256x256xbf16>
    %cst_147 = arith.constant dense<0.000000e+00> : vector<96x256xf32>
    %129 = tpu.matmul %126, %128, %cst_147 {dimension_numbers = #tpu.dot_dimension_numbers<[1], [0], [0], [1], [0, 0, 1, 1], [], []>} : vector<96x256xbf16>, vector<256x256xbf16>, vector<96x256xf32> -> vector<96x256xf32>
    %130 = arith.addf %125, %129 : vector<96x256xf32>
    %c9_148 = arith.constant 9 : index
    %c0_149 = arith.constant 0 : index
    %131 = vector.load %arg12[%c9_148, %c0_149] : memref<112x256xbf16, #tpu.memory_space<vmem>>, vector<96x256xbf16>
    %c3_150 = arith.constant 3 : index
    %c0_151 = arith.constant 0 : index
    %c0_152 = arith.constant 0 : index
    %132 = vector.load %arg5[%c3_150, %c0_151, %c0_152] : memref<5x256x256xbf16, #tpu.memory_space<vmem>>, vector<1x256x256xbf16>
    %133 = vector.shape_cast %132 : vector<1x256x256xbf16> to vector<256x256xbf16>
    %cst_153 = arith.constant dense<0.000000e+00> : vector<96x256xf32>
    %134 = tpu.matmul %131, %133, %cst_153 {dimension_numbers = #tpu.dot_dimension_numbers<[1], [0], [0], [1], [0, 0, 1, 1], [], []>} : vector<96x256xbf16>, vector<256x256xbf16>, vector<96x256xf32> -> vector<96x256xf32>
    %135 = arith.addf %130, %134 : vector<96x256xf32>
    %c10_154 = arith.constant 10 : index
    %c0_155 = arith.constant 0 : index
    %136 = vector.load %arg12[%c10_154, %c0_155] : memref<112x256xbf16, #tpu.memory_space<vmem>>, vector<96x256xbf16>
    %c4_156 = arith.constant 4 : index
    %c0_157 = arith.constant 0 : index
    %c0_158 = arith.constant 0 : index
    %137 = vector.load %arg5[%c4_156, %c0_157, %c0_158] : memref<5x256x256xbf16, #tpu.memory_space<vmem>>, vector<1x256x256xbf16>
    %138 = vector.shape_cast %137 : vector<1x256x256xbf16> to vector<256x256xbf16>
    %cst_159 = arith.constant dense<0.000000e+00> : vector<96x256xf32>
    %139 = tpu.matmul %136, %138, %cst_159 {dimension_numbers = #tpu.dot_dimension_numbers<[1], [0], [0], [1], [0, 0, 1, 1], [], []>} : vector<96x256xbf16>, vector<256x256xbf16>, vector<96x256xf32> -> vector<96x256xf32>
    %140 = arith.addf %135, %139 : vector<96x256xf32>
    %c3_160 = arith.constant 3 : index
    %c0_161 = arith.constant 0 : index
    %141 = vector.load %arg6[%c3_160, %c0_161] : memref<4x256xf32, #tpu.memory_space<vmem>>, vector<1x256xf32>
    %142 = vector.broadcast %141 : vector<1x256xf32> to vector<96x256xf32>
    %143 = arith.addf %140, %142 : vector<96x256xf32>
    %cst_162 = arith.constant 0.000000e+00 : f32
    %144 = vector.broadcast %cst_162 : f32 to vector<96x256xf32>
    %145 = arith.maximumf %143, %144 : vector<96x256xf32>
    %146 = arith.truncf %145 : vector<96x256xf32> to vector<96x256xbf16>
    %c0_163 = arith.constant 0 : index
    %c0_164 = arith.constant 0 : index
    %147 = vector.load %arg7[%c0_163, %c0_164] : memref<256x128xbf16, #tpu.memory_space<vmem>>, vector<256x128xbf16>
    %cst_165 = arith.constant dense<0.000000e+00> : vector<96x128xf32>
    %148 = tpu.matmul %146, %147, %cst_165 {dimension_numbers = #tpu.dot_dimension_numbers<[1], [0], [0], [1], [0, 0, 1, 1], [], []>} : vector<96x256xbf16>, vector<256x128xbf16>, vector<96x128xf32> -> vector<96x128xf32>
    %149 = arith.addf %148, %11 : vector<96x128xf32>
    %c0_166 = arith.constant 0 : index
    %c0_167 = arith.constant 0 : index
    %150 = vector.load %arg10[%c0_166, %c0_167] : memref<2x128xf32, #tpu.memory_space<vmem>>, vector<1x128xf32>
    %151 = vector.broadcast %150 : vector<1x128xf32> to vector<96x128xf32>
    %152 = arith.addf %149, %151 : vector<96x128xf32>
    %cst_168 = arith.constant 0.000000e+00 : f32
    %153 = vector.broadcast %cst_168 : f32 to vector<96x128xf32>
    %154 = arith.maximumf %152, %153 : vector<96x128xf32>
    %155 = arith.truncf %154 : vector<96x128xf32> to vector<96x128xbf16>
    %c0_169 = arith.constant 0 : index
    %c0_170 = arith.constant 0 : index
    %156 = vector.load %arg9[%c0_169, %c0_170] : memref<128x128xbf16, #tpu.memory_space<vmem>>, vector<128x128xbf16>
    %cst_171 = arith.constant dense<0.000000e+00> : vector<96x128xf32>
    %157 = tpu.matmul %155, %156, %cst_171 {dimension_numbers = #tpu.dot_dimension_numbers<[1], [0], [0], [1], [0, 0, 1, 1], [], []>} : vector<96x128xbf16>, vector<128x128xbf16>, vector<96x128xf32> -> vector<96x128xf32>
    %c1_172 = arith.constant 1 : index
    %c0_173 = arith.constant 0 : index
    %158 = vector.load %arg10[%c1_172, %c0_173] : memref<2x128xf32, #tpu.memory_space<vmem>>, vector<1x128xf32>
    %159 = vector.broadcast %158 : vector<1x128xf32> to vector<96x128xf32>
    %160 = arith.addf %157, %159 : vector<96x128xf32>
    %161 = tpu.iota {dimensions = array<i32: 1>} : vector<4x24x1xi32>
    %c16_i32 = arith.constant 16 : i32
    %162 = vector.broadcast %c16_i32 : i32 to vector<4x24x1xi32>
    %163 = arith.cmpi slt, %161, %162 : vector<4x24x1xi32>
    %164 = vector.shape_cast %160 : vector<96x128xf32> to vector<4x24x128xf32>
    %cst_174 = arith.constant -1.000000e+30 : f32
    %165 = vector.shape_cast %163 : vector<4x24x1xi1> to vector<4x24x1xi1>
    %166 = vector.broadcast %165 : vector<4x24x1xi1> to vector<4x24x128xi1>
    %167 = vector.broadcast %cst_174 : f32 to vector<4x24x128xf32>
    %168 = arith.select %166, %164, %167 : vector<4x24x128xi1>, vector<4x24x128xf32>
    %cst_175 = arith.constant dense<0xFF800000> : vector<4x128xf32>
    %169 = vector.multi_reduction <maximumf>, %168, %cst_175 [1] : vector<4x24x128xf32> to vector<4x128xf32>
    %170 = vector.shape_cast %169 : vector<4x128xf32> to vector<4x1x128xf32>
    %171 = vector.broadcast %170 : vector<4x1x128xf32> to vector<4x24x128xf32>
    %172 = arith.subf %168, %171 : vector<4x24x128xf32>
    %173 = math.exp %172 : vector<4x24x128xf32>
    %cst_176 = arith.constant dense<0.000000e+00> : vector<4x128xf32>
    %174 = vector.multi_reduction <add>, %173, %cst_176 [1] : vector<4x24x128xf32> to vector<4x128xf32>
    %175 = vector.shape_cast %174 : vector<4x128xf32> to vector<4x1x128xf32>
    %176 = math.log %175 : vector<4x1x128xf32>
    %177 = arith.addf %176, %170 : vector<4x1x128xf32>
    %178 = vector.broadcast %177 : vector<4x1x128xf32> to vector<4x24x128xf32>
    %179 = arith.subf %168, %178 : vector<4x24x128xf32>
    %180 = arith.truncf %179 : vector<4x24x128xf32> to vector<4x24x128xbf16>
    %c0_177 = arith.constant 0 : index
    %c0_178 = arith.constant 0 : index
    %c0_179 = arith.constant 0 : index
    %181 = vector.load %arg11[%c0_177, %c0_178, %c0_179] : memref<4x24x128xbf16, #tpu.memory_space<vmem>>, vector<4x24x128xbf16>
    tpu.vector_store %arg11[%c0_177, %c0_178, %c0_179], %180 {strides = array<i32>} : memref<4x24x128xbf16, #tpu.memory_space<vmem>>, vector<4x24x128xbf16>,
    return
  }
  func.func @transform_0(%arg0: i32) -> (i32, i32, i32) {
    %c0_i32 = arith.constant 0 : i32
    %c0_i32_0 = arith.constant 0 : i32
    %c0_i32_1 = arith.constant 0 : i32
    return %arg0, %c0_i32, %c0_i32_0 : i32, i32, i32
  }
  func.func @transform_1(%arg0: i32) -> (i32, i32, i32) {
    %c0_i32 = arith.constant 0 : i32
    %c0_i32_0 = arith.constant 0 : i32
    %c0_i32_1 = arith.constant 0 : i32
    %c0_i32_2 = arith.constant 0 : i32
    return %c0_i32, %c0_i32_0, %c0_i32_1 : i32, i32, i32
  }
  func.func @transform_2(%arg0: i32) -> (i32, i32, i32) {
    %c0_i32 = arith.constant 0 : i32
    %c0_i32_0 = arith.constant 0 : i32
    %c0_i32_1 = arith.constant 0 : i32
    %c0_i32_2 = arith.constant 0 : i32
    return %c0_i32, %c0_i32_0, %c0_i32_1 : i32, i32, i32
  }
  func.func @transform_3(%arg0: i32) -> (i32, i32, i32) {
    %c0_i32 = arith.constant 0 : i32
    %c0_i32_0 = arith.constant 0 : i32
    %c0_i32_1 = arith.constant 0 : i32
    %c0_i32_2 = arith.constant 0 : i32
    return %c0_i32, %c0_i32_0, %c0_i32_1 : i32, i32, i32
  }
  func.func @transform_4(%arg0: i32) -> (i32, i32, i32) {
    %c0_i32 = arith.constant 0 : i32
    %c0_i32_0 = arith.constant 0 : i32
    %c0_i32_1 = arith.constant 0 : i32
    %c0_i32_2 = arith.constant 0 : i32
    return %c0_i32, %c0_i32_0, %c0_i32_1 : i32, i32, i32
  }
  func.func @transform_5(%arg0: i32) -> (i32, i32) {
    %c0_i32 = arith.constant 0 : i32
    %c0_i32_0 = arith.constant 0 : i32
    %c0_i32_1 = arith.constant 0 : i32
    return %c0_i32, %c0_i32_0 : i32, i32
  }
  func.func @transform_6(%arg0: i32) -> (i32, i32) {
    %c0_i32 = arith.constant 0 : i32
    %c0_i32_0 = arith.constant 0 : i32
    %c0_i32_1 = arith.constant 0 : i32
    return %c0_i32, %c0_i32_0 : i32, i32
  }
  func.func @transform_7(%arg0: i32) -> (i32, i32) {
    %c0_i32 = arith.constant 0 : i32
    %c0_i32_0 = arith.constant 0 : i32
    %c0_i32_1 = arith.constant 0 : i32
    return %c0_i32, %c0_i32_0 : i32, i32
  }
  func.func @transform_8(%arg0: i32) -> (i32, i32) {
    %c0_i32 = arith.constant 0 : i32
    %c0_i32_0 = arith.constant 0 : i32
    %c0_i32_1 = arith.constant 0 : i32
    return %c0_i32, %c0_i32_0 : i32, i32
  }
  func.func @transform_9(%arg0: i32) -> (i32, i32) {
    %c0_i32 = arith.constant 0 : i32
    %c0_i32_0 = arith.constant 0 : i32
    %c0_i32_1 = arith.constant 0 : i32
    return %c0_i32, %c0_i32_0 : i32, i32
  }
  func.func @transform_10(%arg0: i32) -> (i32, i32, i32) {
    %c0_i32 = arith.constant 0 : i32
    %c0_i32_0 = arith.constant 0 : i32
    %c0_i32_1 = arith.constant 0 : i32
    return %arg0, %c0_i32, %c0_i32_0 : i32, i32, i32
  }
}

</mosaic_0001>

<llo_original>
// kernel: tpu_custom_call.1
$region0: #{tpu_custom_call.1}
  #allocation0 [shape = 'u32[]', space=smem, size = 0x4, offset = 0x4, fixed_abs, tag = 'smem constant byte address 0x4 - core index']
  #allocation1 [shape = 'u32[144,128]{1,0:T(1,128)}', space=vmem, size = 0x12000, scoped, tag = 'internal scratch']
  #allocation2 [shape = 'bf16[112,256]{1,0:T(8,128)(2,1)}', space=vmem, size = 0xe000, scoped, tag = 'scratch operand']
  %s0 = inlined_call_operand.hbm [shape: bf16[4,24,128], index: 0, kind: input, shape index: {}]
  %s1 = inlined_call_operand.hbm [shape: bf16[5,128,256], index: 1, kind: input, shape index: {}]
  %s2 = inlined_call_operand.hbm [shape: bf16[5,256,256], index: 2, kind: input, shape index: {}]
  %s3 = inlined_call_operand.hbm [shape: bf16[5,256,256], index: 3, kind: input, shape index: {}]
  %s4 = inlined_call_operand.hbm [shape: bf16[5,256,256], index: 4, kind: input, shape index: {}]
  %s5 = inlined_call_operand.vmem [shape: f32[4,256], index: 5, kind: input, shape index: {}]
  %s6 = inlined_call_operand.hbm [shape: bf16[256,128], index: 6, kind: input, shape index: {}]
  %s7 = inlined_call_operand.hbm [shape: bf16[128,128], index: 7, kind: input, shape index: {}]
  %s8 = inlined_call_operand.hbm [shape: bf16[128,128], index: 8, kind: input, shape index: {}]
  %s9 = inlined_call_operand.vmem [shape: f32[2,128], index: 9, kind: input, shape index: {}]
  %s10 = inlined_call_operand.hbm [shape: bf16[4,24,128], index: 10, kind: output, shape index: {}]
  %s11 = sld [smem:[#allocation0]]
  $region82: #{tpu_custom_call.1} parent=0
    _
  %s13 = ssub.s32 1, %s11
  %s14 = scalar_select 0, %s13, %s11
  $region1: #{tpu_custom_call.1} parent=0
    #allocation3 [shape = 'u8[24576]{0}', space=vmem, size = 0x6000, scoped, tag = 'input window, operand 0, single buffered']
    #allocation4 [shape = 's32[1]{0}', space=sflag, size = 0x4, scoped, tag = 'scoped memory for tpu_custom_call.1']
    #allocation5 [shape = 's32[1]{0}', space=sflag, size = 0x4, scoped, tag = 'scoped memory for tpu_custom_call.1']
    #allocation6 [shape = 'u8[327680]{0}', space=vmem, size = 0x50000, scoped, tag = 'input window, operand 1, single buffered']
    #allocation7 [shape = 's32[1]{0}', space=sflag, size = 0x4, scoped, tag = 'scoped memory for tpu_custom_call.1']
    #allocation8 [shape = 'u8[655360]{0}', space=vmem, size = 0xa0000, scoped, tag = 'input window, operand 2, single buffered']
    #allocation9 [shape = 'u8[655360]{0}', space=vmem, size = 0xa0000, scoped, tag = 'input window, operand 3, single buffered']
    #allocation10 [shape = 's32[1]{0}', space=sflag, size = 0x4, scoped, tag = 'scoped memory for tpu_custom_call.1']
    #allocation11 [shape = 'u8[655360]{0}', space=vmem, size = 0xa0000, scoped, tag = 'input window, operand 4, single buffered']
    #allocation12 [shape = 'u8[65536]{0}', space=vmem, size = 0x10000, scoped, tag = 'input window, operand 6, single buffered']
    #allocation13 [shape = 's32[1]{0}', space=sflag, size = 0x4, scoped, tag = 'scoped memory for tpu_custom_call.1']
    #allocation14 [shape = 'u8[32768]{0}', space=vmem, size = 0x8000, scoped, tag = 'input window, operand 7, single buffered']
    #allocation15 [shape = 'u8[32768]{0}', space=vmem, size = 0x8000, scoped, tag = 'input window, operand 8, single buffered']
    #allocation16 [shape = 's32[1]{0}', space=sflag, size = 0x4, scoped, tag = 'scoped memory for tpu_custom_call.1']
    #allocation17 [shape = 'u8[24576]{0}', space=vmem, size = 0x6000, scoped, tag = 'output window, operand 0, single buffered']
    %15 = vsyncpa [#allocation4], 0
    %16 = vsyncpa [#allocation7], 0
    %17 = vsyncpa [#allocation10], 0
    %18 = vsyncpa [#allocation13], 0
    %19 = vsyncpa [#allocation16], 0
    %20 = vsyncpa [#allocation5], 0
    // Predicated region
    $region2: #{tpu_custom_call.1} parent=1 // pred_check
      _
    $region3: #{tpu_custom_call.1} parent=1 // pred_check_branch
      %22 = sbr.rel (0) target = $region5
    $region4: #{tpu_custom_call.1} parent=1 // pred_region
      %s24 = ssub.s32 768, 768
      %25 = vsyncadd [#allocation4], %s24
      %s26 = sshll.u32 [#allocation3], 4
      %s27 = int_to_ptr.vmem [resolvable:$true] %s26
      %32 = dma.hbm_to_vmem [thread:$0]  %s0, 768, %s27, [#allocation4], 64, 64, 4
    $region5: #{tpu_custom_call.1} parent=1 // pred_fallthru
      _
    // Predicated region
    $region6: #{tpu_custom_call.1} parent=1 // pred_check
      _
    $region7: #{tpu_custom_call.1} parent=1 // pred_check_branch
      %34 = sbr.rel (0) target = $region9
    $region8: #{tpu_custom_call.1} parent=1 // pred_region
      %s36 = ssub.s32 10240, 10240
      %37 = vsyncadd [#allocation7], %s36
      %s38 = sshll.u32 [#allocation6], 4
      %s39 = int_to_ptr.vmem [resolvable:$true] %s38
      %44 = dma.hbm_to_vmem [thread:$0]  %s1, 10240, %s39, [#allocation7], 128, 128, 8
    $region9: #{tpu_custom_call.1} parent=1 // pred_fallthru
      _
    // Predicated region
    $region10: #{tpu_custom_call.1} parent=1 // pred_check
      _
    $region11: #{tpu_custom_call.1} parent=1 // pred_check_branch
      %46 = sbr.rel (0) target = $region13
    $region12: #{tpu_custom_call.1} parent=1 // pred_region
      %s48 = ssub.s32 20480, 20480
      %49 = vsyncadd [#allocation7], %s48
      %s50 = sshll.u32 [#allocation8], 4
      %s51 = int_to_ptr.vmem [resolvable:$true] %s50
      %56 = dma.hbm_to_vmem [thread:$0]  %s2, 20480, %s51, [#allocation7], 128, 128, 8
    $region13: #{tpu_custom_call.1} parent=1 // pred_fallthru
      _
    // Predicated region
    $region14: #{tpu_custom_call.1} parent=1 // pred_check
      _
    $region15: #{tpu_custom_call.1} parent=1 // pred_check_branch
      %58 = sbr.rel (0) target = $region17
    $region16: #{tpu_custom_call.1} parent=1 // pred_region
      %s60 = ssub.s32 20480, 20480
      %61 = vsyncadd [#allocation10], %s60
      %s62 = sshll.u32 [#allocation9], 4
      %s63 = int_to_ptr.vmem [resolvable:$true] %s62
      %68 = dma.hbm_to_vmem [thread:$0]  %s3, 20480, %s63, [#allocation10], 128, 128, 8
    $region17: #{tpu_custom_call.1} parent=1 // pred_fallthru
      _
    // Predicated region
    $region18: #{tpu_custom_call.1} parent=1 // pred_check
      _
    $region19: #{tpu_custom_call.1} parent=1 // pred_check_branch
      %70 = sbr.rel (0) target = $region21
    $region20: #{tpu_custom_call.1} parent=1 // pred_region
      %s72 = ssub.s32 20480, 20480
      %73 = vsyncadd [#allocation10], %s72
      %s74 = sshll.u32 [#allocation11], 4
      %s75 = int_to_ptr.vmem [resolvable:$true] %s74
      %80 = dma.hbm_to_vmem [thread:$0]  %s4, 20480, %s75, [#allocation10], 128, 128, 8
    $region21: #{tpu_custom_call.1} parent=1 // pred_fallthru
      _
    // Predicated region
    $region22: #{tpu_custom_call.1} parent=1 // pred_check
      _
    $region23: #{tpu_custom_call.1} parent=1 // pred_check_branch
      %82 = sbr.rel (0) target = $region25
    $region24: #{tpu_custom_call.1} parent=1 // pred_region
      _
    $region25: #{tpu_custom_call.1} parent=1 // pred_fallthru
      _
    // Predicated region
    $region26: #{tpu_custom_call.1} parent=1 // pred_check
      _
    $region27: #{tpu_custom_call.1} parent=1 // pred_check_branch
      %84 = sbr.rel (0) target = $region29
    $region28: #{tpu_custom_call.1} parent=1 // pred_region
      %s86 = ssub.s32 2048, 2048
      %87 = vsyncadd [#allocation13], %s86
      %s88 = sshll.u32 [#allocation12], 4
      %s89 = int_to_ptr.vmem [resolvable:$true] %s88
      %94 = dma.hbm_to_vmem [thread:$0]  %s6, 2048, %s89, [#allocation13], 64, 64, 4
    $region29: #{tpu_custom_call.1} parent=1 // pred_fallthru
      _
    // Predicated region
    $region30: #{tpu_custom_call.1} parent=1 // pred_check
      _
    $region31: #{tpu_custom_call.1} parent=1 // pred_check_branch
      %96 = sbr.rel (0) target = $region33
    $region32: #{tpu_custom_call.1} parent=1 // pred_region
      %s98 = ssub.s32 1024, 1024
      %99 = vsyncadd [#allocation13], %s98
      %s100 = sshll.u32 [#allocation14], 4
      %s101 = int_to_ptr.vmem [resolvable:$true] %s100
      %106 = dma.hbm_to_vmem [thread:$0]  %s7, 1024, %s101, [#allocation13], 64, 64, 4
    $region33: #{tpu_custom_call.1} parent=1 // pred_fallthru
      _
    // Predicated region
    $region34: #{tpu_custom_call.1} parent=1 // pred_check
      _
    $region35: #{tpu_custom_call.1} parent=1 // pred_check_branch
      %108 = sbr.rel (0) target = $region37
    $region36: #{tpu_custom_call.1} parent=1 // pred_region
      %s110 = ssub.s32 1024, 1024
      %111 = vsyncadd [#allocation16], %s110
      %s112 = sshll.u32 [#allocation15], 4
      %s113 = int_to_ptr.vmem [resolvable:$true] %s112
      %118 = dma.hbm_to_vmem [thread:$0]  %s8, 1024, %s113, [#allocation16], 64, 64, 4
    $region37: #{tpu_custom_call.1} parent=1 // pred_fallthru
      _
    // Predicated region
    $region38: #{tpu_custom_call.1} parent=1 // pred_check
      _
    $region39: #{tpu_custom_call.1} parent=1 // pred_check_branch
      %120 = sbr.rel (0) target = $region41
    $region40: #{tpu_custom_call.1} parent=1 // pred_region
      _
    $region41: #{tpu_custom_call.1} parent=1 // pred_fallthru
      _
    // Predicated region
    $region42: #{tpu_custom_call.1} parent=1 // pred_check
      _
    $region43: #{tpu_custom_call.1} parent=1 // pred_check_branch
      %122 = sbr.rel (0) target = $region45
    $region44: #{tpu_custom_call.1} parent=1 // pred_region
      %123 = dma.done [#allocation4], 768
    $region45: #{tpu_custom_call.1} parent=1 // pred_fallthru
      _
    // Predicated region
    $region46: #{tpu_custom_call.1} parent=1 // pred_check
      _
    $region47: #{tpu_custom_call.1} parent=1 // pred_check_branch
      %125 = sbr.rel (0) target = $region49
    $region48: #{tpu_custom_call.1} parent=1 // pred_region
      %126 = dma.done [#allocation7], 10240
    $region49: #{tpu_custom_call.1} parent=1 // pred_fallthru
      _
    // Predicated region
    $region50: #{tpu_custom_call.1} parent=1 // pred_check
      _
    $region51: #{tpu_custom_call.1} parent=1 // pred_check_branch
      %128 = sbr.rel (0) target = $region53
    $region52: #{tpu_custom_call.1} parent=1 // pred_region
      %129 = dma.done [#allocation7], 20480
    $region53: #{tpu_custom_call.1} parent=1 // pred_fallthru
      _
    // Predicated region
    $region54: #{tpu_custom_call.1} parent=1 // pred_check
      _
    $region55: #{tpu_custom_call.1} parent=1 // pred_check_branch
      %131 = sbr.rel (0) target = $region57
    $region56: #{tpu_custom_call.1} parent=1 // pred_region
      %132 = dma.done [#allocation10], 20480
    $region57: #{tpu_custom_call.1} parent=1 // pred_fallthru
      _
    // Predicated region
    $region58: #{tpu_custom_call.1} parent=1 // pred_check
      _
    $region59: #{tpu_custom_call.1} parent=1 // pred_check_branch
      %134 = sbr.rel (0) target = $region61
    $region60: #{tpu_custom_call.1} parent=1 // pred_region
      %135 = dma.done [#allocation10], 20480
    $region61: #{tpu_custom_call.1} parent=1 // pred_fallthru
      _
    // Predicated region
    $region62: #{tpu_custom_call.1} parent=1 // pred_check
      _
    $region63: #{tpu_custom_call.1} parent=1 // pred_check_branch
      %137 = sbr.rel (0) target = $region65
    $region64: #{tpu_custom_call.1} parent=1 // pred_region
      %138 = dma.done [#allocation13], 2048
    $region65: #{tpu_custom_call.1} parent=1 // pred_fallthru
      _
    // Predicated region
    $region66: #{tpu_custom_call.1} parent=1 // pred_check
      _
    $region67: #{tpu_custom_call.1} parent=1 // pred_check_branch
      %140 = sbr.rel (0) target = $region69
    $region68: #{tpu_custom_call.1} parent=1 // pred_region
      %141 = dma.done [#allocation13], 1024
    $region69: #{tpu_custom_call.1} parent=1 // pred_fallthru
      _
    // Predicated region
    $region70: #{tpu_custom_call.1} parent=1 // pred_check
      _
    $region71: #{tpu_custom_call.1} parent=1 // pred_check_branch
      %143 = sbr.rel (0) target = $region73
    $region72: #{tpu_custom_call.1} parent=1 // pred_region
      %144 = dma.done [#allocation16], 1024
    $region73: #{tpu_custom_call.1} parent=1 // pred_fallthru
      _
    %146 = vst [vmem:[#allocation2] sm:$0xff] 0
    %147 = vst [vmem:[#allocation2 + $0x68] sm:$0xff] 0
    %v148 = vld [vmem:[#allocation3] sm:$0xf]
    %v149 = vld [vmem:[#allocation3 + $0x4] sm:$0xf]
    %v150 = vld [vmem:[#allocation3 + $0x8] sm:$0xf]
    %v151 = vld [vmem:[#allocation3 + $0xc] sm:$0xf]
    %v152 = vld [vmem:[#allocation3 + $0x10] sm:$0xf]
    %v153 = vld [vmem:[#allocation3 + $0x14] sm:$0xf]
    %v154 = vld [vmem:[#allocation3 + $0x18] sm:$0xf]
    %v155 = vld [vmem:[#allocation3 + $0x1c] sm:$0xf]
    %v156 = vld [vmem:[#allocation3 + $0x20] sm:$0xf]
    %v157 = vld [vmem:[#allocation3 + $0x24] sm:$0xf]
    %v158 = vld [vmem:[#allocation3 + $0x28] sm:$0xf]
    %v159 = vld [vmem:[#allocation3 + $0x2c] sm:$0xf]
    %160 = vst [vmem:[#allocation2 + $0x8] sm:$0xf] %v148
    %161 = vst [vmem:[#allocation2 + $0x10] sm:$0xf] %v149
    %162 = vst [vmem:[#allocation2 + $0x18] sm:$0xf] %v150
    %163 = vst [vmem:[#allocation2 + $0x20] sm:$0xf] %v151
    %164 = vst [vmem:[#allocation2 + $0x28] sm:$0xf] %v152
    %165 = vst [vmem:[#allocation2 + $0x30] sm:$0xf] %v153
    %166 = vst [vmem:[#allocation2 + $0x38] sm:$0xf] %v154
    %167 = vst [vmem:[#allocation2 + $0x40] sm:$0xf] %v155
    %168 = vst [vmem:[#allocation2 + $0x48] sm:$0xf] %v156
    %169 = vst [vmem:[#allocation2 + $0x50] sm:$0xf] %v157
    %170 = vst [vmem:[#allocation2 + $0x58] sm:$0xf] %v158
    %171 = vst [vmem:[#allocation2 + $0x60] sm:$0xf] %v159
    %172 = vst [vmem:[#allocation2 + $0xc] sm:$0xf] 0
    %173 = vst [vmem:[#allocation2 + $0x14] sm:$0xf] 0
    %174 = vst [vmem:[#allocation2 + $0x1c] sm:$0xf] 0
    %175 = vst [vmem:[#allocation2 + $0x24] sm:$0xf] 0
    %176 = vst [vmem:[#allocation2 + $0x2c] sm:$0xf] 0
    %177 = vst [vmem:[#allocation2 + $0x34] sm:$0xf] 0
    %178 = vst [vmem:[#allocation2 + $0x3c] sm:$0xf] 0
    %179 = vst [vmem:[#allocation2 + $0x44] sm:$0xf] 0
    %180 = vst [vmem:[#allocation2 + $0x4c] sm:$0xf] 0
    %181 = vst [vmem:[#allocation2 + $0x54] sm:$0xf] 0
    %182 = vst [vmem:[#allocation2 + $0x5c] sm:$0xf] 0
    %183 = vst [vmem:[#allocation2 + $0x64] sm:$0xf] 0
    %v184 = vld [vmem:[#allocation14] sm:$0xf]
    %v185 = vld [vmem:[#allocation14 + $0x4] sm:$0xf]
    %v186 = vld [vmem:[#allocation14 + $0x8] sm:$0xf]
    %v187 = vld [vmem:[#allocation14 + $0xc] sm:$0xf]
    %v188 = vld [vmem:[#allocation14 + $0x10] sm:$0xf]
    %v189 = vld [vmem:[#allocation14 + $0x14] sm:$0xf]
    %v190 = vld [vmem:[#allocation14 + $0x18] sm:$0xf]
    %v191 = vld [vmem:[#allocation14 + $0x1c] sm:$0xf]
    %v192 = vld [vmem:[#allocation14 + $0x20] sm:$0xf]
    %v193 = vld [vmem:[#allocation14 + $0x24] sm:$0xf]
    %v194 = vld [vmem:[#allocation14 + $0x28] sm:$0xf]
    %v195 = vld [vmem:[#allocation14 + $0x2c] sm:$0xf]
    %v196 = vld [vmem:[#allocation14 + $0x30] sm:$0xf]
    %v197 = vld [vmem:[#allocation14 + $0x34] sm:$0xf]
    %v198 = vld [vmem:[#allocation14 + $0x38] sm:$0xf]
    %v199 = vld [vmem:[#allocation14 + $0x3c] sm:$0xf]
    %v212 = vunpack.c.l.b16 %v148
    %v213 = vunpack.c.l.b16 %v149
    %v214 = vunpack.c.l.b16 %v150
    %v215 = vunpack.c.l.b16 %v151
    %v216 = vunpack.c.l.b16 %v152
    %v217 = vunpack.c.l.b16 %v153
    %v218 = vunpack.c.l.b16 %v154
    %v219 = vunpack.c.l.b16 %v155
    %v220 = vunpack.c.l.b16 %v156
    %v221 = vunpack.c.l.b16 %v157
    %v222 = vunpack.c.l.b16 %v158
    %v223 = vunpack.c.l.b16 %v159
    %v224 = vpack.c.b16 %v213, %v212
    %v225 = vpack.c.b16 %v215, %v214
    %v226 = vpack.c.b16 %v217, %v216
    %v227 = vpack.c.b16 %v219, %v218
    %v228 = vpack.c.b16 %v221, %v220
    %v229 = vpack.c.b16 %v223, %v222
    %v252 = vunpack.c.l.b16 %v184
    %v253 = vunpack.c.l.b16 %v185
    %v254 = vunpack.c.l.b16 %v186
    %v255 = vunpack.c.l.b16 %v187
    %v256 = vunpack.c.l.b16 %v188
    %v257 = vunpack.c.l.b16 %v189
    %v258 = vunpack.c.l.b16 %v190
    %v259 = vunpack.c.l.b16 %v191
    %v260 = vunpack.c.l.b16 %v192
    %v261 = vunpack.c.l.b16 %v193
    %v262 = vunpack.c.l.b16 %v194
    %v263 = vunpack.c.l.b16 %v195
    %v264 = vunpack.c.l.b16 %v196
    %v265 = vunpack.c.l.b16 %v197
    %v266 = vunpack.c.l.b16 %v198
    %v267 = vunpack.c.l.b16 %v199
    %v268 = vpack.c.b16 %v253, %v252
    %v269 = vpack.c.b16 %v255, %v254
    %v270 = vpack.c.b16 %v257, %v256
    %v271 = vpack.c.b16 %v259, %v258
    %v272 = vpack.c.b16 %v261, %v260
    %v273 = vpack.c.b16 %v263, %v262
    %v274 = vpack.c.b16 %v265, %v264
    %v275 = vpack.c.b16 %v267, %v266
    %284 = vmatprep.subr.bf16.mxu0 0
    %285 = vmatpush1.bf16.msra.mxu0 %v275
    %286 = vmatprep.subr.bf16.mxu0 0
    %287 = vmatpush1.bf16.msra.mxu0 %v274
    %288 = vmatprep.subr.bf16.mxu0 0
    %289 = vmatpush1.bf16.msra.mxu0 %v273
    %290 = vmatprep.subr.bf16.mxu0 0
    %291 = vmatpush1.bf16.msra.mxu0 %v272
    %292 = vmatprep.subr.bf16.mxu0 0
    %293 = vmatpush1.bf16.msra.mxu0 %v271
    %294 = vmatprep.subr.bf16.mxu0 0
    %295 = vmatpush1.bf16.msra.mxu0 %v270
    %296 = vmatprep.subr.bf16.mxu0 0
    %297 = vmatpush1.bf16.msra.mxu0 %v269
    %298 = vmatprep.subr.bf16.mxu0 0
    %299 = vmatpush1.bf16.msra.mxu0 %v268
    %300 = vmatprep.subr.bf16.mxu0 0
    %301 = vmatpush2.bf16.msra.mxu0 0
    %302 = vmatprep.subr.bf16.mxu0 0
    %303 = vmatpush2.bf16.msra.mxu0 0
    %304 = vmatprep.subr.bf16.mxu0 0
    %305 = vmatpush2.bf16.msra.mxu0 0
    %306 = vmatprep.subr.bf16.mxu0 0
    %307 = vmatpush2.bf16.msra.mxu0 0
    %308 = vmatprep.subr.bf16.mxu0 0
    %309 = vmatpush2.bf16.msra.mxu0 0
    %310 = vmatprep.subr.bf16.mxu0 0
    %311 = vmatpush2.bf16.msra.mxu0 0
    %312 = vmatprep.subr.bf16.mxu0 0
    %313 = vmatpush2.bf16.msra.mxu0 0
    %314 = vmatprep.subr.bf16.mxu0 0
    %315 = vmatpush2.bf16.msra.mxu0 0
    %316 = vmatprep.mubr.bf16.mxu0 0
    %317 = vmatmul.mubr.bf16.gmra.mxu0 %v224
    %v318 = vpop.f32.mrf.mxu0
    %v319 = vadd.f32 0.0, %v318
    %v320 = vpop.f32.mrf.mxu0
    %v321 = vpop.f32.mrf.mxu0
    %v322 = vadd.f32 0.0, %v321
    %v323 = vpop.f32.mrf.mxu0
    %324 = vmatprep.mubr.bf16.mxu0 0
    %325 = vmatmul.mubr.bf16.gmra.mxu0 %v225
    %v326 = vpop.f32.mrf.mxu0
    %v327 = vadd.f32 0.0, %v326
    %v328 = vpop.f32.mrf.mxu0
    %v329 = vpop.f32.mrf.mxu0
    %v330 = vadd.f32 0.0, %v329
    %v331 = vpop.f32.mrf.mxu0
    %332 = vmatprep.mubr.bf16.mxu0 0
    %333 = vmatmul.mubr.bf16.gmra.mxu0 %v226
    %v334 = vpop.f32.mrf.mxu0
    %v335 = vadd.f32 0.0, %v334
    %v336 = vpop.f32.mrf.mxu0
    %v337 = vpop.f32.mrf.mxu0
    %v338 = vadd.f32 0.0, %v337
    %v339 = vpop.f32.mrf.mxu0
    %340 = vmatprep.mubr.bf16.mxu0 0
    %341 = vmatmul.mubr.bf16.gmra.mxu0 %v227
    %v342 = vpop.f32.mrf.mxu0
    %v343 = vadd.f32 0.0, %v342
    %v344 = vpop.f32.mrf.mxu0
    %v345 = vpop.f32.mrf.mxu0
    %v346 = vadd.f32 0.0, %v345
    %v347 = vpop.f32.mrf.mxu0
    %348 = vmatprep.mubr.bf16.mxu0 0
    %349 = vmatmul.mubr.bf16.gmra.mxu0 %v228
    %v350 = vpop.f32.mrf.mxu0
    %v351 = vadd.f32 0.0, %v350
    %v352 = vpop.f32.mrf.mxu0
    %v353 = vpop.f32.mrf.mxu0
    %v354 = vadd.f32 0.0, %v353
    %v355 = vpop.f32.mrf.mxu0
    %356 = vmatprep.mubr.bf16.mxu0 0
    %357 = vmatmul.mubr.bf16.gmra.mxu0 %v229
    %v358 = vpop.f32.mrf.mxu0
    %v359 = vadd.f32 0.0, %v358
    %v360 = vpop.f32.mrf.mxu0
    %v361 = vpop.f32.mrf.mxu0
    %v362 = vadd.f32 0.0, %v361
    %v363 = vpop.f32.mrf.mxu0
    %364 = vdwg.mxu0
    %v365 = vld [vmem:[#allocation2] sm:$0x8]
    %v366 = vld [vmem:[#allocation2 + $0x8] sm:$0xf]
    %v367 = vld [vmem:[#allocation2 + $0x10] sm:$0xf]
    %v368 = vld [vmem:[#allocation2 + $0x18] sm:$0xf]
    %v369 = vld [vmem:[#allocation2 + $0x20] sm:$0xf]
    %v370 = vld [vmem:[#allocation2 + $0x28] sm:$0xf]
    %v371 = vld [vmem:[#allocation2 + $0x30] sm:$0xf]
    %v372 = vld [vmem:[#allocation2 + $0x38] sm:$0xf]
    %v373 = vld [vmem:[#allocation2 + $0x40] sm:$0xf]
    %v374 = vld [vmem:[#allocation2 + $0x48] sm:$0xf]
    %v375 = vld [vmem:[#allocation2 + $0x50] sm:$0xf]
    %v376 = vld [vmem:[#allocation2 + $0x58] sm:$0xf]
    %v377 = vld [vmem:[#allocation2 + $0x60] sm:$0x7]
    %v378 = vld [vmem:[#allocation6] sm:$0xff]
    %v379 = vld [vmem:[#allocation6 + $0x8] sm:$0xff]
    %v380 = vld [vmem:[#allocation6 + $0x10] sm:$0xff]
    %v381 = vld [vmem:[#allocation6 + $0x18] sm:$0xff]
    %v382 = vld [vmem:[#allocation6 + $0x20] sm:$0xff]
    %v383 = vld [vmem:[#allocation6 + $0x28] sm:$0xff]
    %v384 = vld [vmem:[#allocation6 + $0x30] sm:$0xff]
    %v385 = vld [vmem:[#allocation6 + $0x38] sm:$0xff]
    %v386 = vld [vmem:[#allocation6 + $0x40] sm:$0xff]
    %v387 = vld [vmem:[#allocation6 + $0x48] sm:$0xff]
    %v388 = vld [vmem:[#allocation6 + $0x50] sm:$0xff]
    %v389 = vld [vmem:[#allocation6 + $0x58] sm:$0xff]
    %v390 = vld [vmem:[#allocation6 + $0x60] sm:$0xff]
    %v391 = vld [vmem:[#allocation6 + $0x68] sm:$0xff]
    %v392 = vld [vmem:[#allocation6 + $0x70] sm:$0xff]
    %v393 = vld [vmem:[#allocation6 + $0x78] sm:$0xff]
    %v394 = vld [vmem:[#allocation2 + $0x60] sm:$0xf]
    %s395 = scalar_lea.vmem [#allocation6], 128
    %v396 = vld [vmem:[%s395] sm:$0xff]
    %v397 = vld [vmem:[%s395 + $0x8] sm:$0xff]
    %v398 = vld [vmem:[%s395 + $0x10] sm:$0xff]
    %v399 = vld [vmem:[%s395 + $0x18] sm:$0xff]
    %v400 = vld [vmem:[%s395 + $0x20] sm:$0xff]
    %v401 = vld [vmem:[%s395 + $0x28] sm:$0xff]
    %v402 = vld [vmem:[%s395 + $0x30] sm:$0xff]
    %v403 = vld [vmem:[%s395 + $0x38] sm:$0xff]
    %v404 = vld [vmem:[%s395 + $0x40] sm:$0xff]
    %v405 = vld [vmem:[%s395 + $0x48] sm:$0xff]
    %v406 = vld [vmem:[%s395 + $0x50] sm:$0xff]
    %v407 = vld [vmem:[%s395 + $0x58] sm:$0xff]
    %v408 = vld [vmem:[%s395 + $0x60] sm:$0xff]
    %v409 = vld [vmem:[%s395 + $0x68] sm:$0xff]
    %v410 = vld [vmem:[%s395 + $0x70] sm:$0xff]
    %v411 = vld [vmem:[%s395 + $0x78] sm:$0xff]
    %v425 = vunpack.c.l.b16 %v365
    %v426 = vunpack.c.l.b16 %v366
    %v427 = vunpack.c.l.b16 %v367
    %v428 = vunpack.c.l.b16 %v368
    %v429 = vunpack.c.l.b16 %v369
    %v430 = vunpack.c.l.b16 %v370
    %v431 = vunpack.c.l.b16 %v371
    %v432 = vunpack.c.l.b16 %v372
    %v433 = vunpack.c.l.b16 %v373
    %v434 = vunpack.c.l.b16 %v374
    %v435 = vunpack.c.l.b16 %v375
    %v436 = vunpack.c.l.b16 %v376
    %v437 = vunpack.c.l.b16 %v394
    %v438 = vpack.c.b16 %v426, %v425
    %v439 = vpack.c.b16 %v428, %v427
    %v440 = vpack.c.b16 %v430, %v429
    %v441 = vpack.c.b16 %v432, %v431
    %v442 = vpack.c.b16 %v434, %v433
    %v443 = vpack.c.b16 %v436, %v435
    %v444 = vpack.c.b16 %v437, %v437
    %vm445 = vsmask.f32 4352
    %v447 = vshrl.u32 %v438, 16
    %v449 = vrot.slane %v447, 3
    %v450 = vshll.u32 %v438, 16
    %v452 = vrot.slane %v450, 4
    %v453 = vor.u32 %v449, %v452
    %v455 = vshrl.u32 %v439, 16
    %v457 = vrot.slane %v455, 3
    %v458 = vshll.u32 %v439, 16
    %v460 = vrot.slane %v458, 4
    %v461 = vor.u32 %v457, %v460
    %v462 = vsel %vm445, %v453, %v461
    %v464 = vshrl.u32 %v440, 16
    %v466 = vrot.slane %v464, 3
    %v467 = vshll.u32 %v440, 16
    %v469 = vrot.slane %v467, 4
    %v470 = vor.u32 %v466, %v469
    %v471 = vsel %vm445, %v461, %v470
    %v473 = vshrl.u32 %v441, 16
    %v475 = vrot.slane %v473, 3
    %v476 = vshll.u32 %v441, 16
    %v478 = vrot.slane %v476, 4
    %v479 = vor.u32 %v475, %v478
    %v480 = vsel %vm445, %v470, %v479
    %v482 = vshrl.u32 %v442, 16
    %v484 = vrot.slane %v482, 3
    %v485 = vshll.u32 %v442, 16
    %v487 = vrot.slane %v485, 4
    %v488 = vor.u32 %v484, %v487
    %v489 = vsel %vm445, %v479, %v488
    %v491 = vshrl.u32 %v443, 16
    %v493 = vrot.slane %v491, 3
    %v494 = vshll.u32 %v443, 16
    %v496 = vrot.slane %v494, 4
    %v497 = vor.u32 %v493, %v496
    %v498 = vsel %vm445, %v488, %v497
    %v500 = vshrl.u32 %v444, 16
    %v502 = vrot.slane %v500, 3
    %v503 = vshll.u32 %v444, 16
    %v505 = vrot.slane %v503, 4
    %v506 = vor.u32 %v502, %v505
    %v507 = vsel %vm445, %v497, %v506
    %v530 = vunpack.c.l.b16 %v396
    %v531 = vunpack.c.h.b16 %v396
    %v532 = vunpack.c.l.b16 %v397
    %v533 = vunpack.c.h.b16 %v397
    %v534 = vunpack.c.l.b16 %v398
    %v535 = vunpack.c.h.b16 %v398
    %v536 = vunpack.c.l.b16 %v399
    %v537 = vunpack.c.h.b16 %v399
    %v538 = vunpack.c.l.b16 %v400
    %v539 = vunpack.c.h.b16 %v400
    %v540 = vunpack.c.l.b16 %v401
    %v541 = vunpack.c.h.b16 %v401
    %v542 = vunpack.c.l.b16 %v402
    %v543 = vunpack.c.h.b16 %v402
    %v544 = vunpack.c.l.b16 %v403
    %v545 = vunpack.c.h.b16 %v403
    %v546 = vunpack.c.l.b16 %v404
    %v547 = vunpack.c.h.b16 %v404
    %v548 = vunpack.c.l.b16 %v405
    %v549 = vunpack.c.h.b16 %v405
    %v550 = vunpack.c.l.b16 %v406
    %v551 = vunpack.c.h.b16 %v406
    %v552 = vunpack.c.l.b16 %v407
    %v553 = vunpack.c.h.b16 %v407
    %v554 = vunpack.c.l.b16 %v408
    %v555 = vunpack.c.h.b16 %v408
    %v556 = vunpack.c.l.b16 %v409
    %v557 = vunpack.c.h.b16 %v409
    %v558 = vunpack.c.l.b16 %v410
    %v559 = vunpack.c.h.b16 %v410
    %v560 = vunpack.c.l.b16 %v411
    %v561 = vunpack.c.h.b16 %v411
    %v562 = vpack.c.b16 %v532, %v530
    %v563 = vpack.c.b16 %v533, %v531
    %v564 = vpack.c.b16 %v536, %v534
    %v565 = vpack.c.b16 %v537, %v535
    %v566 = vpack.c.b16 %v540, %v538
    %v567 = vpack.c.b16 %v541, %v539
    %v568 = vpack.c.b16 %v544, %v542
    %v569 = vpack.c.b16 %v545, %v543
    %v570 = vpack.c.b16 %v548, %v546
    %v571 = vpack.c.b16 %v549, %v547
    %v572 = vpack.c.b16 %v552, %v550
    %v573 = vpack.c.b16 %v553, %v551
    %v574 = vpack.c.b16 %v556, %v554
    %v575 = vpack.c.b16 %v557, %v555
    %v576 = vpack.c.b16 %v560, %v558
    %v577 = vpack.c.b16 %v561, %v559
    %594 = vmatprep.subr.bf16.mxu0 %v577
    %595 = vmatpush1.bf16.msra.mxu0 %v576
    %596 = vmatprep.subr.bf16.mxu0 %v575
    %597 = vmatpush1.bf16.msra.mxu0 %v574
    %598 = vmatprep.subr.bf16.mxu0 %v573
    %599 = vmatpush1.bf16.msra.mxu0 %v572
    %600 = vmatprep.subr.bf16.mxu0 %v571
    %601 = vmatpush1.bf16.msra.mxu0 %v570
    %602 = vmatprep.subr.bf16.mxu0 %v569
    %603 = vmatpush1.bf16.msra.mxu0 %v568
    %604 = vmatprep.subr.bf16.mxu0 %v567
    %605 = vmatpush1.bf16.msra.mxu0 %v566
    %606 = vmatprep.subr.bf16.mxu0 %v565
    %607 = vmatpush1.bf16.msra.mxu0 %v564
    %608 = vmatprep.subr.bf16.mxu0 %v563
    %609 = vmatpush1.bf16.msra.mxu0 %v562
    %610 = vmatprep.subr.bf16.mxu0 0
    %611 = vmatpush2.bf16.msra.mxu0 0
    %612 = vmatprep.subr.bf16.mxu0 0
    %613 = vmatpush2.bf16.msra.mxu0 0
    %614 = vmatprep.subr.bf16.mxu0 0
    %615 = vmatpush2.bf16.msra.mxu0 0
    %616 = vmatprep.subr.bf16.mxu0 0
    %617 = vmatpush2.bf16.msra.mxu0 0
    %618 = vmatprep.subr.bf16.mxu0 0
    %619 = vmatpush2.bf16.msra.mxu0 0
    %620 = vmatprep.subr.bf16.mxu0 0
    %621 = vmatpush2.bf16.msra.mxu0 0
    %622 = vmatprep.subr.bf16.mxu0 0
    %623 = vmatpush2.bf16.msra.mxu0 0
    %624 = vmatprep.subr.bf16.mxu0 0
    %625 = vmatpush2.bf16.msra.mxu0 0
    %626 = vmatprep.mubr.bf16.mxu0 0
    %627 = vmatmul.mubr.bf16.gmra.mxu0 %v462
    %v628 = vpop.f32.mrf.mxu0
    %v629 = vadd.f32 0.0, %v628
    %v630 = vpop.f32.mrf.mxu0
    %v631 = vadd.f32 0.0, %v630
    %v632 = vpop.f32.mrf.mxu0
    %v633 = vadd.f32 0.0, %v632
    %v634 = vpop.f32.mrf.mxu0
    %v635 = vadd.f32 0.0, %v634
    %636 = vmatprep.mubr.bf16.mxu0 0
    %637 = vmatmul.mubr.bf16.gmra.mxu0 %v471
    %v638 = vpop.f32.mrf.mxu0
    %v639 = vadd.f32 0.0, %v638
    %v640 = vpop.f32.mrf.mxu0
    %v641 = vadd.f32 0.0, %v640
    %v642 = vpop.f32.mrf.mxu0
    %v643 = vadd.f32 0.0, %v642
    %v644 = vpop.f32.mrf.mxu0
    %v645 = vadd.f32 0.0, %v644
    %646 = vmatprep.mubr.bf16.mxu0 0
    %647 = vmatmul.mubr.bf16.gmra.mxu0 %v480
    %v648 = vpop.f32.mrf.mxu0
    %v649 = vadd.f32 0.0, %v648
    %v650 = vpop.f32.mrf.mxu0
    %v651 = vadd.f32 0.0, %v650
    %v652 = vpop.f32.mrf.mxu0
    %v653 = vadd.f32 0.0, %v652
    %v654 = vpop.f32.mrf.mxu0
    %v655 = vadd.f32 0.0, %v654
    %656 = vmatprep.mubr.bf16.mxu0 0
    %657 = vmatmul.mubr.bf16.gmra.mxu0 %v489
    %v658 = vpop.f32.mrf.mxu0
    %v659 = vadd.f32 0.0, %v658
    %v660 = vpop.f32.mrf.mxu0
    %v661 = vadd.f32 0.0, %v660
    %v662 = vpop.f32.mrf.mxu0
    %v663 = vadd.f32 0.0, %v662
    %v664 = vpop.f32.mrf.mxu0
    %v665 = vadd.f32 0.0, %v664
    %666 = vmatprep.mubr.bf16.mxu0 0
    %667 = vmatmul.mubr.bf16.gmra.mxu0 %v498
    %v668 = vpop.f32.mrf.mxu0
    %v669 = vadd.f32 0.0, %v668
    %v670 = vpop.f32.mrf.mxu0
    %v671 = vadd.f32 0.0, %v670
    %v672 = vpop.f32.mrf.mxu0
    %v673 = vadd.f32 0.0, %v672
    %v674 = vpop.f32.mrf.mxu0
    %v675 = vadd.f32 0.0, %v674
    %676 = vmatprep.mubr.bf16.mxu0 0
    %677 = vmatmul.mubr.bf16.gmra.mxu0 %v507
    %v678 = vpop.f32.mrf.mxu0
    %v679 = vadd.f32 0.0, %v678
    %v680 = vpop.f32.mrf.mxu0
    %v681 = vadd.f32 0.0, %v680
    %v682 = vpop.f32.mrf.mxu0
    %v683 = vadd.f32 0.0, %v682
    %v684 = vpop.f32.mrf.mxu0
    %v685 = vadd.f32 0.0, %v684
    %686 = vdwg.mxu0
    %v688 = vunpack.c.l.b16 %v377
    %v689 = vpack.c.b16 %v688, %v688
    %vm690 = vcmask 1044480
    %v691 = vrot.slane %v438, 3
    %v692 = vrot.slane %v439, 3
    %v693 = vsel %vm690, %v691, %v692
    %v694 = vrot.slane %v440, 3
    %v695 = vsel %vm690, %v692, %v694
    %v696 = vrot.slane %v441, 3
    %v697 = vsel %vm690, %v694, %v696
    %v698 = vrot.slane %v442, 3
    %v699 = vsel %vm690, %v696, %v698
    %v700 = vrot.slane %v443, 3
    %v701 = vsel %vm690, %v698, %v700
    %v702 = vrot.slane %v689, 3
    %v703 = vsel %vm690, %v700, %v702
    %v726 = vunpack.c.l.b16 %v378
    %v727 = vunpack.c.h.b16 %v378
    %v728 = vunpack.c.l.b16 %v379
    %v729 = vunpack.c.h.b16 %v379
    %v730 = vunpack.c.l.b16 %v380
    %v731 = vunpack.c.h.b16 %v380
    %v732 = vunpack.c.l.b16 %v381
    %v733 = vunpack.c.h.b16 %v381
    %v734 = vunpack.c.l.b16 %v382
    %v735 = vunpack.c.h.b16 %v382
    %v736 = vunpack.c.l.b16 %v383
    %v737 = vunpack.c.h.b16 %v383
    %v738 = vunpack.c.l.b16 %v384
    %v739 = vunpack.c.h.b16 %v384
    %v740 = vunpack.c.l.b16 %v385
    %v741 = vunpack.c.h.b16 %v385
    %v742 = vunpack.c.l.b16 %v386
    %v743 = vunpack.c.h.b16 %v386
    %v744 = vunpack.c.l.b16 %v387
    %v745 = vunpack.c.h.b16 %v387
    %v746 = vunpack.c.l.b16 %v388
    %v747 = vunpack.c.h.b16 %v388
    %v748 = vunpack.c.l.b16 %v389
    %v749 = vunpack.c.h.b16 %v389
    %v750 = vunpack.c.l.b16 %v390
    %v751 = vunpack.c.h.b16 %v390
    %v752 = vunpack.c.l.b16 %v391
    %v753 = vunpack.c.h.b16 %v391
    %v754 = vunpack.c.l.b16 %v392
    %v755 = vunpack.c.h.b16 %v392
    %v756 = vunpack.c.l.b16 %v393
    %v757 = vunpack.c.h.b16 %v393
    %v758 = vpack.c.b16 %v728, %v726
    %v759 = vpack.c.b16 %v729, %v727
    %v760 = vpack.c.b16 %v732, %v730
    %v761 = vpack.c.b16 %v733, %v731
    %v762 = vpack.c.b16 %v736, %v734
    %v763 = vpack.c.b16 %v737, %v735
    %v764 = vpack.c.b16 %v740, %v738
    %v765 = vpack.c.b16 %v741, %v739
    %v766 = vpack.c.b16 %v744, %v742
    %v767 = vpack.c.b16 %v745, %v743
    %v768 = vpack.c.b16 %v748, %v746
    %v769 = vpack.c.b16 %v749, %v747
    %v770 = vpack.c.b16 %v752, %v750
    %v771 = vpack.c.b16 %v753, %v751
    %v772 = vpack.c.b16 %v756, %v754
    %v773 = vpack.c.b16 %v757, %v755
    %790 = vmatprep.subr.bf16.mxu0 %v773
    %791 = vmatpush1.bf16.msra.mxu0 %v772
    %792 = vmatprep.subr.bf16.mxu0 %v771
    %793 = vmatpush1.bf16.msra.mxu0 %v770
    %794 = vmatprep.subr.bf16.mxu0 %v769
    %795 = vmatpush1.bf16.msra.mxu0 %v768
    %796 = vmatprep.subr.bf16.mxu0 %v767
    %797 = vmatpush1.bf16.msra.mxu0 %v766
    %798 = vmatprep.subr.bf16.mxu0 %v765
    %799 = vmatpush1.bf16.msra.mxu0 %v764
    %800 = vmatprep.subr.bf16.mxu0 %v763
    %801 = vmatpush1.bf16.msra.mxu0 %v762
    %802 = vmatprep.subr.bf16.mxu0 %v761
    %803 = vmatpush1.bf16.msra.mxu0 %v760
    %804 = vmatprep.subr.bf16.mxu0 %v759
    %805 = vmatpush1.bf16.msra.mxu0 %v758
    %806 = vmatprep.subr.bf16.mxu0 0
    %807 = vmatpush2.bf16.msra.mxu0 0
    %808 = vmatprep.subr.bf16.mxu0 0
    %809 = vmatpush2.bf16.msra.mxu0 0
    %810 = vmatprep.subr.bf16.mxu0 0
    %811 = vmatpush2.bf16.msra.mxu0 0
    %812 = vmatprep.subr.bf16.mxu0 0
    %813 = vmatpush2.bf16.msra.mxu0 0
    %814 = vmatprep.subr.bf16.mxu0 0
    %815 = vmatpush2.bf16.msra.mxu0 0
    %816 = vmatprep.subr.bf16.mxu0 0
    %817 = vmatpush2.bf16.msra.mxu0 0
    %818 = vmatprep.subr.bf16.mxu0 0
    %819 = vmatpush2.bf16.msra.mxu0 0
    %820 = vmatprep.subr.bf16.mxu0 0
    %821 = vmatpush2.bf16.msra.mxu0 0
    %822 = vmatprep.mubr.bf16.mxu0 0
    %823 = vmatmul.mubr.bf16.gmra.mxu0 %v693
    %v824 = vpop.f32.mrf.mxu0
    %v825 = vadd.f32 %v629, %v824
    %v826 = vpop.f32.mrf.mxu0
    %v827 = vadd.f32 %v631, %v826
    %v828 = vpop.f32.mrf.mxu0
    %v829 = vadd.f32 %v633, %v828
    %v830 = vpop.f32.mrf.mxu0
    %v831 = vadd.f32 %v635, %v830
    %832 = vmatprep.mubr.bf16.mxu0 0
    %833 = vmatmul.mubr.bf16.gmra.mxu0 %v695
    %v834 = vpop.f32.mrf.mxu0
    %v835 = vadd.f32 %v639, %v834
    %v836 = vpop.f32.mrf.mxu0
    %v837 = vadd.f32 %v641, %v836
    %v838 = vpop.f32.mrf.mxu0
    %v839 = vadd.f32 %v643, %v838
    %v840 = vpop.f32.mrf.mxu0
    %v841 = vadd.f32 %v645, %v840
    %842 = vmatprep.mubr.bf16.mxu0 0
    %843 = vmatmul.mubr.bf16.gmra.mxu0 %v697
    %v844 = vpop.f32.mrf.mxu0
    %v845 = vadd.f32 %v649, %v844
    %v846 = vpop.f32.mrf.mxu0
    %v847 = vadd.f32 %v651, %v846
    %v848 = vpop.f32.mrf.mxu0
    %v849 = vadd.f32 %v653, %v848
    %v850 = vpop.f32.mrf.mxu0
    %v851 = vadd.f32 %v655, %v850
    %852 = vmatprep.mubr.bf16.mxu0 0
    %853 = vmatmul.mubr.bf16.gmra.mxu0 %v699
    %v854 = vpop.f32.mrf.mxu0
    %v855 = vadd.f32 %v659, %v854
    %v856 = vpop.f32.mrf.mxu0
    %v857 = vadd.f32 %v661, %v856
    %v858 = vpop.f32.mrf.mxu0
    %v859 = vadd.f32 %v663, %v858
    %v860 = vpop.f32.mrf.mxu0
    %v861 = vadd.f32 %v665, %v860
    %862 = vmatprep.mubr.bf16.mxu0 0
    %863 = vmatmul.mubr.bf16.gmra.mxu0 %v701
    %v864 = vpop.f32.mrf.mxu0
    %v865 = vadd.f32 %v669, %v864
    %v866 = vpop.f32.mrf.mxu0
    %v867 = vadd.f32 %v671, %v866
    %v868 = vpop.f32.mrf.mxu0
    %v869 = vadd.f32 %v673, %v868
    %v870 = vpop.f32.mrf.mxu0
    %v871 = vadd.f32 %v675, %v870
    %872 = vmatprep.mubr.bf16.mxu0 0
    %873 = vmatmul.mubr.bf16.gmra.mxu0 %v703
    %v874 = vpop.f32.mrf.mxu0
    %v875 = vadd.f32 %v679, %v874
    %v876 = vpop.f32.mrf.mxu0
    %v877 = vadd.f32 %v681, %v876
    %v878 = vpop.f32.mrf.mxu0
    %v879 = vadd.f32 %v683, %v878
    %v880 = vpop.f32.mrf.mxu0
    %v881 = vadd.f32 %v685, %v880
    %882 = vdwg.mxu0
    %s883 = scalar_lea.vmem [#allocation6], 256
    %v884 = vld [vmem:[%s883] sm:$0xff]
    %v885 = vld [vmem:[%s883 + $0x8] sm:$0xff]
    %v886 = vld [vmem:[%s883 + $0x10] sm:$0xff]
    %v887 = vld [vmem:[%s883 + $0x18] sm:$0xff]
    %v888 = vld [vmem:[%s883 + $0x20] sm:$0xff]
    %v889 = vld [vmem:[%s883 + $0x28] sm:$0xff]
    %v890 = vld [vmem:[%s883 + $0x30] sm:$0xff]
    %v891 = vld [vmem:[%s883 + $0x38] sm:$0xff]
    %v892 = vld [vmem:[%s883 + $0x40] sm:$0xff]
    %v893 = vld [vmem:[%s883 + $0x48] sm:$0xff]
    %v894 = vld [vmem:[%s883 + $0x50] sm:$0xff]
    %v895 = vld [vmem:[%s883 + $0x58] sm:$0xff]
    %v896 = vld [vmem:[%s883 + $0x60] sm:$0xff]
    %v897 = vld [vmem:[%s883 + $0x68] sm:$0xff]
    %v898 = vld [vmem:[%s883 + $0x70] sm:$0xff]
    %v899 = vld [vmem:[%s883 + $0x78] sm:$0xff]
    %v900 = vpack.c.b16 %v427, %v426
    %v901 = vpack.c.b16 %v429, %v428
    %v902 = vpack.c.b16 %v431, %v430
    %v903 = vpack.c.b16 %v433, %v432
    %v904 = vpack.c.b16 %v435, %v434
    %v905 = vpack.c.b16 %v437, %v436
    %v928 = vunpack.c.l.b16 %v884
    %v929 = vunpack.c.h.b16 %v884
    %v930 = vunpack.c.l.b16 %v885
    %v931 = vunpack.c.h.b16 %v885
    %v932 = vunpack.c.l.b16 %v886
    %v933 = vunpack.c.h.b16 %v886
    %v934 = vunpack.c.l.b16 %v887
    %v935 = vunpack.c.h.b16 %v887
    %v936 = vunpack.c.l.b16 %v888
    %v937 = vunpack.c.h.b16 %v888
    %v938 = vunpack.c.l.b16 %v889
    %v939 = vunpack.c.h.b16 %v889
    %v940 = vunpack.c.l.b16 %v890
    %v941 = vunpack.c.h.b16 %v890
    %v942 = vunpack.c.l.b16 %v891
    %v943 = vunpack.c.h.b16 %v891
    %v944 = vunpack.c.l.b16 %v892
    %v945 = vunpack.c.h.b16 %v892
    %v946 = vunpack.c.l.b16 %v893
    %v947 = vunpack.c.h.b16 %v893
    %v948 = vunpack.c.l.b16 %v894
    %v949 = vunpack.c.h.b16 %v894
    %v950 = vunpack.c.l.b16 %v895
    %v951 = vunpack.c.h.b16 %v895
    %v952 = vunpack.c.l.b16 %v896
    %v953 = vunpack.c.h.b16 %v896
    %v954 = vunpack.c.l.b16 %v897
    %v955 = vunpack.c.h.b16 %v897
    %v956 = vunpack.c.l.b16 %v898
    %v957 = vunpack.c.h.b16 %v898
    %v958 = vunpack.c.l.b16 %v899
    %v959 = vunpack.c.h.b16 %v899
    %v960 = vpack.c.b16 %v930, %v928
    %v961 = vpack.c.b16 %v931, %v929
    %v962 = vpack.c.b16 %v934, %v932
    %v963 = vpack.c.b16 %v935, %v933
    %v964 = vpack.c.b16 %v938, %v936
    %v965 = vpack.c.b16 %v939, %v937
    %v966 = vpack.c.b16 %v942, %v940
    %v967 = vpack.c.b16 %v943, %v941
    %v968 = vpack.c.b16 %v946, %v944
    %v969 = vpack.c.b16 %v947, %v945
    %v970 = vpack.c.b16 %v950, %v948
    %v971 = vpack.c.b16 %v951, %v949
    %v972 = vpack.c.b16 %v954, %v952
    %v973 = vpack.c.b16 %v955, %v953
    %v974 = vpack.c.b16 %v958, %v956
    %v975 = vpack.c.b16 %v959, %v957
    %992 = vmatprep.subr.bf16.mxu0 %v975
    %993 = vmatpush1.bf16.msra.mxu0 %v974
    %994 = vmatprep.subr.bf16.mxu0 %v973
    %995 = vmatpush1.bf16.msra.mxu0 %v972
    %996 = vmatprep.subr.bf16.mxu0 %v971
    %997 = vmatpush1.bf16.msra.mxu0 %v970
    %998 = vmatprep.subr.bf16.mxu0 %v969
    %999 = vmatpush1.bf16.msra.mxu0 %v968
    %1000 = vmatprep.subr.bf16.mxu0 %v967
    %1001 = vmatpush1.bf16.msra.mxu0 %v966
    %1002 = vmatprep.subr.bf16.mxu0 %v965
    %1003 = vmatpush1.bf16.msra.mxu0 %v964
    %1004 = vmatprep.subr.bf16.mxu0 %v963
    %1005 = vmatpush1.bf16.msra.mxu0 %v962
    %1006 = vmatprep.subr.bf16.mxu0 %v961
    %1007 = vmatpush1.bf16.msra.mxu0 %v960
    %1008 = vmatprep.subr.bf16.mxu0 0
    %1009 = vmatpush2.bf16.msra.mxu0 0
    %1010 = vmatprep.subr.bf16.mxu0 0
    %1011 = vmatpush2.bf16.msra.mxu0 0
    %1012 = vmatprep.subr.bf16.mxu0 0
    %1013 = vmatpush2.bf16.msra.mxu0 0
    %1014 = vmatprep.subr.bf16.mxu0 0
    %1015 = vmatpush2.bf16.msra.mxu0 0
    %1016 = vmatprep.subr.bf16.mxu0 0
    %1017 = vmatpush2.bf16.msra.mxu0 0
    %1018 = vmatprep.subr.bf16.mxu0 0
    %1019 = vmatpush2.bf16.msra.mxu0 0
    %1020 = vmatprep.subr.bf16.mxu0 0
    %1021 = vmatpush2.bf16.msra.mxu0 0
    %1022 = vmatprep.subr.bf16.mxu0 0
    %1023 = vmatpush2.bf16.msra.mxu0 0
    %1024 = vmatprep.mubr.bf16.mxu0 0
    %1025 = vmatmul.mubr.bf16.gmra.mxu0 %v900
    %v1026 = vpop.f32.mrf.mxu0
    %v1027 = vadd.f32 0.0, %v1026
    %v1028 = vpop.f32.mrf.mxu0
    %v1029 = vadd.f32 0.0, %v1028
    %v1030 = vpop.f32.mrf.mxu0
    %v1031 = vadd.f32 0.0, %v1030
    %v1032 = vpop.f32.mrf.mxu0
    %v1033 = vadd.f32 0.0, %v1032
    %1034 = vmatprep.mubr.bf16.mxu0 0
    %1035 = vmatmul.mubr.bf16.gmra.mxu0 %v901
    %v1036 = vpop.f32.mrf.mxu0
    %v1037 = vadd.f32 0.0, %v1036
    %v1038 = vpop.f32.mrf.mxu0
    %v1039 = vadd.f32 0.0, %v1038
    %v1040 = vpop.f32.mrf.mxu0
    %v1041 = vadd.f32 0.0, %v1040
    %v1042 = vpop.f32.mrf.mxu0
    %v1043 = vadd.f32 0.0, %v1042
    %1044 = vmatprep.mubr.bf16.mxu0 0
    %1045 = vmatmul.mubr.bf16.gmra.mxu0 %v902
    %v1046 = vpop.f32.mrf.mxu0
    %v1047 = vadd.f32 0.0, %v1046
    %v1048 = vpop.f32.mrf.mxu0
    %v1049 = vadd.f32 0.0, %v1048
    %v1050 = vpop.f32.mrf.mxu0
    %v1051 = vadd.f32 0.0, %v1050
    %v1052 = vpop.f32.mrf.mxu0
    %v1053 = vadd.f32 0.0, %v1052
    %1054 = vmatprep.mubr.bf16.mxu0 0
    %1055 = vmatmul.mubr.bf16.gmra.mxu0 %v903
    %v1056 = vpop.f32.mrf.mxu0
    %v1057 = vadd.f32 0.0, %v1056
    %v1058 = vpop.f32.mrf.mxu0
    %v1059 = vadd.f32 0.0, %v1058
    %v1060 = vpop.f32.mrf.mxu0
    %v1061 = vadd.f32 0.0, %v1060
    %v1062 = vpop.f32.mrf.mxu0
    %v1063 = vadd.f32 0.0, %v1062
    %1064 = vmatprep.mubr.bf16.mxu0 0
    %1065 = vmatmul.mubr.bf16.gmra.mxu0 %v904
    %v1066 = vpop.f32.mrf.mxu0
    %v1067 = vadd.f32 0.0, %v1066
    %v1068 = vpop.f32.mrf.mxu0
    %v1069 = vadd.f32 0.0, %v1068
    %v1070 = vpop.f32.mrf.mxu0
    %v1071 = vadd.f32 0.0, %v1070
    %v1072 = vpop.f32.mrf.mxu0
    %v1073 = vadd.f32 0.0, %v1072
    %1074 = vmatprep.mubr.bf16.mxu0 0
    %1075 = vmatmul.mubr.bf16.gmra.mxu0 %v905
    %v1076 = vpop.f32.mrf.mxu0
    %v1077 = vadd.f32 0.0, %v1076
    %v1078 = vpop.f32.mrf.mxu0
    %v1079 = vadd.f32 0.0, %v1078
    %v1080 = vpop.f32.mrf.mxu0
    %v1081 = vadd.f32 0.0, %v1080
    %v1082 = vpop.f32.mrf.mxu0
    %v1083 = vadd.f32 0.0, %v1082
    %1084 = vdwg.mxu0
    %v1085 = vadd.f32 %v825, %v1027
    %v1086 = vadd.f32 %v827, %v1029
    %v1087 = vadd.f32 %v829, %v1031
    %v1088 = vadd.f32 %v831, %v1033
    %v1089 = vadd.f32 %v835, %v1037
    %v1090 = vadd.f32 %v837, %v1039
    %v1091 = vadd.f32 %v839, %v1041
    %v1092 = vadd.f32 %v841, %v1043
    %v1093 = vadd.f32 %v845, %v1047
    %v1094 = vadd.f32 %v847, %v1049
    %v1095 = vadd.f32 %v849, %v1051
    %v1096 = vadd.f32 %v851, %v1053
    %v1097 = vadd.f32 %v855, %v1057
    %v1098 = vadd.f32 %v857, %v1059
    %v1099 = vadd.f32 %v859, %v1061
    %v1100 = vadd.f32 %v861, %v1063
    %v1101 = vadd.f32 %v865, %v1067
    %v1102 = vadd.f32 %v867, %v1069
    %v1103 = vadd.f32 %v869, %v1071
    %v1104 = vadd.f32 %v871, %v1073
    %v1105 = vadd.f32 %v875, %v1077
    %v1106 = vadd.f32 %v877, %v1079
    %v1107 = vadd.f32 %v879, %v1081
    %v1108 = vadd.f32 %v881, %v1083
    %v1109 = vld [vmem:[#allocation2 + $0x8] sm:$0xf]
    %v1110 = vld [vmem:[#allocation2 + $0x10] sm:$0xf]
    %v1111 = vld [vmem:[#allocation2 + $0x18] sm:$0xf]
    %v1112 = vld [vmem:[#allocation2 + $0x20] sm:$0xf]
    %v1113 = vld [vmem:[#allocation2 + $0x28] sm:$0xf]
    %v1114 = vld [vmem:[#allocation2 + $0x30] sm:$0xf]
    %v1115 = vld [vmem:[#allocation2 + $0x38] sm:$0xf]
    %v1116 = vld [vmem:[#allocation2 + $0x40] sm:$0xf]
    %v1117 = vld [vmem:[#allocation2 + $0x48] sm:$0xf]
    %v1118 = vld [vmem:[#allocation2 + $0x50] sm:$0xf]
    %v1119 = vld [vmem:[#allocation2 + $0x58] sm:$0xf]
    %v1120 = vld [vmem:[#allocation2 + $0x60] sm:$0xf]
    %v1121 = vld [vmem:[#allocation2 + $0x68] sm:$0x1]
    %s1122 = scalar_lea.vmem [#allocation6], 384
    %v1123 = vld [vmem:[%s1122] sm:$0xff]
    %v1124 = vld [vmem:[%s1122 + $0x8] sm:$0xff]
    %v1125 = vld [vmem:[%s1122 + $0x10] sm:$0xff]
    %v1126 = vld [vmem:[%s1122 + $0x18] sm:$0xff]
    %v1127 = vld [vmem:[%s1122 + $0x20] sm:$0xff]
    %v1128 = vld [vmem:[%s1122 + $0x28] sm:$0xff]
    %v1129 = vld [vmem:[%s1122 + $0x30] sm:$0xff]
    %v1130 = vld [vmem:[%s1122 + $0x38] sm:$0xff]
    %v1131 = vld [vmem:[%s1122 + $0x40] sm:$0xff]
    %v1132 = vld [vmem:[%s1122 + $0x48] sm:$0xff]
    %v1133 = vld [vmem:[%s1122 + $0x50] sm:$0xff]
    %v1134 = vld [vmem:[%s1122 + $0x58] sm:$0xff]
    %v1135 = vld [vmem:[%s1122 + $0x60] sm:$0xff]
    %v1136 = vld [vmem:[%s1122 + $0x68] sm:$0xff]
    %v1137 = vld [vmem:[%s1122 + $0x70] sm:$0xff]
    %v1138 = vld [vmem:[%s1122 + $0x78] sm:$0xff]
    %v1152 = vunpack.c.l.b16 %v1109
    %v1153 = vunpack.c.l.b16 %v1110
    %v1154 = vunpack.c.l.b16 %v1111
    %v1155 = vunpack.c.l.b16 %v1112
    %v1156 = vunpack.c.l.b16 %v1113
    %v1157 = vunpack.c.l.b16 %v1114
    %v1158 = vunpack.c.l.b16 %v1115
    %v1159 = vunpack.c.l.b16 %v1116
    %v1160 = vunpack.c.l.b16 %v1117
    %v1161 = vunpack.c.l.b16 %v1118
    %v1162 = vunpack.c.l.b16 %v1119
    %v1163 = vunpack.c.l.b16 %v1120
    %v1164 = vunpack.c.l.b16 %v1121
    %v1165 = vpack.c.b16 %v1153, %v1152
    %v1166 = vpack.c.b16 %v1155, %v1154
    %v1167 = vpack.c.b16 %v1157, %v1156
    %v1168 = vpack.c.b16 %v1159, %v1158
    %v1169 = vpack.c.b16 %v1161, %v1160
    %v1170 = vpack.c.b16 %v1163, %v1162
    %v1171 = vpack.c.b16 %v1164, %v1164
    %vm1172 = vsmask.f32 7424
    %v1174 = vshrl.u32 %v1165, 16
    %v1176 = vshll.u32 %v1165, 16
    %v1178 = vrot.slane %v1176, 1
    %v1179 = vor.u32 %v1174, %v1178
    %v1181 = vshll.u32 %v1166, 16
    %v1183 = vrot.slane %v1181, 1
    %v1184 = vsel %vm1172, %v1179, %v1183
    %v1185 = vshrl.u32 %v1166, 16
    %v1187 = vor.u32 %v1185, %v1183
    %v1189 = vshll.u32 %v1167, 16
    %v1191 = vrot.slane %v1189, 1
    %v1192 = vsel %vm1172, %v1187, %v1191
    %v1193 = vshrl.u32 %v1167, 16
    %v1195 = vor.u32 %v1193, %v1191
    %v1197 = vshll.u32 %v1168, 16
    %v1199 = vrot.slane %v1197, 1
    %v1200 = vsel %vm1172, %v1195, %v1199
    %v1201 = vshrl.u32 %v1168, 16
    %v1203 = vor.u32 %v1201, %v1199
    %v1205 = vshll.u32 %v1169, 16
    %v1207 = vrot.slane %v1205, 1
    %v1208 = vsel %vm1172, %v1203, %v1207
    %v1209 = vshrl.u32 %v1169, 16
    %v1211 = vor.u32 %v1209, %v1207
    %v1213 = vshll.u32 %v1170, 16
    %v1215 = vrot.slane %v1213, 1
    %v1216 = vsel %vm1172, %v1211, %v1215
    %v1217 = vshrl.u32 %v1170, 16
    %v1219 = vor.u32 %v1217, %v1215
    %v1221 = vshll.u32 %v1171, 16
    %v1223 = vrot.slane %v1221, 1
    %v1224 = vsel %vm1172, %v1219, %v1223
    %v1247 = vunpack.c.l.b16 %v1123
    %v1248 = vunpack.c.h.b16 %v1123
    %v1249 = vunpack.c.l.b16 %v1124
    %v1250 = vunpack.c.h.b16 %v1124
    %v1251 = vunpack.c.l.b16 %v1125
    %v1252 = vunpack.c.h.b16 %v1125
    %v1253 = vunpack.c.l.b16 %v1126
    %v1254 = vunpack.c.h.b16 %v1126
    %v1255 = vunpack.c.l.b16 %v1127
    %v1256 = vunpack.c.h.b16 %v1127
    %v1257 = vunpack.c.l.b16 %v1128
    %v1258 = vunpack.c.h.b16 %v1128
    %v1259 = vunpack.c.l.b16 %v1129
    %v1260 = vunpack.c.h.b16 %v1129
    %v1261 = vunpack.c.l.b16 %v1130
    %v1262 = vunpack.c.h.b16 %v1130
    %v1263 = vunpack.c.l.b16 %v1131
    %v1264 = vunpack.c.h.b16 %v1131
    %v1265 = vunpack.c.l.b16 %v1132
    %v1266 = vunpack.c.h.b16 %v1132
    %v1267 = vunpack.c.l.b16 %v1133
    %v1268 = vunpack.c.h.b16 %v1133
    %v1269 = vunpack.c.l.b16 %v1134
    %v1270 = vunpack.c.h.b16 %v1134
    %v1271 = vunpack.c.l.b16 %v1135
    %v1272 = vunpack.c.h.b16 %v1135
    %v1273 = vunpack.c.l.b16 %v1136
    %v1274 = vunpack.c.h.b16 %v1136
    %v1275 = vunpack.c.l.b16 %v1137
    %v1276 = vunpack.c.h.b16 %v1137
    %v1277 = vunpack.c.l.b16 %v1138
    %v1278 = vunpack.c.h.b16 %v1138
    %v1279 = vpack.c.b16 %v1249, %v1247
    %v1280 = vpack.c.b16 %v1250, %v1248
    %v1281 = vpack.c.b16 %v1253, %v1251
    %v1282 = vpack.c.b16 %v1254, %v1252
    %v1283 = vpack.c.b16 %v1257, %v1255
    %v1284 = vpack.c.b16 %v1258, %v1256
    %v1285 = vpack.c.b16 %v1261, %v1259
    %v1286 = vpack.c.b16 %v1262, %v1260
    %v1287 = vpack.c.b16 %v1265, %v1263
    %v1288 = vpack.c.b16 %v1266, %v1264
    %v1289 = vpack.c.b16 %v1269, %v1267
    %v1290 = vpack.c.b16 %v1270, %v1268
    %v1291 = vpack.c.b16 %v1273, %v1271
    %v1292 = vpack.c.b16 %v1274, %v1272
    %v1293 = vpack.c.b16 %v1277, %v1275
    %v1294 = vpack.c.b16 %v1278, %v1276
    %1311 = vmatprep.subr.bf16.mxu0 %v1294
    %1312 = vmatpush1.bf16.msra.mxu0 %v1293
    %1313 = vmatprep.subr.bf16.mxu0 %v1292
    %1314 = vmatpush1.bf16.msra.mxu0 %v1291
    %1315 = vmatprep.subr.bf16.mxu0 %v1290
    %1316 = vmatpush1.bf16.msra.mxu0 %v1289
    %1317 = vmatprep.subr.bf16.mxu0 %v1288
    %1318 = vmatpush1.bf16.msra.mxu0 %v1287
    %1319 = vmatprep.subr.bf16.mxu0 %v1286
    %1320 = vmatpush1.bf16.msra.mxu0 %v1285
    %1321 = vmatprep.subr.bf16.mxu0 %v1284
    %1322 = vmatpush1.bf16.msra.mxu0 %v1283
    %1323 = vmatprep.subr.bf16.mxu0 %v1282
    %1324 = vmatpush1.bf16.msra.mxu0 %v1281
    %1325 = vmatprep.subr.bf16.mxu0 %v1280
    %1326 = vmatpush1.bf16.msra.mxu0 %v1279
    %1327 = vmatprep.subr.bf16.mxu0 0
    %1328 = vmatpush2.bf16.msra.mxu0 0
    %1329 = vmatprep.subr.bf16.mxu0 0
    %1330 = vmatpush2.bf16.msra.mxu0 0
    %1331 = vmatprep.subr.bf16.mxu0 0
    %1332 = vmatpush2.bf16.msra.mxu0 0
    %1333 = vmatprep.subr.bf16.mxu0 0
    %1334 = vmatpush2.bf16.msra.mxu0 0
    %1335 = vmatprep.subr.bf16.mxu0 0
    %1336 = vmatpush2.bf16.msra.mxu0 0
    %1337 = vmatprep.subr.bf16.mxu0 0
    %1338 = vmatpush2.bf16.msra.mxu0 0
    %1339 = vmatprep.subr.bf16.mxu0 0
    %1340 = vmatpush2.bf16.msra.mxu0 0
    %1341 = vmatprep.subr.bf16.mxu0 0
    %1342 = vmatpush2.bf16.msra.mxu0 0
    %1343 = vmatprep.mubr.bf16.mxu0 0
    %1344 = vmatmul.mubr.bf16.gmra.mxu0 %v1184
    %v1345 = vpop.f32.mrf.mxu0
    %v1346 = vadd.f32 0.0, %v1345
    %v1347 = vpop.f32.mrf.mxu0
    %v1348 = vadd.f32 0.0, %v1347
    %v1349 = vpop.f32.mrf.mxu0
    %v1350 = vadd.f32 0.0, %v1349
    %v1351 = vpop.f32.mrf.mxu0
    %v1352 = vadd.f32 0.0, %v1351
    %1353 = vmatprep.mubr.bf16.mxu0 0
    %1354 = vmatmul.mubr.bf16.gmra.mxu0 %v1192
    %v1355 = vpop.f32.mrf.mxu0
    %v1356 = vadd.f32 0.0, %v1355
    %v1357 = vpop.f32.mrf.mxu0
    %v1358 = vadd.f32 0.0, %v1357
    %v1359 = vpop.f32.mrf.mxu0
    %v1360 = vadd.f32 0.0, %v1359
    %v1361 = vpop.f32.mrf.mxu0
    %v1362 = vadd.f32 0.0, %v1361
    %1363 = vmatprep.mubr.bf16.mxu0 0
    %1364 = vmatmul.mubr.bf16.gmra.mxu0 %v1200
    %v1365 = vpop.f32.mrf.mxu0
    %v1366 = vadd.f32 0.0, %v1365
    %v1367 = vpop.f32.mrf.mxu0
    %v1368 = vadd.f32 0.0, %v1367
    %v1369 = vpop.f32.mrf.mxu0
    %v1370 = vadd.f32 0.0, %v1369
    %v1371 = vpop.f32.mrf.mxu0
    %v1372 = vadd.f32 0.0, %v1371
    %1373 = vmatprep.mubr.bf16.mxu0 0
    %1374 = vmatmul.mubr.bf16.gmra.mxu0 %v1208
    %v1375 = vpop.f32.mrf.mxu0
    %v1376 = vadd.f32 0.0, %v1375
    %v1377 = vpop.f32.mrf.mxu0
    %v1378 = vadd.f32 0.0, %v1377
    %v1379 = vpop.f32.mrf.mxu0
    %v1380 = vadd.f32 0.0, %v1379
    %v1381 = vpop.f32.mrf.mxu0
    %v1382 = vadd.f32 0.0, %v1381
    %1383 = vmatprep.mubr.bf16.mxu0 0
    %1384 = vmatmul.mubr.bf16.gmra.mxu0 %v1216
    %v1385 = vpop.f32.mrf.mxu0
    %v1386 = vadd.f32 0.0, %v1385
    %v1387 = vpop.f32.mrf.mxu0
    %v1388 = vadd.f32 0.0, %v1387
    %v1389 = vpop.f32.mrf.mxu0
    %v1390 = vadd.f32 0.0, %v1389
    %v1391 = vpop.f32.mrf.mxu0
    %v1392 = vadd.f32 0.0, %v1391
    %1393 = vmatprep.mubr.bf16.mxu0 0
    %1394 = vmatmul.mubr.bf16.gmra.mxu0 %v1224
    %v1395 = vpop.f32.mrf.mxu0
    %v1396 = vadd.f32 0.0, %v1395
    %v1397 = vpop.f32.mrf.mxu0
    %v1398 = vadd.f32 0.0, %v1397
    %v1399 = vpop.f32.mrf.mxu0
    %v1400 = vadd.f32 0.0, %v1399
    %v1401 = vpop.f32.mrf.mxu0
    %v1402 = vadd.f32 0.0, %v1401
    %1403 = vdwg.mxu0
    %v1404 = vadd.f32 %v1085, %v1346
    %v1405 = vadd.f32 %v1086, %v1348
    %v1406 = vadd.f32 %v1087, %v1350
    %v1407 = vadd.f32 %v1088, %v1352
    %v1408 = vadd.f32 %v1089, %v1356
    %v1409 = vadd.f32 %v1090, %v1358
    %v1410 = vadd.f32 %v1091, %v1360
    %v1411 = vadd.f32 %v1092, %v1362
    %v1412 = vadd.f32 %v1093, %v1366
    %v1413 = vadd.f32 %v1094, %v1368
    %v1414 = vadd.f32 %v1095, %v1370
    %v1415 = vadd.f32 %v1096, %v1372
    %v1416 = vadd.f32 %v1097, %v1376
    %v1417 = vadd.f32 %v1098, %v1378
    %v1418 = vadd.f32 %v1099, %v1380
    %v1419 = vadd.f32 %v1100, %v1382
    %v1420 = vadd.f32 %v1101, %v1386
    %v1421 = vadd.f32 %v1102, %v1388
    %v1422 = vadd.f32 %v1103, %v1390
    %v1423 = vadd.f32 %v1104, %v1392
    %v1424 = vadd.f32 %v1105, %v1396
    %v1425 = vadd.f32 %v1106, %v1398
    %v1426 = vadd.f32 %v1107, %v1400
    %v1427 = vadd.f32 %v1108, %v1402
    %v1428 = vld [vmem:[#allocation2 + $0x8] sm:$0xe]
    %s1429 = scalar_lea.vmem [#allocation6], 512
    %v1430 = vld [vmem:[%s1429] sm:$0xff]
    %v1431 = vld [vmem:[%s1429 + $0x8] sm:$0xff]
    %v1432 = vld [vmem:[%s1429 + $0x10] sm:$0xff]
    %v1433 = vld [vmem:[%s1429 + $0x18] sm:$0xff]
    %v1434 = vld [vmem:[%s1429 + $0x20] sm:$0xff]
    %v1435 = vld [vmem:[%s1429 + $0x28] sm:$0xff]
    %v1436 = vld [vmem:[%s1429 + $0x30] sm:$0xff]
    %v1437 = vld [vmem:[%s1429 + $0x38] sm:$0xff]
    %v1438 = vld [vmem:[%s1429 + $0x40] sm:$0xff]
    %v1439 = vld [vmem:[%s1429 + $0x48] sm:$0xff]
    %v1440 = vld [vmem:[%s1429 + $0x50] sm:$0xff]
    %v1441 = vld [vmem:[%s1429 + $0x58] sm:$0xff]
    %v1442 = vld [vmem:[%s1429 + $0x60] sm:$0xff]
    %v1443 = vld [vmem:[%s1429 + $0x68] sm:$0xff]
    %v1444 = vld [vmem:[%s1429 + $0x70] sm:$0xff]
    %v1445 = vld [vmem:[%s1429 + $0x78] sm:$0xff]
    %v1447 = vunpack.c.l.b16 %v1428
    %v1448 = vpack.c.b16 %v1153, %v1447
    %vm1449 = vcmask 1046528
    %v1450 = vrot.slane %v1448, 1
    %v1451 = vrot.slane %v1166, 1
    %v1452 = vsel %vm1449, %v1450, %v1451
    %v1453 = vrot.slane %v1167, 1
    %v1454 = vsel %vm1449, %v1451, %v1453
    %v1455 = vrot.slane %v1168, 1
    %v1456 = vsel %vm1449, %v1453, %v1455
    %v1457 = vrot.slane %v1169, 1
    %v1458 = vsel %vm1449, %v1455, %v1457
    %v1459 = vrot.slane %v1170, 1
    %v1460 = vsel %vm1449, %v1457, %v1459
    %v1461 = vrot.slane %v1171, 1
    %v1462 = vsel %vm1449, %v1459, %v1461
    %v1485 = vunpack.c.l.b16 %v1430
    %v1486 = vunpack.c.h.b16 %v1430
    %v1487 = vunpack.c.l.b16 %v1431
    %v1488 = vunpack.c.h.b16 %v1431
    %v1489 = vunpack.c.l.b16 %v1432
    %v1490 = vunpack.c.h.b16 %v1432
    %v1491 = vunpack.c.l.b16 %v1433
    %v1492 = vunpack.c.h.b16 %v1433
    %v1493 = vunpack.c.l.b16 %v1434
    %v1494 = vunpack.c.h.b16 %v1434
    %v1495 = vunpack.c.l.b16 %v1435
    %v1496 = vunpack.c.h.b16 %v1435
    %v1497 = vunpack.c.l.b16 %v1436
    %v1498 = vunpack.c.h.b16 %v1436
    %v1499 = vunpack.c.l.b16 %v1437
    %v1500 = vunpack.c.h.b16 %v1437
    %v1501 = vunpack.c.l.b16 %v1438
    %v1502 = vunpack.c.h.b16 %v1438
    %v1503 = vunpack.c.l.b16 %v1439
    %v1504 = vunpack.c.h.b16 %v1439
    %v1505 = vunpack.c.l.b16 %v1440
    %v1506 = vunpack.c.h.b16 %v1440
    %v1507 = vunpack.c.l.b16 %v1441
    %v1508 = vunpack.c.h.b16 %v1441
    %v1509 = vunpack.c.l.b16 %v1442
    %v1510 = vunpack.c.h.b16 %v1442
    %v1511 = vunpack.c.l.b16 %v1443
    %v1512 = vunpack.c.h.b16 %v1443
    %v1513 = vunpack.c.l.b16 %v1444
    %v1514 = vunpack.c.h.b16 %v1444
    %v1515 = vunpack.c.l.b16 %v1445
    %v1516 = vunpack.c.h.b16 %v1445
    %v1517 = vpack.c.b16 %v1487, %v1485
    %v1518 = vpack.c.b16 %v1488, %v1486
    %v1519 = vpack.c.b16 %v1491, %v1489
    %v1520 = vpack.c.b16 %v1492, %v1490
    %v1521 = vpack.c.b16 %v1495, %v1493
    %v1522 = vpack.c.b16 %v1496, %v1494
    %v1523 = vpack.c.b16 %v1499, %v1497
    %v1524 = vpack.c.b16 %v1500, %v1498
    %v1525 = vpack.c.b16 %v1503, %v1501
    %v1526 = vpack.c.b16 %v1504, %v1502
    %v1527 = vpack.c.b16 %v1507, %v1505
    %v1528 = vpack.c.b16 %v1508, %v1506
    %v1529 = vpack.c.b16 %v1511, %v1509
    %v1530 = vpack.c.b16 %v1512, %v1510
    %v1531 = vpack.c.b16 %v1515, %v1513
    %v1532 = vpack.c.b16 %v1516, %v1514
    %1549 = vmatprep.subr.bf16.mxu0 %v1532
    %1550 = vmatpush1.bf16.msra.mxu0 %v1531
    %1551 = vmatprep.subr.bf16.mxu0 %v1530
    %1552 = vmatpush1.bf16.msra.mxu0 %v1529
    %1553 = vmatprep.subr.bf16.mxu0 %v1528
    %1554 = vmatpush1.bf16.msra.mxu0 %v1527
    %1555 = vmatprep.subr.bf16.mxu0 %v1526
    %1556 = vmatpush1.bf16.msra.mxu0 %v1525
    %1557 = vmatprep.subr.bf16.mxu0 %v1524
    %1558 = vmatpush1.bf16.msra.mxu0 %v1523
    %1559 = vmatprep.subr.bf16.mxu0 %v1522
    %1560 = vmatpush1.bf16.msra.mxu0 %v1521
    %1561 = vmatprep.subr.bf16.mxu0 %v1520
    %1562 = vmatpush1.bf16.msra.mxu0 %v1519
    %1563 = vmatprep.subr.bf16.mxu0 %v1518
    %1564 = vmatpush1.bf16.msra.mxu0 %v1517
    %1565 = vmatprep.subr.bf16.mxu0 0
    %1566 = vmatpush2.bf16.msra.mxu0 0
    %1567 = vmatprep.subr.bf16.mxu0 0
    %1568 = vmatpush2.bf16.msra.mxu0 0
    %1569 = vmatprep.subr.bf16.mxu0 0
    %1570 = vmatpush2.bf16.msra.mxu0 0
    %1571 = vmatprep.subr.bf16.mxu0 0
    %1572 = vmatpush2.bf16.msra.mxu0 0
    %1573 = vmatprep.subr.bf16.mxu0 0
    %1574 = vmatpush2.bf16.msra.mxu0 0
    %1575 = vmatprep.subr.bf16.mxu0 0
    %1576 = vmatpush2.bf16.msra.mxu0 0
    %1577 = vmatprep.subr.bf16.mxu0 0
    %1578 = vmatpush2.bf16.msra.mxu0 0
    %1579 = vmatprep.subr.bf16.mxu0 0
    %1580 = vmatpush2.bf16.msra.mxu0 0
    %1581 = vmatprep.mubr.bf16.mxu0 0
    %1582 = vmatmul.mubr.bf16.gmra.mxu0 %v1452
    %v1583 = vpop.f32.mrf.mxu0
    %v1584 = vadd.f32 0.0, %v1583
    %v1585 = vpop.f32.mrf.mxu0
    %v1586 = vadd.f32 0.0, %v1585
    %v1587 = vpop.f32.mrf.mxu0
    %v1588 = vadd.f32 0.0, %v1587
    %v1589 = vpop.f32.mrf.mxu0
    %v1590 = vadd.f32 0.0, %v1589
    %1591 = vmatprep.mubr.bf16.mxu0 0
    %1592 = vmatmul.mubr.bf16.gmra.mxu0 %v1454
    %v1593 = vpop.f32.mrf.mxu0
    %v1594 = vadd.f32 0.0, %v1593
    %v1595 = vpop.f32.mrf.mxu0
    %v1596 = vadd.f32 0.0, %v1595
    %v1597 = vpop.f32.mrf.mxu0
    %v1598 = vadd.f32 0.0, %v1597
    %v1599 = vpop.f32.mrf.mxu0
    %v1600 = vadd.f32 0.0, %v1599
    %1601 = vmatprep.mubr.bf16.mxu0 0
    %1602 = vmatmul.mubr.bf16.gmra.mxu0 %v1456
    %v1603 = vpop.f32.mrf.mxu0
    %v1604 = vadd.f32 0.0, %v1603
    %v1605 = vpop.f32.mrf.mxu0
    %v1606 = vadd.f32 0.0, %v1605
    %v1607 = vpop.f32.mrf.mxu0
    %v1608 = vadd.f32 0.0, %v1607
    %v1609 = vpop.f32.mrf.mxu0
    %v1610 = vadd.f32 0.0, %v1609
    %1611 = vmatprep.mubr.bf16.mxu0 0
    %1612 = vmatmul.mubr.bf16.gmra.mxu0 %v1458
    %v1613 = vpop.f32.mrf.mxu0
    %v1614 = vadd.f32 0.0, %v1613
    %v1615 = vpop.f32.mrf.mxu0
    %v1616 = vadd.f32 0.0, %v1615
    %v1617 = vpop.f32.mrf.mxu0
    %v1618 = vadd.f32 0.0, %v1617
    %v1619 = vpop.f32.mrf.mxu0
    %v1620 = vadd.f32 0.0, %v1619
    %1621 = vmatprep.mubr.bf16.mxu0 0
    %1622 = vmatmul.mubr.bf16.gmra.mxu0 %v1460
    %v1623 = vpop.f32.mrf.mxu0
    %v1624 = vadd.f32 0.0, %v1623
    %v1625 = vpop.f32.mrf.mxu0
    %v1626 = vadd.f32 0.0, %v1625
    %v1627 = vpop.f32.mrf.mxu0
    %v1628 = vadd.f32 0.0, %v1627
    %v1629 = vpop.f32.mrf.mxu0
    %v1630 = vadd.f32 0.0, %v1629
    %1631 = vmatprep.mubr.bf16.mxu0 0
    %1632 = vmatmul.mubr.bf16.gmra.mxu0 %v1462
    %v1633 = vpop.f32.mrf.mxu0
    %v1634 = vadd.f32 0.0, %v1633
    %v1635 = vpop.f32.mrf.mxu0
    %v1636 = vadd.f32 0.0, %v1635
    %v1637 = vpop.f32.mrf.mxu0
    %v1638 = vadd.f32 0.0, %v1637
    %v1639 = vpop.f32.mrf.mxu0
    %v1640 = vadd.f32 0.0, %v1639
    %1641 = vdwg.mxu0
    %v1642 = vadd.f32 %v1404, %v1584
    %v1643 = vadd.f32 %v1405, %v1586
    %v1644 = vadd.f32 %v1406, %v1588
    %v1645 = vadd.f32 %v1407, %v1590
    %v1646 = vadd.f32 %v1408, %v1594
    %v1647 = vadd.f32 %v1409, %v1596
    %v1648 = vadd.f32 %v1410, %v1598
    %v1649 = vadd.f32 %v1411, %v1600
    %v1650 = vadd.f32 %v1412, %v1604
    %v1651 = vadd.f32 %v1413, %v1606
    %v1652 = vadd.f32 %v1414, %v1608
    %v1653 = vadd.f32 %v1415, %v1610
    %v1654 = vadd.f32 %v1416, %v1614
    %v1655 = vadd.f32 %v1417, %v1616
    %v1656 = vadd.f32 %v1418, %v1618
    %v1657 = vadd.f32 %v1419, %v1620
    %v1658 = vadd.f32 %v1420, %v1624
    %v1659 = vadd.f32 %v1421, %v1626
    %v1660 = vadd.f32 %v1422, %v1628
    %v1661 = vadd.f32 %v1423, %v1630
    %v1662 = vadd.f32 %v1424, %v1634
    %v1663 = vadd.f32 %v1425, %v1636
    %v1664 = vadd.f32 %v1426, %v1638
    %v1665 = vadd.f32 %v1427, %v1640
    %v1666 = vld [vmem:[%s5] ss:$4 sm:$0x3]
    %v1668 = vlaneseq
    %v1669 = vshrl.u32 %v1668, 7
    %v1670 = vsub.s32 0, %v1669
    %v1671 = vrot.slane %v1666, %v1670
    %v1672 = vlaneseq
    %v1673 = vshrl.u32 %v1672, 7
    %v1674 = vsub.s32 1, %v1673
    %v1675 = vrot.slane %v1666, %v1674
    %v1678 = vadd.f32 %v1642, %v1671
    %v1679 = vadd.f32 %v1643, %v1675
    %v1680 = vadd.f32 %v1644, %v1671
    %v1681 = vadd.f32 %v1645, %v1675
    %v1682 = vadd.f32 %v1646, %v1671
    %v1683 = vadd.f32 %v1647, %v1675
    %v1684 = vadd.f32 %v1648, %v1671
    %v1685 = vadd.f32 %v1649, %v1675
    %v1686 = vadd.f32 %v1650, %v1671
    %v1687 = vadd.f32 %v1651, %v1675
    %v1688 = vadd.f32 %v1652, %v1671
    %v1689 = vadd.f32 %v1653, %v1675
    %v1690 = vadd.f32 %v1654, %v1671
    %v1691 = vadd.f32 %v1655, %v1675
    %v1692 = vadd.f32 %v1656, %v1671
    %v1693 = vadd.f32 %v1657, %v1675
    %v1694 = vadd.f32 %v1658, %v1671
    %v1695 = vadd.f32 %v1659, %v1675
    %v1696 = vadd.f32 %v1660, %v1671
    %v1697 = vadd.f32 %v1661, %v1675
    %v1698 = vadd.f32 %v1662, %v1671
    %v1699 = vadd.f32 %v1663, %v1675
    %v1700 = vadd.f32 %v1664, %v1671
    %v1701 = vadd.f32 %v1665, %v1675
    %v1702 = vmax.f32 %v1678, 0.0
    %v1703 = vmax.f32 %v1679, 0.0
    %v1704 = vmax.f32 %v1680, 0.0
    %v1705 = vmax.f32 %v1681, 0.0
    %v1706 = vmax.f32 %v1682, 0.0
    %v1707 = vmax.f32 %v1683, 0.0
    %v1708 = vmax.f32 %v1684, 0.0
    %v1709 = vmax.f32 %v1685, 0.0
    %v1710 = vmax.f32 %v1686, 0.0
    %v1711 = vmax.f32 %v1687, 0.0
    %v1712 = vmax.f32 %v1688, 0.0
    %v1713 = vmax.f32 %v1689, 0.0
    %v1714 = vmax.f32 %v1690, 0.0
    %v1715 = vmax.f32 %v1691, 0.0
    %v1716 = vmax.f32 %v1692, 0.0
    %v1717 = vmax.f32 %v1693, 0.0
    %v1718 = vmax.f32 %v1694, 0.0
    %v1719 = vmax.f32 %v1695, 0.0
    %v1720 = vmax.f32 %v1696, 0.0
    %v1721 = vmax.f32 %v1697, 0.0
    %v1722 = vmax.f32 %v1698, 0.0
    %v1723 = vmax.f32 %v1699, 0.0
    %v1724 = vmax.f32 %v1700, 0.0
    %v1725 = vmax.f32 %v1701, 0.0
    %v1726 = vpack.c.bf16 %v1704, %v1702
    %v1727 = vpack.c.bf16 %v1705, %v1703
    %v1728 = vpack.c.bf16 %v1708, %v1706
    %v1729 = vpack.c.bf16 %v1709, %v1707
    %v1730 = vpack.c.bf16 %v1712, %v1710
    %v1731 = vpack.c.bf16 %v1713, %v1711
    %v1732 = vpack.c.bf16 %v1716, %v1714
    %v1733 = vpack.c.bf16 %v1717, %v1715
    %v1734 = vpack.c.bf16 %v1720, %v1718
    %v1735 = vpack.c.bf16 %v1721, %v1719
    %v1736 = vpack.c.bf16 %v1724, %v1722
    %v1737 = vpack.c.bf16 %v1725, %v1723
    %v1750 = vunpack.c.l.b16 %v1726
    %v1751 = vunpack.c.l.b16 %v1727
    %v1752 = vunpack.c.h.b16 %v1726
    %v1753 = vunpack.c.h.b16 %v1727
    %v1754 = vunpack.c.l.b16 %v1728
    %v1755 = vunpack.c.l.b16 %v1729
    %v1756 = vunpack.c.h.b16 %v1728
    %v1757 = vunpack.c.h.b16 %v1729
    %v1758 = vunpack.c.l.b16 %v1730
    %v1759 = vunpack.c.l.b16 %v1731
    %v1760 = vunpack.c.h.b16 %v1730
    %v1761 = vunpack.c.h.b16 %v1731
    %v1762 = vunpack.c.l.b16 %v1732
    %v1763 = vunpack.c.l.b16 %v1733
    %v1764 = vunpack.c.h.b16 %v1732
    %v1765 = vunpack.c.h.b16 %v1733
    %v1766 = vunpack.c.l.b16 %v1734
    %v1767 = vunpack.c.l.b16 %v1735
    %v1768 = vunpack.c.h.b16 %v1734
    %v1769 = vunpack.c.h.b16 %v1735
    %v1770 = vunpack.c.l.b16 %v1736
    %v1771 = vunpack.c.l.b16 %v1737
    %v1772 = vunpack.c.h.b16 %v1736
    %v1773 = vunpack.c.h.b16 %v1737
    %v1774 = vpack.c.b16 %v1751, %v1750
    %v1775 = vpack.c.b16 %v1753, %v1752
    %v1776 = vpack.c.b16 %v1755, %v1754
    %v1777 = vpack.c.b16 %v1757, %v1756
    %v1778 = vpack.c.b16 %v1759, %v1758
    %v1779 = vpack.c.b16 %v1761, %v1760
    %v1780 = vpack.c.b16 %v1763, %v1762
    %v1781 = vpack.c.b16 %v1765, %v1764
    %v1782 = vpack.c.b16 %v1767, %v1766
    %v1783 = vpack.c.b16 %v1769, %v1768
    %v1784 = vpack.c.b16 %v1771, %v1770
    %v1785 = vpack.c.b16 %v1773, %v1772
    %1798 = vst [vmem:[#allocation2 + $0x8] sm:$0xff] %v1774
    %1799 = vst [vmem:[#allocation2 + $0x10] sm:$0xff] %v1775
    %1800 = vst [vmem:[#allocation2 + $0x18] sm:$0xff] %v1776
    %1801 = vst [vmem:[#allocation2 + $0x20] sm:$0xff] %v1777
    %1802 = vst [vmem:[#allocation2 + $0x28] sm:$0xff] %v1778
    %1803 = vst [vmem:[#allocation2 + $0x30] sm:$0xff] %v1779
    %1804 = vst [vmem:[#allocation2 + $0x38] sm:$0xff] %v1780
    %1805 = vst [vmem:[#allocation2 + $0x40] sm:$0xff] %v1781
    %1806 = vst [vmem:[#allocation2 + $0x48] sm:$0xff] %v1782
    %1807 = vst [vmem:[#allocation2 + $0x50] sm:$0xff] %v1783
    %1808 = vst [vmem:[#allocation2 + $0x58] sm:$0xff] %v1784
    %1809 = vst [vmem:[#allocation2 + $0x60] sm:$0xff] %v1785
    %1810 = vst [vmem:[#allocation2 + $0x18] sm:$0xff] 0
    %1811 = vst [vmem:[#allocation2 + $0x30] sm:$0xff] 0
    %1812 = vst [vmem:[#allocation2 + $0x48] sm:$0xff] 0
    %1813 = vst [vmem:[#allocation2 + $0x60] sm:$0xff] 0
    %v1814 = vld [vmem:[#allocation2] sm:$0x88]
    %v1815 = vld [vmem:[#allocation2 + $0x8] sm:$0xff]
    %v1816 = vld [vmem:[#allocation2 + $0x10] sm:$0xff]
    %v1817 = vld [vmem:[#allocation2 + $0x18] sm:$0xff]
    %v1818 = vld [vmem:[#allocation2 + $0x20] sm:$0xff]
    %v1819 = vld [vmem:[#allocation2 + $0x28] sm:$0xff]
    %v1820 = vld [vmem:[#allocation2 + $0x30] sm:$0xff]
    %v1821 = vld [vmem:[#allocation2 + $0x38] sm:$0xff]
    %v1822 = vld [vmem:[#allocation2 + $0x40] sm:$0xff]
    %v1823 = vld [vmem:[#allocation2 + $0x48] sm:$0xff]
    %v1824 = vld [vmem:[#allocation2 + $0x50] sm:$0xff]
    %v1825 = vld [vmem:[#allocation2 + $0x58] sm:$0xff]
    %v1826 = vld [vmem:[#allocation2 + $0x60] sm:$0x77]
    %v1827 = vld [vmem:[#allocation8] sm:$0xff]
    %v1828 = vld [vmem:[#allocation8 + $0x8] sm:$0xff]
    %v1829 = vld [vmem:[#allocation8 + $0x10] sm:$0xff]
    %v1830 = vld [vmem:[#allocation8 + $0x18] sm:$0xff]
    %v1831 = vld [vmem:[#allocation8 + $0x20] sm:$0xff]
    %v1832 = vld [vmem:[#allocation8 + $0x28] sm:$0xff]
    %v1833 = vld [vmem:[#allocation8 + $0x30] sm:$0xff]
    %v1834 = vld [vmem:[#allocation8 + $0x38] sm:$0xff]
    %v1835 = vld [vmem:[#allocation8 + $0x40] sm:$0xff]
    %v1836 = vld [vmem:[#allocation8 + $0x48] sm:$0xff]
    %v1837 = vld [vmem:[#allocation8 + $0x50] sm:$0xff]
    %v1838 = vld [vmem:[#allocation8 + $0x58] sm:$0xff]
    %v1839 = vld [vmem:[#allocation8 + $0x60] sm:$0xff]
    %v1840 = vld [vmem:[#allocation8 + $0x68] sm:$0xff]
    %v1841 = vld [vmem:[#allocation8 + $0x70] sm:$0xff]
    %v1842 = vld [vmem:[#allocation8 + $0x78] sm:$0xff]
    %v1843 = vld [vmem:[#allocation8 + $0x80] sm:$0xff]
    %v1844 = vld [vmem:[#allocation8 + $0x88] sm:$0xff]
    %v1845 = vld [vmem:[#allocation8 + $0x90] sm:$0xff]
    %v1846 = vld [vmem:[#allocation8 + $0x98] sm:$0xff]
    %v1847 = vld [vmem:[#allocation8 + $0xa0] sm:$0xff]
    %v1848 = vld [vmem:[#allocation8 + $0xa8] sm:$0xff]
    %v1849 = vld [vmem:[#allocation8 + $0xb0] sm:$0xff]
    %v1850 = vld [vmem:[#allocation8 + $0xb8] sm:$0xff]
    %v1851 = vld [vmem:[#allocation8 + $0xc0] sm:$0xff]
    %v1852 = vld [vmem:[#allocation8 + $0xc8] sm:$0xff]
    %v1853 = vld [vmem:[#allocation8 + $0xd0] sm:$0xff]
    %v1854 = vld [vmem:[#allocation8 + $0xd8] sm:$0xff]
    %v1855 = vld [vmem:[#allocation8 + $0xe0] sm:$0xff]
    %v1856 = vld [vmem:[#allocation8 + $0xe8] sm:$0xff]
    %v1857 = vld [vmem:[#allocation8 + $0xf0] sm:$0xff]
    %v1858 = vld [vmem:[#allocation8 + $0xf8] sm:$0xff]
    %v1859 = vld [vmem:[#allocation2 + $0x60] sm:$0xff]
    %s1860 = scalar_lea.vmem [#allocation8], 256
    %v1861 = vld [vmem:[%s1860] sm:$0xff]
    %v1862 = vld [vmem:[%s1860 + $0x8] sm:$0xff]
    %v1863 = vld [vmem:[%s1860 + $0x10] sm:$0xff]
    %v1864 = vld [vmem:[%s1860 + $0x18] sm:$0xff]
    %v1865 = vld [vmem:[%s1860 + $0x20] sm:$0xff]
    %v1866 = vld [vmem:[%s1860 + $0x28] sm:$0xff]
    %v1867 = vld [vmem:[%s1860 + $0x30] sm:$0xff]
    %v1868 = vld [vmem:[%s1860 + $0x38] sm:$0xff]
    %v1869 = vld [vmem:[%s1860 + $0x40] sm:$0xff]
    %v1870 = vld [vmem:[%s1860 + $0x48] sm:$0xff]
    %v1871 = vld [vmem:[%s1860 + $0x50] sm:$0xff]
    %v1872 = vld [vmem:[%s1860 + $0x58] sm:$0xff]
    %v1873 = vld [vmem:[%s1860 + $0x60] sm:$0xff]
    %v1874 = vld [vmem:[%s1860 + $0x68] sm:$0xff]
    %v1875 = vld [vmem:[%s1860 + $0x70] sm:$0xff]
    %v1876 = vld [vmem:[%s1860 + $0x78] sm:$0xff]
    %v1877 = vld [vmem:[%s1860 + $0x80] sm:$0xff]
    %v1878 = vld [vmem:[%s1860 + $0x88] sm:$0xff]
    %v1879 = vld [vmem:[%s1860 + $0x90] sm:$0xff]
    %v1880 = vld [vmem:[%s1860 + $0x98] sm:$0xff]
    %v1881 = vld [vmem:[%s1860 + $0xa0] sm:$0xff]
    %v1882 = vld [vmem:[%s1860 + $0xa8] sm:$0xff]
    %v1883 = vld [vmem:[%s1860 + $0xb0] sm:$0xff]
    %v1884 = vld [vmem:[%s1860 + $0xb8] sm:$0xff]
    %v1885 = vld [vmem:[%s1860 + $0xc0] sm:$0xff]
    %v1886 = vld [vmem:[%s1860 + $0xc8] sm:$0xff]
    %v1887 = vld [vmem:[%s1860 + $0xd0] sm:$0xff]
    %v1888 = vld [vmem:[%s1860 + $0xd8] sm:$0xff]
    %v1889 = vld [vmem:[%s1860 + $0xe0] sm:$0xff]
    %v1890 = vld [vmem:[%s1860 + $0xe8] sm:$0xff]
    %v1891 = vld [vmem:[%s1860 + $0xf0] sm:$0xff]
    %v1892 = vld [vmem:[%s1860 + $0xf8] sm:$0xff]
    %v1906 = vunpack.c.l.b16 %v1814
    %v1907 = vunpack.c.h.b16 %v1814
    %v1908 = vunpack.c.l.b16 %v1815
    %v1909 = vunpack.c.h.b16 %v1815
    %v1910 = vunpack.c.l.b16 %v1816
    %v1911 = vunpack.c.h.b16 %v1816
    %v1912 = vunpack.c.l.b16 %v1817
    %v1913 = vunpack.c.h.b16 %v1817
    %v1914 = vunpack.c.l.b16 %v1818
    %v1915 = vunpack.c.h.b16 %v1818
    %v1916 = vunpack.c.l.b16 %v1819
    %v1917 = vunpack.c.h.b16 %v1819
    %v1918 = vunpack.c.l.b16 %v1820
    %v1919 = vunpack.c.h.b16 %v1820
    %v1920 = vunpack.c.l.b16 %v1821
    %v1921 = vunpack.c.h.b16 %v1821
    %v1922 = vunpack.c.l.b16 %v1822
    %v1923 = vunpack.c.h.b16 %v1822
    %v1924 = vunpack.c.l.b16 %v1823
    %v1925 = vunpack.c.h.b16 %v1823
    %v1926 = vunpack.c.l.b16 %v1824
    %v1927 = vunpack.c.h.b16 %v1824
    %v1928 = vunpack.c.l.b16 %v1825
    %v1929 = vunpack.c.h.b16 %v1825
    %v1930 = vunpack.c.l.b16 %v1859
    %v1931 = vunpack.c.h.b16 %v1859
    %v1932 = vpack.c.b16 %v1908, %v1906
    %v1933 = vpack.c.b16 %v1909, %v1907
    %v1934 = vpack.c.b16 %v1912, %v1910
    %v1935 = vpack.c.b16 %v1913, %v1911
    %v1936 = vpack.c.b16 %v1916, %v1914
    %v1937 = vpack.c.b16 %v1917, %v1915
    %v1938 = vpack.c.b16 %v1920, %v1918
    %v1939 = vpack.c.b16 %v1921, %v1919
    %v1940 = vpack.c.b16 %v1924, %v1922
    %v1941 = vpack.c.b16 %v1925, %v1923
    %v1942 = vpack.c.b16 %v1928, %v1926
    %v1943 = vpack.c.b16 %v1929, %v1927
    %v1944 = vpack.c.b16 %v1930, %v1930
    %v1945 = vpack.c.b16 %v1931, %v1931
    %v1947 = vshrl.u32 %v1932, 16
    %v1949 = vrot.slane %v1947, 3
    %v1950 = vshll.u32 %v1932, 16
    %v1952 = vrot.slane %v1950, 4
    %v1953 = vor.u32 %v1949, %v1952
    %v1955 = vshrl.u32 %v1934, 16
    %v1957 = vrot.slane %v1955, 3
    %v1958 = vshll.u32 %v1934, 16
    %v1960 = vrot.slane %v1958, 4
    %v1961 = vor.u32 %v1957, %v1960
    %v1962 = vsel %vm445, %v1953, %v1961
    %v1964 = vshrl.u32 %v1933, 16
    %v1966 = vrot.slane %v1964, 3
    %v1967 = vshll.u32 %v1933, 16
    %v1969 = vrot.slane %v1967, 4
    %v1970 = vor.u32 %v1966, %v1969
    %v1972 = vshrl.u32 %v1935, 16
    %v1974 = vrot.slane %v1972, 3
    %v1975 = vshll.u32 %v1935, 16
    %v1977 = vrot.slane %v1975, 4
    %v1978 = vor.u32 %v1974, %v1977
    %v1979 = vsel %vm445, %v1970, %v1978
    %v1981 = vshrl.u32 %v1936, 16
    %v1983 = vrot.slane %v1981, 3
    %v1984 = vshll.u32 %v1936, 16
    %v1986 = vrot.slane %v1984, 4
    %v1987 = vor.u32 %v1983, %v1986
    %v1988 = vsel %vm445, %v1961, %v1987
    %v1990 = vshrl.u32 %v1937, 16
    %v1992 = vrot.slane %v1990, 3
    %v1993 = vshll.u32 %v1937, 16
    %v1995 = vrot.slane %v1993, 4
    %v1996 = vor.u32 %v1992, %v1995
    %v1997 = vsel %vm445, %v1978, %v1996
    %v1999 = vshrl.u32 %v1938, 16
    %v2001 = vrot.slane %v1999, 3
    %v2002 = vshll.u32 %v1938, 16
    %v2004 = vrot.slane %v2002, 4
    %v2005 = vor.u32 %v2001, %v2004
    %v2006 = vsel %vm445, %v1987, %v2005
    %v2008 = vshrl.u32 %v1939, 16
    %v2010 = vrot.slane %v2008, 3
    %v2011 = vshll.u32 %v1939, 16
    %v2013 = vrot.slane %v2011, 4
    %v2014 = vor.u32 %v2010, %v2013
    %v2015 = vsel %vm445, %v1996, %v2014
    %v2017 = vshrl.u32 %v1940, 16
    %v2019 = vrot.slane %v2017, 3
    %v2020 = vshll.u32 %v1940, 16
    %v2022 = vrot.slane %v2020, 4
    %v2023 = vor.u32 %v2019, %v2022
    %v2024 = vsel %vm445, %v2005, %v2023
    %v2026 = vshrl.u32 %v1941, 16
    %v2028 = vrot.slane %v2026, 3
    %v2029 = vshll.u32 %v1941, 16
    %v2031 = vrot.slane %v2029, 4
    %v2032 = vor.u32 %v2028, %v2031
    %v2033 = vsel %vm445, %v2014, %v2032
    %v2035 = vshrl.u32 %v1942, 16
    %v2037 = vrot.slane %v2035, 3
    %v2038 = vshll.u32 %v1942, 16
    %v2040 = vrot.slane %v2038, 4
    %v2041 = vor.u32 %v2037, %v2040
    %v2042 = vsel %vm445, %v2023, %v2041
    %v2044 = vshrl.u32 %v1943, 16
    %v2046 = vrot.slane %v2044, 3
    %v2047 = vshll.u32 %v1943, 16
    %v2049 = vrot.slane %v2047, 4
    %v2050 = vor.u32 %v2046, %v2049
    %v2051 = vsel %vm445, %v2032, %v2050
    %v2053 = vshrl.u32 %v1944, 16
    %v2055 = vrot.slane %v2053, 3
    %v2056 = vshll.u32 %v1944, 16
    %v2058 = vrot.slane %v2056, 4
    %v2059 = vor.u32 %v2055, %v2058
    %v2060 = vsel %vm445, %v2041, %v2059
    %v2062 = vshrl.u32 %v1945, 16
    %v2064 = vrot.slane %v2062, 3
    %v2065 = vshll.u32 %v1945, 16
    %v2067 = vrot.slane %v2065, 4
    %v2068 = vor.u32 %v2064, %v2067
    %v2069 = vsel %vm445, %v2050, %v2068
    %v2114 = vunpack.c.l.b16 %v1861
    %v2115 = vunpack.c.h.b16 %v1861
    %v2116 = vunpack.c.l.b16 %v1862
    %v2117 = vunpack.c.h.b16 %v1862
    %v2118 = vunpack.c.l.b16 %v1863
    %v2119 = vunpack.c.h.b16 %v1863
    %v2120 = vunpack.c.l.b16 %v1864
    %v2121 = vunpack.c.h.b16 %v1864
    %v2122 = vunpack.c.l.b16 %v1865
    %v2123 = vunpack.c.h.b16 %v1865
    %v2124 = vunpack.c.l.b16 %v1866
    %v2125 = vunpack.c.h.b16 %v1866
    %v2126 = vunpack.c.l.b16 %v1867
    %v2127 = vunpack.c.h.b16 %v1867
    %v2128 = vunpack.c.l.b16 %v1868
    %v2129 = vunpack.c.h.b16 %v1868
    %v2130 = vunpack.c.l.b16 %v1869
    %v2131 = vunpack.c.h.b16 %v1869
    %v2132 = vunpack.c.l.b16 %v1870
    %v2133 = vunpack.c.h.b16 %v1870
    %v2134 = vunpack.c.l.b16 %v1871
    %v2135 = vunpack.c.h.b16 %v1871
    %v2136 = vunpack.c.l.b16 %v1872
    %v2137 = vunpack.c.h.b16 %v1872
    %v2138 = vunpack.c.l.b16 %v1873
    %v2139 = vunpack.c.h.b16 %v1873
    %v2140 = vunpack.c.l.b16 %v1874
    %v2141 = vunpack.c.h.b16 %v1874
    %v2142 = vunpack.c.l.b16 %v1875
    %v2143 = vunpack.c.h.b16 %v1875
    %v2144 = vunpack.c.l.b16 %v1876
    %v2145 = vunpack.c.h.b16 %v1876
    %v2146 = vunpack.c.l.b16 %v1877
    %v2147 = vunpack.c.h.b16 %v1877
    %v2148 = vunpack.c.l.b16 %v1878
    %v2149 = vunpack.c.h.b16 %v1878
    %v2150 = vunpack.c.l.b16 %v1879
    %v2151 = vunpack.c.h.b16 %v1879
    %v2152 = vunpack.c.l.b16 %v1880
    %v2153 = vunpack.c.h.b16 %v1880
    %v2154 = vunpack.c.l.b16 %v1881
    %v2155 = vunpack.c.h.b16 %v1881
    %v2156 = vunpack.c.l.b16 %v1882
    %v2157 = vunpack.c.h.b16 %v1882
    %v2158 = vunpack.c.l.b16 %v1883
    %v2159 = vunpack.c.h.b16 %v1883
    %v2160 = vunpack.c.l.b16 %v1884
    %v2161 = vunpack.c.h.b16 %v1884
    %v2162 = vunpack.c.l.b16 %v1885
    %v2163 = vunpack.c.h.b16 %v1885
    %v2164 = vunpack.c.l.b16 %v1886
    %v2165 = vunpack.c.h.b16 %v1886
    %v2166 = vunpack.c.l.b16 %v1887
    %v2167 = vunpack.c.h.b16 %v1887
    %v2168 = vunpack.c.l.b16 %v1888
    %v2169 = vunpack.c.h.b16 %v1888
    %v2170 = vunpack.c.l.b16 %v1889
    %v2171 = vunpack.c.h.b16 %v1889
    %v2172 = vunpack.c.l.b16 %v1890
    %v2173 = vunpack.c.h.b16 %v1890
    %v2174 = vunpack.c.l.b16 %v1891
    %v2175 = vunpack.c.h.b16 %v1891
    %v2176 = vunpack.c.l.b16 %v1892
    %v2177 = vunpack.c.h.b16 %v1892
    %v2178 = vpack.c.b16 %v2116, %v2114
    %v2179 = vpack.c.b16 %v2117, %v2115
    %v2180 = vpack.c.b16 %v2120, %v2118
    %v2181 = vpack.c.b16 %v2121, %v2119
    %v2182 = vpack.c.b16 %v2124, %v2122
    %v2183 = vpack.c.b16 %v2125, %v2123
    %v2184 = vpack.c.b16 %v2128, %v2126
    %v2185 = vpack.c.b16 %v2129, %v2127
    %v2186 = vpack.c.b16 %v2132, %v2130
    %v2187 = vpack.c.b16 %v2133, %v2131
    %v2188 = vpack.c.b16 %v2136, %v2134
    %v2189 = vpack.c.b16 %v2137, %v2135
    %v2190 = vpack.c.b16 %v2140, %v2138
    %v2191 = vpack.c.b16 %v2141, %v2139
    %v2192 = vpack.c.b16 %v2144, %v2142
    %v2193 = vpack.c.b16 %v2145, %v2143
    %v2194 = vpack.c.b16 %v2148, %v2146
    %v2195 = vpack.c.b16 %v2149, %v2147
    %v2196 = vpack.c.b16 %v2152, %v2150
    %v2197 = vpack.c.b16 %v2153, %v2151
    %v2198 = vpack.c.b16 %v2156, %v2154
    %v2199 = vpack.c.b16 %v2157, %v2155
    %v2200 = vpack.c.b16 %v2160, %v2158
    %v2201 = vpack.c.b16 %v2161, %v2159
    %v2202 = vpack.c.b16 %v2164, %v2162
    %v2203 = vpack.c.b16 %v2165, %v2163
    %v2204 = vpack.c.b16 %v2168, %v2166
    %v2205 = vpack.c.b16 %v2169, %v2167
    %v2206 = vpack.c.b16 %v2172, %v2170
    %v2207 = vpack.c.b16 %v2173, %v2171
    %v2208 = vpack.c.b16 %v2176, %v2174
    %v2209 = vpack.c.b16 %v2177, %v2175
    %2242 = vmatprep.subr.bf16.mxu0 %v2193
    %2243 = vmatpush1.bf16.msra.mxu0 %v2192
    %2244 = vmatprep.subr.bf16.mxu0 %v2191
    %2245 = vmatpush1.bf16.msra.mxu0 %v2190
    %2246 = vmatprep.subr.bf16.mxu0 %v2189
    %2247 = vmatpush1.bf16.msra.mxu0 %v2188
    %2248 = vmatprep.subr.bf16.mxu0 %v2187
    %2249 = vmatpush1.bf16.msra.mxu0 %v2186
    %2250 = vmatprep.subr.bf16.mxu0 %v2185
    %2251 = vmatpush1.bf16.msra.mxu0 %v2184
    %2252 = vmatprep.subr.bf16.mxu0 %v2183
    %2253 = vmatpush1.bf16.msra.mxu0 %v2182
    %2254 = vmatprep.subr.bf16.mxu0 %v2181
    %2255 = vmatpush1.bf16.msra.mxu0 %v2180
    %2256 = vmatprep.subr.bf16.mxu0 %v2179
    %2257 = vmatpush1.bf16.msra.mxu0 %v2178
    %2258 = vmatprep.subr.bf16.mxu0 %v2209
    %2259 = vmatpush2.bf16.msra.mxu0 %v2208
    %2260 = vmatprep.subr.bf16.mxu0 %v2207
    %2261 = vmatpush2.bf16.msra.mxu0 %v2206
    %2262 = vmatprep.subr.bf16.mxu0 %v2205
    %2263 = vmatpush2.bf16.msra.mxu0 %v2204
    %2264 = vmatprep.subr.bf16.mxu0 %v2203
    %2265 = vmatpush2.bf16.msra.mxu0 %v2202
    %2266 = vmatprep.subr.bf16.mxu0 %v2201
    %2267 = vmatpush2.bf16.msra.mxu0 %v2200
    %2268 = vmatprep.subr.bf16.mxu0 %v2199
    %2269 = vmatpush2.bf16.msra.mxu0 %v2198
    %2270 = vmatprep.subr.bf16.mxu0 %v2197
    %2271 = vmatpush2.bf16.msra.mxu0 %v2196
    %2272 = vmatprep.subr.bf16.mxu0 %v2195
    %2273 = vmatpush2.bf16.msra.mxu0 %v2194
    %2274 = vmatprep.mubr.bf16.mxu0 %v1979
    %2275 = vmatmul.mubr.bf16.gmra.mxu0 %v1962
    %v2276 = vpop.f32.mrf.mxu0
    %v2277 = vadd.f32 0.0, %v2276
    %v2278 = vpop.f32.mrf.mxu0
    %v2279 = vadd.f32 0.0, %v2278
    %v2280 = vpop.f32.mrf.mxu0
    %v2281 = vadd.f32 0.0, %v2280
    %v2282 = vpop.f32.mrf.mxu0
    %v2283 = vadd.f32 0.0, %v2282
    %2284 = vmatprep.mubr.bf16.mxu0 %v1997
    %2285 = vmatmul.mubr.bf16.gmra.mxu0 %v1988
    %v2286 = vpop.f32.mrf.mxu0
    %v2287 = vadd.f32 0.0, %v2286
    %v2288 = vpop.f32.mrf.mxu0
    %v2289 = vadd.f32 0.0, %v2288
    %v2290 = vpop.f32.mrf.mxu0
    %v2291 = vadd.f32 0.0, %v2290
    %v2292 = vpop.f32.mrf.mxu0
    %v2293 = vadd.f32 0.0, %v2292
    %2294 = vmatprep.mubr.bf16.mxu0 %v2015
    %2295 = vmatmul.mubr.bf16.gmra.mxu0 %v2006
    %v2296 = vpop.f32.mrf.mxu0
    %v2297 = vadd.f32 0.0, %v2296
    %v2298 = vpop.f32.mrf.mxu0
    %v2299 = vadd.f32 0.0, %v2298
    %v2300 = vpop.f32.mrf.mxu0
    %v2301 = vadd.f32 0.0, %v2300
    %v2302 = vpop.f32.mrf.mxu0
    %v2303 = vadd.f32 0.0, %v2302
    %2304 = vmatprep.mubr.bf16.mxu0 %v2033
    %2305 = vmatmul.mubr.bf16.gmra.mxu0 %v2024
    %v2306 = vpop.f32.mrf.mxu0
    %v2307 = vadd.f32 0.0, %v2306
    %v2308 = vpop.f32.mrf.mxu0
    %v2309 = vadd.f32 0.0, %v2308
    %v2310 = vpop.f32.mrf.mxu0
    %v2311 = vadd.f32 0.0, %v2310
    %v2312 = vpop.f32.mrf.mxu0
    %v2313 = vadd.f32 0.0, %v2312
    %2314 = vmatprep.mubr.bf16.mxu0 %v2051
    %2315 = vmatmul.mubr.bf16.gmra.mxu0 %v2042
    %v2316 = vpop.f32.mrf.mxu0
    %v2317 = vadd.f32 0.0, %v2316
    %v2318 = vpop.f32.mrf.mxu0
    %v2319 = vadd.f32 0.0, %v2318
    %v2320 = vpop.f32.mrf.mxu0
    %v2321 = vadd.f32 0.0, %v2320
    %v2322 = vpop.f32.mrf.mxu0
    %v2323 = vadd.f32 0.0, %v2322
    %2324 = vmatprep.mubr.bf16.mxu0 %v2069
    %2325 = vmatmul.mubr.bf16.gmra.mxu0 %v2060
    %v2326 = vpop.f32.mrf.mxu0
    %v2327 = vadd.f32 0.0, %v2326
    %v2328 = vpop.f32.mrf.mxu0
    %v2329 = vadd.f32 0.0, %v2328
    %v2330 = vpop.f32.mrf.mxu0
    %v2331 = vadd.f32 0.0, %v2330
    %v2332 = vpop.f32.mrf.mxu0
    %v2333 = vadd.f32 0.0, %v2332
    %2334 = vdwg.mxu0
    %v2336 = vunpack.c.l.b16 %v1826
    %v2337 = vunpack.c.h.b16 %v1826
    %v2338 = vpack.c.b16 %v2336, %v2336
    %v2339 = vpack.c.b16 %v2337, %v2337
    %v2340 = vrot.slane %v1932, 3
    %v2341 = vrot.slane %v1934, 3
    %v2342 = vsel %vm690, %v2340, %v2341
    %v2343 = vrot.slane %v1933, 3
    %v2344 = vrot.slane %v1935, 3
    %v2345 = vsel %vm690, %v2343, %v2344
    %v2346 = vrot.slane %v1936, 3
    %v2347 = vsel %vm690, %v2341, %v2346
    %v2348 = vrot.slane %v1937, 3
    %v2349 = vsel %vm690, %v2344, %v2348
    %v2350 = vrot.slane %v1938, 3
    %v2351 = vsel %vm690, %v2346, %v2350
    %v2352 = vrot.slane %v1939, 3
    %v2353 = vsel %vm690, %v2348, %v2352
    %v2354 = vrot.slane %v1940, 3
    %v2355 = vsel %vm690, %v2350, %v2354
    %v2356 = vrot.slane %v1941, 3
    %v2357 = vsel %vm690, %v2352, %v2356
    %v2358 = vrot.slane %v1942, 3
    %v2359 = vsel %vm690, %v2354, %v2358
    %v2360 = vrot.slane %v1943, 3
    %v2361 = vsel %vm690, %v2356, %v2360
    %v2362 = vrot.slane %v2338, 3
    %v2363 = vsel %vm690, %v2358, %v2362
    %v2364 = vrot.slane %v2339, 3
    %v2365 = vsel %vm690, %v2360, %v2364
    %v2410 = vunpack.c.l.b16 %v1827
    %v2411 = vunpack.c.h.b16 %v1827
    %v2412 = vunpack.c.l.b16 %v1828
    %v2413 = vunpack.c.h.b16 %v1828
    %v2414 = vunpack.c.l.b16 %v1829
    %v2415 = vunpack.c.h.b16 %v1829
    %v2416 = vunpack.c.l.b16 %v1830
    %v2417 = vunpack.c.h.b16 %v1830
    %v2418 = vunpack.c.l.b16 %v1831
    %v2419 = vunpack.c.h.b16 %v1831
    %v2420 = vunpack.c.l.b16 %v1832
    %v2421 = vunpack.c.h.b16 %v1832
    %v2422 = vunpack.c.l.b16 %v1833
    %v2423 = vunpack.c.h.b16 %v1833
    %v2424 = vunpack.c.l.b16 %v1834
    %v2425 = vunpack.c.h.b16 %v1834
    %v2426 = vunpack.c.l.b16 %v1835
    %v2427 = vunpack.c.h.b16 %v1835
    %v2428 = vunpack.c.l.b16 %v1836
    %v2429 = vunpack.c.h.b16 %v1836
    %v2430 = vunpack.c.l.b16 %v1837
    %v2431 = vunpack.c.h.b16 %v1837
    %v2432 = vunpack.c.l.b16 %v1838
    %v2433 = vunpack.c.h.b16 %v1838
    %v2434 = vunpack.c.l.b16 %v1839
    %v2435 = vunpack.c.h.b16 %v1839
    %v2436 = vunpack.c.l.b16 %v1840
    %v2437 = vunpack.c.h.b16 %v1840
    %v2438 = vunpack.c.l.b16 %v1841
    %v2439 = vunpack.c.h.b16 %v1841
    %v2440 = vunpack.c.l.b16 %v1842
    %v2441 = vunpack.c.h.b16 %v1842
    %v2442 = vunpack.c.l.b16 %v1843
    %v2443 = vunpack.c.h.b16 %v1843
    %v2444 = vunpack.c.l.b16 %v1844
    %v2445 = vunpack.c.h.b16 %v1844
    %v2446 = vunpack.c.l.b16 %v1845
    %v2447 = vunpack.c.h.b16 %v1845
    %v2448 = vunpack.c.l.b16 %v1846
    %v2449 = vunpack.c.h.b16 %v1846
    %v2450 = vunpack.c.l.b16 %v1847
    %v2451 = vunpack.c.h.b16 %v1847
    %v2452 = vunpack.c.l.b16 %v1848
    %v2453 = vunpack.c.h.b16 %v1848
    %v2454 = vunpack.c.l.b16 %v1849
    %v2455 = vunpack.c.h.b16 %v1849
    %v2456 = vunpack.c.l.b16 %v1850
    %v2457 = vunpack.c.h.b16 %v1850
    %v2458 = vunpack.c.l.b16 %v1851
    %v2459 = vunpack.c.h.b16 %v1851
    %v2460 = vunpack.c.l.b16 %v1852
    %v2461 = vunpack.c.h.b16 %v1852
    %v2462 = vunpack.c.l.b16 %v1853
    %v2463 = vunpack.c.h.b16 %v1853
    %v2464 = vunpack.c.l.b16 %v1854
    %v2465 = vunpack.c.h.b16 %v1854
    %v2466 = vunpack.c.l.b16 %v1855
    %v2467 = vunpack.c.h.b16 %v1855
    %v2468 = vunpack.c.l.b16 %v1856
    %v2469 = vunpack.c.h.b16 %v1856
    %v2470 = vunpack.c.l.b16 %v1857
    %v2471 = vunpack.c.h.b16 %v1857
    %v2472 = vunpack.c.l.b16 %v1858
    %v2473 = vunpack.c.h.b16 %v1858
    %v2474 = vpack.c.b16 %v2412, %v2410
    %v2475 = vpack.c.b16 %v2413, %v2411
    %v2476 = vpack.c.b16 %v2416, %v2414
    %v2477 = vpack.c.b16 %v2417, %v2415
    %v2478 = vpack.c.b16 %v2420, %v2418
    %v2479 = vpack.c.b16 %v2421, %v2419
    %v2480 = vpack.c.b16 %v2424, %v2422
    %v2481 = vpack.c.b16 %v2425, %v2423
    %v2482 = vpack.c.b16 %v2428, %v2426
    %v2483 = vpack.c.b16 %v2429, %v2427
    %v2484 = vpack.c.b16 %v2432, %v2430
    %v2485 = vpack.c.b16 %v2433, %v2431
    %v2486 = vpack.c.b16 %v2436, %v2434
    %v2487 = vpack.c.b16 %v2437, %v2435
    %v2488 = vpack.c.b16 %v2440, %v2438
    %v2489 = vpack.c.b16 %v2441, %v2439
    %v2490 = vpack.c.b16 %v2444, %v2442
    %v2491 = vpack.c.b16 %v2445, %v2443
    %v2492 = vpack.c.b16 %v2448, %v2446
    %v2493 = vpack.c.b16 %v2449, %v2447
    %v2494 = vpack.c.b16 %v2452, %v2450
    %v2495 = vpack.c.b16 %v2453, %v2451
    %v2496 = vpack.c.b16 %v2456, %v2454
    %v2497 = vpack.c.b16 %v2457, %v2455
    %v2498 = vpack.c.b16 %v2460, %v2458
    %v2499 = vpack.c.b16 %v2461, %v2459
    %v2500 = vpack.c.b16 %v2464, %v2462
    %v2501 = vpack.c.b16 %v2465, %v2463
    %v2502 = vpack.c.b16 %v2468, %v2466
    %v2503 = vpack.c.b16 %v2469, %v2467
    %v2504 = vpack.c.b16 %v2472, %v2470
    %v2505 = vpack.c.b16 %v2473, %v2471
    %2538 = vmatprep.subr.bf16.mxu0 %v2489
    %2539 = vmatpush1.bf16.msra.mxu0 %v2488
    %2540 = vmatprep.subr.bf16.mxu0 %v2487
    %2541 = vmatpush1.bf16.msra.mxu0 %v2486
    %2542 = vmatprep.subr.bf16.mxu0 %v2485
    %2543 = vmatpush1.bf16.msra.mxu0 %v2484
    %2544 = vmatprep.subr.bf16.mxu0 %v2483
    %2545 = vmatpush1.bf16.msra.mxu0 %v2482
    %2546 = vmatprep.subr.bf16.mxu0 %v2481
    %2547 = vmatpush1.bf16.msra.mxu0 %v2480
    %2548 = vmatprep.subr.bf16.mxu0 %v2479
    %2549 = vmatpush1.bf16.msra.mxu0 %v2478
    %2550 = vmatprep.subr.bf16.mxu0 %v2477
    %2551 = vmatpush1.bf16.msra.mxu0 %v2476
    %2552 = vmatprep.subr.bf16.mxu0 %v2475
    %2553 = vmatpush1.bf16.msra.mxu0 %v2474
    %2554 = vmatprep.subr.bf16.mxu0 %v2505
    %2555 = vmatpush2.bf16.msra.mxu0 %v2504
    %2556 = vmatprep.subr.bf16.mxu0 %v2503
    %2557 = vmatpush2.bf16.msra.mxu0 %v2502
    %2558 = vmatprep.subr.bf16.mxu0 %v2501
    %2559 = vmatpush2.bf16.msra.mxu0 %v2500
    %2560 = vmatprep.subr.bf16.mxu0 %v2499
    %2561 = vmatpush2.bf16.msra.mxu0 %v2498
    %2562 = vmatprep.subr.bf16.mxu0 %v2497
    %2563 = vmatpush2.bf16.msra.mxu0 %v2496
    %2564 = vmatprep.subr.bf16.mxu0 %v2495
    %2565 = vmatpush2.bf16.msra.mxu0 %v2494
    %2566 = vmatprep.subr.bf16.mxu0 %v2493
    %2567 = vmatpush2.bf16.msra.mxu0 %v2492
    %2568 = vmatprep.subr.bf16.mxu0 %v2491
    %2569 = vmatpush2.bf16.msra.mxu0 %v2490
    %2570 = vmatprep.mubr.bf16.mxu0 %v2345
    %2571 = vmatmul.mubr.bf16.gmra.mxu0 %v2342
    %v2572 = vpop.f32.mrf.mxu0
    %v2573 = vadd.f32 %v2277, %v2572
    %v2574 = vpop.f32.mrf.mxu0
    %v2575 = vadd.f32 %v2279, %v2574
    %v2576 = vpop.f32.mrf.mxu0
    %v2577 = vadd.f32 %v2281, %v2576
    %v2578 = vpop.f32.mrf.mxu0
    %v2579 = vadd.f32 %v2283, %v2578
    %2580 = vmatprep.mubr.bf16.mxu0 %v2349
    %2581 = vmatmul.mubr.bf16.gmra.mxu0 %v2347
    %v2582 = vpop.f32.mrf.mxu0
    %v2583 = vadd.f32 %v2287, %v2582
    %v2584 = vpop.f32.mrf.mxu0
    %v2585 = vadd.f32 %v2289, %v2584
    %v2586 = vpop.f32.mrf.mxu0
    %v2587 = vadd.f32 %v2291, %v2586
    %v2588 = vpop.f32.mrf.mxu0
    %v2589 = vadd.f32 %v2293, %v2588
    %2590 = vmatprep.mubr.bf16.mxu0 %v2353
    %2591 = vmatmul.mubr.bf16.gmra.mxu0 %v2351
    %v2592 = vpop.f32.mrf.mxu0
    %v2593 = vadd.f32 %v2297, %v2592
    %v2594 = vpop.f32.mrf.mxu0
    %v2595 = vadd.f32 %v2299, %v2594
    %v2596 = vpop.f32.mrf.mxu0
    %v2597 = vadd.f32 %v2301, %v2596
    %v2598 = vpop.f32.mrf.mxu0
    %v2599 = vadd.f32 %v2303, %v2598
    %2600 = vmatprep.mubr.bf16.mxu0 %v2357
    %2601 = vmatmul.mubr.bf16.gmra.mxu0 %v2355
    %v2602 = vpop.f32.mrf.mxu0
    %v2603 = vadd.f32 %v2307, %v2602
    %v2604 = vpop.f32.mrf.mxu0
    %v2605 = vadd.f32 %v2309, %v2604
    %v2606 = vpop.f32.mrf.mxu0
    %v2607 = vadd.f32 %v2311, %v2606
    %v2608 = vpop.f32.mrf.mxu0
    %v2609 = vadd.f32 %v2313, %v2608
    %2610 = vmatprep.mubr.bf16.mxu0 %v2361
    %2611 = vmatmul.mubr.bf16.gmra.mxu0 %v2359
    %v2612 = vpop.f32.mrf.mxu0
    %v2613 = vadd.f32 %v2317, %v2612
    %v2614 = vpop.f32.mrf.mxu0
    %v2615 = vadd.f32 %v2319, %v2614
    %v2616 = vpop.f32.mrf.mxu0
    %v2617 = vadd.f32 %v2321, %v2616
    %v2618 = vpop.f32.mrf.mxu0
    %v2619 = vadd.f32 %v2323, %v2618
    %2620 = vmatprep.mubr.bf16.mxu0 %v2365
    %2621 = vmatmul.mubr.bf16.gmra.mxu0 %v2363
    %v2622 = vpop.f32.mrf.mxu0
    %v2623 = vadd.f32 %v2327, %v2622
    %v2624 = vpop.f32.mrf.mxu0
    %v2625 = vadd.f32 %v2329, %v2624
    %v2626 = vpop.f32.mrf.mxu0
    %v2627 = vadd.f32 %v2331, %v2626
    %v2628 = vpop.f32.mrf.mxu0
    %v2629 = vadd.f32 %v2333, %v2628
    %2630 = vdwg.mxu0
    %s2631 = scalar_lea.vmem [#allocation8], 512
    %v2632 = vld [vmem:[%s2631] sm:$0xff]
    %v2633 = vld [vmem:[%s2631 + $0x8] sm:$0xff]
    %v2634 = vld [vmem:[%s2631 + $0x10] sm:$0xff]
    %v2635 = vld [vmem:[%s2631 + $0x18] sm:$0xff]
    %v2636 = vld [vmem:[%s2631 + $0x20] sm:$0xff]
    %v2637 = vld [vmem:[%s2631 + $0x28] sm:$0xff]
    %v2638 = vld [vmem:[%s2631 + $0x30] sm:$0xff]
    %v2639 = vld [vmem:[%s2631 + $0x38] sm:$0xff]
    %v2640 = vld [vmem:[%s2631 + $0x40] sm:$0xff]
    %v2641 = vld [vmem:[%s2631 + $0x48] sm:$0xff]
    %v2642 = vld [vmem:[%s2631 + $0x50] sm:$0xff]
    %v2643 = vld [vmem:[%s2631 + $0x58] sm:$0xff]
    %v2644 = vld [vmem:[%s2631 + $0x60] sm:$0xff]
    %v2645 = vld [vmem:[%s2631 + $0x68] sm:$0xff]
    %v2646 = vld [vmem:[%s2631 + $0x70] sm:$0xff]
    %v2647 = vld [vmem:[%s2631 + $0x78] sm:$0xff]
    %v2648 = vld [vmem:[%s2631 + $0x80] sm:$0xff]
    %v2649 = vld [vmem:[%s2631 + $0x88] sm:$0xff]
    %v2650 = vld [vmem:[%s2631 + $0x90] sm:$0xff]
    %v2651 = vld [vmem:[%s2631 + $0x98] sm:$0xff]
    %v2652 = vld [vmem:[%s2631 + $0xa0] sm:$0xff]
    %v2653 = vld [vmem:[%s2631 + $0xa8] sm:$0xff]
    %v2654 = vld [vmem:[%s2631 + $0xb0] sm:$0xff]
    %v2655 = vld [vmem:[%s2631 + $0xb8] sm:$0xff]
    %v2656 = vld [vmem:[%s2631 + $0xc0] sm:$0xff]
    %v2657 = vld [vmem:[%s2631 + $0xc8] sm:$0xff]
    %v2658 = vld [vmem:[%s2631 + $0xd0] sm:$0xff]
    %v2659 = vld [vmem:[%s2631 + $0xd8] sm:$0xff]
    %v2660 = vld [vmem:[%s2631 + $0xe0] sm:$0xff]
    %v2661 = vld [vmem:[%s2631 + $0xe8] sm:$0xff]
    %v2662 = vld [vmem:[%s2631 + $0xf0] sm:$0xff]
    %v2663 = vld [vmem:[%s2631 + $0xf8] sm:$0xff]
    %v2664 = vpack.c.b16 %v1910, %v1908
    %v2665 = vpack.c.b16 %v1911, %v1909
    %v2666 = vpack.c.b16 %v1914, %v1912
    %v2667 = vpack.c.b16 %v1915, %v1913
    %v2668 = vpack.c.b16 %v1918, %v1916
    %v2669 = vpack.c.b16 %v1919, %v1917
    %v2670 = vpack.c.b16 %v1922, %v1920
    %v2671 = vpack.c.b16 %v1923, %v1921
    %v2672 = vpack.c.b16 %v1926, %v1924
    %v2673 = vpack.c.b16 %v1927, %v1925
    %v2674 = vpack.c.b16 %v1930, %v1928
    %v2675 = vpack.c.b16 %v1931, %v1929
    %v2720 = vunpack.c.l.b16 %v2632
    %v2721 = vunpack.c.h.b16 %v2632
    %v2722 = vunpack.c.l.b16 %v2633
    %v2723 = vunpack.c.h.b16 %v2633
    %v2724 = vunpack.c.l.b16 %v2634
    %v2725 = vunpack.c.h.b16 %v2634
    %v2726 = vunpack.c.l.b16 %v2635
    %v2727 = vunpack.c.h.b16 %v2635
    %v2728 = vunpack.c.l.b16 %v2636
    %v2729 = vunpack.c.h.b16 %v2636
    %v2730 = vunpack.c.l.b16 %v2637
    %v2731 = vunpack.c.h.b16 %v2637
    %v2732 = vunpack.c.l.b16 %v2638
    %v2733 = vunpack.c.h.b16 %v2638
    %v2734 = vunpack.c.l.b16 %v2639
    %v2735 = vunpack.c.h.b16 %v2639
    %v2736 = vunpack.c.l.b16 %v2640
    %v2737 = vunpack.c.h.b16 %v2640
    %v2738 = vunpack.c.l.b16 %v2641
    %v2739 = vunpack.c.h.b16 %v2641
    %v2740 = vunpack.c.l.b16 %v2642
    %v2741 = vunpack.c.h.b16 %v2642
    %v2742 = vunpack.c.l.b16 %v2643
    %v2743 = vunpack.c.h.b16 %v2643
    %v2744 = vunpack.c.l.b16 %v2644
    %v2745 = vunpack.c.h.b16 %v2644
    %v2746 = vunpack.c.l.b16 %v2645
    %v2747 = vunpack.c.h.b16 %v2645
    %v2748 = vunpack.c.l.b16 %v2646
    %v2749 = vunpack.c.h.b16 %v2646
    %v2750 = vunpack.c.l.b16 %v2647
    %v2751 = vunpack.c.h.b16 %v2647
    %v2752 = vunpack.c.l.b16 %v2648
    %v2753 = vunpack.c.h.b16 %v2648
    %v2754 = vunpack.c.l.b16 %v2649
    %v2755 = vunpack.c.h.b16 %v2649
    %v2756 = vunpack.c.l.b16 %v2650
    %v2757 = vunpack.c.h.b16 %v2650
    %v2758 = vunpack.c.l.b16 %v2651
    %v2759 = vunpack.c.h.b16 %v2651
    %v2760 = vunpack.c.l.b16 %v2652
    %v2761 = vunpack.c.h.b16 %v2652
    %v2762 = vunpack.c.l.b16 %v2653
    %v2763 = vunpack.c.h.b16 %v2653
    %v2764 = vunpack.c.l.b16 %v2654
    %v2765 = vunpack.c.h.b16 %v2654
    %v2766 = vunpack.c.l.b16 %v2655
    %v2767 = vunpack.c.h.b16 %v2655
    %v2768 = vunpack.c.l.b16 %v2656
    %v2769 = vunpack.c.h.b16 %v2656
    %v2770 = vunpack.c.l.b16 %v2657
    %v2771 = vunpack.c.h.b16 %v2657
    %v2772 = vunpack.c.l.b16 %v2658
    %v2773 = vunpack.c.h.b16 %v2658
    %v2774 = vunpack.c.l.b16 %v2659
    %v2775 = vunpack.c.h.b16 %v2659
    %v2776 = vunpack.c.l.b16 %v2660
    %v2777 = vunpack.c.h.b16 %v2660
    %v2778 = vunpack.c.l.b16 %v2661
    %v2779 = vunpack.c.h.b16 %v2661
    %v2780 = vunpack.c.l.b16 %v2662
    %v2781 = vunpack.c.h.b16 %v2662
    %v2782 = vunpack.c.l.b16 %v2663
    %v2783 = vunpack.c.h.b16 %v2663
    %v2784 = vpack.c.b16 %v2722, %v2720
    %v2785 = vpack.c.b16 %v2723, %v2721
    %v2786 = vpack.c.b16 %v2726, %v2724
    %v2787 = vpack.c.b16 %v2727, %v2725
    %v2788 = vpack.c.b16 %v2730, %v2728
    %v2789 = vpack.c.b16 %v2731, %v2729
    %v2790 = vpack.c.b16 %v2734, %v2732
    %v2791 = vpack.c.b16 %v2735, %v2733
    %v2792 = vpack.c.b16 %v2738, %v2736
    %v2793 = vpack.c.b16 %v2739, %v2737
    %v2794 = vpack.c.b16 %v2742, %v2740
    %v2795 = vpack.c.b16 %v2743, %v2741
    %v2796 = vpack.c.b16 %v2746, %v2744
    %v2797 = vpack.c.b16 %v2747, %v2745
    %v2798 = vpack.c.b16 %v2750, %v2748
    %v2799 = vpack.c.b16 %v2751, %v2749
    %v2800 = vpack.c.b16 %v2754, %v2752
    %v2801 = vpack.c.b16 %v2755, %v2753
    %v2802 = vpack.c.b16 %v2758, %v2756
    %v2803 = vpack.c.b16 %v2759, %v2757
    %v2804 = vpack.c.b16 %v2762, %v2760
    %v2805 = vpack.c.b16 %v2763, %v2761
    %v2806 = vpack.c.b16 %v2766, %v2764
    %v2807 = vpack.c.b16 %v2767, %v2765
    %v2808 = vpack.c.b16 %v2770, %v2768
    %v2809 = vpack.c.b16 %v2771, %v2769
    %v2810 = vpack.c.b16 %v2774, %v2772
    %v2811 = vpack.c.b16 %v2775, %v2773
    %v2812 = vpack.c.b16 %v2778, %v2776
    %v2813 = vpack.c.b16 %v2779, %v2777
    %v2814 = vpack.c.b16 %v2782, %v2780
    %v2815 = vpack.c.b16 %v2783, %v2781
    %2848 = vmatprep.subr.bf16.mxu0 %v2799
    %2849 = vmatpush1.bf16.msra.mxu0 %v2798
    %2850 = vmatprep.subr.bf16.mxu0 %v2797
    %2851 = vmatpush1.bf16.msra.mxu0 %v2796
    %2852 = vmatprep.subr.bf16.mxu0 %v2795
    %2853 = vmatpush1.bf16.msra.mxu0 %v2794
    %2854 = vmatprep.subr.bf16.mxu0 %v2793
    %2855 = vmatpush1.bf16.msra.mxu0 %v2792
    %2856 = vmatprep.subr.bf16.mxu0 %v2791
    %2857 = vmatpush1.bf16.msra.mxu0 %v2790
    %2858 = vmatprep.subr.bf16.mxu0 %v2789
    %2859 = vmatpush1.bf16.msra.mxu0 %v2788
    %2860 = vmatprep.subr.bf16.mxu0 %v2787
    %2861 = vmatpush1.bf16.msra.mxu0 %v2786
    %2862 = vmatprep.subr.bf16.mxu0 %v2785
    %2863 = vmatpush1.bf16.msra.mxu0 %v2784
    %2864 = vmatprep.subr.bf16.mxu0 %v2815
    %2865 = vmatpush2.bf16.msra.mxu0 %v2814
    %2866 = vmatprep.subr.bf16.mxu0 %v2813
    %2867 = vmatpush2.bf16.msra.mxu0 %v2812
    %2868 = vmatprep.subr.bf16.mxu0 %v2811
    %2869 = vmatpush2.bf16.msra.mxu0 %v2810
    %2870 = vmatprep.subr.bf16.mxu0 %v2809
    %2871 = vmatpush2.bf16.msra.mxu0 %v2808
    %2872 = vmatprep.subr.bf16.mxu0 %v2807
    %2873 = vmatpush2.bf16.msra.mxu0 %v2806
    %2874 = vmatprep.subr.bf16.mxu0 %v2805
    %2875 = vmatpush2.bf16.msra.mxu0 %v2804
    %2876 = vmatprep.subr.bf16.mxu0 %v2803
    %2877 = vmatpush2.bf16.msra.mxu0 %v2802
    %2878 = vmatprep.subr.bf16.mxu0 %v2801
    %2879 = vmatpush2.bf16.msra.mxu0 %v2800
    %2880 = vmatprep.mubr.bf16.mxu0 %v2665
    %2881 = vmatmul.mubr.bf16.gmra.mxu0 %v2664
    %v2882 = vpop.f32.mrf.mxu0
    %v2883 = vadd.f32 0.0, %v2882
    %v2884 = vpop.f32.mrf.mxu0
    %v2885 = vadd.f32 0.0, %v2884
    %v2886 = vpop.f32.mrf.mxu0
    %v2887 = vadd.f32 0.0, %v2886
    %v2888 = vpop.f32.mrf.mxu0
    %v2889 = vadd.f32 0.0, %v2888
    %2890 = vmatprep.mubr.bf16.mxu0 %v2667
    %2891 = vmatmul.mubr.bf16.gmra.mxu0 %v2666
    %v2892 = vpop.f32.mrf.mxu0
    %v2893 = vadd.f32 0.0, %v2892
    %v2894 = vpop.f32.mrf.mxu0
    %v2895 = vadd.f32 0.0, %v2894
    %v2896 = vpop.f32.mrf.mxu0
    %v2897 = vadd.f32 0.0, %v2896
    %v2898 = vpop.f32.mrf.mxu0
    %v2899 = vadd.f32 0.0, %v2898
    %2900 = vmatprep.mubr.bf16.mxu0 %v2669
    %2901 = vmatmul.mubr.bf16.gmra.mxu0 %v2668
    %v2902 = vpop.f32.mrf.mxu0
    %v2903 = vadd.f32 0.0, %v2902
    %v2904 = vpop.f32.mrf.mxu0
    %v2905 = vadd.f32 0.0, %v2904
    %v2906 = vpop.f32.mrf.mxu0
    %v2907 = vadd.f32 0.0, %v2906
    %v2908 = vpop.f32.mrf.mxu0
    %v2909 = vadd.f32 0.0, %v2908
    %2910 = vmatprep.mubr.bf16.mxu0 %v2671
    %2911 = vmatmul.mubr.bf16.gmra.mxu0 %v2670
    %v2912 = vpop.f32.mrf.mxu0
    %v2913 = vadd.f32 0.0, %v2912
    %v2914 = vpop.f32.mrf.mxu0
    %v2915 = vadd.f32 0.0, %v2914
    %v2916 = vpop.f32.mrf.mxu0
    %v2917 = vadd.f32 0.0, %v2916
    %v2918 = vpop.f32.mrf.mxu0
    %v2919 = vadd.f32 0.0, %v2918
    %2920 = vmatprep.mubr.bf16.mxu0 %v2673
    %2921 = vmatmul.mubr.bf16.gmra.mxu0 %v2672
    %v2922 = vpop.f32.mrf.mxu0
    %v2923 = vadd.f32 0.0, %v2922
    %v2924 = vpop.f32.mrf.mxu0
    %v2925 = vadd.f32 0.0, %v2924
    %v2926 = vpop.f32.mrf.mxu0
    %v2927 = vadd.f32 0.0, %v2926
    %v2928 = vpop.f32.mrf.mxu0
    %v2929 = vadd.f32 0.0, %v2928
    %2930 = vmatprep.mubr.bf16.mxu0 %v2675
    %2931 = vmatmul.mubr.bf16.gmra.mxu0 %v2674
    %v2932 = vpop.f32.mrf.mxu0
    %v2933 = vadd.f32 0.0, %v2932
    %v2934 = vpop.f32.mrf.mxu0
    %v2935 = vadd.f32 0.0, %v2934
    %v2936 = vpop.f32.mrf.mxu0
    %v2937 = vadd.f32 0.0, %v2936
    %v2938 = vpop.f32.mrf.mxu0
    %v2939 = vadd.f32 0.0, %v2938
    %2940 = vdwg.mxu0
    %v2941 = vadd.f32 %v2573, %v2883
    %v2942 = vadd.f32 %v2575, %v2885
    %v2943 = vadd.f32 %v2577, %v2887
    %v2944 = vadd.f32 %v2579, %v2889
    %v2945 = vadd.f32 %v2583, %v2893
    %v2946 = vadd.f32 %v2585, %v2895
    %v2947 = vadd.f32 %v2587, %v2897
    %v2948 = vadd.f32 %v2589, %v2899
    %v2949 = vadd.f32 %v2593, %v2903
    %v2950 = vadd.f32 %v2595, %v2905
    %v2951 = vadd.f32 %v2597, %v2907
    %v2952 = vadd.f32 %v2599, %v2909
    %v2953 = vadd.f32 %v2603, %v2913
    %v2954 = vadd.f32 %v2605, %v2915
    %v2955 = vadd.f32 %v2607, %v2917
    %v2956 = vadd.f32 %v2609, %v2919
    %v2957 = vadd.f32 %v2613, %v2923
    %v2958 = vadd.f32 %v2615, %v2925
    %v2959 = vadd.f32 %v2617, %v2927
    %v2960 = vadd.f32 %v2619, %v2929
    %v2961 = vadd.f32 %v2623, %v2933
    %v2962 = vadd.f32 %v2625, %v2935
    %v2963 = vadd.f32 %v2627, %v2937
    %v2964 = vadd.f32 %v2629, %v2939
    %v2965 = vld [vmem:[#allocation2 + $0x8] sm:$0xff]
    %v2966 = vld [vmem:[#allocation2 + $0x10] sm:$0xff]
    %v2967 = vld [vmem:[#allocation2 + $0x18] sm:$0xff]
    %v2968 = vld [vmem:[#allocation2 + $0x20] sm:$0xff]
    %v2969 = vld [vmem:[#allocation2 + $0x28] sm:$0xff]
    %v2970 = vld [vmem:[#allocation2 + $0x30] sm:$0xff]
    %v2971 = vld [vmem:[#allocation2 + $0x38] sm:$0xff]
    %v2972 = vld [vmem:[#allocation2 + $0x40] sm:$0xff]
    %v2973 = vld [vmem:[#allocation2 + $0x48] sm:$0xff]
    %v2974 = vld [vmem:[#allocation2 + $0x50] sm:$0xff]
    %v2975 = vld [vmem:[#allocation2 + $0x58] sm:$0xff]
    %v2976 = vld [vmem:[#allocation2 + $0x60] sm:$0xff]
    %v2977 = vld [vmem:[#allocation2 + $0x68] sm:$0x11]
    %s2978 = scalar_lea.vmem [#allocation8], 768
    %v2979 = vld [vmem:[%s2978] sm:$0xff]
    %v2980 = vld [vmem:[%s2978 + $0x8] sm:$0xff]
    %v2981 = vld [vmem:[%s2978 + $0x10] sm:$0xff]
    %v2982 = vld [vmem:[%s2978 + $0x18] sm:$0xff]
    %v2983 = vld [vmem:[%s2978 + $0x20] sm:$0xff]
    %v2984 = vld [vmem:[%s2978 + $0x28] sm:$0xff]
    %v2985 = vld [vmem:[%s2978 + $0x30] sm:$0xff]
    %v2986 = vld [vmem:[%s2978 + $0x38] sm:$0xff]
    %v2987 = vld [vmem:[%s2978 + $0x40] sm:$0xff]
    %v2988 = vld [vmem:[%s2978 + $0x48] sm:$0xff]
    %v2989 = vld [vmem:[%s2978 + $0x50] sm:$0xff]
    %v2990 = vld [vmem:[%s2978 + $0x58] sm:$0xff]
    %v2991 = vld [vmem:[%s2978 + $0x60] sm:$0xff]
    %v2992 = vld [vmem:[%s2978 + $0x68] sm:$0xff]
    %v2993 = vld [vmem:[%s2978 + $0x70] sm:$0xff]
    %v2994 = vld [vmem:[%s2978 + $0x78] sm:$0xff]
    %v2995 = vld [vmem:[%s2978 + $0x80] sm:$0xff]
    %v2996 = vld [vmem:[%s2978 + $0x88] sm:$0xff]
    %v2997 = vld [vmem:[%s2978 + $0x90] sm:$0xff]
    %v2998 = vld [vmem:[%s2978 + $0x98] sm:$0xff]
    %v2999 = vld [vmem:[%s2978 + $0xa0] sm:$0xff]
    %v3000 = vld [vmem:[%s2978 + $0xa8] sm:$0xff]
    %v3001 = vld [vmem:[%s2978 + $0xb0] sm:$0xff]
    %v3002 = vld [vmem:[%s2978 + $0xb8] sm:$0xff]
    %v3003 = vld [vmem:[%s2978 + $0xc0] sm:$0xff]
    %v3004 = vld [vmem:[%s2978 + $0xc8] sm:$0xff]
    %v3005 = vld [vmem:[%s2978 + $0xd0] sm:$0xff]
    %v3006 = vld [vmem:[%s2978 + $0xd8] sm:$0xff]
    %v3007 = vld [vmem:[%s2978 + $0xe0] sm:$0xff]
    %v3008 = vld [vmem:[%s2978 + $0xe8] sm:$0xff]
    %v3009 = vld [vmem:[%s2978 + $0xf0] sm:$0xff]
    %v3010 = vld [vmem:[%s2978 + $0xf8] sm:$0xff]
    %v3024 = vunpack.c.l.b16 %v2965
    %v3025 = vunpack.c.h.b16 %v2965
    %v3026 = vunpack.c.l.b16 %v2966
    %v3027 = vunpack.c.h.b16 %v2966
    %v3028 = vunpack.c.l.b16 %v2967
    %v3029 = vunpack.c.h.b16 %v2967
    %v3030 = vunpack.c.l.b16 %v2968
    %v3031 = vunpack.c.h.b16 %v2968
    %v3032 = vunpack.c.l.b16 %v2969
    %v3033 = vunpack.c.h.b16 %v2969
    %v3034 = vunpack.c.l.b16 %v2970
    %v3035 = vunpack.c.h.b16 %v2970
    %v3036 = vunpack.c.l.b16 %v2971
    %v3037 = vunpack.c.h.b16 %v2971
    %v3038 = vunpack.c.l.b16 %v2972
    %v3039 = vunpack.c.h.b16 %v2972
    %v3040 = vunpack.c.l.b16 %v2973
    %v3041 = vunpack.c.h.b16 %v2973
    %v3042 = vunpack.c.l.b16 %v2974
    %v3043 = vunpack.c.h.b16 %v2974
    %v3044 = vunpack.c.l.b16 %v2975
    %v3045 = vunpack.c.h.b16 %v2975
    %v3046 = vunpack.c.l.b16 %v2976
    %v3047 = vunpack.c.h.b16 %v2976
    %v3048 = vunpack.c.l.b16 %v2977
    %v3049 = vunpack.c.h.b16 %v2977
    %v3050 = vpack.c.b16 %v3026, %v3024
    %v3051 = vpack.c.b16 %v3027, %v3025
    %v3052 = vpack.c.b16 %v3030, %v3028
    %v3053 = vpack.c.b16 %v3031, %v3029
    %v3054 = vpack.c.b16 %v3034, %v3032
    %v3055 = vpack.c.b16 %v3035, %v3033
    %v3056 = vpack.c.b16 %v3038, %v3036
    %v3057 = vpack.c.b16 %v3039, %v3037
    %v3058 = vpack.c.b16 %v3042, %v3040
    %v3059 = vpack.c.b16 %v3043, %v3041
    %v3060 = vpack.c.b16 %v3046, %v3044
    %v3061 = vpack.c.b16 %v3047, %v3045
    %v3062 = vpack.c.b16 %v3048, %v3048
    %v3063 = vpack.c.b16 %v3049, %v3049
    %v3065 = vshrl.u32 %v3050, 16
    %v3067 = vshll.u32 %v3050, 16
    %v3069 = vrot.slane %v3067, 1
    %v3070 = vor.u32 %v3065, %v3069
    %v3072 = vshll.u32 %v3052, 16
    %v3074 = vrot.slane %v3072, 1
    %v3075 = vsel %vm1172, %v3070, %v3074
    %v3077 = vshrl.u32 %v3051, 16
    %v3079 = vshll.u32 %v3051, 16
    %v3081 = vrot.slane %v3079, 1
    %v3082 = vor.u32 %v3077, %v3081
    %v3084 = vshll.u32 %v3053, 16
    %v3086 = vrot.slane %v3084, 1
    %v3087 = vsel %vm1172, %v3082, %v3086
    %v3088 = vshrl.u32 %v3052, 16
    %v3090 = vor.u32 %v3088, %v3074
    %v3092 = vshll.u32 %v3054, 16
    %v3094 = vrot.slane %v3092, 1
    %v3095 = vsel %vm1172, %v3090, %v3094
    %v3096 = vshrl.u32 %v3053, 16
    %v3098 = vor.u32 %v3096, %v3086
    %v3100 = vshll.u32 %v3055, 16
    %v3102 = vrot.slane %v3100, 1
    %v3103 = vsel %vm1172, %v3098, %v3102
    %v3104 = vshrl.u32 %v3054, 16
    %v3106 = vor.u32 %v3104, %v3094
    %v3108 = vshll.u32 %v3056, 16
    %v3110 = vrot.slane %v3108, 1
    %v3111 = vsel %vm1172, %v3106, %v3110
    %v3112 = vshrl.u32 %v3055, 16
    %v3114 = vor.u32 %v3112, %v3102
    %v3116 = vshll.u32 %v3057, 16
    %v3118 = vrot.slane %v3116, 1
    %v3119 = vsel %vm1172, %v3114, %v3118
    %v3120 = vshrl.u32 %v3056, 16
    %v3122 = vor.u32 %v3120, %v3110
    %v3124 = vshll.u32 %v3058, 16
    %v3126 = vrot.slane %v3124, 1
    %v3127 = vsel %vm1172, %v3122, %v3126
    %v3128 = vshrl.u32 %v3057, 16
    %v3130 = vor.u32 %v3128, %v3118
    %v3132 = vshll.u32 %v3059, 16
    %v3134 = vrot.slane %v3132, 1
    %v3135 = vsel %vm1172, %v3130, %v3134
    %v3136 = vshrl.u32 %v3058, 16
    %v3138 = vor.u32 %v3136, %v3126
    %v3140 = vshll.u32 %v3060, 16
    %v3142 = vrot.slane %v3140, 1
    %v3143 = vsel %vm1172, %v3138, %v3142
    %v3144 = vshrl.u32 %v3059, 16
    %v3146 = vor.u32 %v3144, %v3134
    %v3148 = vshll.u32 %v3061, 16
    %v3150 = vrot.slane %v3148, 1
    %v3151 = vsel %vm1172, %v3146, %v3150
    %v3152 = vshrl.u32 %v3060, 16
    %v3154 = vor.u32 %v3152, %v3142
    %v3156 = vshll.u32 %v3062, 16
    %v3158 = vrot.slane %v3156, 1
    %v3159 = vsel %vm1172, %v3154, %v3158
    %v3160 = vshrl.u32 %v3061, 16
    %v3162 = vor.u32 %v3160, %v3150
    %v3164 = vshll.u32 %v3063, 16
    %v3166 = vrot.slane %v3164, 1
    %v3167 = vsel %vm1172, %v3162, %v3166
    %v3212 = vunpack.c.l.b16 %v2979
    %v3213 = vunpack.c.h.b16 %v2979
    %v3214 = vunpack.c.l.b16 %v2980
    %v3215 = vunpack.c.h.b16 %v2980
    %v3216 = vunpack.c.l.b16 %v2981
    %v3217 = vunpack.c.h.b16 %v2981
    %v3218 = vunpack.c.l.b16 %v2982
    %v3219 = vunpack.c.h.b16 %v2982
    %v3220 = vunpack.c.l.b16 %v2983
    %v3221 = vunpack.c.h.b16 %v2983
    %v3222 = vunpack.c.l.b16 %v2984
    %v3223 = vunpack.c.h.b16 %v2984
    %v3224 = vunpack.c.l.b16 %v2985
    %v3225 = vunpack.c.h.b16 %v2985
    %v3226 = vunpack.c.l.b16 %v2986
    %v3227 = vunpack.c.h.b16 %v2986
    %v3228 = vunpack.c.l.b16 %v2987
    %v3229 = vunpack.c.h.b16 %v2987
    %v3230 = vunpack.c.l.b16 %v2988
    %v3231 = vunpack.c.h.b16 %v2988
    %v3232 = vunpack.c.l.b16 %v2989
    %v3233 = vunpack.c.h.b16 %v2989
    %v3234 = vunpack.c.l.b16 %v2990
    %v3235 = vunpack.c.h.b16 %v2990
    %v3236 = vunpack.c.l.b16 %v2991
    %v3237 = vunpack.c.h.b16 %v2991
    %v3238 = vunpack.c.l.b16 %v2992
    %v3239 = vunpack.c.h.b16 %v2992
    %v3240 = vunpack.c.l.b16 %v2993
    %v3241 = vunpack.c.h.b16 %v2993
    %v3242 = vunpack.c.l.b16 %v2994
    %v3243 = vunpack.c.h.b16 %v2994
    %v3244 = vunpack.c.l.b16 %v2995
    %v3245 = vunpack.c.h.b16 %v2995
    %v3246 = vunpack.c.l.b16 %v2996
    %v3247 = vunpack.c.h.b16 %v2996
    %v3248 = vunpack.c.l.b16 %v2997
    %v3249 = vunpack.c.h.b16 %v2997
    %v3250 = vunpack.c.l.b16 %v2998
    %v3251 = vunpack.c.h.b16 %v2998
    %v3252 = vunpack.c.l.b16 %v2999
    %v3253 = vunpack.c.h.b16 %v2999
    %v3254 = vunpack.c.l.b16 %v3000
    %v3255 = vunpack.c.h.b16 %v3000
    %v3256 = vunpack.c.l.b16 %v3001
    %v3257 = vunpack.c.h.b16 %v3001
    %v3258 = vunpack.c.l.b16 %v3002
    %v3259 = vunpack.c.h.b16 %v3002
    %v3260 = vunpack.c.l.b16 %v3003
    %v3261 = vunpack.c.h.b16 %v3003
    %v3262 = vunpack.c.l.b16 %v3004
    %v3263 = vunpack.c.h.b16 %v3004
    %v3264 = vunpack.c.l.b16 %v3005
    %v3265 = vunpack.c.h.b16 %v3005
    %v3266 = vunpack.c.l.b16 %v3006
    %v3267 = vunpack.c.h.b16 %v3006
    %v3268 = vunpack.c.l.b16 %v3007
    %v3269 = vunpack.c.h.b16 %v3007
    %v3270 = vunpack.c.l.b16 %v3008
    %v3271 = vunpack.c.h.b16 %v3008
    %v3272 = vunpack.c.l.b16 %v3009
    %v3273 = vunpack.c.h.b16 %v3009
    %v3274 = vunpack.c.l.b16 %v3010
    %v3275 = vunpack.c.h.b16 %v3010
    %v3276 = vpack.c.b16 %v3214, %v3212
    %v3277 = vpack.c.b16 %v3215, %v3213
    %v3278 = vpack.c.b16 %v3218, %v3216
    %v3279 = vpack.c.b16 %v3219, %v3217
    %v3280 = vpack.c.b16 %v3222, %v3220
    %v3281 = vpack.c.b16 %v3223, %v3221
    %v3282 = vpack.c.b16 %v3226, %v3224
    %v3283 = vpack.c.b16 %v3227, %v3225
    %v3284 = vpack.c.b16 %v3230, %v3228
    %v3285 = vpack.c.b16 %v3231, %v3229
    %v3286 = vpack.c.b16 %v3234, %v3232
    %v3287 = vpack.c.b16 %v3235, %v3233
    %v3288 = vpack.c.b16 %v3238, %v3236
    %v3289 = vpack.c.b16 %v3239, %v3237
    %v3290 = vpack.c.b16 %v3242, %v3240
    %v3291 = vpack.c.b16 %v3243, %v3241
    %v3292 = vpack.c.b16 %v3246, %v3244
    %v3293 = vpack.c.b16 %v3247, %v3245
    %v3294 = vpack.c.b16 %v3250, %v3248
    %v3295 = vpack.c.b16 %v3251, %v3249
    %v3296 = vpack.c.b16 %v3254, %v3252
    %v3297 = vpack.c.b16 %v3255, %v3253
    %v3298 = vpack.c.b16 %v3258, %v3256
    %v3299 = vpack.c.b16 %v3259, %v3257
    %v3300 = vpack.c.b16 %v3262, %v3260
    %v3301 = vpack.c.b16 %v3263, %v3261
    %v3302 = vpack.c.b16 %v3266, %v3264
    %v3303 = vpack.c.b16 %v3267, %v3265
    %v3304 = vpack.c.b16 %v3270, %v3268
    %v3305 = vpack.c.b16 %v3271, %v3269
    %v3306 = vpack.c.b16 %v3274, %v3272
    %v3307 = vpack.c.b16 %v3275, %v3273
    %3340 = vmatprep.subr.bf16.mxu0 %v3291
    %3341 = vmatpush1.bf16.msra.mxu0 %v3290
    %3342 = vmatprep.subr.bf16.mxu0 %v3289
    %3343 = vmatpush1.bf16.msra.mxu0 %v3288
    %3344 = vmatprep.subr.bf16.mxu0 %v3287
    %3345 = vmatpush1.bf16.msra.mxu0 %v3286
    %3346 = vmatprep.subr.bf16.mxu0 %v3285
    %3347 = vmatpush1.bf16.msra.mxu0 %v3284
    %3348 = vmatprep.subr.bf16.mxu0 %v3283
    %3349 = vmatpush1.bf16.msra.mxu0 %v3282
    %3350 = vmatprep.subr.bf16.mxu0 %v3281
    %3351 = vmatpush1.bf16.msra.mxu0 %v3280
    %3352 = vmatprep.subr.bf16.mxu0 %v3279
    %3353 = vmatpush1.bf16.msra.mxu0 %v3278
    %3354 = vmatprep.subr.bf16.mxu0 %v3277
    %3355 = vmatpush1.bf16.msra.mxu0 %v3276
    %3356 = vmatprep.subr.bf16.mxu0 %v3307
    %3357 = vmatpush2.bf16.msra.mxu0 %v3306
    %3358 = vmatprep.subr.bf16.mxu0 %v3305
    %3359 = vmatpush2.bf16.msra.mxu0 %v3304
    %3360 = vmatprep.subr.bf16.mxu0 %v3303
    %3361 = vmatpush2.bf16.msra.mxu0 %v3302
    %3362 = vmatprep.subr.bf16.mxu0 %v3301
    %3363 = vmatpush2.bf16.msra.mxu0 %v3300
    %3364 = vmatprep.subr.bf16.mxu0 %v3299
    %3365 = vmatpush2.bf16.msra.mxu0 %v3298
    %3366 = vmatprep.subr.bf16.mxu0 %v3297
    %3367 = vmatpush2.bf16.msra.mxu0 %v3296
    %3368 = vmatprep.subr.bf16.mxu0 %v3295
    %3369 = vmatpush2.bf16.msra.mxu0 %v3294
    %3370 = vmatprep.subr.bf16.mxu0 %v3293
    %3371 = vmatpush2.bf16.msra.mxu0 %v3292
    %3372 = vmatprep.mubr.bf16.mxu0 %v3087
    %3373 = vmatmul.mubr.bf16.gmra.mxu0 %v3075
    %v3374 = vpop.f32.mrf.mxu0
    %v3375 = vadd.f32 0.0, %v3374
    %v3376 = vpop.f32.mrf.mxu0
    %v3377 = vadd.f32 0.0, %v3376
    %v3378 = vpop.f32.mrf.mxu0
    %v3379 = vadd.f32 0.0, %v3378
    %v3380 = vpop.f32.mrf.mxu0
    %v3381 = vadd.f32 0.0, %v3380
    %3382 = vmatprep.mubr.bf16.mxu0 %v3103
    %3383 = vmatmul.mubr.bf16.gmra.mxu0 %v3095
    %v3384 = vpop.f32.mrf.mxu0
    %v3385 = vadd.f32 0.0, %v3384
    %v3386 = vpop.f32.mrf.mxu0
    %v3387 = vadd.f32 0.0, %v3386
    %v3388 = vpop.f32.mrf.mxu0
    %v3389 = vadd.f32 0.0, %v3388
    %v3390 = vpop.f32.mrf.mxu0
    %v3391 = vadd.f32 0.0, %v3390
    %3392 = vmatprep.mubr.bf16.mxu0 %v3119
    %3393 = vmatmul.mubr.bf16.gmra.mxu0 %v3111
    %v3394 = vpop.f32.mrf.mxu0
    %v3395 = vadd.f32 0.0, %v3394
    %v3396 = vpop.f32.mrf.mxu0
    %v3397 = vadd.f32 0.0, %v3396
    %v3398 = vpop.f32.mrf.mxu0
    %v3399 = vadd.f32 0.0, %v3398
    %v3400 = vpop.f32.mrf.mxu0
    %v3401 = vadd.f32 0.0, %v3400
    %3402 = vmatprep.mubr.bf16.mxu0 %v3135
    %3403 = vmatmul.mubr.bf16.gmra.mxu0 %v3127
    %v3404 = vpop.f32.mrf.mxu0
    %v3405 = vadd.f32 0.0, %v3404
    %v3406 = vpop.f32.mrf.mxu0
    %v3407 = vadd.f32 0.0, %v3406
    %v3408 = vpop.f32.mrf.mxu0
    %v3409 = vadd.f32 0.0, %v3408
    %v3410 = vpop.f32.mrf.mxu0
    %v3411 = vadd.f32 0.0, %v3410
    %3412 = vmatprep.mubr.bf16.mxu0 %v3151
    %3413 = vmatmul.mubr.bf16.gmra.mxu0 %v3143
    %v3414 = vpop.f32.mrf.mxu0
    %v3415 = vadd.f32 0.0, %v3414
    %v3416 = vpop.f32.mrf.mxu0
    %v3417 = vadd.f32 0.0, %v3416
    %v3418 = vpop.f32.mrf.mxu0
    %v3419 = vadd.f32 0.0, %v3418
    %v3420 = vpop.f32.mrf.mxu0
    %v3421 = vadd.f32 0.0, %v3420
    %3422 = vmatprep.mubr.bf16.mxu0 %v3167
    %3423 = vmatmul.mubr.bf16.gmra.mxu0 %v3159
    %v3424 = vpop.f32.mrf.mxu0
    %v3425 = vadd.f32 0.0, %v3424
    %v3426 = vpop.f32.mrf.mxu0
    %v3427 = vadd.f32 0.0, %v3426
    %v3428 = vpop.f32.mrf.mxu0
    %v3429 = vadd.f32 0.0, %v3428
    %v3430 = vpop.f32.mrf.mxu0
    %v3431 = vadd.f32 0.0, %v3430
    %3432 = vdwg.mxu0
    %v3433 = vadd.f32 %v2941, %v3375
    %v3434 = vadd.f32 %v2942, %v3377
    %v3435 = vadd.f32 %v2943, %v3379
    %v3436 = vadd.f32 %v2944, %v3381
    %v3437 = vadd.f32 %v2945, %v3385
    %v3438 = vadd.f32 %v2946, %v3387
    %v3439 = vadd.f32 %v2947, %v3389
    %v3440 = vadd.f32 %v2948, %v3391
    %v3441 = vadd.f32 %v2949, %v3395
    %v3442 = vadd.f32 %v2950, %v3397
    %v3443 = vadd.f32 %v2951, %v3399
    %v3444 = vadd.f32 %v2952, %v3401
    %v3445 = vadd.f32 %v2953, %v3405
    %v3446 = vadd.f32 %v2954, %v3407
    %v3447 = vadd.f32 %v2955, %v3409
    %v3448 = vadd.f32 %v2956, %v3411
    %v3449 = vadd.f32 %v2957, %v3415
    %v3450 = vadd.f32 %v2958, %v3417
    %v3451 = vadd.f32 %v2959, %v3419
    %v3452 = vadd.f32 %v2960, %v3421
    %v3453 = vadd.f32 %v2961, %v3425
    %v3454 = vadd.f32 %v2962, %v3427
    %v3455 = vadd.f32 %v2963, %v3429
    %v3456 = vadd.f32 %v2964, %v3431
    %v3457 = vld [vmem:[#allocation2 + $0x8] sm:$0xee]
    %s3458 = scalar_lea.vmem [#allocation8], 1024
    %v3459 = vld [vmem:[%s3458] sm:$0xff]
    %v3460 = vld [vmem:[%s3458 + $0x8] sm:$0xff]
    %v3461 = vld [vmem:[%s3458 + $0x10] sm:$0xff]
    %v3462 = vld [vmem:[%s3458 + $0x18] sm:$0xff]
    %v3463 = vld [vmem:[%s3458 + $0x20] sm:$0xff]
    %v3464 = vld [vmem:[%s3458 + $0x28] sm:$0xff]
    %v3465 = vld [vmem:[%s3458 + $0x30] sm:$0xff]
    %v3466 = vld [vmem:[%s3458 + $0x38] sm:$0xff]
    %v3467 = vld [vmem:[%s3458 + $0x40] sm:$0xff]
    %v3468 = vld [vmem:[%s3458 + $0x48] sm:$0xff]
    %v3469 = vld [vmem:[%s3458 + $0x50] sm:$0xff]
    %v3470 = vld [vmem:[%s3458 + $0x58] sm:$0xff]
    %v3471 = vld [vmem:[%s3458 + $0x60] sm:$0xff]
    %v3472 = vld [vmem:[%s3458 + $0x68] sm:$0xff]
    %v3473 = vld [vmem:[%s3458 + $0x70] sm:$0xff]
    %v3474 = vld [vmem:[%s3458 + $0x78] sm:$0xff]
    %v3475 = vld [vmem:[%s3458 + $0x80] sm:$0xff]
    %v3476 = vld [vmem:[%s3458 + $0x88] sm:$0xff]
    %v3477 = vld [vmem:[%s3458 + $0x90] sm:$0xff]
    %v3478 = vld [vmem:[%s3458 + $0x98] sm:$0xff]
    %v3479 = vld [vmem:[%s3458 + $0xa0] sm:$0xff]
    %v3480 = vld [vmem:[%s3458 + $0xa8] sm:$0xff]
    %v3481 = vld [vmem:[%s3458 + $0xb0] sm:$0xff]
    %v3482 = vld [vmem:[%s3458 + $0xb8] sm:$0xff]
    %v3483 = vld [vmem:[%s3458 + $0xc0] sm:$0xff]
    %v3484 = vld [vmem:[%s3458 + $0xc8] sm:$0xff]
    %v3485 = vld [vmem:[%s3458 + $0xd0] sm:$0xff]
    %v3486 = vld [vmem:[%s3458 + $0xd8] sm:$0xff]
    %v3487 = vld [vmem:[%s3458 + $0xe0] sm:$0xff]
    %v3488 = vld [vmem:[%s3458 + $0xe8] sm:$0xff]
    %v3489 = vld [vmem:[%s3458 + $0xf0] sm:$0xff]
    %v3490 = vld [vmem:[%s3458 + $0xf8] sm:$0xff]
    %v3492 = vunpack.c.l.b16 %v3457
    %v3493 = vunpack.c.h.b16 %v3457
    %v3494 = vpack.c.b16 %v3026, %v3492
    %v3495 = vpack.c.b16 %v3027, %v3493
    %v3496 = vrot.slane %v3494, 1
    %v3497 = vrot.slane %v3052, 1
    %v3498 = vsel %vm1449, %v3496, %v3497
    %v3499 = vrot.slane %v3495, 1
    %v3500 = vrot.slane %v3053, 1
    %v3501 = vsel %vm1449, %v3499, %v3500
    %v3502 = vrot.slane %v3054, 1
    %v3503 = vsel %vm1449, %v3497, %v3502
    %v3504 = vrot.slane %v3055, 1
    %v3505 = vsel %vm1449, %v3500, %v3504
    %v3506 = vrot.slane %v3056, 1
    %v3507 = vsel %vm1449, %v3502, %v3506
    %v3508 = vrot.slane %v3057, 1
    %v3509 = vsel %vm1449, %v3504, %v3508
    %v3510 = vrot.slane %v3058, 1
    %v3511 = vsel %vm1449, %v3506, %v3510
    %v3512 = vrot.slane %v3059, 1
    %v3513 = vsel %vm1449, %v3508, %v3512
    %v3514 = vrot.slane %v3060, 1
    %v3515 = vsel %vm1449, %v3510, %v3514
    %v3516 = vrot.slane %v3061, 1
    %v3517 = vsel %vm1449, %v3512, %v3516
    %v3518 = vrot.slane %v3062, 1
    %v3519 = vsel %vm1449, %v3514, %v3518
    %v3520 = vrot.slane %v3063, 1
    %v3521 = vsel %vm1449, %v3516, %v3520
    %v3566 = vunpack.c.l.b16 %v3459
    %v3567 = vunpack.c.h.b16 %v3459
    %v3568 = vunpack.c.l.b16 %v3460
    %v3569 = vunpack.c.h.b16 %v3460
    %v3570 = vunpack.c.l.b16 %v3461
    %v3571 = vunpack.c.h.b16 %v3461
    %v3572 = vunpack.c.l.b16 %v3462
    %v3573 = vunpack.c.h.b16 %v3462
    %v3574 = vunpack.c.l.b16 %v3463
    %v3575 = vunpack.c.h.b16 %v3463
    %v3576 = vunpack.c.l.b16 %v3464
    %v3577 = vunpack.c.h.b16 %v3464
    %v3578 = vunpack.c.l.b16 %v3465
    %v3579 = vunpack.c.h.b16 %v3465
    %v3580 = vunpack.c.l.b16 %v3466
    %v3581 = vunpack.c.h.b16 %v3466
    %v3582 = vunpack.c.l.b16 %v3467
    %v3583 = vunpack.c.h.b16 %v3467
    %v3584 = vunpack.c.l.b16 %v3468
    %v3585 = vunpack.c.h.b16 %v3468
    %v3586 = vunpack.c.l.b16 %v3469
    %v3587 = vunpack.c.h.b16 %v3469
    %v3588 = vunpack.c.l.b16 %v3470
    %v3589 = vunpack.c.h.b16 %v3470
    %v3590 = vunpack.c.l.b16 %v3471
    %v3591 = vunpack.c.h.b16 %v3471
    %v3592 = vunpack.c.l.b16 %v3472
    %v3593 = vunpack.c.h.b16 %v3472
    %v3594 = vunpack.c.l.b16 %v3473
    %v3595 = vunpack.c.h.b16 %v3473
    %v3596 = vunpack.c.l.b16 %v3474
    %v3597 = vunpack.c.h.b16 %v3474
    %v3598 = vunpack.c.l.b16 %v3475
    %v3599 = vunpack.c.h.b16 %v3475
    %v3600 = vunpack.c.l.b16 %v3476
    %v3601 = vunpack.c.h.b16 %v3476
    %v3602 = vunpack.c.l.b16 %v3477
    %v3603 = vunpack.c.h.b16 %v3477
    %v3604 = vunpack.c.l.b16 %v3478
    %v3605 = vunpack.c.h.b16 %v3478
    %v3606 = vunpack.c.l.b16 %v3479
    %v3607 = vunpack.c.h.b16 %v3479
    %v3608 = vunpack.c.l.b16 %v3480
    %v3609 = vunpack.c.h.b16 %v3480
    %v3610 = vunpack.c.l.b16 %v3481
    %v3611 = vunpack.c.h.b16 %v3481
    %v3612 = vunpack.c.l.b16 %v3482
    %v3613 = vunpack.c.h.b16 %v3482
    %v3614 = vunpack.c.l.b16 %v3483
    %v3615 = vunpack.c.h.b16 %v3483
    %v3616 = vunpack.c.l.b16 %v3484
    %v3617 = vunpack.c.h.b16 %v3484
    %v3618 = vunpack.c.l.b16 %v3485
    %v3619 = vunpack.c.h.b16 %v3485
    %v3620 = vunpack.c.l.b16 %v3486
    %v3621 = vunpack.c.h.b16 %v3486
    %v3622 = vunpack.c.l.b16 %v3487
    %v3623 = vunpack.c.h.b16 %v3487
    %v3624 = vunpack.c.l.b16 %v3488
    %v3625 = vunpack.c.h.b16 %v3488
    %v3626 = vunpack.c.l.b16 %v3489
    %v3627 = vunpack.c.h.b16 %v3489
    %v3628 = vunpack.c.l.b16 %v3490
    %v3629 = vunpack.c.h.b16 %v3490
    %v3630 = vpack.c.b16 %v3568, %v3566
    %v3631 = vpack.c.b16 %v3569, %v3567
    %v3632 = vpack.c.b16 %v3572, %v3570
    %v3633 = vpack.c.b16 %v3573, %v3571
    %v3634 = vpack.c.b16 %v3576, %v3574
    %v3635 = vpack.c.b16 %v3577, %v3575
    %v3636 = vpack.c.b16 %v3580, %v3578
    %v3637 = vpack.c.b16 %v3581, %v3579
    %v3638 = vpack.c.b16 %v3584, %v3582
    %v3639 = vpack.c.b16 %v3585, %v3583
    %v3640 = vpack.c.b16 %v3588, %v3586
    %v3641 = vpack.c.b16 %v3589, %v3587
    %v3642 = vpack.c.b16 %v3592, %v3590
    %v3643 = vpack.c.b16 %v3593, %v3591
    %v3644 = vpack.c.b16 %v3596, %v3594
    %v3645 = vpack.c.b16 %v3597, %v3595
    %v3646 = vpack.c.b16 %v3600, %v3598
    %v3647 = vpack.c.b16 %v3601, %v3599
    %v3648 = vpack.c.b16 %v3604, %v3602
    %v3649 = vpack.c.b16 %v3605, %v3603
    %v3650 = vpack.c.b16 %v3608, %v3606
    %v3651 = vpack.c.b16 %v3609, %v3607
    %v3652 = vpack.c.b16 %v3612, %v3610
    %v3653 = vpack.c.b16 %v3613, %v3611
    %v3654 = vpack.c.b16 %v3616, %v3614
    %v3655 = vpack.c.b16 %v3617, %v3615
    %v3656 = vpack.c.b16 %v3620, %v3618
    %v3657 = vpack.c.b16 %v3621, %v3619
    %v3658 = vpack.c.b16 %v3624, %v3622
    %v3659 = vpack.c.b16 %v3625, %v3623
    %v3660 = vpack.c.b16 %v3628, %v3626
    %v3661 = vpack.c.b16 %v3629, %v3627
    %3694 = vmatprep.subr.bf16.mxu0 %v3645
    %3695 = vmatpush1.bf16.msra.mxu0 %v3644
    %3696 = vmatprep.subr.bf16.mxu0 %v3643
    %3697 = vmatpush1.bf16.msra.mxu0 %v3642
    %3698 = vmatprep.subr.bf16.mxu0 %v3641
    %3699 = vmatpush1.bf16.msra.mxu0 %v3640
    %3700 = vmatprep.subr.bf16.mxu0 %v3639
    %3701 = vmatpush1.bf16.msra.mxu0 %v3638
    %3702 = vmatprep.subr.bf16.mxu0 %v3637
    %3703 = vmatpush1.bf16.msra.mxu0 %v3636
    %3704 = vmatprep.subr.bf16.mxu0 %v3635
    %3705 = vmatpush1.bf16.msra.mxu0 %v3634
    %3706 = vmatprep.subr.bf16.mxu0 %v3633
    %3707 = vmatpush1.bf16.msra.mxu0 %v3632
    %3708 = vmatprep.subr.bf16.mxu0 %v3631
    %3709 = vmatpush1.bf16.msra.mxu0 %v3630
    %3710 = vmatprep.subr.bf16.mxu0 %v3661
    %3711 = vmatpush2.bf16.msra.mxu0 %v3660
    %3712 = vmatprep.subr.bf16.mxu0 %v3659
    %3713 = vmatpush2.bf16.msra.mxu0 %v3658
    %3714 = vmatprep.subr.bf16.mxu0 %v3657
    %3715 = vmatpush2.bf16.msra.mxu0 %v3656
    %3716 = vmatprep.subr.bf16.mxu0 %v3655
    %3717 = vmatpush2.bf16.msra.mxu0 %v3654
    %3718 = vmatprep.subr.bf16.mxu0 %v3653
    %3719 = vmatpush2.bf16.msra.mxu0 %v3652
    %3720 = vmatprep.subr.bf16.mxu0 %v3651
    %3721 = vmatpush2.bf16.msra.mxu0 %v3650
    %3722 = vmatprep.subr.bf16.mxu0 %v3649
    %3723 = vmatpush2.bf16.msra.mxu0 %v3648
    %3724 = vmatprep.subr.bf16.mxu0 %v3647
    %3725 = vmatpush2.bf16.msra.mxu0 %v3646
    %3726 = vmatprep.mubr.bf16.mxu0 %v3501
    %3727 = vmatmul.mubr.bf16.gmra.mxu0 %v3498
    %v3728 = vpop.f32.mrf.mxu0
    %v3729 = vadd.f32 0.0, %v3728
    %v3730 = vpop.f32.mrf.mxu0
    %v3731 = vadd.f32 0.0, %v3730
    %v3732 = vpop.f32.mrf.mxu0
    %v3733 = vadd.f32 0.0, %v3732
    %v3734 = vpop.f32.mrf.mxu0
    %v3735 = vadd.f32 0.0, %v3734
    %3736 = vmatprep.mubr.bf16.mxu0 %v3505
    %3737 = vmatmul.mubr.bf16.gmra.mxu0 %v3503
    %v3738 = vpop.f32.mrf.mxu0
    %v3739 = vadd.f32 0.0, %v3738
    %v3740 = vpop.f32.mrf.mxu0
    %v3741 = vadd.f32 0.0, %v3740
    %v3742 = vpop.f32.mrf.mxu0
    %v3743 = vadd.f32 0.0, %v3742
    %v3744 = vpop.f32.mrf.mxu0
    %v3745 = vadd.f32 0.0, %v3744
    %3746 = vmatprep.mubr.bf16.mxu0 %v3509
    %3747 = vmatmul.mubr.bf16.gmra.mxu0 %v3507
    %v3748 = vpop.f32.mrf.mxu0
    %v3749 = vadd.f32 0.0, %v3748
    %v3750 = vpop.f32.mrf.mxu0
    %v3751 = vadd.f32 0.0, %v3750
    %v3752 = vpop.f32.mrf.mxu0
    %v3753 = vadd.f32 0.0, %v3752
    %v3754 = vpop.f32.mrf.mxu0
    %v3755 = vadd.f32 0.0, %v3754
    %3756 = vmatprep.mubr.bf16.mxu0 %v3513
    %3757 = vmatmul.mubr.bf16.gmra.mxu0 %v3511
    %v3758 = vpop.f32.mrf.mxu0
    %v3759 = vadd.f32 0.0, %v3758
    %v3760 = vpop.f32.mrf.mxu0
    %v3761 = vadd.f32 0.0, %v3760
    %v3762 = vpop.f32.mrf.mxu0
    %v3763 = vadd.f32 0.0, %v3762
    %v3764 = vpop.f32.mrf.mxu0
    %v3765 = vadd.f32 0.0, %v3764
    %3766 = vmatprep.mubr.bf16.mxu0 %v3517
    %3767 = vmatmul.mubr.bf16.gmra.mxu0 %v3515
    %v3768 = vpop.f32.mrf.mxu0
    %v3769 = vadd.f32 0.0, %v3768
    %v3770 = vpop.f32.mrf.mxu0
    %v3771 = vadd.f32 0.0, %v3770
    %v3772 = vpop.f32.mrf.mxu0
    %v3773 = vadd.f32 0.0, %v3772
    %v3774 = vpop.f32.mrf.mxu0
    %v3775 = vadd.f32 0.0, %v3774
    %3776 = vmatprep.mubr.bf16.mxu0 %v3521
    %3777 = vmatmul.mubr.bf16.gmra.mxu0 %v3519
    %v3778 = vpop.f32.mrf.mxu0
    %v3779 = vadd.f32 0.0, %v3778
    %v3780 = vpop.f32.mrf.mxu0
    %v3781 = vadd.f32 0.0, %v3780
    %v3782 = vpop.f32.mrf.mxu0
    %v3783 = vadd.f32 0.0, %v3782
    %v3784 = vpop.f32.mrf.mxu0
    %v3785 = vadd.f32 0.0, %v3784
    %3786 = vdwg.mxu0
    %v3787 = vadd.f32 %v3433, %v3729
    %v3788 = vadd.f32 %v3434, %v3731
    %v3789 = vadd.f32 %v3435, %v3733
    %v3790 = vadd.f32 %v3436, %v3735
    %v3791 = vadd.f32 %v3437, %v3739
    %v3792 = vadd.f32 %v3438, %v3741
    %v3793 = vadd.f32 %v3439, %v3743
    %v3794 = vadd.f32 %v3440, %v3745
    %v3795 = vadd.f32 %v3441, %v3749
    %v3796 = vadd.f32 %v3442, %v3751
    %v3797 = vadd.f32 %v3443, %v3753
    %v3798 = vadd.f32 %v3444, %v3755
    %v3799 = vadd.f32 %v3445, %v3759
    %v3800 = vadd.f32 %v3446, %v3761
    %v3801 = vadd.f32 %v3447, %v3763
    %v3802 = vadd.f32 %v3448, %v3765
    %v3803 = vadd.f32 %v3449, %v3769
    %v3804 = vadd.f32 %v3450, %v3771
    %v3805 = vadd.f32 %v3451, %v3773
    %v3806 = vadd.f32 %v3452, %v3775
    %v3807 = vadd.f32 %v3453, %v3779
    %v3808 = vadd.f32 %v3454, %v3781
    %v3809 = vadd.f32 %v3455, %v3783
    %v3810 = vadd.f32 %v3456, %v3785
    %s3811 = scalar_lea.vmem %s5, 1
    %v3812 = vld [vmem:[%s3811] ss:$4 sm:$0x3]
    %v3814 = vlaneseq
    %v3815 = vshrl.u32 %v3814, 7
    %v3816 = vsub.s32 0, %v3815
    %v3817 = vrot.slane %v3812, %v3816
    %v3818 = vlaneseq
    %v3819 = vshrl.u32 %v3818, 7
    %v3820 = vsub.s32 1, %v3819
    %v3821 = vrot.slane %v3812, %v3820
    %v3824 = vadd.f32 %v3787, %v3817
    %v3825 = vadd.f32 %v3788, %v3821
    %v3826 = vadd.f32 %v3789, %v3817
    %v3827 = vadd.f32 %v3790, %v3821
    %v3828 = vadd.f32 %v3791, %v3817
    %v3829 = vadd.f32 %v3792, %v3821
    %v3830 = vadd.f32 %v3793, %v3817
    %v3831 = vadd.f32 %v3794, %v3821
    %v3832 = vadd.f32 %v3795, %v3817
    %v3833 = vadd.f32 %v3796, %v3821
    %v3834 = vadd.f32 %v3797, %v3817
    %v3835 = vadd.f32 %v3798, %v3821
    %v3836 = vadd.f32 %v3799, %v3817
    %v3837 = vadd.f32 %v3800, %v3821
    %v3838 = vadd.f32 %v3801, %v3817
    %v3839 = vadd.f32 %v3802, %v3821
    %v3840 = vadd.f32 %v3803, %v3817
    %v3841 = vadd.f32 %v3804, %v3821
    %v3842 = vadd.f32 %v3805, %v3817
    %v3843 = vadd.f32 %v3806, %v3821
    %v3844 = vadd.f32 %v3807, %v3817
    %v3845 = vadd.f32 %v3808, %v3821
    %v3846 = vadd.f32 %v3809, %v3817
    %v3847 = vadd.f32 %v3810, %v3821
    %v3848 = vmax.f32 %v3824, 0.0
    %v3849 = vmax.f32 %v3825, 0.0
    %v3850 = vmax.f32 %v3826, 0.0
    %v3851 = vmax.f32 %v3827, 0.0
    %v3852 = vmax.f32 %v3828, 0.0
    %v3853 = vmax.f32 %v3829, 0.0
    %v3854 = vmax.f32 %v3830, 0.0
    %v3855 = vmax.f32 %v3831, 0.0
    %v3856 = vmax.f32 %v3832, 0.0
    %v3857 = vmax.f32 %v3833, 0.0
    %v3858 = vmax.f32 %v3834, 0.0
    %v3859 = vmax.f32 %v3835, 0.0
    %v3860 = vmax.f32 %v3836, 0.0
    %v3861 = vmax.f32 %v3837, 0.0
    %v3862 = vmax.f32 %v3838, 0.0
    %v3863 = vmax.f32 %v3839, 0.0
    %v3864 = vmax.f32 %v3840, 0.0
    %v3865 = vmax.f32 %v3841, 0.0
    %v3866 = vmax.f32 %v3842, 0.0
    %v3867 = vmax.f32 %v3843, 0.0
    %v3868 = vmax.f32 %v3844, 0.0
    %v3869 = vmax.f32 %v3845, 0.0
    %v3870 = vmax.f32 %v3846, 0.0
    %v3871 = vmax.f32 %v3847, 0.0
    %v3872 = vpack.c.bf16 %v3850, %v3848
    %v3873 = vpack.c.bf16 %v3851, %v3849
    %v3874 = vpack.c.bf16 %v3854, %v3852
    %v3875 = vpack.c.bf16 %v3855, %v3853
    %v3876 = vpack.c.bf16 %v3858, %v3856
    %v3877 = vpack.c.bf16 %v3859, %v3857
    %v3878 = vpack.c.bf16 %v3862, %v3860
    %v3879 = vpack.c.bf16 %v3863, %v3861
    %v3880 = vpack.c.bf16 %v3866, %v3864
    %v3881 = vpack.c.bf16 %v3867, %v3865
    %v3882 = vpack.c.bf16 %v3870, %v3868
    %v3883 = vpack.c.bf16 %v3871, %v3869
    %v3896 = vunpack.c.l.b16 %v3872
    %v3897 = vunpack.c.l.b16 %v3873
    %v3898 = vunpack.c.h.b16 %v3872
    %v3899 = vunpack.c.h.b16 %v3873
    %v3900 = vunpack.c.l.b16 %v3874
    %v3901 = vunpack.c.l.b16 %v3875
    %v3902 = vunpack.c.h.b16 %v3874
    %v3903 = vunpack.c.h.b16 %v3875
    %v3904 = vunpack.c.l.b16 %v3876
    %v3905 = vunpack.c.l.b16 %v3877
    %v3906 = vunpack.c.h.b16 %v3876
    %v3907 = vunpack.c.h.b16 %v3877
    %v3908 = vunpack.c.l.b16 %v3878
    %v3909 = vunpack.c.l.b16 %v3879
    %v3910 = vunpack.c.h.b16 %v3878
    %v3911 = vunpack.c.h.b16 %v3879
    %v3912 = vunpack.c.l.b16 %v3880
    %v3913 = vunpack.c.l.b16 %v3881
    %v3914 = vunpack.c.h.b16 %v3880
    %v3915 = vunpack.c.h.b16 %v3881
    %v3916 = vunpack.c.l.b16 %v3882
    %v3917 = vunpack.c.l.b16 %v3883
    %v3918 = vunpack.c.h.b16 %v3882
    %v3919 = vunpack.c.h.b16 %v3883
    %v3920 = vpack.c.b16 %v3897, %v3896
    %v3921 = vpack.c.b16 %v3899, %v3898
    %v3922 = vpack.c.b16 %v3901, %v3900
    %v3923 = vpack.c.b16 %v3903, %v3902
    %v3924 = vpack.c.b16 %v3905, %v3904
    %v3925 = vpack.c.b16 %v3907, %v3906
    %v3926 = vpack.c.b16 %v3909, %v3908
    %v3927 = vpack.c.b16 %v3911, %v3910
    %v3928 = vpack.c.b16 %v3913, %v3912
    %v3929 = vpack.c.b16 %v3915, %v3914
    %v3930 = vpack.c.b16 %v3917, %v3916
    %v3931 = vpack.c.b16 %v3919, %v3918
    %3944 = vst [vmem:[#allocation2 + $0x8] sm:$0xff] %v3920
    %3945 = vst [vmem:[#allocation2 + $0x10] sm:$0xff] %v3921
    %3946 = vst [vmem:[#allocation2 + $0x18] sm:$0xff] %v3922
    %3947 = vst [vmem:[#allocation2 + $0x20] sm:$0xff] %v3923
    %3948 = vst [vmem:[#allocation2 + $0x28] sm:$0xff] %v3924
    %3949 = vst [vmem:[#allocation2 + $0x30] sm:$0xff] %v3925
    %3950 = vst [vmem:[#allocation2 + $0x38] sm:$0xff] %v3926
    %3951 = vst [vmem:[#allocation2 + $0x40] sm:$0xff] %v3927
    %3952 = vst [vmem:[#allocation2 + $0x48] sm:$0xff] %v3928
    %3953 = vst [vmem:[#allocation2 + $0x50] sm:$0xff] %v3929
    %3954 = vst [vmem:[#allocation2 + $0x58] sm:$0xff] %v3930
    %3955 = vst [vmem:[#allocation2 + $0x60] sm:$0xff] %v3931
    %3956 = vst [vmem:[#allocation2 + $0x18] sm:$0xff] 0
    %3957 = vst [vmem:[#allocation2 + $0x30] sm:$0xff] 0
    %3958 = vst [vmem:[#allocation2 + $0x48] sm:$0xff] 0
    %3959 = vst [vmem:[#allocation2 + $0x60] sm:$0xff] 0
    %v3960 = vld [vmem:[#allocation2] sm:$0x88]
    %v3961 = vld [vmem:[#allocation2 + $0x8] sm:$0xff]
    %v3962 = vld [vmem:[#allocation2 + $0x10] sm:$0xff]
    %v3963 = vld [vmem:[#allocation2 + $0x18] sm:$0xff]
    %v3964 = vld [vmem:[#allocation2 + $0x20] sm:$0xff]
    %v3965 = vld [vmem:[#allocation2 + $0x28] sm:$0xff]
    %v3966 = vld [vmem:[#allocation2 + $0x30] sm:$0xff]
    %v3967 = vld [vmem:[#allocation2 + $0x38] sm:$0xff]
    %v3968 = vld [vmem:[#allocation2 + $0x40] sm:$0xff]
    %v3969 = vld [vmem:[#allocation2 + $0x48] sm:$0xff]
    %v3970 = vld [vmem:[#allocation2 + $0x50] sm:$0xff]
    %v3971 = vld [vmem:[#allocation2 + $0x58] sm:$0xff]
    %v3972 = vld [vmem:[#allocation2 + $0x60] sm:$0x77]
    %v3973 = vld [vmem:[#allocation9] sm:$0xff]
    %v3974 = vld [vmem:[#allocation9 + $0x8] sm:$0xff]
    %v3975 = vld [vmem:[#allocation9 + $0x10] sm:$0xff]
    %v3976 = vld [vmem:[#allocation9 + $0x18] sm:$0xff]
    %v3977 = vld [vmem:[#allocation9 + $0x20] sm:$0xff]
    %v3978 = vld [vmem:[#allocation9 + $0x28] sm:$0xff]
    %v3979 = vld [vmem:[#allocation9 + $0x30] sm:$0xff]
    %v3980 = vld [vmem:[#allocation9 + $0x38] sm:$0xff]
    %v3981 = vld [vmem:[#allocation9 + $0x40] sm:$0xff]
    %v3982 = vld [vmem:[#allocation9 + $0x48] sm:$0xff]
    %v3983 = vld [vmem:[#allocation9 + $0x50] sm:$0xff]
    %v3984 = vld [vmem:[#allocation9 + $0x58] sm:$0xff]
    %v3985 = vld [vmem:[#allocation9 + $0x60] sm:$0xff]
    %v3986 = vld [vmem:[#allocation9 + $0x68] sm:$0xff]
    %v3987 = vld [vmem:[#allocation9 + $0x70] sm:$0xff]
    %v3988 = vld [vmem:[#allocation9 + $0x78] sm:$0xff]
    %v3989 = vld [vmem:[#allocation9 + $0x80] sm:$0xff]
    %v3990 = vld [vmem:[#allocation9 + $0x88] sm:$0xff]
    %v3991 = vld [vmem:[#allocation9 + $0x90] sm:$0xff]
    %v3992 = vld [vmem:[#allocation9 + $0x98] sm:$0xff]
    %v3993 = vld [vmem:[#allocation9 + $0xa0] sm:$0xff]
    %v3994 = vld [vmem:[#allocation9 + $0xa8] sm:$0xff]
    %v3995 = vld [vmem:[#allocation9 + $0xb0] sm:$0xff]
    %v3996 = vld [vmem:[#allocation9 + $0xb8] sm:$0xff]
    %v3997 = vld [vmem:[#allocation9 + $0xc0] sm:$0xff]
    %v3998 = vld [vmem:[#allocation9 + $0xc8] sm:$0xff]
    %v3999 = vld [vmem:[#allocation9 + $0xd0] sm:$0xff]
    %v4000 = vld [vmem:[#allocation9 + $0xd8] sm:$0xff]
    %v4001 = vld [vmem:[#allocation9 + $0xe0] sm:$0xff]
    %v4002 = vld [vmem:[#allocation9 + $0xe8] sm:$0xff]
    %v4003 = vld [vmem:[#allocation9 + $0xf0] sm:$0xff]
    %v4004 = vld [vmem:[#allocation9 + $0xf8] sm:$0xff]
    %v4005 = vld [vmem:[#allocation2 + $0x60] sm:$0xff]
    %s4006 = scalar_lea.vmem [#allocation9], 256
    %v4007 = vld [vmem:[%s4006] sm:$0xff]
    %v4008 = vld [vmem:[%s4006 + $0x8] sm:$0xff]
    %v4009 = vld [vmem:[%s4006 + $0x10] sm:$0xff]
    %v4010 = vld [vmem:[%s4006 + $0x18] sm:$0xff]
    %v4011 = vld [vmem:[%s4006 + $0x20] sm:$0xff]
    %v4012 = vld [vmem:[%s4006 + $0x28] sm:$0xff]
    %v4013 = vld [vmem:[%s4006 + $0x30] sm:$0xff]
    %v4014 = vld [vmem:[%s4006 + $0x38] sm:$0xff]
    %v4015 = vld [vmem:[%s4006 + $0x40] sm:$0xff]
    %v4016 = vld [vmem:[%s4006 + $0x48] sm:$0xff]
    %v4017 = vld [vmem:[%s4006 + $0x50] sm:$0xff]
    %v4018 = vld [vmem:[%s4006 + $0x58] sm:$0xff]
    %v4019 = vld [vmem:[%s4006 + $0x60] sm:$0xff]
    %v4020 = vld [vmem:[%s4006 + $0x68] sm:$0xff]
    %v4021 = vld [vmem:[%s4006 + $0x70] sm:$0xff]
    %v4022 = vld [vmem:[%s4006 + $0x78] sm:$0xff]
    %v4023 = vld [vmem:[%s4006 + $0x80] sm:$0xff]
    %v4024 = vld [vmem:[%s4006 + $0x88] sm:$0xff]
    %v4025 = vld [vmem:[%s4006 + $0x90] sm:$0xff]
    %v4026 = vld [vmem:[%s4006 + $0x98] sm:$0xff]
    %v4027 = vld [vmem:[%s4006 + $0xa0] sm:$0xff]
    %v4028 = vld [vmem:[%s4006 + $0xa8] sm:$0xff]
    %v4029 = vld [vmem:[%s4006 + $0xb0] sm:$0xff]
    %v4030 = vld [vmem:[%s4006 + $0xb8] sm:$0xff]
    %v4031 = vld [vmem:[%s4006 + $0xc0] sm:$0xff]
    %v4032 = vld [vmem:[%s4006 + $0xc8] sm:$0xff]
    %v4033 = vld [vmem:[%s4006 + $0xd0] sm:$0xff]
    %v4034 = vld [vmem:[%s4006 + $0xd8] sm:$0xff]
    %v4035 = vld [vmem:[%s4006 + $0xe0] sm:$0xff]
    %v4036 = vld [vmem:[%s4006 + $0xe8] sm:$0xff]
    %v4037 = vld [vmem:[%s4006 + $0xf0] sm:$0xff]
    %v4038 = vld [vmem:[%s4006 + $0xf8] sm:$0xff]
    %v4052 = vunpack.c.l.b16 %v3960
    %v4053 = vunpack.c.h.b16 %v3960
    %v4054 = vunpack.c.l.b16 %v3961
    %v4055 = vunpack.c.h.b16 %v3961
    %v4056 = vunpack.c.l.b16 %v3962
    %v4057 = vunpack.c.h.b16 %v3962
    %v4058 = vunpack.c.l.b16 %v3963
    %v4059 = vunpack.c.h.b16 %v3963
    %v4060 = vunpack.c.l.b16 %v3964
    %v4061 = vunpack.c.h.b16 %v3964
    %v4062 = vunpack.c.l.b16 %v3965
    %v4063 = vunpack.c.h.b16 %v3965
    %v4064 = vunpack.c.l.b16 %v3966
    %v4065 = vunpack.c.h.b16 %v3966
    %v4066 = vunpack.c.l.b16 %v3967
    %v4067 = vunpack.c.h.b16 %v3967
    %v4068 = vunpack.c.l.b16 %v3968
    %v4069 = vunpack.c.h.b16 %v3968
    %v4070 = vunpack.c.l.b16 %v3969
    %v4071 = vunpack.c.h.b16 %v3969
    %v4072 = vunpack.c.l.b16 %v3970
    %v4073 = vunpack.c.h.b16 %v3970
    %v4074 = vunpack.c.l.b16 %v3971
    %v4075 = vunpack.c.h.b16 %v3971
    %v4076 = vunpack.c.l.b16 %v4005
    %v4077 = vunpack.c.h.b16 %v4005
    %v4078 = vpack.c.b16 %v4054, %v4052
    %v4079 = vpack.c.b16 %v4055, %v4053
    %v4080 = vpack.c.b16 %v4058, %v4056
    %v4081 = vpack.c.b16 %v4059, %v4057
    %v4082 = vpack.c.b16 %v4062, %v4060
    %v4083 = vpack.c.b16 %v4063, %v4061
    %v4084 = vpack.c.b16 %v4066, %v4064
    %v4085 = vpack.c.b16 %v4067, %v4065
    %v4086 = vpack.c.b16 %v4070, %v4068
    %v4087 = vpack.c.b16 %v4071, %v4069
    %v4088 = vpack.c.b16 %v4074, %v4072
    %v4089 = vpack.c.b16 %v4075, %v4073
    %v4090 = vpack.c.b16 %v4076, %v4076
    %v4091 = vpack.c.b16 %v4077, %v4077
    %v4093 = vshrl.u32 %v4078, 16
    %v4095 = vrot.slane %v4093, 3
    %v4096 = vshll.u32 %v4078, 16
    %v4098 = vrot.slane %v4096, 4
    %v4099 = vor.u32 %v4095, %v4098
    %v4101 = vshrl.u32 %v4080, 16
    %v4103 = vrot.slane %v4101, 3
    %v4104 = vshll.u32 %v4080, 16
    %v4106 = vrot.slane %v4104, 4
    %v4107 = vor.u32 %v4103, %v4106
    %v4108 = vsel %vm445, %v4099, %v4107
    %v4110 = vshrl.u32 %v4079, 16
    %v4112 = vrot.slane %v4110, 3
    %v4113 = vshll.u32 %v4079, 16
    %v4115 = vrot.slane %v4113, 4
    %v4116 = vor.u32 %v4112, %v4115
    %v4118 = vshrl.u32 %v4081, 16
    %v4120 = vrot.slane %v4118, 3
    %v4121 = vshll.u32 %v4081, 16
    %v4123 = vrot.slane %v4121, 4
    %v4124 = vor.u32 %v4120, %v4123
    %v4125 = vsel %vm445, %v4116, %v4124
    %v4127 = vshrl.u32 %v4082, 16
    %v4129 = vrot.slane %v4127, 3
    %v4130 = vshll.u32 %v4082, 16
    %v4132 = vrot.slane %v4130, 4
    %v4133 = vor.u32 %v4129, %v4132
    %v4134 = vsel %vm445, %v4107, %v4133
    %v4136 = vshrl.u32 %v4083, 16
    %v4138 = vrot.slane %v4136, 3
    %v4139 = vshll.u32 %v4083, 16
    %v4141 = vrot.slane %v4139, 4
    %v4142 = vor.u32 %v4138, %v4141
    %v4143 = vsel %vm445, %v4124, %v4142
    %v4145 = vshrl.u32 %v4084, 16
    %v4147 = vrot.slane %v4145, 3
    %v4148 = vshll.u32 %v4084, 16
    %v4150 = vrot.slane %v4148, 4
    %v4151 = vor.u32 %v4147, %v4150
    %v4152 = vsel %vm445, %v4133, %v4151
    %v4154 = vshrl.u32 %v4085, 16
    %v4156 = vrot.slane %v4154, 3
    %v4157 = vshll.u32 %v4085, 16
    %v4159 = vrot.slane %v4157, 4
    %v4160 = vor.u32 %v4156, %v4159
    %v4161 = vsel %vm445, %v4142, %v4160
    %v4163 = vshrl.u32 %v4086, 16
    %v4165 = vrot.slane %v4163, 3
    %v4166 = vshll.u32 %v4086, 16
    %v4168 = vrot.slane %v4166, 4
    %v4169 = vor.u32 %v4165, %v4168
    %v4170 = vsel %vm445, %v4151, %v4169
    %v4172 = vshrl.u32 %v4087, 16
    %v4174 = vrot.slane %v4172, 3
    %v4175 = vshll.u32 %v4087, 16
    %v4177 = vrot.slane %v4175, 4
    %v4178 = vor.u32 %v4174, %v4177
    %v4179 = vsel %vm445, %v4160, %v4178
    %v4181 = vshrl.u32 %v4088, 16
    %v4183 = vrot.slane %v4181, 3
    %v4184 = vshll.u32 %v4088, 16
    %v4186 = vrot.slane %v4184, 4
    %v4187 = vor.u32 %v4183, %v4186
    %v4188 = vsel %vm445, %v4169, %v4187
    %v4190 = vshrl.u32 %v4089, 16
    %v4192 = vrot.slane %v4190, 3
    %v4193 = vshll.u32 %v4089, 16
    %v4195 = vrot.slane %v4193, 4
    %v4196 = vor.u32 %v4192, %v4195
    %v4197 = vsel %vm445, %v4178, %v4196
    %v4199 = vshrl.u32 %v4090, 16
    %v4201 = vrot.slane %v4199, 3
    %v4202 = vshll.u32 %v4090, 16
    %v4204 = vrot.slane %v4202, 4
    %v4205 = vor.u32 %v4201, %v4204
    %v4206 = vsel %vm445, %v4187, %v4205
    %v4208 = vshrl.u32 %v4091, 16
    %v4210 = vrot.slane %v4208, 3
    %v4211 = vshll.u32 %v4091, 16
    %v4213 = vrot.slane %v4211, 4
    %v4214 = vor.u32 %v4210, %v4213
    %v4215 = vsel %vm445, %v4196, %v4214
    %v4260 = vunpack.c.l.b16 %v4007
    %v4261 = vunpack.c.h.b16 %v4007
    %v4262 = vunpack.c.l.b16 %v4008
    %v4263 = vunpack.c.h.b16 %v4008
    %v4264 = vunpack.c.l.b16 %v4009
    %v4265 = vunpack.c.h.b16 %v4009
    %v4266 = vunpack.c.l.b16 %v4010
    %v4267 = vunpack.c.h.b16 %v4010
    %v4268 = vunpack.c.l.b16 %v4011
    %v4269 = vunpack.c.h.b16 %v4011
    %v4270 = vunpack.c.l.b16 %v4012
    %v4271 = vunpack.c.h.b16 %v4012
    %v4272 = vunpack.c.l.b16 %v4013
    %v4273 = vunpack.c.h.b16 %v4013
    %v4274 = vunpack.c.l.b16 %v4014
    %v4275 = vunpack.c.h.b16 %v4014
    %v4276 = vunpack.c.l.b16 %v4015
    %v4277 = vunpack.c.h.b16 %v4015
    %v4278 = vunpack.c.l.b16 %v4016
    %v4279 = vunpack.c.h.b16 %v4016
    %v4280 = vunpack.c.l.b16 %v4017
    %v4281 = vunpack.c.h.b16 %v4017
    %v4282 = vunpack.c.l.b16 %v4018
    %v4283 = vunpack.c.h.b16 %v4018
    %v4284 = vunpack.c.l.b16 %v4019
    %v4285 = vunpack.c.h.b16 %v4019
    %v4286 = vunpack.c.l.b16 %v4020
    %v4287 = vunpack.c.h.b16 %v4020
    %v4288 = vunpack.c.l.b16 %v4021
    %v4289 = vunpack.c.h.b16 %v4021
    %v4290 = vunpack.c.l.b16 %v4022
    %v4291 = vunpack.c.h.b16 %v4022
    %v4292 = vunpack.c.l.b16 %v4023
    %v4293 = vunpack.c.h.b16 %v4023
    %v4294 = vunpack.c.l.b16 %v4024
    %v4295 = vunpack.c.h.b16 %v4024
    %v4296 = vunpack.c.l.b16 %v4025
    %v4297 = vunpack.c.h.b16 %v4025
    %v4298 = vunpack.c.l.b16 %v4026
    %v4299 = vunpack.c.h.b16 %v4026
    %v4300 = vunpack.c.l.b16 %v4027
    %v4301 = vunpack.c.h.b16 %v4027
    %v4302 = vunpack.c.l.b16 %v4028
    %v4303 = vunpack.c.h.b16 %v4028
    %v4304 = vunpack.c.l.b16 %v4029
    %v4305 = vunpack.c.h.b16 %v4029
    %v4306 = vunpack.c.l.b16 %v4030
    %v4307 = vunpack.c.h.b16 %v4030
    %v4308 = vunpack.c.l.b16 %v4031
    %v4309 = vunpack.c.h.b16 %v4031
    %v4310 = vunpack.c.l.b16 %v4032
    %v4311 = vunpack.c.h.b16 %v4032
    %v4312 = vunpack.c.l.b16 %v4033
    %v4313 = vunpack.c.h.b16 %v4033
    %v4314 = vunpack.c.l.b16 %v4034
    %v4315 = vunpack.c.h.b16 %v4034
    %v4316 = vunpack.c.l.b16 %v4035
    %v4317 = vunpack.c.h.b16 %v4035
    %v4318 = vunpack.c.l.b16 %v4036
    %v4319 = vunpack.c.h.b16 %v4036
    %v4320 = vunpack.c.l.b16 %v4037
    %v4321 = vunpack.c.h.b16 %v4037
    %v4322 = vunpack.c.l.b16 %v4038
    %v4323 = vunpack.c.h.b16 %v4038
    %v4324 = vpack.c.b16 %v4262, %v4260
    %v4325 = vpack.c.b16 %v4263, %v4261
    %v4326 = vpack.c.b16 %v4266, %v4264
    %v4327 = vpack.c.b16 %v4267, %v4265
    %v4328 = vpack.c.b16 %v4270, %v4268
    %v4329 = vpack.c.b16 %v4271, %v4269
    %v4330 = vpack.c.b16 %v4274, %v4272
    %v4331 = vpack.c.b16 %v4275, %v4273
    %v4332 = vpack.c.b16 %v4278, %v4276
    %v4333 = vpack.c.b16 %v4279, %v4277
    %v4334 = vpack.c.b16 %v4282, %v4280
    %v4335 = vpack.c.b16 %v4283, %v4281
    %v4336 = vpack.c.b16 %v4286, %v4284
    %v4337 = vpack.c.b16 %v4287, %v4285
    %v4338 = vpack.c.b16 %v4290, %v4288
    %v4339 = vpack.c.b16 %v4291, %v4289
    %v4340 = vpack.c.b16 %v4294, %v4292
    %v4341 = vpack.c.b16 %v4295, %v4293
    %v4342 = vpack.c.b16 %v4298, %v4296
    %v4343 = vpack.c.b16 %v4299, %v4297
    %v4344 = vpack.c.b16 %v4302, %v4300
    %v4345 = vpack.c.b16 %v4303, %v4301
    %v4346 = vpack.c.b16 %v4306, %v4304
    %v4347 = vpack.c.b16 %v4307, %v4305
    %v4348 = vpack.c.b16 %v4310, %v4308
    %v4349 = vpack.c.b16 %v4311, %v4309
    %v4350 = vpack.c.b16 %v4314, %v4312
    %v4351 = vpack.c.b16 %v4315, %v4313
    %v4352 = vpack.c.b16 %v4318, %v4316
    %v4353 = vpack.c.b16 %v4319, %v4317
    %v4354 = vpack.c.b16 %v4322, %v4320
    %v4355 = vpack.c.b16 %v4323, %v4321
    %4388 = vmatprep.subr.bf16.mxu0 %v4339
    %4389 = vmatpush1.bf16.msra.mxu0 %v4338
    %4390 = vmatprep.subr.bf16.mxu0 %v4337
    %4391 = vmatpush1.bf16.msra.mxu0 %v4336
    %4392 = vmatprep.subr.bf16.mxu0 %v4335
    %4393 = vmatpush1.bf16.msra.mxu0 %v4334
    %4394 = vmatprep.subr.bf16.mxu0 %v4333
    %4395 = vmatpush1.bf16.msra.mxu0 %v4332
    %4396 = vmatprep.subr.bf16.mxu0 %v4331
    %4397 = vmatpush1.bf16.msra.mxu0 %v4330
    %4398 = vmatprep.subr.bf16.mxu0 %v4329
    %4399 = vmatpush1.bf16.msra.mxu0 %v4328
    %4400 = vmatprep.subr.bf16.mxu0 %v4327
    %4401 = vmatpush1.bf16.msra.mxu0 %v4326
    %4402 = vmatprep.subr.bf16.mxu0 %v4325
    %4403 = vmatpush1.bf16.msra.mxu0 %v4324
    %4404 = vmatprep.subr.bf16.mxu0 %v4355
    %4405 = vmatpush2.bf16.msra.mxu0 %v4354
    %4406 = vmatprep.subr.bf16.mxu0 %v4353
    %4407 = vmatpush2.bf16.msra.mxu0 %v4352
    %4408 = vmatprep.subr.bf16.mxu0 %v4351
    %4409 = vmatpush2.bf16.msra.mxu0 %v4350
    %4410 = vmatprep.subr.bf16.mxu0 %v4349
    %4411 = vmatpush2.bf16.msra.mxu0 %v4348
    %4412 = vmatprep.subr.bf16.mxu0 %v4347
    %4413 = vmatpush2.bf16.msra.mxu0 %v4346
    %4414 = vmatprep.subr.bf16.mxu0 %v4345
    %4415 = vmatpush2.bf16.msra.mxu0 %v4344
    %4416 = vmatprep.subr.bf16.mxu0 %v4343
    %4417 = vmatpush2.bf16.msra.mxu0 %v4342
    %4418 = vmatprep.subr.bf16.mxu0 %v4341
    %4419 = vmatpush2.bf16.msra.mxu0 %v4340
    %4420 = vmatprep.mubr.bf16.mxu0 %v4125
    %4421 = vmatmul.mubr.bf16.gmra.mxu0 %v4108
    %v4422 = vpop.f32.mrf.mxu0
    %v4423 = vadd.f32 0.0, %v4422
    %v4424 = vpop.f32.mrf.mxu0
    %v4425 = vadd.f32 0.0, %v4424
    %v4426 = vpop.f32.mrf.mxu0
    %v4427 = vadd.f32 0.0, %v4426
    %v4428 = vpop.f32.mrf.mxu0
    %v4429 = vadd.f32 0.0, %v4428
    %4430 = vmatprep.mubr.bf16.mxu0 %v4143
    %4431 = vmatmul.mubr.bf16.gmra.mxu0 %v4134
    %v4432 = vpop.f32.mrf.mxu0
    %v4433 = vadd.f32 0.0, %v4432
    %v4434 = vpop.f32.mrf.mxu0
    %v4435 = vadd.f32 0.0, %v4434
    %v4436 = vpop.f32.mrf.mxu0
    %v4437 = vadd.f32 0.0, %v4436
    %v4438 = vpop.f32.mrf.mxu0
    %v4439 = vadd.f32 0.0, %v4438
    %4440 = vmatprep.mubr.bf16.mxu0 %v4161
    %4441 = vmatmul.mubr.bf16.gmra.mxu0 %v4152
    %v4442 = vpop.f32.mrf.mxu0
    %v4443 = vadd.f32 0.0, %v4442
    %v4444 = vpop.f32.mrf.mxu0
    %v4445 = vadd.f32 0.0, %v4444
    %v4446 = vpop.f32.mrf.mxu0
    %v4447 = vadd.f32 0.0, %v4446
    %v4448 = vpop.f32.mrf.mxu0
    %v4449 = vadd.f32 0.0, %v4448
    %4450 = vmatprep.mubr.bf16.mxu0 %v4179
    %4451 = vmatmul.mubr.bf16.gmra.mxu0 %v4170
    %v4452 = vpop.f32.mrf.mxu0
    %v4453 = vadd.f32 0.0, %v4452
    %v4454 = vpop.f32.mrf.mxu0
    %v4455 = vadd.f32 0.0, %v4454
    %v4456 = vpop.f32.mrf.mxu0
    %v4457 = vadd.f32 0.0, %v4456
    %v4458 = vpop.f32.mrf.mxu0
    %v4459 = vadd.f32 0.0, %v4458
    %4460 = vmatprep.mubr.bf16.mxu0 %v4197
    %4461 = vmatmul.mubr.bf16.gmra.mxu0 %v4188
    %v4462 = vpop.f32.mrf.mxu0
    %v4463 = vadd.f32 0.0, %v4462
    %v4464 = vpop.f32.mrf.mxu0
    %v4465 = vadd.f32 0.0, %v4464
    %v4466 = vpop.f32.mrf.mxu0
    %v4467 = vadd.f32 0.0, %v4466
    %v4468 = vpop.f32.mrf.mxu0
    %v4469 = vadd.f32 0.0, %v4468
    %4470 = vmatprep.mubr.bf16.mxu0 %v4215
    %4471 = vmatmul.mubr.bf16.gmra.mxu0 %v4206
    %v4472 = vpop.f32.mrf.mxu0
    %v4473 = vadd.f32 0.0, %v4472
    %v4474 = vpop.f32.mrf.mxu0
    %v4475 = vadd.f32 0.0, %v4474
    %v4476 = vpop.f32.mrf.mxu0
    %v4477 = vadd.f32 0.0, %v4476
    %v4478 = vpop.f32.mrf.mxu0
    %v4479 = vadd.f32 0.0, %v4478
    %4480 = vdwg.mxu0
    %v4482 = vunpack.c.l.b16 %v3972
    %v4483 = vunpack.c.h.b16 %v3972
    %v4484 = vpack.c.b16 %v4482, %v4482
    %v4485 = vpack.c.b16 %v4483, %v4483
    %v4486 = vrot.slane %v4078, 3
    %v4487 = vrot.slane %v4080, 3
    %v4488 = vsel %vm690, %v4486, %v4487
    %v4489 = vrot.slane %v4079, 3
    %v4490 = vrot.slane %v4081, 3
    %v4491 = vsel %vm690, %v4489, %v4490
    %v4492 = vrot.slane %v4082, 3
    %v4493 = vsel %vm690, %v4487, %v4492
    %v4494 = vrot.slane %v4083, 3
    %v4495 = vsel %vm690, %v4490, %v4494
    %v4496 = vrot.slane %v4084, 3
    %v4497 = vsel %vm690, %v4492, %v4496
    %v4498 = vrot.slane %v4085, 3
    %v4499 = vsel %vm690, %v4494, %v4498
    %v4500 = vrot.slane %v4086, 3
    %v4501 = vsel %vm690, %v4496, %v4500
    %v4502 = vrot.slane %v4087, 3
    %v4503 = vsel %vm690, %v4498, %v4502
    %v4504 = vrot.slane %v4088, 3
    %v4505 = vsel %vm690, %v4500, %v4504
    %v4506 = vrot.slane %v4089, 3
    %v4507 = vsel %vm690, %v4502, %v4506
    %v4508 = vrot.slane %v4484, 3
    %v4509 = vsel %vm690, %v4504, %v4508
    %v4510 = vrot.slane %v4485, 3
    %v4511 = vsel %vm690, %v4506, %v4510
    %v4556 = vunpack.c.l.b16 %v3973
    %v4557 = vunpack.c.h.b16 %v3973
    %v4558 = vunpack.c.l.b16 %v3974
    %v4559 = vunpack.c.h.b16 %v3974
    %v4560 = vunpack.c.l.b16 %v3975
    %v4561 = vunpack.c.h.b16 %v3975
    %v4562 = vunpack.c.l.b16 %v3976
    %v4563 = vunpack.c.h.b16 %v3976
    %v4564 = vunpack.c.l.b16 %v3977
    %v4565 = vunpack.c.h.b16 %v3977
    %v4566 = vunpack.c.l.b16 %v3978
    %v4567 = vunpack.c.h.b16 %v3978
    %v4568 = vunpack.c.l.b16 %v3979
    %v4569 = vunpack.c.h.b16 %v3979
    %v4570 = vunpack.c.l.b16 %v3980
    %v4571 = vunpack.c.h.b16 %v3980
    %v4572 = vunpack.c.l.b16 %v3981
    %v4573 = vunpack.c.h.b16 %v3981
    %v4574 = vunpack.c.l.b16 %v3982
    %v4575 = vunpack.c.h.b16 %v3982
    %v4576 = vunpack.c.l.b16 %v3983
    %v4577 = vunpack.c.h.b16 %v3983
    %v4578 = vunpack.c.l.b16 %v3984
    %v4579 = vunpack.c.h.b16 %v3984
    %v4580 = vunpack.c.l.b16 %v3985
    %v4581 = vunpack.c.h.b16 %v3985
    %v4582 = vunpack.c.l.b16 %v3986
    %v4583 = vunpack.c.h.b16 %v3986
    %v4584 = vunpack.c.l.b16 %v3987
    %v4585 = vunpack.c.h.b16 %v3987
    %v4586 = vunpack.c.l.b16 %v3988
    %v4587 = vunpack.c.h.b16 %v3988
    %v4588 = vunpack.c.l.b16 %v3989
    %v4589 = vunpack.c.h.b16 %v3989
    %v4590 = vunpack.c.l.b16 %v3990
    %v4591 = vunpack.c.h.b16 %v3990
    %v4592 = vunpack.c.l.b16 %v3991
    %v4593 = vunpack.c.h.b16 %v3991
    %v4594 = vunpack.c.l.b16 %v3992
    %v4595 = vunpack.c.h.b16 %v3992
    %v4596 = vunpack.c.l.b16 %v3993
    %v4597 = vunpack.c.h.b16 %v3993
    %v4598 = vunpack.c.l.b16 %v3994
    %v4599 = vunpack.c.h.b16 %v3994
    %v4600 = vunpack.c.l.b16 %v3995
    %v4601 = vunpack.c.h.b16 %v3995
    %v4602 = vunpack.c.l.b16 %v3996
    %v4603 = vunpack.c.h.b16 %v3996
    %v4604 = vunpack.c.l.b16 %v3997
    %v4605 = vunpack.c.h.b16 %v3997
    %v4606 = vunpack.c.l.b16 %v3998
    %v4607 = vunpack.c.h.b16 %v3998
    %v4608 = vunpack.c.l.b16 %v3999
    %v4609 = vunpack.c.h.b16 %v3999
    %v4610 = vunpack.c.l.b16 %v4000
    %v4611 = vunpack.c.h.b16 %v4000
    %v4612 = vunpack.c.l.b16 %v4001
    %v4613 = vunpack.c.h.b16 %v4001
    %v4614 = vunpack.c.l.b16 %v4002
    %v4615 = vunpack.c.h.b16 %v4002
    %v4616 = vunpack.c.l.b16 %v4003
    %v4617 = vunpack.c.h.b16 %v4003
    %v4618 = vunpack.c.l.b16 %v4004
    %v4619 = vunpack.c.h.b16 %v4004
    %v4620 = vpack.c.b16 %v4558, %v4556
    %v4621 = vpack.c.b16 %v4559, %v4557
    %v4622 = vpack.c.b16 %v4562, %v4560
    %v4623 = vpack.c.b16 %v4563, %v4561
    %v4624 = vpack.c.b16 %v4566, %v4564
    %v4625 = vpack.c.b16 %v4567, %v4565
    %v4626 = vpack.c.b16 %v4570, %v4568
    %v4627 = vpack.c.b16 %v4571, %v4569
    %v4628 = vpack.c.b16 %v4574, %v4572
    %v4629 = vpack.c.b16 %v4575, %v4573
    %v4630 = vpack.c.b16 %v4578, %v4576
    %v4631 = vpack.c.b16 %v4579, %v4577
    %v4632 = vpack.c.b16 %v4582, %v4580
    %v4633 = vpack.c.b16 %v4583, %v4581
    %v4634 = vpack.c.b16 %v4586, %v4584
    %v4635 = vpack.c.b16 %v4587, %v4585
    %v4636 = vpack.c.b16 %v4590, %v4588
    %v4637 = vpack.c.b16 %v4591, %v4589
    %v4638 = vpack.c.b16 %v4594, %v4592
    %v4639 = vpack.c.b16 %v4595, %v4593
    %v4640 = vpack.c.b16 %v4598, %v4596
    %v4641 = vpack.c.b16 %v4599, %v4597
    %v4642 = vpack.c.b16 %v4602, %v4600
    %v4643 = vpack.c.b16 %v4603, %v4601
    %v4644 = vpack.c.b16 %v4606, %v4604
    %v4645 = vpack.c.b16 %v4607, %v4605
    %v4646 = vpack.c.b16 %v4610, %v4608
    %v4647 = vpack.c.b16 %v4611, %v4609
    %v4648 = vpack.c.b16 %v4614, %v4612
    %v4649 = vpack.c.b16 %v4615, %v4613
    %v4650 = vpack.c.b16 %v4618, %v4616
    %v4651 = vpack.c.b16 %v4619, %v4617
    %4684 = vmatprep.subr.bf16.mxu0 %v4635
    %4685 = vmatpush1.bf16.msra.mxu0 %v4634
    %4686 = vmatprep.subr.bf16.mxu0 %v4633
    %4687 = vmatpush1.bf16.msra.mxu0 %v4632
    %4688 = vmatprep.subr.bf16.mxu0 %v4631
    %4689 = vmatpush1.bf16.msra.mxu0 %v4630
    %4690 = vmatprep.subr.bf16.mxu0 %v4629
    %4691 = vmatpush1.bf16.msra.mxu0 %v4628
    %4692 = vmatprep.subr.bf16.mxu0 %v4627
    %4693 = vmatpush1.bf16.msra.mxu0 %v4626
    %4694 = vmatprep.subr.bf16.mxu0 %v4625
    %4695 = vmatpush1.bf16.msra.mxu0 %v4624
    %4696 = vmatprep.subr.bf16.mxu0 %v4623
    %4697 = vmatpush1.bf16.msra.mxu0 %v4622
    %4698 = vmatprep.subr.bf16.mxu0 %v4621
    %4699 = vmatpush1.bf16.msra.mxu0 %v4620
    %4700 = vmatprep.subr.bf16.mxu0 %v4651
    %4701 = vmatpush2.bf16.msra.mxu0 %v4650
    %4702 = vmatprep.subr.bf16.mxu0 %v4649
    %4703 = vmatpush2.bf16.msra.mxu0 %v4648
    %4704 = vmatprep.subr.bf16.mxu0 %v4647
    %4705 = vmatpush2.bf16.msra.mxu0 %v4646
    %4706 = vmatprep.subr.bf16.mxu0 %v4645
    %4707 = vmatpush2.bf16.msra.mxu0 %v4644
    %4708 = vmatprep.subr.bf16.mxu0 %v4643
    %4709 = vmatpush2.bf16.msra.mxu0 %v4642
    %4710 = vmatprep.subr.bf16.mxu0 %v4641
    %4711 = vmatpush2.bf16.msra.mxu0 %v4640
    %4712 = vmatprep.subr.bf16.mxu0 %v4639
    %4713 = vmatpush2.bf16.msra.mxu0 %v4638
    %4714 = vmatprep.subr.bf16.mxu0 %v4637
    %4715 = vmatpush2.bf16.msra.mxu0 %v4636
    %4716 = vmatprep.mubr.bf16.mxu0 %v4491
    %4717 = vmatmul.mubr.bf16.gmra.mxu0 %v4488
    %v4718 = vpop.f32.mrf.mxu0
    %v4719 = vadd.f32 %v4423, %v4718
    %v4720 = vpop.f32.mrf.mxu0
    %v4721 = vadd.f32 %v4425, %v4720
    %v4722 = vpop.f32.mrf.mxu0
    %v4723 = vadd.f32 %v4427, %v4722
    %v4724 = vpop.f32.mrf.mxu0
    %v4725 = vadd.f32 %v4429, %v4724
    %4726 = vmatprep.mubr.bf16.mxu0 %v4495
    %4727 = vmatmul.mubr.bf16.gmra.mxu0 %v4493
    %v4728 = vpop.f32.mrf.mxu0
    %v4729 = vadd.f32 %v4433, %v4728
    %v4730 = vpop.f32.mrf.mxu0
    %v4731 = vadd.f32 %v4435, %v4730
    %v4732 = vpop.f32.mrf.mxu0
    %v4733 = vadd.f32 %v4437, %v4732
    %v4734 = vpop.f32.mrf.mxu0
    %v4735 = vadd.f32 %v4439, %v4734
    %4736 = vmatprep.mubr.bf16.mxu0 %v4499
    %4737 = vmatmul.mubr.bf16.gmra.mxu0 %v4497
    %v4738 = vpop.f32.mrf.mxu0
    %v4739 = vadd.f32 %v4443, %v4738
    %v4740 = vpop.f32.mrf.mxu0
    %v4741 = vadd.f32 %v4445, %v4740
    %v4742 = vpop.f32.mrf.mxu0
    %v4743 = vadd.f32 %v4447, %v4742
    %v4744 = vpop.f32.mrf.mxu0
    %v4745 = vadd.f32 %v4449, %v4744
    %4746 = vmatprep.mubr.bf16.mxu0 %v4503
    %4747 = vmatmul.mubr.bf16.gmra.mxu0 %v4501
    %v4748 = vpop.f32.mrf.mxu0
    %v4749 = vadd.f32 %v4453, %v4748
    %v4750 = vpop.f32.mrf.mxu0
    %v4751 = vadd.f32 %v4455, %v4750
    %v4752 = vpop.f32.mrf.mxu0
    %v4753 = vadd.f32 %v4457, %v4752
    %v4754 = vpop.f32.mrf.mxu0
    %v4755 = vadd.f32 %v4459, %v4754
    %4756 = vmatprep.mubr.bf16.mxu0 %v4507
    %4757 = vmatmul.mubr.bf16.gmra.mxu0 %v4505
    %v4758 = vpop.f32.mrf.mxu0
    %v4759 = vadd.f32 %v4463, %v4758
    %v4760 = vpop.f32.mrf.mxu0
    %v4761 = vadd.f32 %v4465, %v4760
    %v4762 = vpop.f32.mrf.mxu0
    %v4763 = vadd.f32 %v4467, %v4762
    %v4764 = vpop.f32.mrf.mxu0
    %v4765 = vadd.f32 %v4469, %v4764
    %4766 = vmatprep.mubr.bf16.mxu0 %v4511
    %4767 = vmatmul.mubr.bf16.gmra.mxu0 %v4509
    %v4768 = vpop.f32.mrf.mxu0
    %v4769 = vadd.f32 %v4473, %v4768
    %v4770 = vpop.f32.mrf.mxu0
    %v4771 = vadd.f32 %v4475, %v4770
    %v4772 = vpop.f32.mrf.mxu0
    %v4773 = vadd.f32 %v4477, %v4772
    %v4774 = vpop.f32.mrf.mxu0
    %v4775 = vadd.f32 %v4479, %v4774
    %4776 = vdwg.mxu0
    %s4777 = scalar_lea.vmem [#allocation9], 512
    %v4778 = vld [vmem:[%s4777] sm:$0xff]
    %v4779 = vld [vmem:[%s4777 + $0x8] sm:$0xff]
    %v4780 = vld [vmem:[%s4777 + $0x10] sm:$0xff]
    %v4781 = vld [vmem:[%s4777 + $0x18] sm:$0xff]
    %v4782 = vld [vmem:[%s4777 + $0x20] sm:$0xff]
    %v4783 = vld [vmem:[%s4777 + $0x28] sm:$0xff]
    %v4784 = vld [vmem:[%s4777 + $0x30] sm:$0xff]
    %v4785 = vld [vmem:[%s4777 + $0x38] sm:$0xff]
    %v4786 = vld [vmem:[%s4777 + $0x40] sm:$0xff]
    %v4787 = vld [vmem:[%s4777 + $0x48] sm:$0xff]
    %v4788 = vld [vmem:[%s4777 + $0x50] sm:$0xff]
    %v4789 = vld [vmem:[%s4777 + $0x58] sm:$0xff]
    %v4790 = vld [vmem:[%s4777 + $0x60] sm:$0xff]
    %v4791 = vld [vmem:[%s4777 + $0x68] sm:$0xff]
    %v4792 = vld [vmem:[%s4777 + $0x70] sm:$0xff]
    %v4793 = vld [vmem:[%s4777 + $0x78] sm:$0xff]
    %v4794 = vld [vmem:[%s4777 + $0x80] sm:$0xff]
    %v4795 = vld [vmem:[%s4777 + $0x88] sm:$0xff]
    %v4796 = vld [vmem:[%s4777 + $0x90] sm:$0xff]
    %v4797 = vld [vmem:[%s4777 + $0x98] sm:$0xff]
    %v4798 = vld [vmem:[%s4777 + $0xa0] sm:$0xff]
    %v4799 = vld [vmem:[%s4777 + $0xa8] sm:$0xff]
    %v4800 = vld [vmem:[%s4777 + $0xb0] sm:$0xff]
    %v4801 = vld [vmem:[%s4777 + $0xb8] sm:$0xff]
    %v4802 = vld [vmem:[%s4777 + $0xc0] sm:$0xff]
    %v4803 = vld [vmem:[%s4777 + $0xc8] sm:$0xff]
    %v4804 = vld [vmem:[%s4777 + $0xd0] sm:$0xff]
    %v4805 = vld [vmem:[%s4777 + $0xd8] sm:$0xff]
    %v4806 = vld [vmem:[%s4777 + $0xe0] sm:$0xff]
    %v4807 = vld [vmem:[%s4777 + $0xe8] sm:$0xff]
    %v4808 = vld [vmem:[%s4777 + $0xf0] sm:$0xff]
    %v4809 = vld [vmem:[%s4777 + $0xf8] sm:$0xff]
    %v4810 = vpack.c.b16 %v4056, %v4054
    %v4811 = vpack.c.b16 %v4057, %v4055
    %v4812 = vpack.c.b16 %v4060, %v4058
    %v4813 = vpack.c.b16 %v4061, %v4059
    %v4814 = vpack.c.b16 %v4064, %v4062
    %v4815 = vpack.c.b16 %v4065, %v4063
    %v4816 = vpack.c.b16 %v4068, %v4066
    %v4817 = vpack.c.b16 %v4069, %v4067
    %v4818 = vpack.c.b16 %v4072, %v4070
    %v4819 = vpack.c.b16 %v4073, %v4071
    %v4820 = vpack.c.b16 %v4076, %v4074
    %v4821 = vpack.c.b16 %v4077, %v4075
    %v4866 = vunpack.c.l.b16 %v4778
    %v4867 = vunpack.c.h.b16 %v4778
    %v4868 = vunpack.c.l.b16 %v4779
    %v4869 = vunpack.c.h.b16 %v4779
    %v4870 = vunpack.c.l.b16 %v4780
    %v4871 = vunpack.c.h.b16 %v4780
    %v4872 = vunpack.c.l.b16 %v4781
    %v4873 = vunpack.c.h.b16 %v4781
    %v4874 = vunpack.c.l.b16 %v4782
    %v4875 = vunpack.c.h.b16 %v4782
    %v4876 = vunpack.c.l.b16 %v4783
    %v4877 = vunpack.c.h.b16 %v4783
    %v4878 = vunpack.c.l.b16 %v4784
    %v4879 = vunpack.c.h.b16 %v4784
    %v4880 = vunpack.c.l.b16 %v4785
    %v4881 = vunpack.c.h.b16 %v4785
    %v4882 = vunpack.c.l.b16 %v4786
    %v4883 = vunpack.c.h.b16 %v4786
    %v4884 = vunpack.c.l.b16 %v4787
    %v4885 = vunpack.c.h.b16 %v4787
    %v4886 = vunpack.c.l.b16 %v4788
    %v4887 = vunpack.c.h.b16 %v4788
    %v4888 = vunpack.c.l.b16 %v4789
    %v4889 = vunpack.c.h.b16 %v4789
    %v4890 = vunpack.c.l.b16 %v4790
    %v4891 = vunpack.c.h.b16 %v4790
    %v4892 = vunpack.c.l.b16 %v4791
    %v4893 = vunpack.c.h.b16 %v4791
    %v4894 = vunpack.c.l.b16 %v4792
    %v4895 = vunpack.c.h.b16 %v4792
    %v4896 = vunpack.c.l.b16 %v4793
    %v4897 = vunpack.c.h.b16 %v4793
    %v4898 = vunpack.c.l.b16 %v4794
    %v4899 = vunpack.c.h.b16 %v4794
    %v4900 = vunpack.c.l.b16 %v4795
    %v4901 = vunpack.c.h.b16 %v4795
    %v4902 = vunpack.c.l.b16 %v4796
    %v4903 = vunpack.c.h.b16 %v4796
    %v4904 = vunpack.c.l.b16 %v4797
    %v4905 = vunpack.c.h.b16 %v4797
    %v4906 = vunpack.c.l.b16 %v4798
    %v4907 = vunpack.c.h.b16 %v4798
    %v4908 = vunpack.c.l.b16 %v4799
    %v4909 = vunpack.c.h.b16 %v4799
    %v4910 = vunpack.c.l.b16 %v4800
    %v4911 = vunpack.c.h.b16 %v4800
    %v4912 = vunpack.c.l.b16 %v4801
    %v4913 = vunpack.c.h.b16 %v4801
    %v4914 = vunpack.c.l.b16 %v4802
    %v4915 = vunpack.c.h.b16 %v4802
    %v4916 = vunpack.c.l.b16 %v4803
    %v4917 = vunpack.c.h.b16 %v4803
    %v4918 = vunpack.c.l.b16 %v4804
    %v4919 = vunpack.c.h.b16 %v4804
    %v4920 = vunpack.c.l.b16 %v4805
    %v4921 = vunpack.c.h.b16 %v4805
    %v4922 = vunpack.c.l.b16 %v4806
    %v4923 = vunpack.c.h.b16 %v4806
    %v4924 = vunpack.c.l.b16 %v4807
    %v4925 = vunpack.c.h.b16 %v4807
    %v4926 = vunpack.c.l.b16 %v4808
    %v4927 = vunpack.c.h.b16 %v4808
    %v4928 = vunpack.c.l.b16 %v4809
    %v4929 = vunpack.c.h.b16 %v4809
    %v4930 = vpack.c.b16 %v4868, %v4866
    %v4931 = vpack.c.b16 %v4869, %v4867
    %v4932 = vpack.c.b16 %v4872, %v4870
    %v4933 = vpack.c.b16 %v4873, %v4871
    %v4934 = vpack.c.b16 %v4876, %v4874
    %v4935 = vpack.c.b16 %v4877, %v4875
    %v4936 = vpack.c.b16 %v4880, %v4878
    %v4937 = vpack.c.b16 %v4881, %v4879
    %v4938 = vpack.c.b16 %v4884, %v4882
    %v4939 = vpack.c.b16 %v4885, %v4883
    %v4940 = vpack.c.b16 %v4888, %v4886
    %v4941 = vpack.c.b16 %v4889, %v4887
    %v4942 = vpack.c.b16 %v4892, %v4890
    %v4943 = vpack.c.b16 %v4893, %v4891
    %v4944 = vpack.c.b16 %v4896, %v4894
    %v4945 = vpack.c.b16 %v4897, %v4895
    %v4946 = vpack.c.b16 %v4900, %v4898
    %v4947 = vpack.c.b16 %v4901, %v4899
    %v4948 = vpack.c.b16 %v4904, %v4902
    %v4949 = vpack.c.b16 %v4905, %v4903
    %v4950 = vpack.c.b16 %v4908, %v4906
    %v4951 = vpack.c.b16 %v4909, %v4907
    %v4952 = vpack.c.b16 %v4912, %v4910
    %v4953 = vpack.c.b16 %v4913, %v4911
    %v4954 = vpack.c.b16 %v4916, %v4914
    %v4955 = vpack.c.b16 %v4917, %v4915
    %v4956 = vpack.c.b16 %v4920, %v4918
    %v4957 = vpack.c.b16 %v4921, %v4919
    %v4958 = vpack.c.b16 %v4924, %v4922
    %v4959 = vpack.c.b16 %v4925, %v4923
    %v4960 = vpack.c.b16 %v4928, %v4926
    %v4961 = vpack.c.b16 %v4929, %v4927
    %4994 = vmatprep.subr.bf16.mxu0 %v4945
    %4995 = vmatpush1.bf16.msra.mxu0 %v4944
    %4996 = vmatprep.subr.bf16.mxu0 %v4943
    %4997 = vmatpush1.bf16.msra.mxu0 %v4942
    %4998 = vmatprep.subr.bf16.mxu0 %v4941
    %4999 = vmatpush1.bf16.msra.mxu0 %v4940
    %5000 = vmatprep.subr.bf16.mxu0 %v4939
    %5001 = vmatpush1.bf16.msra.mxu0 %v4938
    %5002 = vmatprep.subr.bf16.mxu0 %v4937
    %5003 = vmatpush1.bf16.msra.mxu0 %v4936
    %5004 = vmatprep.subr.bf16.mxu0 %v4935
    %5005 = vmatpush1.bf16.msra.mxu0 %v4934
    %5006 = vmatprep.subr.bf16.mxu0 %v4933
    %5007 = vmatpush1.bf16.msra.mxu0 %v4932
    %5008 = vmatprep.subr.bf16.mxu0 %v4931
    %5009 = vmatpush1.bf16.msra.mxu0 %v4930
    %5010 = vmatprep.subr.bf16.mxu0 %v4961
    %5011 = vmatpush2.bf16.msra.mxu0 %v4960
    %5012 = vmatprep.subr.bf16.mxu0 %v4959
    %5013 = vmatpush2.bf16.msra.mxu0 %v4958
    %5014 = vmatprep.subr.bf16.mxu0 %v4957
    %5015 = vmatpush2.bf16.msra.mxu0 %v4956
    %5016 = vmatprep.subr.bf16.mxu0 %v4955
    %5017 = vmatpush2.bf16.msra.mxu0 %v4954
    %5018 = vmatprep.subr.bf16.mxu0 %v4953
    %5019 = vmatpush2.bf16.msra.mxu0 %v4952
    %5020 = vmatprep.subr.bf16.mxu0 %v4951
    %5021 = vmatpush2.bf16.msra.mxu0 %v4950
    %5022 = vmatprep.subr.bf16.mxu0 %v4949
    %5023 = vmatpush2.bf16.msra.mxu0 %v4948
    %5024 = vmatprep.subr.bf16.mxu0 %v4947
    %5025 = vmatpush2.bf16.msra.mxu0 %v4946
    %5026 = vmatprep.mubr.bf16.mxu0 %v4811
    %5027 = vmatmul.mubr.bf16.gmra.mxu0 %v4810
    %v5028 = vpop.f32.mrf.mxu0
    %v5029 = vadd.f32 0.0, %v5028
    %v5030 = vpop.f32.mrf.mxu0
    %v5031 = vadd.f32 0.0, %v5030
    %v5032 = vpop.f32.mrf.mxu0
    %v5033 = vadd.f32 0.0, %v5032
    %v5034 = vpop.f32.mrf.mxu0
    %v5035 = vadd.f32 0.0, %v5034
    %5036 = vmatprep.mubr.bf16.mxu0 %v4813
    %5037 = vmatmul.mubr.bf16.gmra.mxu0 %v4812
    %v5038 = vpop.f32.mrf.mxu0
    %v5039 = vadd.f32 0.0, %v5038
    %v5040 = vpop.f32.mrf.mxu0
    %v5041 = vadd.f32 0.0, %v5040
    %v5042 = vpop.f32.mrf.mxu0
    %v5043 = vadd.f32 0.0, %v5042
    %v5044 = vpop.f32.mrf.mxu0
    %v5045 = vadd.f32 0.0, %v5044
    %5046 = vmatprep.mubr.bf16.mxu0 %v4815
    %5047 = vmatmul.mubr.bf16.gmra.mxu0 %v4814
    %v5048 = vpop.f32.mrf.mxu0
    %v5049 = vadd.f32 0.0, %v5048
    %v5050 = vpop.f32.mrf.mxu0
    %v5051 = vadd.f32 0.0, %v5050
    %v5052 = vpop.f32.mrf.mxu0
    %v5053 = vadd.f32 0.0, %v5052
    %v5054 = vpop.f32.mrf.mxu0
    %v5055 = vadd.f32 0.0, %v5054
    %5056 = vmatprep.mubr.bf16.mxu0 %v4817
    %5057 = vmatmul.mubr.bf16.gmra.mxu0 %v4816
    %v5058 = vpop.f32.mrf.mxu0
    %v5059 = vadd.f32 0.0, %v5058
    %v5060 = vpop.f32.mrf.mxu0
    %v5061 = vadd.f32 0.0, %v5060
    %v5062 = vpop.f32.mrf.mxu0
    %v5063 = vadd.f32 0.0, %v5062
    %v5064 = vpop.f32.mrf.mxu0
    %v5065 = vadd.f32 0.0, %v5064
    %5066 = vmatprep.mubr.bf16.mxu0 %v4819
    %5067 = vmatmul.mubr.bf16.gmra.mxu0 %v4818
    %v5068 = vpop.f32.mrf.mxu0
    %v5069 = vadd.f32 0.0, %v5068
    %v5070 = vpop.f32.mrf.mxu0
    %v5071 = vadd.f32 0.0, %v5070
    %v5072 = vpop.f32.mrf.mxu0
    %v5073 = vadd.f32 0.0, %v5072
    %v5074 = vpop.f32.mrf.mxu0
    %v5075 = vadd.f32 0.0, %v5074
    %5076 = vmatprep.mubr.bf16.mxu0 %v4821
    %5077 = vmatmul.mubr.bf16.gmra.mxu0 %v4820
    %v5078 = vpop.f32.mrf.mxu0
    %v5079 = vadd.f32 0.0, %v5078
    %v5080 = vpop.f32.mrf.mxu0
    %v5081 = vadd.f32 0.0, %v5080
    %v5082 = vpop.f32.mrf.mxu0
    %v5083 = vadd.f32 0.0, %v5082
    %v5084 = vpop.f32.mrf.mxu0
    %v5085 = vadd.f32 0.0, %v5084
    %5086 = vdwg.mxu0
    %v5087 = vadd.f32 %v4719, %v5029
    %v5088 = vadd.f32 %v4721, %v5031
    %v5089 = vadd.f32 %v4723, %v5033
    %v5090 = vadd.f32 %v4725, %v5035
    %v5091 = vadd.f32 %v4729, %v5039
    %v5092 = vadd.f32 %v4731, %v5041
    %v5093 = vadd.f32 %v4733, %v5043
    %v5094 = vadd.f32 %v4735, %v5045
    %v5095 = vadd.f32 %v4739, %v5049
    %v5096 = vadd.f32 %v4741, %v5051
    %v5097 = vadd.f32 %v4743, %v5053
    %v5098 = vadd.f32 %v4745, %v5055
    %v5099 = vadd.f32 %v4749, %v5059
    %v5100 = vadd.f32 %v4751, %v5061
    %v5101 = vadd.f32 %v4753, %v5063
    %v5102 = vadd.f32 %v4755, %v5065
    %v5103 = vadd.f32 %v4759, %v5069
    %v5104 = vadd.f32 %v4761, %v5071
    %v5105 = vadd.f32 %v4763, %v5073
    %v5106 = vadd.f32 %v4765, %v5075
    %v5107 = vadd.f32 %v4769, %v5079
    %v5108 = vadd.f32 %v4771, %v5081
    %v5109 = vadd.f32 %v4773, %v5083
    %v5110 = vadd.f32 %v4775, %v5085
    %v5111 = vld [vmem:[#allocation2 + $0x8] sm:$0xff]
    %v5112 = vld [vmem:[#allocation2 + $0x10] sm:$0xff]
    %v5113 = vld [vmem:[#allocation2 + $0x18] sm:$0xff]
    %v5114 = vld [vmem:[#allocation2 + $0x20] sm:$0xff]
    %v5115 = vld [vmem:[#allocation2 + $0x28] sm:$0xff]
    %v5116 = vld [vmem:[#allocation2 + $0x30] sm:$0xff]
    %v5117 = vld [vmem:[#allocation2 + $0x38] sm:$0xff]
    %v5118 = vld [vmem:[#allocation2 + $0x40] sm:$0xff]
    %v5119 = vld [vmem:[#allocation2 + $0x48] sm:$0xff]
    %v5120 = vld [vmem:[#allocation2 + $0x50] sm:$0xff]
    %v5121 = vld [vmem:[#allocation2 + $0x58] sm:$0xff]
    %v5122 = vld [vmem:[#allocation2 + $0x60] sm:$0xff]
    %v5123 = vld [vmem:[#allocation2 + $0x68] sm:$0x11]
    %s5124 = scalar_lea.vmem [#allocation9], 768
    %v5125 = vld [vmem:[%s5124] sm:$0xff]
    %v5126 = vld [vmem:[%s5124 + $0x8] sm:$0xff]
    %v5127 = vld [vmem:[%s5124 + $0x10] sm:$0xff]
    %v5128 = vld [vmem:[%s5124 + $0x18] sm:$0xff]
    %v5129 = vld [vmem:[%s5124 + $0x20] sm:$0xff]
    %v5130 = vld [vmem:[%s5124 + $0x28] sm:$0xff]
    %v5131 = vld [vmem:[%s5124 + $0x30] sm:$0xff]
    %v5132 = vld [vmem:[%s5124 + $0x38] sm:$0xff]
    %v5133 = vld [vmem:[%s5124 + $0x40] sm:$0xff]
    %v5134 = vld [vmem:[%s5124 + $0x48] sm:$0xff]
    %v5135 = vld [vmem:[%s5124 + $0x50] sm:$0xff]
    %v5136 = vld [vmem:[%s5124 + $0x58] sm:$0xff]
    %v5137 = vld [vmem:[%s5124 + $0x60] sm:$0xff]
    %v5138 = vld [vmem:[%s5124 + $0x68] sm:$0xff]
    %v5139 = vld [vmem:[%s5124 + $0x70] sm:$0xff]
    %v5140 = vld [vmem:[%s5124 + $0x78] sm:$0xff]
    %v5141 = vld [vmem:[%s5124 + $0x80] sm:$0xff]
    %v5142 = vld [vmem:[%s5124 + $0x88] sm:$0xff]
    %v5143 = vld [vmem:[%s5124 + $0x90] sm:$0xff]
    %v5144 = vld [vmem:[%s5124 + $0x98] sm:$0xff]
    %v5145 = vld [vmem:[%s5124 + $0xa0] sm:$0xff]
    %v5146 = vld [vmem:[%s5124 + $0xa8] sm:$0xff]
    %v5147 = vld [vmem:[%s5124 + $0xb0] sm:$0xff]
    %v5148 = vld [vmem:[%s5124 + $0xb8] sm:$0xff]
    %v5149 = vld [vmem:[%s5124 + $0xc0] sm:$0xff]
    %v5150 = vld [vmem:[%s5124 + $0xc8] sm:$0xff]
    %v5151 = vld [vmem:[%s5124 + $0xd0] sm:$0xff]
    %v5152 = vld [vmem:[%s5124 + $0xd8] sm:$0xff]
    %v5153 = vld [vmem:[%s5124 + $0xe0] sm:$0xff]
    %v5154 = vld [vmem:[%s5124 + $0xe8] sm:$0xff]
    %v5155 = vld [vmem:[%s5124 + $0xf0] sm:$0xff]
    %v5156 = vld [vmem:[%s5124 + $0xf8] sm:$0xff]
    %v5170 = vunpack.c.l.b16 %v5111
    %v5171 = vunpack.c.h.b16 %v5111
    %v5172 = vunpack.c.l.b16 %v5112
    %v5173 = vunpack.c.h.b16 %v5112
    %v5174 = vunpack.c.l.b16 %v5113
    %v5175 = vunpack.c.h.b16 %v5113
    %v5176 = vunpack.c.l.b16 %v5114
    %v5177 = vunpack.c.h.b16 %v5114
    %v5178 = vunpack.c.l.b16 %v5115
    %v5179 = vunpack.c.h.b16 %v5115
    %v5180 = vunpack.c.l.b16 %v5116
    %v5181 = vunpack.c.h.b16 %v5116
    %v5182 = vunpack.c.l.b16 %v5117
    %v5183 = vunpack.c.h.b16 %v5117
    %v5184 = vunpack.c.l.b16 %v5118
    %v5185 = vunpack.c.h.b16 %v5118
    %v5186 = vunpack.c.l.b16 %v5119
    %v5187 = vunpack.c.h.b16 %v5119
    %v5188 = vunpack.c.l.b16 %v5120
    %v5189 = vunpack.c.h.b16 %v5120
    %v5190 = vunpack.c.l.b16 %v5121
    %v5191 = vunpack.c.h.b16 %v5121
    %v5192 = vunpack.c.l.b16 %v5122
    %v5193 = vunpack.c.h.b16 %v5122
    %v5194 = vunpack.c.l.b16 %v5123
    %v5195 = vunpack.c.h.b16 %v5123
    %v5196 = vpack.c.b16 %v5172, %v5170
    %v5197 = vpack.c.b16 %v5173, %v5171
    %v5198 = vpack.c.b16 %v5176, %v5174
    %v5199 = vpack.c.b16 %v5177, %v5175
    %v5200 = vpack.c.b16 %v5180, %v5178
    %v5201 = vpack.c.b16 %v5181, %v5179
    %v5202 = vpack.c.b16 %v5184, %v5182
    %v5203 = vpack.c.b16 %v5185, %v5183
    %v5204 = vpack.c.b16 %v5188, %v5186
    %v5205 = vpack.c.b16 %v5189, %v5187
    %v5206 = vpack.c.b16 %v5192, %v5190
    %v5207 = vpack.c.b16 %v5193, %v5191
    %v5208 = vpack.c.b16 %v5194, %v5194
    %v5209 = vpack.c.b16 %v5195, %v5195
    %v5211 = vshrl.u32 %v5196, 16
    %v5213 = vshll.u32 %v5196, 16
    %v5215 = vrot.slane %v5213, 1
    %v5216 = vor.u32 %v5211, %v5215
    %v5218 = vshll.u32 %v5198, 16
    %v5220 = vrot.slane %v5218, 1
    %v5221 = vsel %vm1172, %v5216, %v5220
    %v5223 = vshrl.u32 %v5197, 16
    %v5225 = vshll.u32 %v5197, 16
    %v5227 = vrot.slane %v5225, 1
    %v5228 = vor.u32 %v5223, %v5227
    %v5230 = vshll.u32 %v5199, 16
    %v5232 = vrot.slane %v5230, 1
    %v5233 = vsel %vm1172, %v5228, %v5232
    %v5234 = vshrl.u32 %v5198, 16
    %v5236 = vor.u32 %v5234, %v5220
    %v5238 = vshll.u32 %v5200, 16
    %v5240 = vrot.slane %v5238, 1
    %v5241 = vsel %vm1172, %v5236, %v5240
    %v5242 = vshrl.u32 %v5199, 16
    %v5244 = vor.u32 %v5242, %v5232
    %v5246 = vshll.u32 %v5201, 16
    %v5248 = vrot.slane %v5246, 1
    %v5249 = vsel %vm1172, %v5244, %v5248
    %v5250 = vshrl.u32 %v5200, 16
    %v5252 = vor.u32 %v5250, %v5240
    %v5254 = vshll.u32 %v5202, 16
    %v5256 = vrot.slane %v5254, 1
    %v5257 = vsel %vm1172, %v5252, %v5256
    %v5258 = vshrl.u32 %v5201, 16
    %v5260 = vor.u32 %v5258, %v5248
    %v5262 = vshll.u32 %v5203, 16
    %v5264 = vrot.slane %v5262, 1
    %v5265 = vsel %vm1172, %v5260, %v5264
    %v5266 = vshrl.u32 %v5202, 16
    %v5268 = vor.u32 %v5266, %v5256
    %v5270 = vshll.u32 %v5204, 16
    %v5272 = vrot.slane %v5270, 1
    %v5273 = vsel %vm1172, %v5268, %v5272
    %v5274 = vshrl.u32 %v5203, 16
    %v5276 = vor.u32 %v5274, %v5264
    %v5278 = vshll.u32 %v5205, 16
    %v5280 = vrot.slane %v5278, 1
    %v5281 = vsel %vm1172, %v5276, %v5280
    %v5282 = vshrl.u32 %v5204, 16
    %v5284 = vor.u32 %v5282, %v5272
    %v5286 = vshll.u32 %v5206, 16
    %v5288 = vrot.slane %v5286, 1
    %v5289 = vsel %vm1172, %v5284, %v5288
    %v5290 = vshrl.u32 %v5205, 16
    %v5292 = vor.u32 %v5290, %v5280
    %v5294 = vshll.u32 %v5207, 16
    %v5296 = vrot.slane %v5294, 1
    %v5297 = vsel %vm1172, %v5292, %v5296
    %v5298 = vshrl.u32 %v5206, 16
    %v5300 = vor.u32 %v5298, %v5288
    %v5302 = vshll.u32 %v5208, 16
    %v5304 = vrot.slane %v5302, 1
    %v5305 = vsel %vm1172, %v5300, %v5304
    %v5306 = vshrl.u32 %v5207, 16
    %v5308 = vor.u32 %v5306, %v5296
    %v5310 = vshll.u32 %v5209, 16
    %v5312 = vrot.slane %v5310, 1
    %v5313 = vsel %vm1172, %v5308, %v5312
    %v5358 = vunpack.c.l.b16 %v5125
    %v5359 = vunpack.c.h.b16 %v5125
    %v5360 = vunpack.c.l.b16 %v5126
    %v5361 = vunpack.c.h.b16 %v5126
    %v5362 = vunpack.c.l.b16 %v5127
    %v5363 = vunpack.c.h.b16 %v5127
    %v5364 = vunpack.c.l.b16 %v5128
    %v5365 = vunpack.c.h.b16 %v5128
    %v5366 = vunpack.c.l.b16 %v5129
    %v5367 = vunpack.c.h.b16 %v5129
    %v5368 = vunpack.c.l.b16 %v5130
    %v5369 = vunpack.c.h.b16 %v5130
    %v5370 = vunpack.c.l.b16 %v5131
    %v5371 = vunpack.c.h.b16 %v5131
    %v5372 = vunpack.c.l.b16 %v5132
    %v5373 = vunpack.c.h.b16 %v5132
    %v5374 = vunpack.c.l.b16 %v5133
    %v5375 = vunpack.c.h.b16 %v5133
    %v5376 = vunpack.c.l.b16 %v5134
    %v5377 = vunpack.c.h.b16 %v5134
    %v5378 = vunpack.c.l.b16 %v5135
    %v5379 = vunpack.c.h.b16 %v5135
    %v5380 = vunpack.c.l.b16 %v5136
    %v5381 = vunpack.c.h.b16 %v5136
    %v5382 = vunpack.c.l.b16 %v5137
    %v5383 = vunpack.c.h.b16 %v5137
    %v5384 = vunpack.c.l.b16 %v5138
    %v5385 = vunpack.c.h.b16 %v5138
    %v5386 = vunpack.c.l.b16 %v5139
    %v5387 = vunpack.c.h.b16 %v5139
    %v5388 = vunpack.c.l.b16 %v5140
    %v5389 = vunpack.c.h.b16 %v5140
    %v5390 = vunpack.c.l.b16 %v5141
    %v5391 = vunpack.c.h.b16 %v5141
    %v5392 = vunpack.c.l.b16 %v5142
    %v5393 = vunpack.c.h.b16 %v5142
    %v5394 = vunpack.c.l.b16 %v5143
    %v5395 = vunpack.c.h.b16 %v5143
    %v5396 = vunpack.c.l.b16 %v5144
    %v5397 = vunpack.c.h.b16 %v5144
    %v5398 = vunpack.c.l.b16 %v5145
    %v5399 = vunpack.c.h.b16 %v5145
    %v5400 = vunpack.c.l.b16 %v5146
    %v5401 = vunpack.c.h.b16 %v5146
    %v5402 = vunpack.c.l.b16 %v5147
    %v5403 = vunpack.c.h.b16 %v5147
    %v5404 = vunpack.c.l.b16 %v5148
    %v5405 = vunpack.c.h.b16 %v5148
    %v5406 = vunpack.c.l.b16 %v5149
    %v5407 = vunpack.c.h.b16 %v5149
    %v5408 = vunpack.c.l.b16 %v5150
    %v5409 = vunpack.c.h.b16 %v5150
    %v5410 = vunpack.c.l.b16 %v5151
    %v5411 = vunpack.c.h.b16 %v5151
    %v5412 = vunpack.c.l.b16 %v5152
    %v5413 = vunpack.c.h.b16 %v5152
    %v5414 = vunpack.c.l.b16 %v5153
    %v5415 = vunpack.c.h.b16 %v5153
    %v5416 = vunpack.c.l.b16 %v5154
    %v5417 = vunpack.c.h.b16 %v5154
    %v5418 = vunpack.c.l.b16 %v5155
    %v5419 = vunpack.c.h.b16 %v5155
    %v5420 = vunpack.c.l.b16 %v5156
    %v5421 = vunpack.c.h.b16 %v5156
    %v5422 = vpack.c.b16 %v5360, %v5358
    %v5423 = vpack.c.b16 %v5361, %v5359
    %v5424 = vpack.c.b16 %v5364, %v5362
    %v5425 = vpack.c.b16 %v5365, %v5363
    %v5426 = vpack.c.b16 %v5368, %v5366
    %v5427 = vpack.c.b16 %v5369, %v5367
    %v5428 = vpack.c.b16 %v5372, %v5370
    %v5429 = vpack.c.b16 %v5373, %v5371
    %v5430 = vpack.c.b16 %v5376, %v5374
    %v5431 = vpack.c.b16 %v5377, %v5375
    %v5432 = vpack.c.b16 %v5380, %v5378
    %v5433 = vpack.c.b16 %v5381, %v5379
    %v5434 = vpack.c.b16 %v5384, %v5382
    %v5435 = vpack.c.b16 %v5385, %v5383
    %v5436 = vpack.c.b16 %v5388, %v5386
    %v5437 = vpack.c.b16 %v5389, %v5387
    %v5438 = vpack.c.b16 %v5392, %v5390
    %v5439 = vpack.c.b16 %v5393, %v5391
    %v5440 = vpack.c.b16 %v5396, %v5394
    %v5441 = vpack.c.b16 %v5397, %v5395
    %v5442 = vpack.c.b16 %v5400, %v5398
    %v5443 = vpack.c.b16 %v5401, %v5399
    %v5444 = vpack.c.b16 %v5404, %v5402
    %v5445 = vpack.c.b16 %v5405, %v5403
    %v5446 = vpack.c.b16 %v5408, %v5406
    %v5447 = vpack.c.b16 %v5409, %v5407
    %v5448 = vpack.c.b16 %v5412, %v5410
    %v5449 = vpack.c.b16 %v5413, %v5411
    %v5450 = vpack.c.b16 %v5416, %v5414
    %v5451 = vpack.c.b16 %v5417, %v5415
    %v5452 = vpack.c.b16 %v5420, %v5418
    %v5453 = vpack.c.b16 %v5421, %v5419
    %5486 = vmatprep.subr.bf16.mxu0 %v5437
    %5487 = vmatpush1.bf16.msra.mxu0 %v5436
    %5488 = vmatprep.subr.bf16.mxu0 %v5435
    %5489 = vmatpush1.bf16.msra.mxu0 %v5434
    %5490 = vmatprep.subr.bf16.mxu0 %v5433
    %5491 = vmatpush1.bf16.msra.mxu0 %v5432
    %5492 = vmatprep.subr.bf16.mxu0 %v5431
    %5493 = vmatpush1.bf16.msra.mxu0 %v5430
    %5494 = vmatprep.subr.bf16.mxu0 %v5429
    %5495 = vmatpush1.bf16.msra.mxu0 %v5428
    %5496 = vmatprep.subr.bf16.mxu0 %v5427
    %5497 = vmatpush1.bf16.msra.mxu0 %v5426
    %5498 = vmatprep.subr.bf16.mxu0 %v5425
    %5499 = vmatpush1.bf16.msra.mxu0 %v5424
    %5500 = vmatprep.subr.bf16.mxu0 %v5423
    %5501 = vmatpush1.bf16.msra.mxu0 %v5422
    %5502 = vmatprep.subr.bf16.mxu0 %v5453
    %5503 = vmatpush2.bf16.msra.mxu0 %v5452
    %5504 = vmatprep.subr.bf16.mxu0 %v5451
    %5505 = vmatpush2.bf16.msra.mxu0 %v5450
    %5506 = vmatprep.subr.bf16.mxu0 %v5449
    %5507 = vmatpush2.bf16.msra.mxu0 %v5448
    %5508 = vmatprep.subr.bf16.mxu0 %v5447
    %5509 = vmatpush2.bf16.msra.mxu0 %v5446
    %5510 = vmatprep.subr.bf16.mxu0 %v5445
    %5511 = vmatpush2.bf16.msra.mxu0 %v5444
    %5512 = vmatprep.subr.bf16.mxu0 %v5443
    %5513 = vmatpush2.bf16.msra.mxu0 %v5442
    %5514 = vmatprep.subr.bf16.mxu0 %v5441
    %5515 = vmatpush2.bf16.msra.mxu0 %v5440
    %5516 = vmatprep.subr.bf16.mxu0 %v5439
    %5517 = vmatpush2.bf16.msra.mxu0 %v5438
    %5518 = vmatprep.mubr.bf16.mxu0 %v5233
    %5519 = vmatmul.mubr.bf16.gmra.mxu0 %v5221
    %v5520 = vpop.f32.mrf.mxu0
    %v5521 = vadd.f32 0.0, %v5520
    %v5522 = vpop.f32.mrf.mxu0
    %v5523 = vadd.f32 0.0, %v5522
    %v5524 = vpop.f32.mrf.mxu0
    %v5525 = vadd.f32 0.0, %v5524
    %v5526 = vpop.f32.mrf.mxu0
    %v5527 = vadd.f32 0.0, %v5526
    %5528 = vmatprep.mubr.bf16.mxu0 %v5249
    %5529 = vmatmul.mubr.bf16.gmra.mxu0 %v5241
    %v5530 = vpop.f32.mrf.mxu0
    %v5531 = vadd.f32 0.0, %v5530
    %v5532 = vpop.f32.mrf.mxu0
    %v5533 = vadd.f32 0.0, %v5532
    %v5534 = vpop.f32.mrf.mxu0
    %v5535 = vadd.f32 0.0, %v5534
    %v5536 = vpop.f32.mrf.mxu0
    %v5537 = vadd.f32 0.0, %v5536
    %5538 = vmatprep.mubr.bf16.mxu0 %v5265
    %5539 = vmatmul.mubr.bf16.gmra.mxu0 %v5257
    %v5540 = vpop.f32.mrf.mxu0
    %v5541 = vadd.f32 0.0, %v5540
    %v5542 = vpop.f32.mrf.mxu0
    %v5543 = vadd.f32 0.0, %v5542
    %v5544 = vpop.f32.mrf.mxu0
    %v5545 = vadd.f32 0.0, %v5544
    %v5546 = vpop.f32.mrf.mxu0
    %v5547 = vadd.f32 0.0, %v5546
    %5548 = vmatprep.mubr.bf16.mxu0 %v5281
    %5549 = vmatmul.mubr.bf16.gmra.mxu0 %v5273
    %v5550 = vpop.f32.mrf.mxu0
    %v5551 = vadd.f32 0.0, %v5550
    %v5552 = vpop.f32.mrf.mxu0
    %v5553 = vadd.f32 0.0, %v5552
    %v5554 = vpop.f32.mrf.mxu0
    %v5555 = vadd.f32 0.0, %v5554
    %v5556 = vpop.f32.mrf.mxu0
    %v5557 = vadd.f32 0.0, %v5556
    %5558 = vmatprep.mubr.bf16.mxu0 %v5297
    %5559 = vmatmul.mubr.bf16.gmra.mxu0 %v5289
    %v5560 = vpop.f32.mrf.mxu0
    %v5561 = vadd.f32 0.0, %v5560
    %v5562 = vpop.f32.mrf.mxu0
    %v5563 = vadd.f32 0.0, %v5562
    %v5564 = vpop.f32.mrf.mxu0
    %v5565 = vadd.f32 0.0, %v5564
    %v5566 = vpop.f32.mrf.mxu0
    %v5567 = vadd.f32 0.0, %v5566
    %5568 = vmatprep.mubr.bf16.mxu0 %v5313
    %5569 = vmatmul.mubr.bf16.gmra.mxu0 %v5305
    %v5570 = vpop.f32.mrf.mxu0
    %v5571 = vadd.f32 0.0, %v5570
    %v5572 = vpop.f32.mrf.mxu0
    %v5573 = vadd.f32 0.0, %v5572
    %v5574 = vpop.f32.mrf.mxu0
    %v5575 = vadd.f32 0.0, %v5574
    %v5576 = vpop.f32.mrf.mxu0
    %v5577 = vadd.f32 0.0, %v5576
    %5578 = vdwg.mxu0
    %v5579 = vadd.f32 %v5087, %v5521
    %v5580 = vadd.f32 %v5088, %v5523
    %v5581 = vadd.f32 %v5089, %v5525
    %v5582 = vadd.f32 %v5090, %v5527
    %v5583 = vadd.f32 %v5091, %v5531
    %v5584 = vadd.f32 %v5092, %v5533
    %v5585 = vadd.f32 %v5093, %v5535
    %v5586 = vadd.f32 %v5094, %v5537
    %v5587 = vadd.f32 %v5095, %v5541
    %v5588 = vadd.f32 %v5096, %v5543
    %v5589 = vadd.f32 %v5097, %v5545
    %v5590 = vadd.f32 %v5098, %v5547
    %v5591 = vadd.f32 %v5099, %v5551
    %v5592 = vadd.f32 %v5100, %v5553
    %v5593 = vadd.f32 %v5101, %v5555
    %v5594 = vadd.f32 %v5102, %v5557
    %v5595 = vadd.f32 %v5103, %v5561
    %v5596 = vadd.f32 %v5104, %v5563
    %v5597 = vadd.f32 %v5105, %v5565
    %v5598 = vadd.f32 %v5106, %v5567
    %v5599 = vadd.f32 %v5107, %v5571
    %v5600 = vadd.f32 %v5108, %v5573
    %v5601 = vadd.f32 %v5109, %v5575
    %v5602 = vadd.f32 %v5110, %v5577
    %v5603 = vld [vmem:[#allocation2 + $0x8] sm:$0xee]
    %s5604 = scalar_lea.vmem [#allocation9], 1024
    %v5605 = vld [vmem:[%s5604] sm:$0xff]
    %v5606 = vld [vmem:[%s5604 + $0x8] sm:$0xff]
    %v5607 = vld [vmem:[%s5604 + $0x10] sm:$0xff]
    %v5608 = vld [vmem:[%s5604 + $0x18] sm:$0xff]
    %v5609 = vld [vmem:[%s5604 + $0x20] sm:$0xff]
    %v5610 = vld [vmem:[%s5604 + $0x28] sm:$0xff]
    %v5611 = vld [vmem:[%s5604 + $0x30] sm:$0xff]
    %v5612 = vld [vmem:[%s5604 + $0x38] sm:$0xff]
    %v5613 = vld [vmem:[%s5604 + $0x40] sm:$0xff]
    %v5614 = vld [vmem:[%s5604 + $0x48] sm:$0xff]
    %v5615 = vld [vmem:[%s5604 + $0x50] sm:$0xff]
    %v5616 = vld [vmem:[%s5604 + $0x58] sm:$0xff]
    %v5617 = vld [vmem:[%s5604 + $0x60] sm:$0xff]
    %v5618 = vld [vmem:[%s5604 + $0x68] sm:$0xff]
    %v5619 = vld [vmem:[%s5604 + $0x70] sm:$0xff]
    %v5620 = vld [vmem:[%s5604 + $0x78] sm:$0xff]
    %v5621 = vld [vmem:[%s5604 + $0x80] sm:$0xff]
    %v5622 = vld [vmem:[%s5604 + $0x88] sm:$0xff]
    %v5623 = vld [vmem:[%s5604 + $0x90] sm:$0xff]
    %v5624 = vld [vmem:[%s5604 + $0x98] sm:$0xff]
    %v5625 = vld [vmem:[%s5604 + $0xa0] sm:$0xff]
    %v5626 = vld [vmem:[%s5604 + $0xa8] sm:$0xff]
    %v5627 = vld [vmem:[%s5604 + $0xb0] sm:$0xff]
    %v5628 = vld [vmem:[%s5604 + $0xb8] sm:$0xff]
    %v5629 = vld [vmem:[%s5604 + $0xc0] sm:$0xff]
    %v5630 = vld [vmem:[%s5604 + $0xc8] sm:$0xff]
    %v5631 = vld [vmem:[%s5604 + $0xd0] sm:$0xff]
    %v5632 = vld [vmem:[%s5604 + $0xd8] sm:$0xff]
    %v5633 = vld [vmem:[%s5604 + $0xe0] sm:$0xff]
    %v5634 = vld [vmem:[%s5604 + $0xe8] sm:$0xff]
    %v5635 = vld [vmem:[%s5604 + $0xf0] sm:$0xff]
    %v5636 = vld [vmem:[%s5604 + $0xf8] sm:$0xff]
    %v5638 = vunpack.c.l.b16 %v5603
    %v5639 = vunpack.c.h.b16 %v5603
    %v5640 = vpack.c.b16 %v5172, %v5638
    %v5641 = vpack.c.b16 %v5173, %v5639
    %v5642 = vrot.slane %v5640, 1
    %v5643 = vrot.slane %v5198, 1
    %v5644 = vsel %vm1449, %v5642, %v5643
    %v5645 = vrot.slane %v5641, 1
    %v5646 = vrot.slane %v5199, 1
    %v5647 = vsel %vm1449, %v5645, %v5646
    %v5648 = vrot.slane %v5200, 1
    %v5649 = vsel %vm1449, %v5643, %v5648
    %v5650 = vrot.slane %v5201, 1
    %v5651 = vsel %vm1449, %v5646, %v5650
    %v5652 = vrot.slane %v5202, 1
    %v5653 = vsel %vm1449, %v5648, %v5652
    %v5654 = vrot.slane %v5203, 1
    %v5655 = vsel %vm1449, %v5650, %v5654
    %v5656 = vrot.slane %v5204, 1
    %v5657 = vsel %vm1449, %v5652, %v5656
    %v5658 = vrot.slane %v5205, 1
    %v5659 = vsel %vm1449, %v5654, %v5658
    %v5660 = vrot.slane %v5206, 1
    %v5661 = vsel %vm1449, %v5656, %v5660
    %v5662 = vrot.slane %v5207, 1
    %v5663 = vsel %vm1449, %v5658, %v5662
    %v5664 = vrot.slane %v5208, 1
    %v5665 = vsel %vm1449, %v5660, %v5664
    %v5666 = vrot.slane %v5209, 1
    %v5667 = vsel %vm1449, %v5662, %v5666
    %v5712 = vunpack.c.l.b16 %v5605
    %v5713 = vunpack.c.h.b16 %v5605
    %v5714 = vunpack.c.l.b16 %v5606
    %v5715 = vunpack.c.h.b16 %v5606
    %v5716 = vunpack.c.l.b16 %v5607
    %v5717 = vunpack.c.h.b16 %v5607
    %v5718 = vunpack.c.l.b16 %v5608
    %v5719 = vunpack.c.h.b16 %v5608
    %v5720 = vunpack.c.l.b16 %v5609
    %v5721 = vunpack.c.h.b16 %v5609
    %v5722 = vunpack.c.l.b16 %v5610
    %v5723 = vunpack.c.h.b16 %v5610
    %v5724 = vunpack.c.l.b16 %v5611
    %v5725 = vunpack.c.h.b16 %v5611
    %v5726 = vunpack.c.l.b16 %v5612
    %v5727 = vunpack.c.h.b16 %v5612
    %v5728 = vunpack.c.l.b16 %v5613
    %v5729 = vunpack.c.h.b16 %v5613
    %v5730 = vunpack.c.l.b16 %v5614
    %v5731 = vunpack.c.h.b16 %v5614
    %v5732 = vunpack.c.l.b16 %v5615
    %v5733 = vunpack.c.h.b16 %v5615
    %v5734 = vunpack.c.l.b16 %v5616
    %v5735 = vunpack.c.h.b16 %v5616
    %v5736 = vunpack.c.l.b16 %v5617
    %v5737 = vunpack.c.h.b16 %v5617
    %v5738 = vunpack.c.l.b16 %v5618
    %v5739 = vunpack.c.h.b16 %v5618
    %v5740 = vunpack.c.l.b16 %v5619
    %v5741 = vunpack.c.h.b16 %v5619
    %v5742 = vunpack.c.l.b16 %v5620
    %v5743 = vunpack.c.h.b16 %v5620
    %v5744 = vunpack.c.l.b16 %v5621
    %v5745 = vunpack.c.h.b16 %v5621
    %v5746 = vunpack.c.l.b16 %v5622
    %v5747 = vunpack.c.h.b16 %v5622
    %v5748 = vunpack.c.l.b16 %v5623
    %v5749 = vunpack.c.h.b16 %v5623
    %v5750 = vunpack.c.l.b16 %v5624
    %v5751 = vunpack.c.h.b16 %v5624
    %v5752 = vunpack.c.l.b16 %v5625
    %v5753 = vunpack.c.h.b16 %v5625
    %v5754 = vunpack.c.l.b16 %v5626
    %v5755 = vunpack.c.h.b16 %v5626
    %v5756 = vunpack.c.l.b16 %v5627
    %v5757 = vunpack.c.h.b16 %v5627
    %v5758 = vunpack.c.l.b16 %v5628
    %v5759 = vunpack.c.h.b16 %v5628
    %v5760 = vunpack.c.l.b16 %v5629
    %v5761 = vunpack.c.h.b16 %v5629
    %v5762 = vunpack.c.l.b16 %v5630
    %v5763 = vunpack.c.h.b16 %v5630
    %v5764 = vunpack.c.l.b16 %v5631
    %v5765 = vunpack.c.h.b16 %v5631
    %v5766 = vunpack.c.l.b16 %v5632
    %v5767 = vunpack.c.h.b16 %v5632
    %v5768 = vunpack.c.l.b16 %v5633
    %v5769 = vunpack.c.h.b16 %v5633
    %v5770 = vunpack.c.l.b16 %v5634
    %v5771 = vunpack.c.h.b16 %v5634
    %v5772 = vunpack.c.l.b16 %v5635
    %v5773 = vunpack.c.h.b16 %v5635
    %v5774 = vunpack.c.l.b16 %v5636
    %v5775 = vunpack.c.h.b16 %v5636
    %v5776 = vpack.c.b16 %v5714, %v5712
    %v5777 = vpack.c.b16 %v5715, %v5713
    %v5778 = vpack.c.b16 %v5718, %v5716
    %v5779 = vpack.c.b16 %v5719, %v5717
    %v5780 = vpack.c.b16 %v5722, %v5720
    %v5781 = vpack.c.b16 %v5723, %v5721
    %v5782 = vpack.c.b16 %v5726, %v5724
    %v5783 = vpack.c.b16 %v5727, %v5725
    %v5784 = vpack.c.b16 %v5730, %v5728
    %v5785 = vpack.c.b16 %v5731, %v5729
    %v5786 = vpack.c.b16 %v5734, %v5732
    %v5787 = vpack.c.b16 %v5735, %v5733
    %v5788 = vpack.c.b16 %v5738, %v5736
    %v5789 = vpack.c.b16 %v5739, %v5737
    %v5790 = vpack.c.b16 %v5742, %v5740
    %v5791 = vpack.c.b16 %v5743, %v5741
    %v5792 = vpack.c.b16 %v5746, %v5744
    %v5793 = vpack.c.b16 %v5747, %v5745
    %v5794 = vpack.c.b16 %v5750, %v5748
    %v5795 = vpack.c.b16 %v5751, %v5749
    %v5796 = vpack.c.b16 %v5754, %v5752
    %v5797 = vpack.c.b16 %v5755, %v5753
    %v5798 = vpack.c.b16 %v5758, %v5756
    %v5799 = vpack.c.b16 %v5759, %v5757
    %v5800 = vpack.c.b16 %v5762, %v5760
    %v5801 = vpack.c.b16 %v5763, %v5761
    %v5802 = vpack.c.b16 %v5766, %v5764
    %v5803 = vpack.c.b16 %v5767, %v5765
    %v5804 = vpack.c.b16 %v5770, %v5768
    %v5805 = vpack.c.b16 %v5771, %v5769
    %v5806 = vpack.c.b16 %v5774, %v5772
    %v5807 = vpack.c.b16 %v5775, %v5773
    %5840 = vmatprep.subr.bf16.mxu0 %v5791
    %5841 = vmatpush1.bf16.msra.mxu0 %v5790
    %5842 = vmatprep.subr.bf16.mxu0 %v5789
    %5843 = vmatpush1.bf16.msra.mxu0 %v5788
    %5844 = vmatprep.subr.bf16.mxu0 %v5787
    %5845 = vmatpush1.bf16.msra.mxu0 %v5786
    %5846 = vmatprep.subr.bf16.mxu0 %v5785
    %5847 = vmatpush1.bf16.msra.mxu0 %v5784
    %5848 = vmatprep.subr.bf16.mxu0 %v5783
    %5849 = vmatpush1.bf16.msra.mxu0 %v5782
    %5850 = vmatprep.subr.bf16.mxu0 %v5781
    %5851 = vmatpush1.bf16.msra.mxu0 %v5780
    %5852 = vmatprep.subr.bf16.mxu0 %v5779
    %5853 = vmatpush1.bf16.msra.mxu0 %v5778
    %5854 = vmatprep.subr.bf16.mxu0 %v5777
    %5855 = vmatpush1.bf16.msra.mxu0 %v5776
    %5856 = vmatprep.subr.bf16.mxu0 %v5807
    %5857 = vmatpush2.bf16.msra.mxu0 %v5806
    %5858 = vmatprep.subr.bf16.mxu0 %v5805
    %5859 = vmatpush2.bf16.msra.mxu0 %v5804
    %5860 = vmatprep.subr.bf16.mxu0 %v5803
    %5861 = vmatpush2.bf16.msra.mxu0 %v5802
    %5862 = vmatprep.subr.bf16.mxu0 %v5801
    %5863 = vmatpush2.bf16.msra.mxu0 %v5800
    %5864 = vmatprep.subr.bf16.mxu0 %v5799
    %5865 = vmatpush2.bf16.msra.mxu0 %v5798
    %5866 = vmatprep.subr.bf16.mxu0 %v5797
    %5867 = vmatpush2.bf16.msra.mxu0 %v5796
    %5868 = vmatprep.subr.bf16.mxu0 %v5795
    %5869 = vmatpush2.bf16.msra.mxu0 %v5794
    %5870 = vmatprep.subr.bf16.mxu0 %v5793
    %5871 = vmatpush2.bf16.msra.mxu0 %v5792
    %5872 = vmatprep.mubr.bf16.mxu0 %v5647
    %5873 = vmatmul.mubr.bf16.gmra.mxu0 %v5644
    %v5874 = vpop.f32.mrf.mxu0
    %v5875 = vadd.f32 0.0, %v5874
    %v5876 = vpop.f32.mrf.mxu0
    %v5877 = vadd.f32 0.0, %v5876
    %v5878 = vpop.f32.mrf.mxu0
    %v5879 = vadd.f32 0.0, %v5878
    %v5880 = vpop.f32.mrf.mxu0
    %v5881 = vadd.f32 0.0, %v5880
    %5882 = vmatprep.mubr.bf16.mxu0 %v5651
    %5883 = vmatmul.mubr.bf16.gmra.mxu0 %v5649
    %v5884 = vpop.f32.mrf.mxu0
    %v5885 = vadd.f32 0.0, %v5884
    %v5886 = vpop.f32.mrf.mxu0
    %v5887 = vadd.f32 0.0, %v5886
    %v5888 = vpop.f32.mrf.mxu0
    %v5889 = vadd.f32 0.0, %v5888
    %v5890 = vpop.f32.mrf.mxu0
    %v5891 = vadd.f32 0.0, %v5890
    %5892 = vmatprep.mubr.bf16.mxu0 %v5655
    %5893 = vmatmul.mubr.bf16.gmra.mxu0 %v5653
    %v5894 = vpop.f32.mrf.mxu0
    %v5895 = vadd.f32 0.0, %v5894
    %v5896 = vpop.f32.mrf.mxu0
    %v5897 = vadd.f32 0.0, %v5896
    %v5898 = vpop.f32.mrf.mxu0
    %v5899 = vadd.f32 0.0, %v5898
    %v5900 = vpop.f32.mrf.mxu0
    %v5901 = vadd.f32 0.0, %v5900
    %5902 = vmatprep.mubr.bf16.mxu0 %v5659
    %5903 = vmatmul.mubr.bf16.gmra.mxu0 %v5657
    %v5904 = vpop.f32.mrf.mxu0
    %v5905 = vadd.f32 0.0, %v5904
    %v5906 = vpop.f32.mrf.mxu0
    %v5907 = vadd.f32 0.0, %v5906
    %v5908 = vpop.f32.mrf.mxu0
    %v5909 = vadd.f32 0.0, %v5908
    %v5910 = vpop.f32.mrf.mxu0
    %v5911 = vadd.f32 0.0, %v5910
    %5912 = vmatprep.mubr.bf16.mxu0 %v5663
    %5913 = vmatmul.mubr.bf16.gmra.mxu0 %v5661
    %v5914 = vpop.f32.mrf.mxu0
    %v5915 = vadd.f32 0.0, %v5914
    %v5916 = vpop.f32.mrf.mxu0
    %v5917 = vadd.f32 0.0, %v5916
    %v5918 = vpop.f32.mrf.mxu0
    %v5919 = vadd.f32 0.0, %v5918
    %v5920 = vpop.f32.mrf.mxu0
    %v5921 = vadd.f32 0.0, %v5920
    %5922 = vmatprep.mubr.bf16.mxu0 %v5667
    %5923 = vmatmul.mubr.bf16.gmra.mxu0 %v5665
    %v5924 = vpop.f32.mrf.mxu0
    %v5925 = vadd.f32 0.0, %v5924
    %v5926 = vpop.f32.mrf.mxu0
    %v5927 = vadd.f32 0.0, %v5926
    %v5928 = vpop.f32.mrf.mxu0
    %v5929 = vadd.f32 0.0, %v5928
    %v5930 = vpop.f32.mrf.mxu0
    %v5931 = vadd.f32 0.0, %v5930
    %5932 = vdwg.mxu0
    %v5933 = vadd.f32 %v5579, %v5875
    %v5934 = vadd.f32 %v5580, %v5877
    %v5935 = vadd.f32 %v5581, %v5879
    %v5936 = vadd.f32 %v5582, %v5881
    %v5937 = vadd.f32 %v5583, %v5885
    %v5938 = vadd.f32 %v5584, %v5887
    %v5939 = vadd.f32 %v5585, %v5889
    %v5940 = vadd.f32 %v5586, %v5891
    %v5941 = vadd.f32 %v5587, %v5895
    %v5942 = vadd.f32 %v5588, %v5897
    %v5943 = vadd.f32 %v5589, %v5899
    %v5944 = vadd.f32 %v5590, %v5901
    %v5945 = vadd.f32 %v5591, %v5905
    %v5946 = vadd.f32 %v5592, %v5907
    %v5947 = vadd.f32 %v5593, %v5909
    %v5948 = vadd.f32 %v5594, %v5911
    %v5949 = vadd.f32 %v5595, %v5915
    %v5950 = vadd.f32 %v5596, %v5917
    %v5951 = vadd.f32 %v5597, %v5919
    %v5952 = vadd.f32 %v5598, %v5921
    %v5953 = vadd.f32 %v5599, %v5925
    %v5954 = vadd.f32 %v5600, %v5927
    %v5955 = vadd.f32 %v5601, %v5929
    %v5956 = vadd.f32 %v5602, %v5931
    %s5957 = scalar_lea.vmem %s5, 2
    %v5958 = vld [vmem:[%s5957] ss:$4 sm:$0x3]
    %v5960 = vlaneseq
    %v5961 = vshrl.u32 %v5960, 7
    %v5962 = vsub.s32 0, %v5961
    %v5963 = vrot.slane %v5958, %v5962
    %v5964 = vlaneseq
    %v5965 = vshrl.u32 %v5964, 7
    %v5966 = vsub.s32 1, %v5965
    %v5967 = vrot.slane %v5958, %v5966
    %v5970 = vadd.f32 %v5933, %v5963
    %v5971 = vadd.f32 %v5934, %v5967
    %v5972 = vadd.f32 %v5935, %v5963
    %v5973 = vadd.f32 %v5936, %v5967
    %v5974 = vadd.f32 %v5937, %v5963
    %v5975 = vadd.f32 %v5938, %v5967
    %v5976 = vadd.f32 %v5939, %v5963
    %v5977 = vadd.f32 %v5940, %v5967
    %v5978 = vadd.f32 %v5941, %v5963
    %v5979 = vadd.f32 %v5942, %v5967
    %v5980 = vadd.f32 %v5943, %v5963
    %v5981 = vadd.f32 %v5944, %v5967
    %v5982 = vadd.f32 %v5945, %v5963
    %v5983 = vadd.f32 %v5946, %v5967
    %v5984 = vadd.f32 %v5947, %v5963
    %v5985 = vadd.f32 %v5948, %v5967
    %v5986 = vadd.f32 %v5949, %v5963
    %v5987 = vadd.f32 %v5950, %v5967
    %v5988 = vadd.f32 %v5951, %v5963
    %v5989 = vadd.f32 %v5952, %v5967
    %v5990 = vadd.f32 %v5953, %v5963
    %v5991 = vadd.f32 %v5954, %v5967
    %v5992 = vadd.f32 %v5955, %v5963
    %v5993 = vadd.f32 %v5956, %v5967
    %v5994 = vmax.f32 %v5970, 0.0
    %v5995 = vmax.f32 %v5971, 0.0
    %v5996 = vmax.f32 %v5972, 0.0
    %v5997 = vmax.f32 %v5973, 0.0
    %v5998 = vmax.f32 %v5974, 0.0
    %v5999 = vmax.f32 %v5975, 0.0
    %v6000 = vmax.f32 %v5976, 0.0
    %v6001 = vmax.f32 %v5977, 0.0
    %v6002 = vmax.f32 %v5978, 0.0
    %v6003 = vmax.f32 %v5979, 0.0
    %v6004 = vmax.f32 %v5980, 0.0
    %v6005 = vmax.f32 %v5981, 0.0
    %v6006 = vmax.f32 %v5982, 0.0
    %v6007 = vmax.f32 %v5983, 0.0
    %v6008 = vmax.f32 %v5984, 0.0
    %v6009 = vmax.f32 %v5985, 0.0
    %v6010 = vmax.f32 %v5986, 0.0
    %v6011 = vmax.f32 %v5987, 0.0
    %v6012 = vmax.f32 %v5988, 0.0
    %v6013 = vmax.f32 %v5989, 0.0
    %v6014 = vmax.f32 %v5990, 0.0
    %v6015 = vmax.f32 %v5991, 0.0
    %v6016 = vmax.f32 %v5992, 0.0
    %v6017 = vmax.f32 %v5993, 0.0
    %v6018 = vpack.c.bf16 %v5996, %v5994
    %v6019 = vpack.c.bf16 %v5997, %v5995
    %v6020 = vpack.c.bf16 %v6000, %v5998
    %v6021 = vpack.c.bf16 %v6001, %v5999
    %v6022 = vpack.c.bf16 %v6004, %v6002
    %v6023 = vpack.c.bf16 %v6005, %v6003
    %v6024 = vpack.c.bf16 %v6008, %v6006
    %v6025 = vpack.c.bf16 %v6009, %v6007
    %v6026 = vpack.c.bf16 %v6012, %v6010
    %v6027 = vpack.c.bf16 %v6013, %v6011
    %v6028 = vpack.c.bf16 %v6016, %v6014
    %v6029 = vpack.c.bf16 %v6017, %v6015
    %v6042 = vunpack.c.l.b16 %v6018
    %v6043 = vunpack.c.l.b16 %v6019
    %v6044 = vunpack.c.h.b16 %v6018
    %v6045 = vunpack.c.h.b16 %v6019
    %v6046 = vunpack.c.l.b16 %v6020
    %v6047 = vunpack.c.l.b16 %v6021
    %v6048 = vunpack.c.h.b16 %v6020
    %v6049 = vunpack.c.h.b16 %v6021
    %v6050 = vunpack.c.l.b16 %v6022
    %v6051 = vunpack.c.l.b16 %v6023
    %v6052 = vunpack.c.h.b16 %v6022
    %v6053 = vunpack.c.h.b16 %v6023
    %v6054 = vunpack.c.l.b16 %v6024
    %v6055 = vunpack.c.l.b16 %v6025
    %v6056 = vunpack.c.h.b16 %v6024
    %v6057 = vunpack.c.h.b16 %v6025
    %v6058 = vunpack.c.l.b16 %v6026
    %v6059 = vunpack.c.l.b16 %v6027
    %v6060 = vunpack.c.h.b16 %v6026
    %v6061 = vunpack.c.h.b16 %v6027
    %v6062 = vunpack.c.l.b16 %v6028
    %v6063 = vunpack.c.l.b16 %v6029
    %v6064 = vunpack.c.h.b16 %v6028
    %v6065 = vunpack.c.h.b16 %v6029
    %v6066 = vpack.c.b16 %v6043, %v6042
    %v6067 = vpack.c.b16 %v6045, %v6044
    %v6068 = vpack.c.b16 %v6047, %v6046
    %v6069 = vpack.c.b16 %v6049, %v6048
    %v6070 = vpack.c.b16 %v6051, %v6050
    %v6071 = vpack.c.b16 %v6053, %v6052
    %v6072 = vpack.c.b16 %v6055, %v6054
    %v6073 = vpack.c.b16 %v6057, %v6056
    %v6074 = vpack.c.b16 %v6059, %v6058
    %v6075 = vpack.c.b16 %v6061, %v6060
    %v6076 = vpack.c.b16 %v6063, %v6062
    %v6077 = vpack.c.b16 %v6065, %v6064
    %6090 = vst [vmem:[#allocation2 + $0x8] sm:$0xff] %v6066
    %6091 = vst [vmem:[#allocation2 + $0x10] sm:$0xff] %v6067
    %6092 = vst [vmem:[#allocation2 + $0x18] sm:$0xff] %v6068
    %6093 = vst [vmem:[#allocation2 + $0x20] sm:$0xff] %v6069
    %6094 = vst [vmem:[#allocation2 + $0x28] sm:$0xff] %v6070
    %6095 = vst [vmem:[#allocation2 + $0x30] sm:$0xff] %v6071
    %6096 = vst [vmem:[#allocation2 + $0x38] sm:$0xff] %v6072
    %6097 = vst [vmem:[#allocation2 + $0x40] sm:$0xff] %v6073
    %6098 = vst [vmem:[#allocation2 + $0x48] sm:$0xff] %v6074
    %6099 = vst [vmem:[#allocation2 + $0x50] sm:$0xff] %v6075
    %6100 = vst [vmem:[#allocation2 + $0x58] sm:$0xff] %v6076
    %6101 = vst [vmem:[#allocation2 + $0x60] sm:$0xff] %v6077
    %6102 = vst [vmem:[#allocation2 + $0x18] sm:$0xff] 0
    %6103 = vst [vmem:[#allocation2 + $0x30] sm:$0xff] 0
    %6104 = vst [vmem:[#allocation2 + $0x48] sm:$0xff] 0
    %6105 = vst [vmem:[#allocation2 + $0x60] sm:$0xff] 0
    %v6106 = vld [vmem:[#allocation2] sm:$0x88]
    %v6107 = vld [vmem:[#allocation2 + $0x8] sm:$0xff]
    %v6108 = vld [vmem:[#allocation2 + $0x10] sm:$0xff]
    %v6109 = vld [vmem:[#allocation2 + $0x18] sm:$0xff]
    %v6110 = vld [vmem:[#allocation2 + $0x20] sm:$0xff]
    %v6111 = vld [vmem:[#allocation2 + $0x28] sm:$0xff]
    %v6112 = vld [vmem:[#allocation2 + $0x30] sm:$0xff]
    %v6113 = vld [vmem:[#allocation2 + $0x38] sm:$0xff]
    %v6114 = vld [vmem:[#allocation2 + $0x40] sm:$0xff]
    %v6115 = vld [vmem:[#allocation2 + $0x48] sm:$0xff]
    %v6116 = vld [vmem:[#allocation2 + $0x50] sm:$0xff]
    %v6117 = vld [vmem:[#allocation2 + $0x58] sm:$0xff]
    %v6118 = vld [vmem:[#allocation2 + $0x60] sm:$0x77]
    %v6119 = vld [vmem:[#allocation11] sm:$0xff]
    %v6120 = vld [vmem:[#allocation11 + $0x8] sm:$0xff]
    %v6121 = vld [vmem:[#allocation11 + $0x10] sm:$0xff]
    %v6122 = vld [vmem:[#allocation11 + $0x18] sm:$0xff]
    %v6123 = vld [vmem:[#allocation11 + $0x20] sm:$0xff]
    %v6124 = vld [vmem:[#allocation11 + $0x28] sm:$0xff]
    %v6125 = vld [vmem:[#allocation11 + $0x30] sm:$0xff]
    %v6126 = vld [vmem:[#allocation11 + $0x38] sm:$0xff]
    %v6127 = vld [vmem:[#allocation11 + $0x40] sm:$0xff]
    %v6128 = vld [vmem:[#allocation11 + $0x48] sm:$0xff]
    %v6129 = vld [vmem:[#allocation11 + $0x50] sm:$0xff]
    %v6130 = vld [vmem:[#allocation11 + $0x58] sm:$0xff]
    %v6131 = vld [vmem:[#allocation11 + $0x60] sm:$0xff]
    %v6132 = vld [vmem:[#allocation11 + $0x68] sm:$0xff]
    %v6133 = vld [vmem:[#allocation11 + $0x70] sm:$0xff]
    %v6134 = vld [vmem:[#allocation11 + $0x78] sm:$0xff]
    %v6135 = vld [vmem:[#allocation11 + $0x80] sm:$0xff]
    %v6136 = vld [vmem:[#allocation11 + $0x88] sm:$0xff]
    %v6137 = vld [vmem:[#allocation11 + $0x90] sm:$0xff]
    %v6138 = vld [vmem:[#allocation11 + $0x98] sm:$0xff]
    %v6139 = vld [vmem:[#allocation11 + $0xa0] sm:$0xff]
    %v6140 = vld [vmem:[#allocation11 + $0xa8] sm:$0xff]
    %v6141 = vld [vmem:[#allocation11 + $0xb0] sm:$0xff]
    %v6142 = vld [vmem:[#allocation11 + $0xb8] sm:$0xff]
    %v6143 = vld [vmem:[#allocation11 + $0xc0] sm:$0xff]
    %v6144 = vld [vmem:[#allocation11 + $0xc8] sm:$0xff]
    %v6145 = vld [vmem:[#allocation11 + $0xd0] sm:$0xff]
    %v6146 = vld [vmem:[#allocation11 + $0xd8] sm:$0xff]
    %v6147 = vld [vmem:[#allocation11 + $0xe0] sm:$0xff]
    %v6148 = vld [vmem:[#allocation11 + $0xe8] sm:$0xff]
    %v6149 = vld [vmem:[#allocation11 + $0xf0] sm:$0xff]
    %v6150 = vld [vmem:[#allocation11 + $0xf8] sm:$0xff]
    %v6151 = vld [vmem:[#allocation2 + $0x60] sm:$0xff]
    %s6152 = scalar_lea.vmem [#allocation11], 256
    %v6153 = vld [vmem:[%s6152] sm:$0xff]
    %v6154 = vld [vmem:[%s6152 + $0x8] sm:$0xff]
    %v6155 = vld [vmem:[%s6152 + $0x10] sm:$0xff]
    %v6156 = vld [vmem:[%s6152 + $0x18] sm:$0xff]
    %v6157 = vld [vmem:[%s6152 + $0x20] sm:$0xff]
    %v6158 = vld [vmem:[%s6152 + $0x28] sm:$0xff]
    %v6159 = vld [vmem:[%s6152 + $0x30] sm:$0xff]
    %v6160 = vld [vmem:[%s6152 + $0x38] sm:$0xff]
    %v6161 = vld [vmem:[%s6152 + $0x40] sm:$0xff]
    %v6162 = vld [vmem:[%s6152 + $0x48] sm:$0xff]
    %v6163 = vld [vmem:[%s6152 + $0x50] sm:$0xff]
    %v6164 = vld [vmem:[%s6152 + $0x58] sm:$0xff]
    %v6165 = vld [vmem:[%s6152 + $0x60] sm:$0xff]
    %v6166 = vld [vmem:[%s6152 + $0x68] sm:$0xff]
    %v6167 = vld [vmem:[%s6152 + $0x70] sm:$0xff]
    %v6168 = vld [vmem:[%s6152 + $0x78] sm:$0xff]
    %v6169 = vld [vmem:[%s6152 + $0x80] sm:$0xff]
    %v6170 = vld [vmem:[%s6152 + $0x88] sm:$0xff]
    %v6171 = vld [vmem:[%s6152 + $0x90] sm:$0xff]
    %v6172 = vld [vmem:[%s6152 + $0x98] sm:$0xff]
    %v6173 = vld [vmem:[%s6152 + $0xa0] sm:$0xff]
    %v6174 = vld [vmem:[%s6152 + $0xa8] sm:$0xff]
    %v6175 = vld [vmem:[%s6152 + $0xb0] sm:$0xff]
    %v6176 = vld [vmem:[%s6152 + $0xb8] sm:$0xff]
    %v6177 = vld [vmem:[%s6152 + $0xc0] sm:$0xff]
    %v6178 = vld [vmem:[%s6152 + $0xc8] sm:$0xff]
    %v6179 = vld [vmem:[%s6152 + $0xd0] sm:$0xff]
    %v6180 = vld [vmem:[%s6152 + $0xd8] sm:$0xff]
    %v6181 = vld [vmem:[%s6152 + $0xe0] sm:$0xff]
    %v6182 = vld [vmem:[%s6152 + $0xe8] sm:$0xff]
    %v6183 = vld [vmem:[%s6152 + $0xf0] sm:$0xff]
    %v6184 = vld [vmem:[%s6152 + $0xf8] sm:$0xff]
    %v6198 = vunpack.c.l.b16 %v6106
    %v6199 = vunpack.c.h.b16 %v6106
    %v6200 = vunpack.c.l.b16 %v6107
    %v6201 = vunpack.c.h.b16 %v6107
    %v6202 = vunpack.c.l.b16 %v6108
    %v6203 = vunpack.c.h.b16 %v6108
    %v6204 = vunpack.c.l.b16 %v6109
    %v6205 = vunpack.c.h.b16 %v6109
    %v6206 = vunpack.c.l.b16 %v6110
    %v6207 = vunpack.c.h.b16 %v6110
    %v6208 = vunpack.c.l.b16 %v6111
    %v6209 = vunpack.c.h.b16 %v6111
    %v6210 = vunpack.c.l.b16 %v6112
    %v6211 = vunpack.c.h.b16 %v6112
    %v6212 = vunpack.c.l.b16 %v6113
    %v6213 = vunpack.c.h.b16 %v6113
    %v6214 = vunpack.c.l.b16 %v6114
    %v6215 = vunpack.c.h.b16 %v6114
    %v6216 = vunpack.c.l.b16 %v6115
    %v6217 = vunpack.c.h.b16 %v6115
    %v6218 = vunpack.c.l.b16 %v6116
    %v6219 = vunpack.c.h.b16 %v6116
    %v6220 = vunpack.c.l.b16 %v6117
    %v6221 = vunpack.c.h.b16 %v6117
    %v6222 = vunpack.c.l.b16 %v6151
    %v6223 = vunpack.c.h.b16 %v6151
    %v6224 = vpack.c.b16 %v6200, %v6198
    %v6225 = vpack.c.b16 %v6201, %v6199
    %v6226 = vpack.c.b16 %v6204, %v6202
    %v6227 = vpack.c.b16 %v6205, %v6203
    %v6228 = vpack.c.b16 %v6208, %v6206
    %v6229 = vpack.c.b16 %v6209, %v6207
    %v6230 = vpack.c.b16 %v6212, %v6210
    %v6231 = vpack.c.b16 %v6213, %v6211
    %v6232 = vpack.c.b16 %v6216, %v6214
    %v6233 = vpack.c.b16 %v6217, %v6215
    %v6234 = vpack.c.b16 %v6220, %v6218
    %v6235 = vpack.c.b16 %v6221, %v6219
    %v6236 = vpack.c.b16 %v6222, %v6222
    %v6237 = vpack.c.b16 %v6223, %v6223
    %v6239 = vshrl.u32 %v6224, 16
    %v6241 = vrot.slane %v6239, 3
    %v6242 = vshll.u32 %v6224, 16
    %v6244 = vrot.slane %v6242, 4
    %v6245 = vor.u32 %v6241, %v6244
    %v6247 = vshrl.u32 %v6226, 16
    %v6249 = vrot.slane %v6247, 3
    %v6250 = vshll.u32 %v6226, 16
    %v6252 = vrot.slane %v6250, 4
    %v6253 = vor.u32 %v6249, %v6252
    %v6254 = vsel %vm445, %v6245, %v6253
    %v6256 = vshrl.u32 %v6225, 16
    %v6258 = vrot.slane %v6256, 3
    %v6259 = vshll.u32 %v6225, 16
    %v6261 = vrot.slane %v6259, 4
    %v6262 = vor.u32 %v6258, %v6261
    %v6264 = vshrl.u32 %v6227, 16
    %v6266 = vrot.slane %v6264, 3
    %v6267 = vshll.u32 %v6227, 16
    %v6269 = vrot.slane %v6267, 4
    %v6270 = vor.u32 %v6266, %v6269
    %v6271 = vsel %vm445, %v6262, %v6270
    %v6273 = vshrl.u32 %v6228, 16
    %v6275 = vrot.slane %v6273, 3
    %v6276 = vshll.u32 %v6228, 16
    %v6278 = vrot.slane %v6276, 4
    %v6279 = vor.u32 %v6275, %v6278
    %v6280 = vsel %vm445, %v6253, %v6279
    %v6282 = vshrl.u32 %v6229, 16
    %v6284 = vrot.slane %v6282, 3
    %v6285 = vshll.u32 %v6229, 16
    %v6287 = vrot.slane %v6285, 4
    %v6288 = vor.u32 %v6284, %v6287
    %v6289 = vsel %vm445, %v6270, %v6288
    %v6291 = vshrl.u32 %v6230, 16
    %v6293 = vrot.slane %v6291, 3
    %v6294 = vshll.u32 %v6230, 16
    %v6296 = vrot.slane %v6294, 4
    %v6297 = vor.u32 %v6293, %v6296
    %v6298 = vsel %vm445, %v6279, %v6297
    %v6300 = vshrl.u32 %v6231, 16
    %v6302 = vrot.slane %v6300, 3
    %v6303 = vshll.u32 %v6231, 16
    %v6305 = vrot.slane %v6303, 4
    %v6306 = vor.u32 %v6302, %v6305
    %v6307 = vsel %vm445, %v6288, %v6306
    %v6309 = vshrl.u32 %v6232, 16
    %v6311 = vrot.slane %v6309, 3
    %v6312 = vshll.u32 %v6232, 16
    %v6314 = vrot.slane %v6312, 4
    %v6315 = vor.u32 %v6311, %v6314
    %v6316 = vsel %vm445, %v6297, %v6315
    %v6318 = vshrl.u32 %v6233, 16
    %v6320 = vrot.slane %v6318, 3
    %v6321 = vshll.u32 %v6233, 16
    %v6323 = vrot.slane %v6321, 4
    %v6324 = vor.u32 %v6320, %v6323
    %v6325 = vsel %vm445, %v6306, %v6324
    %v6327 = vshrl.u32 %v6234, 16
    %v6329 = vrot.slane %v6327, 3
    %v6330 = vshll.u32 %v6234, 16
    %v6332 = vrot.slane %v6330, 4
    %v6333 = vor.u32 %v6329, %v6332
    %v6334 = vsel %vm445, %v6315, %v6333
    %v6336 = vshrl.u32 %v6235, 16
    %v6338 = vrot.slane %v6336, 3
    %v6339 = vshll.u32 %v6235, 16
    %v6341 = vrot.slane %v6339, 4
    %v6342 = vor.u32 %v6338, %v6341
    %v6343 = vsel %vm445, %v6324, %v6342
    %v6345 = vshrl.u32 %v6236, 16
    %v6347 = vrot.slane %v6345, 3
    %v6348 = vshll.u32 %v6236, 16
    %v6350 = vrot.slane %v6348, 4
    %v6351 = vor.u32 %v6347, %v6350
    %v6352 = vsel %vm445, %v6333, %v6351
    %v6354 = vshrl.u32 %v6237, 16
    %v6356 = vrot.slane %v6354, 3
    %v6357 = vshll.u32 %v6237, 16
    %v6359 = vrot.slane %v6357, 4
    %v6360 = vor.u32 %v6356, %v6359
    %v6361 = vsel %vm445, %v6342, %v6360
    %v6406 = vunpack.c.l.b16 %v6153
    %v6407 = vunpack.c.h.b16 %v6153
    %v6408 = vunpack.c.l.b16 %v6154
    %v6409 = vunpack.c.h.b16 %v6154
    %v6410 = vunpack.c.l.b16 %v6155
    %v6411 = vunpack.c.h.b16 %v6155
    %v6412 = vunpack.c.l.b16 %v6156
    %v6413 = vunpack.c.h.b16 %v6156
    %v6414 = vunpack.c.l.b16 %v6157
    %v6415 = vunpack.c.h.b16 %v6157
    %v6416 = vunpack.c.l.b16 %v6158
    %v6417 = vunpack.c.h.b16 %v6158
    %v6418 = vunpack.c.l.b16 %v6159
    %v6419 = vunpack.c.h.b16 %v6159
    %v6420 = vunpack.c.l.b16 %v6160
    %v6421 = vunpack.c.h.b16 %v6160
    %v6422 = vunpack.c.l.b16 %v6161
    %v6423 = vunpack.c.h.b16 %v6161
    %v6424 = vunpack.c.l.b16 %v6162
    %v6425 = vunpack.c.h.b16 %v6162
    %v6426 = vunpack.c.l.b16 %v6163
    %v6427 = vunpack.c.h.b16 %v6163
    %v6428 = vunpack.c.l.b16 %v6164
    %v6429 = vunpack.c.h.b16 %v6164
    %v6430 = vunpack.c.l.b16 %v6165
    %v6431 = vunpack.c.h.b16 %v6165
    %v6432 = vunpack.c.l.b16 %v6166
    %v6433 = vunpack.c.h.b16 %v6166
    %v6434 = vunpack.c.l.b16 %v6167
    %v6435 = vunpack.c.h.b16 %v6167
    %v6436 = vunpack.c.l.b16 %v6168
    %v6437 = vunpack.c.h.b16 %v6168
    %v6438 = vunpack.c.l.b16 %v6169
    %v6439 = vunpack.c.h.b16 %v6169
    %v6440 = vunpack.c.l.b16 %v6170
    %v6441 = vunpack.c.h.b16 %v6170
    %v6442 = vunpack.c.l.b16 %v6171
    %v6443 = vunpack.c.h.b16 %v6171
    %v6444 = vunpack.c.l.b16 %v6172
    %v6445 = vunpack.c.h.b16 %v6172
    %v6446 = vunpack.c.l.b16 %v6173
    %v6447 = vunpack.c.h.b16 %v6173
    %v6448 = vunpack.c.l.b16 %v6174
    %v6449 = vunpack.c.h.b16 %v6174
    %v6450 = vunpack.c.l.b16 %v6175
    %v6451 = vunpack.c.h.b16 %v6175
    %v6452 = vunpack.c.l.b16 %v6176
    %v6453 = vunpack.c.h.b16 %v6176
    %v6454 = vunpack.c.l.b16 %v6177
    %v6455 = vunpack.c.h.b16 %v6177
    %v6456 = vunpack.c.l.b16 %v6178
    %v6457 = vunpack.c.h.b16 %v6178
    %v6458 = vunpack.c.l.b16 %v6179
    %v6459 = vunpack.c.h.b16 %v6179
    %v6460 = vunpack.c.l.b16 %v6180
    %v6461 = vunpack.c.h.b16 %v6180
    %v6462 = vunpack.c.l.b16 %v6181
    %v6463 = vunpack.c.h.b16 %v6181
    %v6464 = vunpack.c.l.b16 %v6182
    %v6465 = vunpack.c.h.b16 %v6182
    %v6466 = vunpack.c.l.b16 %v6183
    %v6467 = vunpack.c.h.b16 %v6183
    %v6468 = vunpack.c.l.b16 %v6184
    %v6469 = vunpack.c.h.b16 %v6184
    %v6470 = vpack.c.b16 %v6408, %v6406
    %v6471 = vpack.c.b16 %v6409, %v6407
    %v6472 = vpack.c.b16 %v6412, %v6410
    %v6473 = vpack.c.b16 %v6413, %v6411
    %v6474 = vpack.c.b16 %v6416, %v6414
    %v6475 = vpack.c.b16 %v6417, %v6415
    %v6476 = vpack.c.b16 %v6420, %v6418
    %v6477 = vpack.c.b16 %v6421, %v6419
    %v6478 = vpack.c.b16 %v6424, %v6422
    %v6479 = vpack.c.b16 %v6425, %v6423
    %v6480 = vpack.c.b16 %v6428, %v6426
    %v6481 = vpack.c.b16 %v6429, %v6427
    %v6482 = vpack.c.b16 %v6432, %v6430
    %v6483 = vpack.c.b16 %v6433, %v6431
    %v6484 = vpack.c.b16 %v6436, %v6434
    %v6485 = vpack.c.b16 %v6437, %v6435
    %v6486 = vpack.c.b16 %v6440, %v6438
    %v6487 = vpack.c.b16 %v6441, %v6439
    %v6488 = vpack.c.b16 %v6444, %v6442
    %v6489 = vpack.c.b16 %v6445, %v6443
    %v6490 = vpack.c.b16 %v6448, %v6446
    %v6491 = vpack.c.b16 %v6449, %v6447
    %v6492 = vpack.c.b16 %v6452, %v6450
    %v6493 = vpack.c.b16 %v6453, %v6451
    %v6494 = vpack.c.b16 %v6456, %v6454
    %v6495 = vpack.c.b16 %v6457, %v6455
    %v6496 = vpack.c.b16 %v6460, %v6458
    %v6497 = vpack.c.b16 %v6461, %v6459
    %v6498 = vpack.c.b16 %v6464, %v6462
    %v6499 = vpack.c.b16 %v6465, %v6463
    %v6500 = vpack.c.b16 %v6468, %v6466
    %v6501 = vpack.c.b16 %v6469, %v6467
    %6534 = vmatprep.subr.bf16.mxu0 %v6485
    %6535 = vmatpush1.bf16.msra.mxu0 %v6484
    %6536 = vmatprep.subr.bf16.mxu0 %v6483
    %6537 = vmatpush1.bf16.msra.mxu0 %v6482
    %6538 = vmatprep.subr.bf16.mxu0 %v6481
    %6539 = vmatpush1.bf16.msra.mxu0 %v6480
    %6540 = vmatprep.subr.bf16.mxu0 %v6479
    %6541 = vmatpush1.bf16.msra.mxu0 %v6478
    %6542 = vmatprep.subr.bf16.mxu0 %v6477
    %6543 = vmatpush1.bf16.msra.mxu0 %v6476
    %6544 = vmatprep.subr.bf16.mxu0 %v6475
    %6545 = vmatpush1.bf16.msra.mxu0 %v6474
    %6546 = vmatprep.subr.bf16.mxu0 %v6473
    %6547 = vmatpush1.bf16.msra.mxu0 %v6472
    %6548 = vmatprep.subr.bf16.mxu0 %v6471
    %6549 = vmatpush1.bf16.msra.mxu0 %v6470
    %6550 = vmatprep.subr.bf16.mxu0 %v6501
    %6551 = vmatpush2.bf16.msra.mxu0 %v6500
    %6552 = vmatprep.subr.bf16.mxu0 %v6499
    %6553 = vmatpush2.bf16.msra.mxu0 %v6498
    %6554 = vmatprep.subr.bf16.mxu0 %v6497
    %6555 = vmatpush2.bf16.msra.mxu0 %v6496
    %6556 = vmatprep.subr.bf16.mxu0 %v6495
    %6557 = vmatpush2.bf16.msra.mxu0 %v6494
    %6558 = vmatprep.subr.bf16.mxu0 %v6493
    %6559 = vmatpush2.bf16.msra.mxu0 %v6492
    %6560 = vmatprep.subr.bf16.mxu0 %v6491
    %6561 = vmatpush2.bf16.msra.mxu0 %v6490
    %6562 = vmatprep.subr.bf16.mxu0 %v6489
    %6563 = vmatpush2.bf16.msra.mxu0 %v6488
    %6564 = vmatprep.subr.bf16.mxu0 %v6487
    %6565 = vmatpush2.bf16.msra.mxu0 %v6486
    %6566 = vmatprep.mubr.bf16.mxu0 %v6271
    %6567 = vmatmul.mubr.bf16.gmra.mxu0 %v6254
    %v6568 = vpop.f32.mrf.mxu0
    %v6569 = vadd.f32 0.0, %v6568
    %v6570 = vpop.f32.mrf.mxu0
    %v6571 = vadd.f32 0.0, %v6570
    %v6572 = vpop.f32.mrf.mxu0
    %v6573 = vadd.f32 0.0, %v6572
    %v6574 = vpop.f32.mrf.mxu0
    %v6575 = vadd.f32 0.0, %v6574
    %6576 = vmatprep.mubr.bf16.mxu0 %v6289
    %6577 = vmatmul.mubr.bf16.gmra.mxu0 %v6280
    %v6578 = vpop.f32.mrf.mxu0
    %v6579 = vadd.f32 0.0, %v6578
    %v6580 = vpop.f32.mrf.mxu0
    %v6581 = vadd.f32 0.0, %v6580
    %v6582 = vpop.f32.mrf.mxu0
    %v6583 = vadd.f32 0.0, %v6582
    %v6584 = vpop.f32.mrf.mxu0
    %v6585 = vadd.f32 0.0, %v6584
    %6586 = vmatprep.mubr.bf16.mxu0 %v6307
    %6587 = vmatmul.mubr.bf16.gmra.mxu0 %v6298
    %v6588 = vpop.f32.mrf.mxu0
    %v6589 = vadd.f32 0.0, %v6588
    %v6590 = vpop.f32.mrf.mxu0
    %v6591 = vadd.f32 0.0, %v6590
    %v6592 = vpop.f32.mrf.mxu0
    %v6593 = vadd.f32 0.0, %v6592
    %v6594 = vpop.f32.mrf.mxu0
    %v6595 = vadd.f32 0.0, %v6594
    %6596 = vmatprep.mubr.bf16.mxu0 %v6325
    %6597 = vmatmul.mubr.bf16.gmra.mxu0 %v6316
    %v6598 = vpop.f32.mrf.mxu0
    %v6599 = vadd.f32 0.0, %v6598
    %v6600 = vpop.f32.mrf.mxu0
    %v6601 = vadd.f32 0.0, %v6600
    %v6602 = vpop.f32.mrf.mxu0
    %v6603 = vadd.f32 0.0, %v6602
    %v6604 = vpop.f32.mrf.mxu0
    %v6605 = vadd.f32 0.0, %v6604
    %6606 = vmatprep.mubr.bf16.mxu0 %v6343
    %6607 = vmatmul.mubr.bf16.gmra.mxu0 %v6334
    %v6608 = vpop.f32.mrf.mxu0
    %v6609 = vadd.f32 0.0, %v6608
    %v6610 = vpop.f32.mrf.mxu0
    %v6611 = vadd.f32 0.0, %v6610
    %v6612 = vpop.f32.mrf.mxu0
    %v6613 = vadd.f32 0.0, %v6612
    %v6614 = vpop.f32.mrf.mxu0
    %v6615 = vadd.f32 0.0, %v6614
    %6616 = vmatprep.mubr.bf16.mxu0 %v6361
    %6617 = vmatmul.mubr.bf16.gmra.mxu0 %v6352
    %v6618 = vpop.f32.mrf.mxu0
    %v6619 = vadd.f32 0.0, %v6618
    %v6620 = vpop.f32.mrf.mxu0
    %v6621 = vadd.f32 0.0, %v6620
    %v6622 = vpop.f32.mrf.mxu0
    %v6623 = vadd.f32 0.0, %v6622
    %v6624 = vpop.f32.mrf.mxu0
    %v6625 = vadd.f32 0.0, %v6624
    %6626 = vdwg.mxu0
    %v6628 = vunpack.c.l.b16 %v6118
    %v6629 = vunpack.c.h.b16 %v6118
    %v6630 = vpack.c.b16 %v6628, %v6628
    %v6631 = vpack.c.b16 %v6629, %v6629
    %v6632 = vrot.slane %v6224, 3
    %v6633 = vrot.slane %v6226, 3
    %v6634 = vsel %vm690, %v6632, %v6633
    %v6635 = vrot.slane %v6225, 3
    %v6636 = vrot.slane %v6227, 3
    %v6637 = vsel %vm690, %v6635, %v6636
    %v6638 = vrot.slane %v6228, 3
    %v6639 = vsel %vm690, %v6633, %v6638
    %v6640 = vrot.slane %v6229, 3
    %v6641 = vsel %vm690, %v6636, %v6640
    %v6642 = vrot.slane %v6230, 3
    %v6643 = vsel %vm690, %v6638, %v6642
    %v6644 = vrot.slane %v6231, 3
    %v6645 = vsel %vm690, %v6640, %v6644
    %v6646 = vrot.slane %v6232, 3
    %v6647 = vsel %vm690, %v6642, %v6646
    %v6648 = vrot.slane %v6233, 3
    %v6649 = vsel %vm690, %v6644, %v6648
    %v6650 = vrot.slane %v6234, 3
    %v6651 = vsel %vm690, %v6646, %v6650
    %v6652 = vrot.slane %v6235, 3
    %v6653 = vsel %vm690, %v6648, %v6652
    %v6654 = vrot.slane %v6630, 3
    %v6655 = vsel %vm690, %v6650, %v6654
    %v6656 = vrot.slane %v6631, 3
    %v6657 = vsel %vm690, %v6652, %v6656
    %v6702 = vunpack.c.l.b16 %v6119
    %v6703 = vunpack.c.h.b16 %v6119
    %v6704 = vunpack.c.l.b16 %v6120
    %v6705 = vunpack.c.h.b16 %v6120
    %v6706 = vunpack.c.l.b16 %v6121
    %v6707 = vunpack.c.h.b16 %v6121
    %v6708 = vunpack.c.l.b16 %v6122
    %v6709 = vunpack.c.h.b16 %v6122
    %v6710 = vunpack.c.l.b16 %v6123
    %v6711 = vunpack.c.h.b16 %v6123
    %v6712 = vunpack.c.l.b16 %v6124
    %v6713 = vunpack.c.h.b16 %v6124
    %v6714 = vunpack.c.l.b16 %v6125
    %v6715 = vunpack.c.h.b16 %v6125
    %v6716 = vunpack.c.l.b16 %v6126
    %v6717 = vunpack.c.h.b16 %v6126
    %v6718 = vunpack.c.l.b16 %v6127
    %v6719 = vunpack.c.h.b16 %v6127
    %v6720 = vunpack.c.l.b16 %v6128
    %v6721 = vunpack.c.h.b16 %v6128
    %v6722 = vunpack.c.l.b16 %v6129
    %v6723 = vunpack.c.h.b16 %v6129
    %v6724 = vunpack.c.l.b16 %v6130
    %v6725 = vunpack.c.h.b16 %v6130
    %v6726 = vunpack.c.l.b16 %v6131
    %v6727 = vunpack.c.h.b16 %v6131
    %v6728 = vunpack.c.l.b16 %v6132
    %v6729 = vunpack.c.h.b16 %v6132
    %v6730 = vunpack.c.l.b16 %v6133
    %v6731 = vunpack.c.h.b16 %v6133
    %v6732 = vunpack.c.l.b16 %v6134
    %v6733 = vunpack.c.h.b16 %v6134
    %v6734 = vunpack.c.l.b16 %v6135
    %v6735 = vunpack.c.h.b16 %v6135
    %v6736 = vunpack.c.l.b16 %v6136
    %v6737 = vunpack.c.h.b16 %v6136
    %v6738 = vunpack.c.l.b16 %v6137
    %v6739 = vunpack.c.h.b16 %v6137
    %v6740 = vunpack.c.l.b16 %v6138
    %v6741 = vunpack.c.h.b16 %v6138
    %v6742 = vunpack.c.l.b16 %v6139
    %v6743 = vunpack.c.h.b16 %v6139
    %v6744 = vunpack.c.l.b16 %v6140
    %v6745 = vunpack.c.h.b16 %v6140
    %v6746 = vunpack.c.l.b16 %v6141
    %v6747 = vunpack.c.h.b16 %v6141
    %v6748 = vunpack.c.l.b16 %v6142
    %v6749 = vunpack.c.h.b16 %v6142
    %v6750 = vunpack.c.l.b16 %v6143
    %v6751 = vunpack.c.h.b16 %v6143
    %v6752 = vunpack.c.l.b16 %v6144
    %v6753 = vunpack.c.h.b16 %v6144
    %v6754 = vunpack.c.l.b16 %v6145
    %v6755 = vunpack.c.h.b16 %v6145
    %v6756 = vunpack.c.l.b16 %v6146
    %v6757 = vunpack.c.h.b16 %v6146
    %v6758 = vunpack.c.l.b16 %v6147
    %v6759 = vunpack.c.h.b16 %v6147
    %v6760 = vunpack.c.l.b16 %v6148
    %v6761 = vunpack.c.h.b16 %v6148
    %v6762 = vunpack.c.l.b16 %v6149
    %v6763 = vunpack.c.h.b16 %v6149
    %v6764 = vunpack.c.l.b16 %v6150
    %v6765 = vunpack.c.h.b16 %v6150
    %v6766 = vpack.c.b16 %v6704, %v6702
    %v6767 = vpack.c.b16 %v6705, %v6703
    %v6768 = vpack.c.b16 %v6708, %v6706
    %v6769 = vpack.c.b16 %v6709, %v6707
    %v6770 = vpack.c.b16 %v6712, %v6710
    %v6771 = vpack.c.b16 %v6713, %v6711
    %v6772 = vpack.c.b16 %v6716, %v6714
    %v6773 = vpack.c.b16 %v6717, %v6715
    %v6774 = vpack.c.b16 %v6720, %v6718
    %v6775 = vpack.c.b16 %v6721, %v6719
    %v6776 = vpack.c.b16 %v6724, %v6722
    %v6777 = vpack.c.b16 %v6725, %v6723
    %v6778 = vpack.c.b16 %v6728, %v6726
    %v6779 = vpack.c.b16 %v6729, %v6727
    %v6780 = vpack.c.b16 %v6732, %v6730
    %v6781 = vpack.c.b16 %v6733, %v6731
    %v6782 = vpack.c.b16 %v6736, %v6734
    %v6783 = vpack.c.b16 %v6737, %v6735
    %v6784 = vpack.c.b16 %v6740, %v6738
    %v6785 = vpack.c.b16 %v6741, %v6739
    %v6786 = vpack.c.b16 %v6744, %v6742
    %v6787 = vpack.c.b16 %v6745, %v6743
    %v6788 = vpack.c.b16 %v6748, %v6746
    %v6789 = vpack.c.b16 %v6749, %v6747
    %v6790 = vpack.c.b16 %v6752, %v6750
    %v6791 = vpack.c.b16 %v6753, %v6751
    %v6792 = vpack.c.b16 %v6756, %v6754
    %v6793 = vpack.c.b16 %v6757, %v6755
    %v6794 = vpack.c.b16 %v6760, %v6758
    %v6795 = vpack.c.b16 %v6761, %v6759
    %v6796 = vpack.c.b16 %v6764, %v6762
    %v6797 = vpack.c.b16 %v6765, %v6763
    %6830 = vmatprep.subr.bf16.mxu0 %v6781
    %6831 = vmatpush1.bf16.msra.mxu0 %v6780
    %6832 = vmatprep.subr.bf16.mxu0 %v6779
    %6833 = vmatpush1.bf16.msra.mxu0 %v6778
    %6834 = vmatprep.subr.bf16.mxu0 %v6777
    %6835 = vmatpush1.bf16.msra.mxu0 %v6776
    %6836 = vmatprep.subr.bf16.mxu0 %v6775
    %6837 = vmatpush1.bf16.msra.mxu0 %v6774
    %6838 = vmatprep.subr.bf16.mxu0 %v6773
    %6839 = vmatpush1.bf16.msra.mxu0 %v6772
    %6840 = vmatprep.subr.bf16.mxu0 %v6771
    %6841 = vmatpush1.bf16.msra.mxu0 %v6770
    %6842 = vmatprep.subr.bf16.mxu0 %v6769
    %6843 = vmatpush1.bf16.msra.mxu0 %v6768
    %6844 = vmatprep.subr.bf16.mxu0 %v6767
    %6845 = vmatpush1.bf16.msra.mxu0 %v6766
    %6846 = vmatprep.subr.bf16.mxu0 %v6797
    %6847 = vmatpush2.bf16.msra.mxu0 %v6796
    %6848 = vmatprep.subr.bf16.mxu0 %v6795
    %6849 = vmatpush2.bf16.msra.mxu0 %v6794
    %6850 = vmatprep.subr.bf16.mxu0 %v6793
    %6851 = vmatpush2.bf16.msra.mxu0 %v6792
    %6852 = vmatprep.subr.bf16.mxu0 %v6791
    %6853 = vmatpush2.bf16.msra.mxu0 %v6790
    %6854 = vmatprep.subr.bf16.mxu0 %v6789
    %6855 = vmatpush2.bf16.msra.mxu0 %v6788
    %6856 = vmatprep.subr.bf16.mxu0 %v6787
    %6857 = vmatpush2.bf16.msra.mxu0 %v6786
    %6858 = vmatprep.subr.bf16.mxu0 %v6785
    %6859 = vmatpush2.bf16.msra.mxu0 %v6784
    %6860 = vmatprep.subr.bf16.mxu0 %v6783
    %6861 = vmatpush2.bf16.msra.mxu0 %v6782
    %6862 = vmatprep.mubr.bf16.mxu0 %v6637
    %6863 = vmatmul.mubr.bf16.gmra.mxu0 %v6634
    %v6864 = vpop.f32.mrf.mxu0
    %v6865 = vadd.f32 %v6569, %v6864
    %v6866 = vpop.f32.mrf.mxu0
    %v6867 = vadd.f32 %v6571, %v6866
    %v6868 = vpop.f32.mrf.mxu0
    %v6869 = vadd.f32 %v6573, %v6868
    %v6870 = vpop.f32.mrf.mxu0
    %v6871 = vadd.f32 %v6575, %v6870
    %6872 = vmatprep.mubr.bf16.mxu0 %v6641
    %6873 = vmatmul.mubr.bf16.gmra.mxu0 %v6639
    %v6874 = vpop.f32.mrf.mxu0
    %v6875 = vadd.f32 %v6579, %v6874
    %v6876 = vpop.f32.mrf.mxu0
    %v6877 = vadd.f32 %v6581, %v6876
    %v6878 = vpop.f32.mrf.mxu0
    %v6879 = vadd.f32 %v6583, %v6878
    %v6880 = vpop.f32.mrf.mxu0
    %v6881 = vadd.f32 %v6585, %v6880
    %6882 = vmatprep.mubr.bf16.mxu0 %v6645
    %6883 = vmatmul.mubr.bf16.gmra.mxu0 %v6643
    %v6884 = vpop.f32.mrf.mxu0
    %v6885 = vadd.f32 %v6589, %v6884
    %v6886 = vpop.f32.mrf.mxu0
    %v6887 = vadd.f32 %v6591, %v6886
    %v6888 = vpop.f32.mrf.mxu0
    %v6889 = vadd.f32 %v6593, %v6888
    %v6890 = vpop.f32.mrf.mxu0
    %v6891 = vadd.f32 %v6595, %v6890
    %6892 = vmatprep.mubr.bf16.mxu0 %v6649
    %6893 = vmatmul.mubr.bf16.gmra.mxu0 %v6647
    %v6894 = vpop.f32.mrf.mxu0
    %v6895 = vadd.f32 %v6599, %v6894
    %v6896 = vpop.f32.mrf.mxu0
    %v6897 = vadd.f32 %v6601, %v6896
    %v6898 = vpop.f32.mrf.mxu0
    %v6899 = vadd.f32 %v6603, %v6898
    %v6900 = vpop.f32.mrf.mxu0
    %v6901 = vadd.f32 %v6605, %v6900
    %6902 = vmatprep.mubr.bf16.mxu0 %v6653
    %6903 = vmatmul.mubr.bf16.gmra.mxu0 %v6651
    %v6904 = vpop.f32.mrf.mxu0
    %v6905 = vadd.f32 %v6609, %v6904
    %v6906 = vpop.f32.mrf.mxu0
    %v6907 = vadd.f32 %v6611, %v6906
    %v6908 = vpop.f32.mrf.mxu0
    %v6909 = vadd.f32 %v6613, %v6908
    %v6910 = vpop.f32.mrf.mxu0
    %v6911 = vadd.f32 %v6615, %v6910
    %6912 = vmatprep.mubr.bf16.mxu0 %v6657
    %6913 = vmatmul.mubr.bf16.gmra.mxu0 %v6655
    %v6914 = vpop.f32.mrf.mxu0
    %v6915 = vadd.f32 %v6619, %v6914
    %v6916 = vpop.f32.mrf.mxu0
    %v6917 = vadd.f32 %v6621, %v6916
    %v6918 = vpop.f32.mrf.mxu0
    %v6919 = vadd.f32 %v6623, %v6918
    %v6920 = vpop.f32.mrf.mxu0
    %v6921 = vadd.f32 %v6625, %v6920
    %6922 = vdwg.mxu0
    %s6923 = scalar_lea.vmem [#allocation11], 512
    %v6924 = vld [vmem:[%s6923] sm:$0xff]
    %v6925 = vld [vmem:[%s6923 + $0x8] sm:$0xff]
    %v6926 = vld [vmem:[%s6923 + $0x10] sm:$0xff]
    %v6927 = vld [vmem:[%s6923 + $0x18] sm:$0xff]
    %v6928 = vld [vmem:[%s6923 + $0x20] sm:$0xff]
    %v6929 = vld [vmem:[%s6923 + $0x28] sm:$0xff]
    %v6930 = vld [vmem:[%s6923 + $0x30] sm:$0xff]
    %v6931 = vld [vmem:[%s6923 + $0x38] sm:$0xff]
    %v6932 = vld [vmem:[%s6923 + $0x40] sm:$0xff]
    %v6933 = vld [vmem:[%s6923 + $0x48] sm:$0xff]
    %v6934 = vld [vmem:[%s6923 + $0x50] sm:$0xff]
    %v6935 = vld [vmem:[%s6923 + $0x58] sm:$0xff]
    %v6936 = vld [vmem:[%s6923 + $0x60] sm:$0xff]
    %v6937 = vld [vmem:[%s6923 + $0x68] sm:$0xff]
    %v6938 = vld [vmem:[%s6923 + $0x70] sm:$0xff]
    %v6939 = vld [vmem:[%s6923 + $0x78] sm:$0xff]
    %v6940 = vld [vmem:[%s6923 + $0x80] sm:$0xff]
    %v6941 = vld [vmem:[%s6923 + $0x88] sm:$0xff]
    %v6942 = vld [vmem:[%s6923 + $0x90] sm:$0xff]
    %v6943 = vld [vmem:[%s6923 + $0x98] sm:$0xff]
    %v6944 = vld [vmem:[%s6923 + $0xa0] sm:$0xff]
    %v6945 = vld [vmem:[%s6923 + $0xa8] sm:$0xff]
    %v6946 = vld [vmem:[%s6923 + $0xb0] sm:$0xff]
    %v6947 = vld [vmem:[%s6923 + $0xb8] sm:$0xff]
    %v6948 = vld [vmem:[%s6923 + $0xc0] sm:$0xff]
    %v6949 = vld [vmem:[%s6923 + $0xc8] sm:$0xff]
    %v6950 = vld [vmem:[%s6923 + $0xd0] sm:$0xff]
    %v6951 = vld [vmem:[%s6923 + $0xd8] sm:$0xff]
    %v6952 = vld [vmem:[%s6923 + $0xe0] sm:$0xff]
    %v6953 = vld [vmem:[%s6923 + $0xe8] sm:$0xff]
    %v6954 = vld [vmem:[%s6923 + $0xf0] sm:$0xff]
    %v6955 = vld [vmem:[%s6923 + $0xf8] sm:$0xff]
    %v6956 = vpack.c.b16 %v6202, %v6200
    %v6957 = vpack.c.b16 %v6203, %v6201
    %v6958 = vpack.c.b16 %v6206, %v6204
    %v6959 = vpack.c.b16 %v6207, %v6205
    %v6960 = vpack.c.b16 %v6210, %v6208
    %v6961 = vpack.c.b16 %v6211, %v6209
    %v6962 = vpack.c.b16 %v6214, %v6212
    %v6963 = vpack.c.b16 %v6215, %v6213
    %v6964 = vpack.c.b16 %v6218, %v6216
    %v6965 = vpack.c.b16 %v6219, %v6217
    %v6966 = vpack.c.b16 %v6222, %v6220
    %v6967 = vpack.c.b16 %v6223, %v6221
    %v7012 = vunpack.c.l.b16 %v6924
    %v7013 = vunpack.c.h.b16 %v6924
    %v7014 = vunpack.c.l.b16 %v6925
    %v7015 = vunpack.c.h.b16 %v6925
    %v7016 = vunpack.c.l.b16 %v6926
    %v7017 = vunpack.c.h.b16 %v6926
    %v7018 = vunpack.c.l.b16 %v6927
    %v7019 = vunpack.c.h.b16 %v6927
    %v7020 = vunpack.c.l.b16 %v6928
    %v7021 = vunpack.c.h.b16 %v6928
    %v7022 = vunpack.c.l.b16 %v6929
    %v7023 = vunpack.c.h.b16 %v6929
    %v7024 = vunpack.c.l.b16 %v6930
    %v7025 = vunpack.c.h.b16 %v6930
    %v7026 = vunpack.c.l.b16 %v6931
    %v7027 = vunpack.c.h.b16 %v6931
    %v7028 = vunpack.c.l.b16 %v6932
    %v7029 = vunpack.c.h.b16 %v6932
    %v7030 = vunpack.c.l.b16 %v6933
    %v7031 = vunpack.c.h.b16 %v6933
    %v7032 = vunpack.c.l.b16 %v6934
    %v7033 = vunpack.c.h.b16 %v6934
    %v7034 = vunpack.c.l.b16 %v6935
    %v7035 = vunpack.c.h.b16 %v6935
    %v7036 = vunpack.c.l.b16 %v6936
    %v7037 = vunpack.c.h.b16 %v6936
    %v7038 = vunpack.c.l.b16 %v6937
    %v7039 = vunpack.c.h.b16 %v6937
    %v7040 = vunpack.c.l.b16 %v6938
    %v7041 = vunpack.c.h.b16 %v6938
    %v7042 = vunpack.c.l.b16 %v6939
    %v7043 = vunpack.c.h.b16 %v6939
    %v7044 = vunpack.c.l.b16 %v6940
    %v7045 = vunpack.c.h.b16 %v6940
    %v7046 = vunpack.c.l.b16 %v6941
    %v7047 = vunpack.c.h.b16 %v6941
    %v7048 = vunpack.c.l.b16 %v6942
    %v7049 = vunpack.c.h.b16 %v6942
    %v7050 = vunpack.c.l.b16 %v6943
    %v7051 = vunpack.c.h.b16 %v6943
    %v7052 = vunpack.c.l.b16 %v6944
    %v7053 = vunpack.c.h.b16 %v6944
    %v7054 = vunpack.c.l.b16 %v6945
    %v7055 = vunpack.c.h.b16 %v6945
    %v7056 = vunpack.c.l.b16 %v6946
    %v7057 = vunpack.c.h.b16 %v6946
    %v7058 = vunpack.c.l.b16 %v6947
    %v7059 = vunpack.c.h.b16 %v6947
    %v7060 = vunpack.c.l.b16 %v6948
    %v7061 = vunpack.c.h.b16 %v6948
    %v7062 = vunpack.c.l.b16 %v6949
    %v7063 = vunpack.c.h.b16 %v6949
    %v7064 = vunpack.c.l.b16 %v6950
    %v7065 = vunpack.c.h.b16 %v6950
    %v7066 = vunpack.c.l.b16 %v6951
    %v7067 = vunpack.c.h.b16 %v6951
    %v7068 = vunpack.c.l.b16 %v6952
    %v7069 = vunpack.c.h.b16 %v6952
    %v7070 = vunpack.c.l.b16 %v6953
    %v7071 = vunpack.c.h.b16 %v6953
    %v7072 = vunpack.c.l.b16 %v6954
    %v7073 = vunpack.c.h.b16 %v6954
    %v7074 = vunpack.c.l.b16 %v6955
    %v7075 = vunpack.c.h.b16 %v6955
    %v7076 = vpack.c.b16 %v7014, %v7012
    %v7077 = vpack.c.b16 %v7015, %v7013
    %v7078 = vpack.c.b16 %v7018, %v7016
    %v7079 = vpack.c.b16 %v7019, %v7017
    %v7080 = vpack.c.b16 %v7022, %v7020
    %v7081 = vpack.c.b16 %v7023, %v7021
    %v7082 = vpack.c.b16 %v7026, %v7024
    %v7083 = vpack.c.b16 %v7027, %v7025
    %v7084 = vpack.c.b16 %v7030, %v7028
    %v7085 = vpack.c.b16 %v7031, %v7029
    %v7086 = vpack.c.b16 %v7034, %v7032
    %v7087 = vpack.c.b16 %v7035, %v7033
    %v7088 = vpack.c.b16 %v7038, %v7036
    %v7089 = vpack.c.b16 %v7039, %v7037
    %v7090 = vpack.c.b16 %v7042, %v7040
    %v7091 = vpack.c.b16 %v7043, %v7041
    %v7092 = vpack.c.b16 %v7046, %v7044
    %v7093 = vpack.c.b16 %v7047, %v7045
    %v7094 = vpack.c.b16 %v7050, %v7048
    %v7095 = vpack.c.b16 %v7051, %v7049
    %v7096 = vpack.c.b16 %v7054, %v7052
    %v7097 = vpack.c.b16 %v7055, %v7053
    %v7098 = vpack.c.b16 %v7058, %v7056
    %v7099 = vpack.c.b16 %v7059, %v7057
    %v7100 = vpack.c.b16 %v7062, %v7060
    %v7101 = vpack.c.b16 %v7063, %v7061
    %v7102 = vpack.c.b16 %v7066, %v7064
    %v7103 = vpack.c.b16 %v7067, %v7065
    %v7104 = vpack.c.b16 %v7070, %v7068
    %v7105 = vpack.c.b16 %v7071, %v7069
    %v7106 = vpack.c.b16 %v7074, %v7072
    %v7107 = vpack.c.b16 %v7075, %v7073
    %7140 = vmatprep.subr.bf16.mxu0 %v7091
    %7141 = vmatpush1.bf16.msra.mxu0 %v7090
    %7142 = vmatprep.subr.bf16.mxu0 %v7089
    %7143 = vmatpush1.bf16.msra.mxu0 %v7088
    %7144 = vmatprep.subr.bf16.mxu0 %v7087
    %7145 = vmatpush1.bf16.msra.mxu0 %v7086
    %7146 = vmatprep.subr.bf16.mxu0 %v7085
    %7147 = vmatpush1.bf16.msra.mxu0 %v7084
    %7148 = vmatprep.subr.bf16.mxu0 %v7083
    %7149 = vmatpush1.bf16.msra.mxu0 %v7082
    %7150 = vmatprep.subr.bf16.mxu0 %v7081
    %7151 = vmatpush1.bf16.msra.mxu0 %v7080
    %7152 = vmatprep.subr.bf16.mxu0 %v7079
    %7153 = vmatpush1.bf16.msra.mxu0 %v7078
    %7154 = vmatprep.subr.bf16.mxu0 %v7077
    %7155 = vmatpush1.bf16.msra.mxu0 %v7076
    %7156 = vmatprep.subr.bf16.mxu0 %v7107
    %7157 = vmatpush2.bf16.msra.mxu0 %v7106
    %7158 = vmatprep.subr.bf16.mxu0 %v7105
    %7159 = vmatpush2.bf16.msra.mxu0 %v7104
    %7160 = vmatprep.subr.bf16.mxu0 %v7103
    %7161 = vmatpush2.bf16.msra.mxu0 %v7102
    %7162 = vmatprep.subr.bf16.mxu0 %v7101
    %7163 = vmatpush2.bf16.msra.mxu0 %v7100
    %7164 = vmatprep.subr.bf16.mxu0 %v7099
    %7165 = vmatpush2.bf16.msra.mxu0 %v7098
    %7166 = vmatprep.subr.bf16.mxu0 %v7097
    %7167 = vmatpush2.bf16.msra.mxu0 %v7096
    %7168 = vmatprep.subr.bf16.mxu0 %v7095
    %7169 = vmatpush2.bf16.msra.mxu0 %v7094
    %7170 = vmatprep.subr.bf16.mxu0 %v7093
    %7171 = vmatpush2.bf16.msra.mxu0 %v7092
    %7172 = vmatprep.mubr.bf16.mxu0 %v6957
    %7173 = vmatmul.mubr.bf16.gmra.mxu0 %v6956
    %v7174 = vpop.f32.mrf.mxu0
    %v7175 = vadd.f32 0.0, %v7174
    %v7176 = vpop.f32.mrf.mxu0
    %v7177 = vadd.f32 0.0, %v7176
    %v7178 = vpop.f32.mrf.mxu0
    %v7179 = vadd.f32 0.0, %v7178
    %v7180 = vpop.f32.mrf.mxu0
    %v7181 = vadd.f32 0.0, %v7180
    %7182 = vmatprep.mubr.bf16.mxu0 %v6959
    %7183 = vmatmul.mubr.bf16.gmra.mxu0 %v6958
    %v7184 = vpop.f32.mrf.mxu0
    %v7185 = vadd.f32 0.0, %v7184
    %v7186 = vpop.f32.mrf.mxu0
    %v7187 = vadd.f32 0.0, %v7186
    %v7188 = vpop.f32.mrf.mxu0
    %v7189 = vadd.f32 0.0, %v7188
    %v7190 = vpop.f32.mrf.mxu0
    %v7191 = vadd.f32 0.0, %v7190
    %7192 = vmatprep.mubr.bf16.mxu0 %v6961
    %7193 = vmatmul.mubr.bf16.gmra.mxu0 %v6960
    %v7194 = vpop.f32.mrf.mxu0
    %v7195 = vadd.f32 0.0, %v7194
    %v7196 = vpop.f32.mrf.mxu0
    %v7197 = vadd.f32 0.0, %v7196
    %v7198 = vpop.f32.mrf.mxu0
    %v7199 = vadd.f32 0.0, %v7198
    %v7200 = vpop.f32.mrf.mxu0
    %v7201 = vadd.f32 0.0, %v7200
    %7202 = vmatprep.mubr.bf16.mxu0 %v6963
    %7203 = vmatmul.mubr.bf16.gmra.mxu0 %v6962
    %v7204 = vpop.f32.mrf.mxu0
    %v7205 = vadd.f32 0.0, %v7204
    %v7206 = vpop.f32.mrf.mxu0
    %v7207 = vadd.f32 0.0, %v7206
    %v7208 = vpop.f32.mrf.mxu0
    %v7209 = vadd.f32 0.0, %v7208
    %v7210 = vpop.f32.mrf.mxu0
    %v7211 = vadd.f32 0.0, %v7210
    %7212 = vmatprep.mubr.bf16.mxu0 %v6965
    %7213 = vmatmul.mubr.bf16.gmra.mxu0 %v6964
    %v7214 = vpop.f32.mrf.mxu0
    %v7215 = vadd.f32 0.0, %v7214
    %v7216 = vpop.f32.mrf.mxu0
    %v7217 = vadd.f32 0.0, %v7216
    %v7218 = vpop.f32.mrf.mxu0
    %v7219 = vadd.f32 0.0, %v7218
    %v7220 = vpop.f32.mrf.mxu0
    %v7221 = vadd.f32 0.0, %v7220
    %7222 = vmatprep.mubr.bf16.mxu0 %v6967
    %7223 = vmatmul.mubr.bf16.gmra.mxu0 %v6966
    %v7224 = vpop.f32.mrf.mxu0
    %v7225 = vadd.f32 0.0, %v7224
    %v7226 = vpop.f32.mrf.mxu0
    %v7227 = vadd.f32 0.0, %v7226
    %v7228 = vpop.f32.mrf.mxu0
    %v7229 = vadd.f32 0.0, %v7228
    %v7230 = vpop.f32.mrf.mxu0
    %v7231 = vadd.f32 0.0, %v7230
    %7232 = vdwg.mxu0
    %v7233 = vadd.f32 %v6865, %v7175
    %v7234 = vadd.f32 %v6867, %v7177
    %v7235 = vadd.f32 %v6869, %v7179
    %v7236 = vadd.f32 %v6871, %v7181
    %v7237 = vadd.f32 %v6875, %v7185
    %v7238 = vadd.f32 %v6877, %v7187
    %v7239 = vadd.f32 %v6879, %v7189
    %v7240 = vadd.f32 %v6881, %v7191
    %v7241 = vadd.f32 %v6885, %v7195
    %v7242 = vadd.f32 %v6887, %v7197
    %v7243 = vadd.f32 %v6889, %v7199
    %v7244 = vadd.f32 %v6891, %v7201
    %v7245 = vadd.f32 %v6895, %v7205
    %v7246 = vadd.f32 %v6897, %v7207
    %v7247 = vadd.f32 %v6899, %v7209
    %v7248 = vadd.f32 %v6901, %v7211
    %v7249 = vadd.f32 %v6905, %v7215
    %v7250 = vadd.f32 %v6907, %v7217
    %v7251 = vadd.f32 %v6909, %v7219
    %v7252 = vadd.f32 %v6911, %v7221
    %v7253 = vadd.f32 %v6915, %v7225
    %v7254 = vadd.f32 %v6917, %v7227
    %v7255 = vadd.f32 %v6919, %v7229
    %v7256 = vadd.f32 %v6921, %v7231
    %v7257 = vld [vmem:[#allocation2 + $0x8] sm:$0xff]
    %v7258 = vld [vmem:[#allocation2 + $0x10] sm:$0xff]
    %v7259 = vld [vmem:[#allocation2 + $0x18] sm:$0xff]
    %v7260 = vld [vmem:[#allocation2 + $0x20] sm:$0xff]
    %v7261 = vld [vmem:[#allocation2 + $0x28] sm:$0xff]
    %v7262 = vld [vmem:[#allocation2 + $0x30] sm:$0xff]
    %v7263 = vld [vmem:[#allocation2 + $0x38] sm:$0xff]
    %v7264 = vld [vmem:[#allocation2 + $0x40] sm:$0xff]
    %v7265 = vld [vmem:[#allocation2 + $0x48] sm:$0xff]
    %v7266 = vld [vmem:[#allocation2 + $0x50] sm:$0xff]
    %v7267 = vld [vmem:[#allocation2 + $0x58] sm:$0xff]
    %v7268 = vld [vmem:[#allocation2 + $0x60] sm:$0xff]
    %v7269 = vld [vmem:[#allocation2 + $0x68] sm:$0x11]
    %s7270 = scalar_lea.vmem [#allocation11], 768
    %v7271 = vld [vmem:[%s7270] sm:$0xff]
    %v7272 = vld [vmem:[%s7270 + $0x8] sm:$0xff]
    %v7273 = vld [vmem:[%s7270 + $0x10] sm:$0xff]
    %v7274 = vld [vmem:[%s7270 + $0x18] sm:$0xff]
    %v7275 = vld [vmem:[%s7270 + $0x20] sm:$0xff]
    %v7276 = vld [vmem:[%s7270 + $0x28] sm:$0xff]
    %v7277 = vld [vmem:[%s7270 + $0x30] sm:$0xff]
    %v7278 = vld [vmem:[%s7270 + $0x38] sm:$0xff]
    %v7279 = vld [vmem:[%s7270 + $0x40] sm:$0xff]
    %v7280 = vld [vmem:[%s7270 + $0x48] sm:$0xff]
    %v7281 = vld [vmem:[%s7270 + $0x50] sm:$0xff]
    %v7282 = vld [vmem:[%s7270 + $0x58] sm:$0xff]
    %v7283 = vld [vmem:[%s7270 + $0x60] sm:$0xff]
    %v7284 = vld [vmem:[%s7270 + $0x68] sm:$0xff]
    %v7285 = vld [vmem:[%s7270 + $0x70] sm:$0xff]
    %v7286 = vld [vmem:[%s7270 + $0x78] sm:$0xff]
    %v7287 = vld [vmem:[%s7270 + $0x80] sm:$0xff]
    %v7288 = vld [vmem:[%s7270 + $0x88] sm:$0xff]
    %v7289 = vld [vmem:[%s7270 + $0x90] sm:$0xff]
    %v7290 = vld [vmem:[%s7270 + $0x98] sm:$0xff]
    %v7291 = vld [vmem:[%s7270 + $0xa0] sm:$0xff]
    %v7292 = vld [vmem:[%s7270 + $0xa8] sm:$0xff]
    %v7293 = vld [vmem:[%s7270 + $0xb0] sm:$0xff]
    %v7294 = vld [vmem:[%s7270 + $0xb8] sm:$0xff]
    %v7295 = vld [vmem:[%s7270 + $0xc0] sm:$0xff]
    %v7296 = vld [vmem:[%s7270 + $0xc8] sm:$0xff]
    %v7297 = vld [vmem:[%s7270 + $0xd0] sm:$0xff]
    %v7298 = vld [vmem:[%s7270 + $0xd8] sm:$0xff]
    %v7299 = vld [vmem:[%s7270 + $0xe0] sm:$0xff]
    %v7300 = vld [vmem:[%s7270 + $0xe8] sm:$0xff]
    %v7301 = vld [vmem:[%s7270 + $0xf0] sm:$0xff]
    %v7302 = vld [vmem:[%s7270 + $0xf8] sm:$0xff]
    %v7316 = vunpack.c.l.b16 %v7257
    %v7317 = vunpack.c.h.b16 %v7257
    %v7318 = vunpack.c.l.b16 %v7258
    %v7319 = vunpack.c.h.b16 %v7258
    %v7320 = vunpack.c.l.b16 %v7259
    %v7321 = vunpack.c.h.b16 %v7259
    %v7322 = vunpack.c.l.b16 %v7260
    %v7323 = vunpack.c.h.b16 %v7260
    %v7324 = vunpack.c.l.b16 %v7261
    %v7325 = vunpack.c.h.b16 %v7261
    %v7326 = vunpack.c.l.b16 %v7262
    %v7327 = vunpack.c.h.b16 %v7262
    %v7328 = vunpack.c.l.b16 %v7263
    %v7329 = vunpack.c.h.b16 %v7263
    %v7330 = vunpack.c.l.b16 %v7264
    %v7331 = vunpack.c.h.b16 %v7264
    %v7332 = vunpack.c.l.b16 %v7265
    %v7333 = vunpack.c.h.b16 %v7265
    %v7334 = vunpack.c.l.b16 %v7266
    %v7335 = vunpack.c.h.b16 %v7266
    %v7336 = vunpack.c.l.b16 %v7267
    %v7337 = vunpack.c.h.b16 %v7267
    %v7338 = vunpack.c.l.b16 %v7268
    %v7339 = vunpack.c.h.b16 %v7268
    %v7340 = vunpack.c.l.b16 %v7269
    %v7341 = vunpack.c.h.b16 %v7269
    %v7342 = vpack.c.b16 %v7318, %v7316
    %v7343 = vpack.c.b16 %v7319, %v7317
    %v7344 = vpack.c.b16 %v7322, %v7320
    %v7345 = vpack.c.b16 %v7323, %v7321
    %v7346 = vpack.c.b16 %v7326, %v7324
    %v7347 = vpack.c.b16 %v7327, %v7325
    %v7348 = vpack.c.b16 %v7330, %v7328
    %v7349 = vpack.c.b16 %v7331, %v7329
    %v7350 = vpack.c.b16 %v7334, %v7332
    %v7351 = vpack.c.b16 %v7335, %v7333
    %v7352 = vpack.c.b16 %v7338, %v7336
    %v7353 = vpack.c.b16 %v7339, %v7337
    %v7354 = vpack.c.b16 %v7340, %v7340
    %v7355 = vpack.c.b16 %v7341, %v7341
    %v7357 = vshrl.u32 %v7342, 16
    %v7359 = vshll.u32 %v7342, 16
    %v7361 = vrot.slane %v7359, 1
    %v7362 = vor.u32 %v7357, %v7361
    %v7364 = vshll.u32 %v7344, 16
    %v7366 = vrot.slane %v7364, 1
    %v7367 = vsel %vm1172, %v7362, %v7366
    %v7369 = vshrl.u32 %v7343, 16
    %v7371 = vshll.u32 %v7343, 16
    %v7373 = vrot.slane %v7371, 1
    %v7374 = vor.u32 %v7369, %v7373
    %v7376 = vshll.u32 %v7345, 16
    %v7378 = vrot.slane %v7376, 1
    %v7379 = vsel %vm1172, %v7374, %v7378
    %v7380 = vshrl.u32 %v7344, 16
    %v7382 = vor.u32 %v7380, %v7366
    %v7384 = vshll.u32 %v7346, 16
    %v7386 = vrot.slane %v7384, 1
    %v7387 = vsel %vm1172, %v7382, %v7386
    %v7388 = vshrl.u32 %v7345, 16
    %v7390 = vor.u32 %v7388, %v7378
    %v7392 = vshll.u32 %v7347, 16
    %v7394 = vrot.slane %v7392, 1
    %v7395 = vsel %vm1172, %v7390, %v7394
    %v7396 = vshrl.u32 %v7346, 16
    %v7398 = vor.u32 %v7396, %v7386
    %v7400 = vshll.u32 %v7348, 16
    %v7402 = vrot.slane %v7400, 1
    %v7403 = vsel %vm1172, %v7398, %v7402
    %v7404 = vshrl.u32 %v7347, 16
    %v7406 = vor.u32 %v7404, %v7394
    %v7408 = vshll.u32 %v7349, 16
    %v7410 = vrot.slane %v7408, 1
    %v7411 = vsel %vm1172, %v7406, %v7410
    %v7412 = vshrl.u32 %v7348, 16
    %v7414 = vor.u32 %v7412, %v7402
    %v7416 = vshll.u32 %v7350, 16
    %v7418 = vrot.slane %v7416, 1
    %v7419 = vsel %vm1172, %v7414, %v7418
    %v7420 = vshrl.u32 %v7349, 16
    %v7422 = vor.u32 %v7420, %v7410
    %v7424 = vshll.u32 %v7351, 16
    %v7426 = vrot.slane %v7424, 1
    %v7427 = vsel %vm1172, %v7422, %v7426
    %v7428 = vshrl.u32 %v7350, 16
    %v7430 = vor.u32 %v7428, %v7418
    %v7432 = vshll.u32 %v7352, 16
    %v7434 = vrot.slane %v7432, 1
    %v7435 = vsel %vm1172, %v7430, %v7434
    %v7436 = vshrl.u32 %v7351, 16
    %v7438 = vor.u32 %v7436, %v7426
    %v7440 = vshll.u32 %v7353, 16
    %v7442 = vrot.slane %v7440, 1
    %v7443 = vsel %vm1172, %v7438, %v7442
    %v7444 = vshrl.u32 %v7352, 16
    %v7446 = vor.u32 %v7444, %v7434
    %v7448 = vshll.u32 %v7354, 16
    %v7450 = vrot.slane %v7448, 1
    %v7451 = vsel %vm1172, %v7446, %v7450
    %v7452 = vshrl.u32 %v7353, 16
    %v7454 = vor.u32 %v7452, %v7442
    %v7456 = vshll.u32 %v7355, 16
    %v7458 = vrot.slane %v7456, 1
    %v7459 = vsel %vm1172, %v7454, %v7458
    %v7504 = vunpack.c.l.b16 %v7271
    %v7505 = vunpack.c.h.b16 %v7271
    %v7506 = vunpack.c.l.b16 %v7272
    %v7507 = vunpack.c.h.b16 %v7272
    %v7508 = vunpack.c.l.b16 %v7273
    %v7509 = vunpack.c.h.b16 %v7273
    %v7510 = vunpack.c.l.b16 %v7274
    %v7511 = vunpack.c.h.b16 %v7274
    %v7512 = vunpack.c.l.b16 %v7275
    %v7513 = vunpack.c.h.b16 %v7275
    %v7514 = vunpack.c.l.b16 %v7276
    %v7515 = vunpack.c.h.b16 %v7276
    %v7516 = vunpack.c.l.b16 %v7277
    %v7517 = vunpack.c.h.b16 %v7277
    %v7518 = vunpack.c.l.b16 %v7278
    %v7519 = vunpack.c.h.b16 %v7278
    %v7520 = vunpack.c.l.b16 %v7279
    %v7521 = vunpack.c.h.b16 %v7279
    %v7522 = vunpack.c.l.b16 %v7280
    %v7523 = vunpack.c.h.b16 %v7280
    %v7524 = vunpack.c.l.b16 %v7281
    %v7525 = vunpack.c.h.b16 %v7281
    %v7526 = vunpack.c.l.b16 %v7282
    %v7527 = vunpack.c.h.b16 %v7282
    %v7528 = vunpack.c.l.b16 %v7283
    %v7529 = vunpack.c.h.b16 %v7283
    %v7530 = vunpack.c.l.b16 %v7284
    %v7531 = vunpack.c.h.b16 %v7284
    %v7532 = vunpack.c.l.b16 %v7285
    %v7533 = vunpack.c.h.b16 %v7285
    %v7534 = vunpack.c.l.b16 %v7286
    %v7535 = vunpack.c.h.b16 %v7286
    %v7536 = vunpack.c.l.b16 %v7287
    %v7537 = vunpack.c.h.b16 %v7287
    %v7538 = vunpack.c.l.b16 %v7288
    %v7539 = vunpack.c.h.b16 %v7288
    %v7540 = vunpack.c.l.b16 %v7289
    %v7541 = vunpack.c.h.b16 %v7289
    %v7542 = vunpack.c.l.b16 %v7290
    %v7543 = vunpack.c.h.b16 %v7290
    %v7544 = vunpack.c.l.b16 %v7291
    %v7545 = vunpack.c.h.b16 %v7291
    %v7546 = vunpack.c.l.b16 %v7292
    %v7547 = vunpack.c.h.b16 %v7292
    %v7548 = vunpack.c.l.b16 %v7293
    %v7549 = vunpack.c.h.b16 %v7293
    %v7550 = vunpack.c.l.b16 %v7294
    %v7551 = vunpack.c.h.b16 %v7294
    %v7552 = vunpack.c.l.b16 %v7295
    %v7553 = vunpack.c.h.b16 %v7295
    %v7554 = vunpack.c.l.b16 %v7296
    %v7555 = vunpack.c.h.b16 %v7296
    %v7556 = vunpack.c.l.b16 %v7297
    %v7557 = vunpack.c.h.b16 %v7297
    %v7558 = vunpack.c.l.b16 %v7298
    %v7559 = vunpack.c.h.b16 %v7298
    %v7560 = vunpack.c.l.b16 %v7299
    %v7561 = vunpack.c.h.b16 %v7299
    %v7562 = vunpack.c.l.b16 %v7300
    %v7563 = vunpack.c.h.b16 %v7300
    %v7564 = vunpack.c.l.b16 %v7301
    %v7565 = vunpack.c.h.b16 %v7301
    %v7566 = vunpack.c.l.b16 %v7302
    %v7567 = vunpack.c.h.b16 %v7302
    %v7568 = vpack.c.b16 %v7506, %v7504
    %v7569 = vpack.c.b16 %v7507, %v7505
    %v7570 = vpack.c.b16 %v7510, %v7508
    %v7571 = vpack.c.b16 %v7511, %v7509
    %v7572 = vpack.c.b16 %v7514, %v7512
    %v7573 = vpack.c.b16 %v7515, %v7513
    %v7574 = vpack.c.b16 %v7518, %v7516
    %v7575 = vpack.c.b16 %v7519, %v7517
    %v7576 = vpack.c.b16 %v7522, %v7520
    %v7577 = vpack.c.b16 %v7523, %v7521
    %v7578 = vpack.c.b16 %v7526, %v7524
    %v7579 = vpack.c.b16 %v7527, %v7525
    %v7580 = vpack.c.b16 %v7530, %v7528
    %v7581 = vpack.c.b16 %v7531, %v7529
    %v7582 = vpack.c.b16 %v7534, %v7532
    %v7583 = vpack.c.b16 %v7535, %v7533
    %v7584 = vpack.c.b16 %v7538, %v7536
    %v7585 = vpack.c.b16 %v7539, %v7537
    %v7586 = vpack.c.b16 %v7542, %v7540
    %v7587 = vpack.c.b16 %v7543, %v7541
    %v7588 = vpack.c.b16 %v7546, %v7544
    %v7589 = vpack.c.b16 %v7547, %v7545
    %v7590 = vpack.c.b16 %v7550, %v7548
    %v7591 = vpack.c.b16 %v7551, %v7549
    %v7592 = vpack.c.b16 %v7554, %v7552
    %v7593 = vpack.c.b16 %v7555, %v7553
    %v7594 = vpack.c.b16 %v7558, %v7556
    %v7595 = vpack.c.b16 %v7559, %v7557
    %v7596 = vpack.c.b16 %v7562, %v7560
    %v7597 = vpack.c.b16 %v7563, %v7561
    %v7598 = vpack.c.b16 %v7566, %v7564
    %v7599 = vpack.c.b16 %v7567, %v7565
    %7632 = vmatprep.subr.bf16.mxu0 %v7583
    %7633 = vmatpush1.bf16.msra.mxu0 %v7582
    %7634 = vmatprep.subr.bf16.mxu0 %v7581
    %7635 = vmatpush1.bf16.msra.mxu0 %v7580
    %7636 = vmatprep.subr.bf16.mxu0 %v7579
    %7637 = vmatpush1.bf16.msra.mxu0 %v7578
    %7638 = vmatprep.subr.bf16.mxu0 %v7577
    %7639 = vmatpush1.bf16.msra.mxu0 %v7576
    %7640 = vmatprep.subr.bf16.mxu0 %v7575
    %7641 = vmatpush1.bf16.msra.mxu0 %v7574
    %7642 = vmatprep.subr.bf16.mxu0 %v7573
    %7643 = vmatpush1.bf16.msra.mxu0 %v7572
    %7644 = vmatprep.subr.bf16.mxu0 %v7571
    %7645 = vmatpush1.bf16.msra.mxu0 %v7570
    %7646 = vmatprep.subr.bf16.mxu0 %v7569
    %7647 = vmatpush1.bf16.msra.mxu0 %v7568
    %7648 = vmatprep.subr.bf16.mxu0 %v7599
    %7649 = vmatpush2.bf16.msra.mxu0 %v7598
    %7650 = vmatprep.subr.bf16.mxu0 %v7597
    %7651 = vmatpush2.bf16.msra.mxu0 %v7596
    %7652 = vmatprep.subr.bf16.mxu0 %v7595
    %7653 = vmatpush2.bf16.msra.mxu0 %v7594
    %7654 = vmatprep.subr.bf16.mxu0 %v7593
    %7655 = vmatpush2.bf16.msra.mxu0 %v7592
    %7656 = vmatprep.subr.bf16.mxu0 %v7591
    %7657 = vmatpush2.bf16.msra.mxu0 %v7590
    %7658 = vmatprep.subr.bf16.mxu0 %v7589
    %7659 = vmatpush2.bf16.msra.mxu0 %v7588
    %7660 = vmatprep.subr.bf16.mxu0 %v7587
    %7661 = vmatpush2.bf16.msra.mxu0 %v7586
    %7662 = vmatprep.subr.bf16.mxu0 %v7585
    %7663 = vmatpush2.bf16.msra.mxu0 %v7584
    %7664 = vmatprep.mubr.bf16.mxu0 %v7379
    %7665 = vmatmul.mubr.bf16.gmra.mxu0 %v7367
    %v7666 = vpop.f32.mrf.mxu0
    %v7667 = vadd.f32 0.0, %v7666
    %v7668 = vpop.f32.mrf.mxu0
    %v7669 = vadd.f32 0.0, %v7668
    %v7670 = vpop.f32.mrf.mxu0
    %v7671 = vadd.f32 0.0, %v7670
    %v7672 = vpop.f32.mrf.mxu0
    %v7673 = vadd.f32 0.0, %v7672
    %7674 = vmatprep.mubr.bf16.mxu0 %v7395
    %7675 = vmatmul.mubr.bf16.gmra.mxu0 %v7387
    %v7676 = vpop.f32.mrf.mxu0
    %v7677 = vadd.f32 0.0, %v7676
    %v7678 = vpop.f32.mrf.mxu0
    %v7679 = vadd.f32 0.0, %v7678
    %v7680 = vpop.f32.mrf.mxu0
    %v7681 = vadd.f32 0.0, %v7680
    %v7682 = vpop.f32.mrf.mxu0
    %v7683 = vadd.f32 0.0, %v7682
    %7684 = vmatprep.mubr.bf16.mxu0 %v7411
    %7685 = vmatmul.mubr.bf16.gmra.mxu0 %v7403
    %v7686 = vpop.f32.mrf.mxu0
    %v7687 = vadd.f32 0.0, %v7686
    %v7688 = vpop.f32.mrf.mxu0
    %v7689 = vadd.f32 0.0, %v7688
    %v7690 = vpop.f32.mrf.mxu0
    %v7691 = vadd.f32 0.0, %v7690
    %v7692 = vpop.f32.mrf.mxu0
    %v7693 = vadd.f32 0.0, %v7692
    %7694 = vmatprep.mubr.bf16.mxu0 %v7427
    %7695 = vmatmul.mubr.bf16.gmra.mxu0 %v7419
    %v7696 = vpop.f32.mrf.mxu0
    %v7697 = vadd.f32 0.0, %v7696
    %v7698 = vpop.f32.mrf.mxu0
    %v7699 = vadd.f32 0.0, %v7698
    %v7700 = vpop.f32.mrf.mxu0
    %v7701 = vadd.f32 0.0, %v7700
    %v7702 = vpop.f32.mrf.mxu0
    %v7703 = vadd.f32 0.0, %v7702
    %7704 = vmatprep.mubr.bf16.mxu0 %v7443
    %7705 = vmatmul.mubr.bf16.gmra.mxu0 %v7435
    %v7706 = vpop.f32.mrf.mxu0
    %v7707 = vadd.f32 0.0, %v7706
    %v7708 = vpop.f32.mrf.mxu0
    %v7709 = vadd.f32 0.0, %v7708
    %v7710 = vpop.f32.mrf.mxu0
    %v7711 = vadd.f32 0.0, %v7710
    %v7712 = vpop.f32.mrf.mxu0
    %v7713 = vadd.f32 0.0, %v7712
    %7714 = vmatprep.mubr.bf16.mxu0 %v7459
    %7715 = vmatmul.mubr.bf16.gmra.mxu0 %v7451
    %v7716 = vpop.f32.mrf.mxu0
    %v7717 = vadd.f32 0.0, %v7716
    %v7718 = vpop.f32.mrf.mxu0
    %v7719 = vadd.f32 0.0, %v7718
    %v7720 = vpop.f32.mrf.mxu0
    %v7721 = vadd.f32 0.0, %v7720
    %v7722 = vpop.f32.mrf.mxu0
    %v7723 = vadd.f32 0.0, %v7722
    %7724 = vdwg.mxu0
    %v7725 = vadd.f32 %v7233, %v7667
    %v7726 = vadd.f32 %v7234, %v7669
    %v7727 = vadd.f32 %v7235, %v7671
    %v7728 = vadd.f32 %v7236, %v7673
    %v7729 = vadd.f32 %v7237, %v7677
    %v7730 = vadd.f32 %v7238, %v7679
    %v7731 = vadd.f32 %v7239, %v7681
    %v7732 = vadd.f32 %v7240, %v7683
    %v7733 = vadd.f32 %v7241, %v7687
    %v7734 = vadd.f32 %v7242, %v7689
    %v7735 = vadd.f32 %v7243, %v7691
    %v7736 = vadd.f32 %v7244, %v7693
    %v7737 = vadd.f32 %v7245, %v7697
    %v7738 = vadd.f32 %v7246, %v7699
    %v7739 = vadd.f32 %v7247, %v7701
    %v7740 = vadd.f32 %v7248, %v7703
    %v7741 = vadd.f32 %v7249, %v7707
    %v7742 = vadd.f32 %v7250, %v7709
    %v7743 = vadd.f32 %v7251, %v7711
    %v7744 = vadd.f32 %v7252, %v7713
    %v7745 = vadd.f32 %v7253, %v7717
    %v7746 = vadd.f32 %v7254, %v7719
    %v7747 = vadd.f32 %v7255, %v7721
    %v7748 = vadd.f32 %v7256, %v7723
    %v7749 = vld [vmem:[#allocation2 + $0x8] sm:$0xee]
    %s7750 = scalar_lea.vmem [#allocation11], 1024
    %v7751 = vld [vmem:[%s7750] sm:$0xff]
    %v7752 = vld [vmem:[%s7750 + $0x8] sm:$0xff]
    %v7753 = vld [vmem:[%s7750 + $0x10] sm:$0xff]
    %v7754 = vld [vmem:[%s7750 + $0x18] sm:$0xff]
    %v7755 = vld [vmem:[%s7750 + $0x20] sm:$0xff]
    %v7756 = vld [vmem:[%s7750 + $0x28] sm:$0xff]
    %v7757 = vld [vmem:[%s7750 + $0x30] sm:$0xff]
    %v7758 = vld [vmem:[%s7750 + $0x38] sm:$0xff]
    %v7759 = vld [vmem:[%s7750 + $0x40] sm:$0xff]
    %v7760 = vld [vmem:[%s7750 + $0x48] sm:$0xff]
    %v7761 = vld [vmem:[%s7750 + $0x50] sm:$0xff]
    %v7762 = vld [vmem:[%s7750 + $0x58] sm:$0xff]
    %v7763 = vld [vmem:[%s7750 + $0x60] sm:$0xff]
    %v7764 = vld [vmem:[%s7750 + $0x68] sm:$0xff]
    %v7765 = vld [vmem:[%s7750 + $0x70] sm:$0xff]
    %v7766 = vld [vmem:[%s7750 + $0x78] sm:$0xff]
    %v7767 = vld [vmem:[%s7750 + $0x80] sm:$0xff]
    %v7768 = vld [vmem:[%s7750 + $0x88] sm:$0xff]
    %v7769 = vld [vmem:[%s7750 + $0x90] sm:$0xff]
    %v7770 = vld [vmem:[%s7750 + $0x98] sm:$0xff]
    %v7771 = vld [vmem:[%s7750 + $0xa0] sm:$0xff]
    %v7772 = vld [vmem:[%s7750 + $0xa8] sm:$0xff]
    %v7773 = vld [vmem:[%s7750 + $0xb0] sm:$0xff]
    %v7774 = vld [vmem:[%s7750 + $0xb8] sm:$0xff]
    %v7775 = vld [vmem:[%s7750 + $0xc0] sm:$0xff]
    %v7776 = vld [vmem:[%s7750 + $0xc8] sm:$0xff]
    %v7777 = vld [vmem:[%s7750 + $0xd0] sm:$0xff]
    %v7778 = vld [vmem:[%s7750 + $0xd8] sm:$0xff]
    %v7779 = vld [vmem:[%s7750 + $0xe0] sm:$0xff]
    %v7780 = vld [vmem:[%s7750 + $0xe8] sm:$0xff]
    %v7781 = vld [vmem:[%s7750 + $0xf0] sm:$0xff]
    %v7782 = vld [vmem:[%s7750 + $0xf8] sm:$0xff]
    %v7784 = vunpack.c.l.b16 %v7749
    %v7785 = vunpack.c.h.b16 %v7749
    %v7786 = vpack.c.b16 %v7318, %v7784
    %v7787 = vpack.c.b16 %v7319, %v7785
    %v7788 = vrot.slane %v7786, 1
    %v7789 = vrot.slane %v7344, 1
    %v7790 = vsel %vm1449, %v7788, %v7789
    %v7791 = vrot.slane %v7787, 1
    %v7792 = vrot.slane %v7345, 1
    %v7793 = vsel %vm1449, %v7791, %v7792
    %v7794 = vrot.slane %v7346, 1
    %v7795 = vsel %vm1449, %v7789, %v7794
    %v7796 = vrot.slane %v7347, 1
    %v7797 = vsel %vm1449, %v7792, %v7796
    %v7798 = vrot.slane %v7348, 1
    %v7799 = vsel %vm1449, %v7794, %v7798
    %v7800 = vrot.slane %v7349, 1
    %v7801 = vsel %vm1449, %v7796, %v7800
    %v7802 = vrot.slane %v7350, 1
    %v7803 = vsel %vm1449, %v7798, %v7802
    %v7804 = vrot.slane %v7351, 1
    %v7805 = vsel %vm1449, %v7800, %v7804
    %v7806 = vrot.slane %v7352, 1
    %v7807 = vsel %vm1449, %v7802, %v7806
    %v7808 = vrot.slane %v7353, 1
    %v7809 = vsel %vm1449, %v7804, %v7808
    %v7810 = vrot.slane %v7354, 1
    %v7811 = vsel %vm1449, %v7806, %v7810
    %v7812 = vrot.slane %v7355, 1
    %v7813 = vsel %vm1449, %v7808, %v7812
    %v7858 = vunpack.c.l.b16 %v7751
    %v7859 = vunpack.c.h.b16 %v7751
    %v7860 = vunpack.c.l.b16 %v7752
    %v7861 = vunpack.c.h.b16 %v7752
    %v7862 = vunpack.c.l.b16 %v7753
    %v7863 = vunpack.c.h.b16 %v7753
    %v7864 = vunpack.c.l.b16 %v7754
    %v7865 = vunpack.c.h.b16 %v7754
    %v7866 = vunpack.c.l.b16 %v7755
    %v7867 = vunpack.c.h.b16 %v7755
    %v7868 = vunpack.c.l.b16 %v7756
    %v7869 = vunpack.c.h.b16 %v7756
    %v7870 = vunpack.c.l.b16 %v7757
    %v7871 = vunpack.c.h.b16 %v7757
    %v7872 = vunpack.c.l.b16 %v7758
    %v7873 = vunpack.c.h.b16 %v7758
    %v7874 = vunpack.c.l.b16 %v7759
    %v7875 = vunpack.c.h.b16 %v7759
    %v7876 = vunpack.c.l.b16 %v7760
    %v7877 = vunpack.c.h.b16 %v7760
    %v7878 = vunpack.c.l.b16 %v7761
    %v7879 = vunpack.c.h.b16 %v7761
    %v7880 = vunpack.c.l.b16 %v7762
    %v7881 = vunpack.c.h.b16 %v7762
    %v7882 = vunpack.c.l.b16 %v7763
    %v7883 = vunpack.c.h.b16 %v7763
    %v7884 = vunpack.c.l.b16 %v7764
    %v7885 = vunpack.c.h.b16 %v7764
    %v7886 = vunpack.c.l.b16 %v7765
    %v7887 = vunpack.c.h.b16 %v7765
    %v7888 = vunpack.c.l.b16 %v7766
    %v7889 = vunpack.c.h.b16 %v7766
    %v7890 = vunpack.c.l.b16 %v7767
    %v7891 = vunpack.c.h.b16 %v7767
    %v7892 = vunpack.c.l.b16 %v7768
    %v7893 = vunpack.c.h.b16 %v7768
    %v7894 = vunpack.c.l.b16 %v7769
    %v7895 = vunpack.c.h.b16 %v7769
    %v7896 = vunpack.c.l.b16 %v7770
    %v7897 = vunpack.c.h.b16 %v7770
    %v7898 = vunpack.c.l.b16 %v7771
    %v7899 = vunpack.c.h.b16 %v7771
    %v7900 = vunpack.c.l.b16 %v7772
    %v7901 = vunpack.c.h.b16 %v7772
    %v7902 = vunpack.c.l.b16 %v7773
    %v7903 = vunpack.c.h.b16 %v7773
    %v7904 = vunpack.c.l.b16 %v7774
    %v7905 = vunpack.c.h.b16 %v7774
    %v7906 = vunpack.c.l.b16 %v7775
    %v7907 = vunpack.c.h.b16 %v7775
    %v7908 = vunpack.c.l.b16 %v7776
    %v7909 = vunpack.c.h.b16 %v7776
    %v7910 = vunpack.c.l.b16 %v7777
    %v7911 = vunpack.c.h.b16 %v7777
    %v7912 = vunpack.c.l.b16 %v7778
    %v7913 = vunpack.c.h.b16 %v7778
    %v7914 = vunpack.c.l.b16 %v7779
    %v7915 = vunpack.c.h.b16 %v7779
    %v7916 = vunpack.c.l.b16 %v7780
    %v7917 = vunpack.c.h.b16 %v7780
    %v7918 = vunpack.c.l.b16 %v7781
    %v7919 = vunpack.c.h.b16 %v7781
    %v7920 = vunpack.c.l.b16 %v7782
    %v7921 = vunpack.c.h.b16 %v7782
    %v7922 = vpack.c.b16 %v7860, %v7858
    %v7923 = vpack.c.b16 %v7861, %v7859
    %v7924 = vpack.c.b16 %v7864, %v7862
    %v7925 = vpack.c.b16 %v7865, %v7863
    %v7926 = vpack.c.b16 %v7868, %v7866
    %v7927 = vpack.c.b16 %v7869, %v7867
    %v7928 = vpack.c.b16 %v7872, %v7870
    %v7929 = vpack.c.b16 %v7873, %v7871
    %v7930 = vpack.c.b16 %v7876, %v7874
    %v7931 = vpack.c.b16 %v7877, %v7875
    %v7932 = vpack.c.b16 %v7880, %v7878
    %v7933 = vpack.c.b16 %v7881, %v7879
    %v7934 = vpack.c.b16 %v7884, %v7882
    %v7935 = vpack.c.b16 %v7885, %v7883
    %v7936 = vpack.c.b16 %v7888, %v7886
    %v7937 = vpack.c.b16 %v7889, %v7887
    %v7938 = vpack.c.b16 %v7892, %v7890
    %v7939 = vpack.c.b16 %v7893, %v7891
    %v7940 = vpack.c.b16 %v7896, %v7894
    %v7941 = vpack.c.b16 %v7897, %v7895
    %v7942 = vpack.c.b16 %v7900, %v7898
    %v7943 = vpack.c.b16 %v7901, %v7899
    %v7944 = vpack.c.b16 %v7904, %v7902
    %v7945 = vpack.c.b16 %v7905, %v7903
    %v7946 = vpack.c.b16 %v7908, %v7906
    %v7947 = vpack.c.b16 %v7909, %v7907
    %v7948 = vpack.c.b16 %v7912, %v7910
    %v7949 = vpack.c.b16 %v7913, %v7911
    %v7950 = vpack.c.b16 %v7916, %v7914
    %v7951 = vpack.c.b16 %v7917, %v7915
    %v7952 = vpack.c.b16 %v7920, %v7918
    %v7953 = vpack.c.b16 %v7921, %v7919
    %7986 = vmatprep.subr.bf16.mxu0 %v7937
    %7987 = vmatpush1.bf16.msra.mxu0 %v7936
    %7988 = vmatprep.subr.bf16.mxu0 %v7935
    %7989 = vmatpush1.bf16.msra.mxu0 %v7934
    %7990 = vmatprep.subr.bf16.mxu0 %v7933
    %7991 = vmatpush1.bf16.msra.mxu0 %v7932
    %7992 = vmatprep.subr.bf16.mxu0 %v7931
    %7993 = vmatpush1.bf16.msra.mxu0 %v7930
    %7994 = vmatprep.subr.bf16.mxu0 %v7929
    %7995 = vmatpush1.bf16.msra.mxu0 %v7928
    %7996 = vmatprep.subr.bf16.mxu0 %v7927
    %7997 = vmatpush1.bf16.msra.mxu0 %v7926
    %7998 = vmatprep.subr.bf16.mxu0 %v7925
    %7999 = vmatpush1.bf16.msra.mxu0 %v7924
    %8000 = vmatprep.subr.bf16.mxu0 %v7923
    %8001 = vmatpush1.bf16.msra.mxu0 %v7922
    %8002 = vmatprep.subr.bf16.mxu0 %v7953
    %8003 = vmatpush2.bf16.msra.mxu0 %v7952
    %8004 = vmatprep.subr.bf16.mxu0 %v7951
    %8005 = vmatpush2.bf16.msra.mxu0 %v7950
    %8006 = vmatprep.subr.bf16.mxu0 %v7949
    %8007 = vmatpush2.bf16.msra.mxu0 %v7948
    %8008 = vmatprep.subr.bf16.mxu0 %v7947
    %8009 = vmatpush2.bf16.msra.mxu0 %v7946
    %8010 = vmatprep.subr.bf16.mxu0 %v7945
    %8011 = vmatpush2.bf16.msra.mxu0 %v7944
    %8012 = vmatprep.subr.bf16.mxu0 %v7943
    %8013 = vmatpush2.bf16.msra.mxu0 %v7942
    %8014 = vmatprep.subr.bf16.mxu0 %v7941
    %8015 = vmatpush2.bf16.msra.mxu0 %v7940
    %8016 = vmatprep.subr.bf16.mxu0 %v7939
    %8017 = vmatpush2.bf16.msra.mxu0 %v7938
    %8018 = vmatprep.mubr.bf16.mxu0 %v7793
    %8019 = vmatmul.mubr.bf16.gmra.mxu0 %v7790
    %v8020 = vpop.f32.mrf.mxu0
    %v8021 = vadd.f32 0.0, %v8020
    %v8022 = vpop.f32.mrf.mxu0
    %v8023 = vadd.f32 0.0, %v8022
    %v8024 = vpop.f32.mrf.mxu0
    %v8025 = vadd.f32 0.0, %v8024
    %v8026 = vpop.f32.mrf.mxu0
    %v8027 = vadd.f32 0.0, %v8026
    %8028 = vmatprep.mubr.bf16.mxu0 %v7797
    %8029 = vmatmul.mubr.bf16.gmra.mxu0 %v7795
    %v8030 = vpop.f32.mrf.mxu0
    %v8031 = vadd.f32 0.0, %v8030
    %v8032 = vpop.f32.mrf.mxu0
    %v8033 = vadd.f32 0.0, %v8032
    %v8034 = vpop.f32.mrf.mxu0
    %v8035 = vadd.f32 0.0, %v8034
    %v8036 = vpop.f32.mrf.mxu0
    %v8037 = vadd.f32 0.0, %v8036
    %8038 = vmatprep.mubr.bf16.mxu0 %v7801
    %8039 = vmatmul.mubr.bf16.gmra.mxu0 %v7799
    %v8040 = vpop.f32.mrf.mxu0
    %v8041 = vadd.f32 0.0, %v8040
    %v8042 = vpop.f32.mrf.mxu0
    %v8043 = vadd.f32 0.0, %v8042
    %v8044 = vpop.f32.mrf.mxu0
    %v8045 = vadd.f32 0.0, %v8044
    %v8046 = vpop.f32.mrf.mxu0
    %v8047 = vadd.f32 0.0, %v8046
    %8048 = vmatprep.mubr.bf16.mxu0 %v7805
    %8049 = vmatmul.mubr.bf16.gmra.mxu0 %v7803
    %v8050 = vpop.f32.mrf.mxu0
    %v8051 = vadd.f32 0.0, %v8050
    %v8052 = vpop.f32.mrf.mxu0
    %v8053 = vadd.f32 0.0, %v8052
    %v8054 = vpop.f32.mrf.mxu0
    %v8055 = vadd.f32 0.0, %v8054
    %v8056 = vpop.f32.mrf.mxu0
    %v8057 = vadd.f32 0.0, %v8056
    %8058 = vmatprep.mubr.bf16.mxu0 %v7809
    %8059 = vmatmul.mubr.bf16.gmra.mxu0 %v7807
    %v8060 = vpop.f32.mrf.mxu0
    %v8061 = vadd.f32 0.0, %v8060
    %v8062 = vpop.f32.mrf.mxu0
    %v8063 = vadd.f32 0.0, %v8062
    %v8064 = vpop.f32.mrf.mxu0
    %v8065 = vadd.f32 0.0, %v8064
    %v8066 = vpop.f32.mrf.mxu0
    %v8067 = vadd.f32 0.0, %v8066
    %8068 = vmatprep.mubr.bf16.mxu0 %v7813
    %8069 = vmatmul.mubr.bf16.gmra.mxu0 %v7811
    %v8070 = vpop.f32.mrf.mxu0
    %v8071 = vadd.f32 0.0, %v8070
    %v8072 = vpop.f32.mrf.mxu0
    %v8073 = vadd.f32 0.0, %v8072
    %v8074 = vpop.f32.mrf.mxu0
    %v8075 = vadd.f32 0.0, %v8074
    %v8076 = vpop.f32.mrf.mxu0
    %v8077 = vadd.f32 0.0, %v8076
    %8078 = vdwg.mxu0
    %v8079 = vadd.f32 %v7725, %v8021
    %v8080 = vadd.f32 %v7726, %v8023
    %v8081 = vadd.f32 %v7727, %v8025
    %v8082 = vadd.f32 %v7728, %v8027
    %v8083 = vadd.f32 %v7729, %v8031
    %v8084 = vadd.f32 %v7730, %v8033
    %v8085 = vadd.f32 %v7731, %v8035
    %v8086 = vadd.f32 %v7732, %v8037
    %v8087 = vadd.f32 %v7733, %v8041
    %v8088 = vadd.f32 %v7734, %v8043
    %v8089 = vadd.f32 %v7735, %v8045
    %v8090 = vadd.f32 %v7736, %v8047
    %v8091 = vadd.f32 %v7737, %v8051
    %v8092 = vadd.f32 %v7738, %v8053
    %v8093 = vadd.f32 %v7739, %v8055
    %v8094 = vadd.f32 %v7740, %v8057
    %v8095 = vadd.f32 %v7741, %v8061
    %v8096 = vadd.f32 %v7742, %v8063
    %v8097 = vadd.f32 %v7743, %v8065
    %v8098 = vadd.f32 %v7744, %v8067
    %v8099 = vadd.f32 %v7745, %v8071
    %v8100 = vadd.f32 %v7746, %v8073
    %v8101 = vadd.f32 %v7747, %v8075
    %v8102 = vadd.f32 %v7748, %v8077
    %s8103 = scalar_lea.vmem %s5, 3
    %v8104 = vld [vmem:[%s8103] ss:$4 sm:$0x3]
    %v8106 = vlaneseq
    %v8107 = vshrl.u32 %v8106, 7
    %v8108 = vsub.s32 0, %v8107
    %v8109 = vrot.slane %v8104, %v8108
    %v8110 = vlaneseq
    %v8111 = vshrl.u32 %v8110, 7
    %v8112 = vsub.s32 1, %v8111
    %v8113 = vrot.slane %v8104, %v8112
    %v8116 = vadd.f32 %v8079, %v8109
    %v8117 = vadd.f32 %v8080, %v8113
    %v8118 = vadd.f32 %v8081, %v8109
    %v8119 = vadd.f32 %v8082, %v8113
    %v8120 = vadd.f32 %v8083, %v8109
    %v8121 = vadd.f32 %v8084, %v8113
    %v8122 = vadd.f32 %v8085, %v8109
    %v8123 = vadd.f32 %v8086, %v8113
    %v8124 = vadd.f32 %v8087, %v8109
    %v8125 = vadd.f32 %v8088, %v8113
    %v8126 = vadd.f32 %v8089, %v8109
    %v8127 = vadd.f32 %v8090, %v8113
    %v8128 = vadd.f32 %v8091, %v8109
    %v8129 = vadd.f32 %v8092, %v8113
    %v8130 = vadd.f32 %v8093, %v8109
    %v8131 = vadd.f32 %v8094, %v8113
    %v8132 = vadd.f32 %v8095, %v8109
    %v8133 = vadd.f32 %v8096, %v8113
    %v8134 = vadd.f32 %v8097, %v8109
    %v8135 = vadd.f32 %v8098, %v8113
    %v8136 = vadd.f32 %v8099, %v8109
    %v8137 = vadd.f32 %v8100, %v8113
    %v8138 = vadd.f32 %v8101, %v8109
    %v8139 = vadd.f32 %v8102, %v8113
    %v8140 = vmax.f32 %v8116, 0.0
    %v8141 = vmax.f32 %v8117, 0.0
    %v8142 = vmax.f32 %v8118, 0.0
    %v8143 = vmax.f32 %v8119, 0.0
    %v8144 = vmax.f32 %v8120, 0.0
    %v8145 = vmax.f32 %v8121, 0.0
    %v8146 = vmax.f32 %v8122, 0.0
    %v8147 = vmax.f32 %v8123, 0.0
    %v8148 = vmax.f32 %v8124, 0.0
    %v8149 = vmax.f32 %v8125, 0.0
    %v8150 = vmax.f32 %v8126, 0.0
    %v8151 = vmax.f32 %v8127, 0.0
    %v8152 = vmax.f32 %v8128, 0.0
    %v8153 = vmax.f32 %v8129, 0.0
    %v8154 = vmax.f32 %v8130, 0.0
    %v8155 = vmax.f32 %v8131, 0.0
    %v8156 = vmax.f32 %v8132, 0.0
    %v8157 = vmax.f32 %v8133, 0.0
    %v8158 = vmax.f32 %v8134, 0.0
    %v8159 = vmax.f32 %v8135, 0.0
    %v8160 = vmax.f32 %v8136, 0.0
    %v8161 = vmax.f32 %v8137, 0.0
    %v8162 = vmax.f32 %v8138, 0.0
    %v8163 = vmax.f32 %v8139, 0.0
    %v8164 = vpack.c.bf16 %v8142, %v8140
    %v8165 = vpack.c.bf16 %v8143, %v8141
    %v8166 = vpack.c.bf16 %v8146, %v8144
    %v8167 = vpack.c.bf16 %v8147, %v8145
    %v8168 = vpack.c.bf16 %v8150, %v8148
    %v8169 = vpack.c.bf16 %v8151, %v8149
    %v8170 = vpack.c.bf16 %v8154, %v8152
    %v8171 = vpack.c.bf16 %v8155, %v8153
    %v8172 = vpack.c.bf16 %v8158, %v8156
    %v8173 = vpack.c.bf16 %v8159, %v8157
    %v8174 = vpack.c.bf16 %v8162, %v8160
    %v8175 = vpack.c.bf16 %v8163, %v8161
    %v8176 = vld [vmem:[#allocation12] sm:$0xf]
    %v8177 = vld [vmem:[#allocation12 + $0x4] sm:$0xf]
    %v8178 = vld [vmem:[#allocation12 + $0x8] sm:$0xf]
    %v8179 = vld [vmem:[#allocation12 + $0xc] sm:$0xf]
    %v8180 = vld [vmem:[#allocation12 + $0x10] sm:$0xf]
    %v8181 = vld [vmem:[#allocation12 + $0x14] sm:$0xf]
    %v8182 = vld [vmem:[#allocation12 + $0x18] sm:$0xf]
    %v8183 = vld [vmem:[#allocation12 + $0x1c] sm:$0xf]
    %v8184 = vld [vmem:[#allocation12 + $0x20] sm:$0xf]
    %v8185 = vld [vmem:[#allocation12 + $0x24] sm:$0xf]
    %v8186 = vld [vmem:[#allocation12 + $0x28] sm:$0xf]
    %v8187 = vld [vmem:[#allocation12 + $0x2c] sm:$0xf]
    %v8188 = vld [vmem:[#allocation12 + $0x30] sm:$0xf]
    %v8189 = vld [vmem:[#allocation12 + $0x34] sm:$0xf]
    %v8190 = vld [vmem:[#allocation12 + $0x38] sm:$0xf]
    %v8191 = vld [vmem:[#allocation12 + $0x3c] sm:$0xf]
    %v8192 = vld [vmem:[#allocation12 + $0x40] sm:$0xf]
    %v8193 = vld [vmem:[#allocation12 + $0x44] sm:$0xf]
    %v8194 = vld [vmem:[#allocation12 + $0x48] sm:$0xf]
    %v8195 = vld [vmem:[#allocation12 + $0x4c] sm:$0xf]
    %v8196 = vld [vmem:[#allocation12 + $0x50] sm:$0xf]
    %v8197 = vld [vmem:[#allocation12 + $0x54] sm:$0xf]
    %v8198 = vld [vmem:[#allocation12 + $0x58] sm:$0xf]
    %v8199 = vld [vmem:[#allocation12 + $0x5c] sm:$0xf]
    %v8200 = vld [vmem:[#allocation12 + $0x60] sm:$0xf]
    %v8201 = vld [vmem:[#allocation12 + $0x64] sm:$0xf]
    %v8202 = vld [vmem:[#allocation12 + $0x68] sm:$0xf]
    %v8203 = vld [vmem:[#allocation12 + $0x6c] sm:$0xf]
    %v8204 = vld [vmem:[#allocation12 + $0x70] sm:$0xf]
    %v8205 = vld [vmem:[#allocation12 + $0x74] sm:$0xf]
    %v8206 = vld [vmem:[#allocation12 + $0x78] sm:$0xf]
    %v8207 = vld [vmem:[#allocation12 + $0x7c] sm:$0xf]
    %v8240 = vunpack.c.l.b16 %v8176
    %v8241 = vunpack.c.l.b16 %v8177
    %v8242 = vunpack.c.l.b16 %v8178
    %v8243 = vunpack.c.l.b16 %v8179
    %v8244 = vunpack.c.l.b16 %v8180
    %v8245 = vunpack.c.l.b16 %v8181
    %v8246 = vunpack.c.l.b16 %v8182
    %v8247 = vunpack.c.l.b16 %v8183
    %v8248 = vunpack.c.l.b16 %v8184
    %v8249 = vunpack.c.l.b16 %v8185
    %v8250 = vunpack.c.l.b16 %v8186
    %v8251 = vunpack.c.l.b16 %v8187
    %v8252 = vunpack.c.l.b16 %v8188
    %v8253 = vunpack.c.l.b16 %v8189
    %v8254 = vunpack.c.l.b16 %v8190
    %v8255 = vunpack.c.l.b16 %v8191
    %v8256 = vunpack.c.l.b16 %v8192
    %v8257 = vunpack.c.l.b16 %v8193
    %v8258 = vunpack.c.l.b16 %v8194
    %v8259 = vunpack.c.l.b16 %v8195
    %v8260 = vunpack.c.l.b16 %v8196
    %v8261 = vunpack.c.l.b16 %v8197
    %v8262 = vunpack.c.l.b16 %v8198
    %v8263 = vunpack.c.l.b16 %v8199
    %v8264 = vunpack.c.l.b16 %v8200
    %v8265 = vunpack.c.l.b16 %v8201
    %v8266 = vunpack.c.l.b16 %v8202
    %v8267 = vunpack.c.l.b16 %v8203
    %v8268 = vunpack.c.l.b16 %v8204
    %v8269 = vunpack.c.l.b16 %v8205
    %v8270 = vunpack.c.l.b16 %v8206
    %v8271 = vunpack.c.l.b16 %v8207
    %v8272 = vpack.c.b16 %v8241, %v8240
    %v8273 = vpack.c.b16 %v8243, %v8242
    %v8274 = vpack.c.b16 %v8245, %v8244
    %v8275 = vpack.c.b16 %v8247, %v8246
    %v8276 = vpack.c.b16 %v8249, %v8248
    %v8277 = vpack.c.b16 %v8251, %v8250
    %v8278 = vpack.c.b16 %v8253, %v8252
    %v8279 = vpack.c.b16 %v8255, %v8254
    %v8280 = vpack.c.b16 %v8257, %v8256
    %v8281 = vpack.c.b16 %v8259, %v8258
    %v8282 = vpack.c.b16 %v8261, %v8260
    %v8283 = vpack.c.b16 %v8263, %v8262
    %v8284 = vpack.c.b16 %v8265, %v8264
    %v8285 = vpack.c.b16 %v8267, %v8266
    %v8286 = vpack.c.b16 %v8269, %v8268
    %v8287 = vpack.c.b16 %v8271, %v8270
    %8304 = vmatprep.subr.bf16.mxu0 0
    %8305 = vmatpush1.bf16.msra.mxu0 %v8279
    %8306 = vmatprep.subr.bf16.mxu0 0
    %8307 = vmatpush1.bf16.msra.mxu0 %v8278
    %8308 = vmatprep.subr.bf16.mxu0 0
    %8309 = vmatpush1.bf16.msra.mxu0 %v8277
    %8310 = vmatprep.subr.bf16.mxu0 0
    %8311 = vmatpush1.bf16.msra.mxu0 %v8276
    %8312 = vmatprep.subr.bf16.mxu0 0
    %8313 = vmatpush1.bf16.msra.mxu0 %v8275
    %8314 = vmatprep.subr.bf16.mxu0 0
    %8315 = vmatpush1.bf16.msra.mxu0 %v8274
    %8316 = vmatprep.subr.bf16.mxu0 0
    %8317 = vmatpush1.bf16.msra.mxu0 %v8273
    %8318 = vmatprep.subr.bf16.mxu0 0
    %8319 = vmatpush1.bf16.msra.mxu0 %v8272
    %8320 = vmatprep.subr.bf16.mxu0 0
    %8321 = vmatpush2.bf16.msra.mxu0 %v8287
    %8322 = vmatprep.subr.bf16.mxu0 0
    %8323 = vmatpush2.bf16.msra.mxu0 %v8286
    %8324 = vmatprep.subr.bf16.mxu0 0
    %8325 = vmatpush2.bf16.msra.mxu0 %v8285
    %8326 = vmatprep.subr.bf16.mxu0 0
    %8327 = vmatpush2.bf16.msra.mxu0 %v8284
    %8328 = vmatprep.subr.bf16.mxu0 0
    %8329 = vmatpush2.bf16.msra.mxu0 %v8283
    %8330 = vmatprep.subr.bf16.mxu0 0
    %8331 = vmatpush2.bf16.msra.mxu0 %v8282
    %8332 = vmatprep.subr.bf16.mxu0 0
    %8333 = vmatpush2.bf16.msra.mxu0 %v8281
    %8334 = vmatprep.subr.bf16.mxu0 0
    %8335 = vmatpush2.bf16.msra.mxu0 %v8280
    %8336 = vmatprep.mubr.bf16.mxu0 %v8165
    %8337 = vmatmul.mubr.bf16.gmra.mxu0 %v8164
    %v8338 = vpop.f32.mrf.mxu0
    %v8339 = vadd.f32 %v319, %v8338
    %v8340 = vpop.f32.mrf.mxu0
    %v8341 = vpop.f32.mrf.mxu0
    %v8342 = vadd.f32 %v322, %v8341
    %v8343 = vpop.f32.mrf.mxu0
    %8344 = vmatprep.mubr.bf16.mxu0 %v8167
    %8345 = vmatmul.mubr.bf16.gmra.mxu0 %v8166
    %v8346 = vpop.f32.mrf.mxu0
    %v8347 = vadd.f32 %v327, %v8346
    %v8348 = vpop.f32.mrf.mxu0
    %v8349 = vpop.f32.mrf.mxu0
    %v8350 = vadd.f32 %v330, %v8349
    %v8351 = vpop.f32.mrf.mxu0
    %8352 = vmatprep.mubr.bf16.mxu0 %v8169
    %8353 = vmatmul.mubr.bf16.gmra.mxu0 %v8168
    %v8354 = vpop.f32.mrf.mxu0
    %v8355 = vadd.f32 %v335, %v8354
    %v8356 = vpop.f32.mrf.mxu0
    %v8357 = vpop.f32.mrf.mxu0
    %v8358 = vadd.f32 %v338, %v8357
    %v8359 = vpop.f32.mrf.mxu0
    %8360 = vmatprep.mubr.bf16.mxu0 %v8171
    %8361 = vmatmul.mubr.bf16.gmra.mxu0 %v8170
    %v8362 = vpop.f32.mrf.mxu0
    %v8363 = vadd.f32 %v343, %v8362
    %v8364 = vpop.f32.mrf.mxu0
    %v8365 = vpop.f32.mrf.mxu0
    %v8366 = vadd.f32 %v346, %v8365
    %v8367 = vpop.f32.mrf.mxu0
    %8368 = vmatprep.mubr.bf16.mxu0 %v8173
    %8369 = vmatmul.mubr.bf16.gmra.mxu0 %v8172
    %v8370 = vpop.f32.mrf.mxu0
    %v8371 = vadd.f32 %v351, %v8370
    %v8372 = vpop.f32.mrf.mxu0
    %v8373 = vpop.f32.mrf.mxu0
    %v8374 = vadd.f32 %v354, %v8373
    %v8375 = vpop.f32.mrf.mxu0
    %8376 = vmatprep.mubr.bf16.mxu0 %v8175
    %8377 = vmatmul.mubr.bf16.gmra.mxu0 %v8174
    %v8378 = vpop.f32.mrf.mxu0
    %v8379 = vadd.f32 %v359, %v8378
    %v8380 = vpop.f32.mrf.mxu0
    %v8381 = vpop.f32.mrf.mxu0
    %v8382 = vadd.f32 %v362, %v8381
    %v8383 = vpop.f32.mrf.mxu0
    %8384 = vdwg.mxu0
    %v8385 = vld [vmem:[%s9] sm:$0x1]
    %v8386 = vlaneseq
    %v8387 = vshrl.u32 %v8386, 7
    %v8388 = vsub.s32 0, %v8387
    %v8389 = vrot.slane %v8385, %v8388
    %v8390 = vadd.f32 %v8339, %v8389
    %v8391 = vadd.f32 %v8342, %v8389
    %v8392 = vadd.f32 %v8347, %v8389
    %v8393 = vadd.f32 %v8350, %v8389
    %v8394 = vadd.f32 %v8355, %v8389
    %v8395 = vadd.f32 %v8358, %v8389
    %v8396 = vadd.f32 %v8363, %v8389
    %v8397 = vadd.f32 %v8366, %v8389
    %v8398 = vadd.f32 %v8371, %v8389
    %v8399 = vadd.f32 %v8374, %v8389
    %v8400 = vadd.f32 %v8379, %v8389
    %v8401 = vadd.f32 %v8382, %v8389
    %v8402 = vmax.f32 %v8390, 0.0
    %v8403 = vmax.f32 %v8391, 0.0
    %v8404 = vmax.f32 %v8392, 0.0
    %v8405 = vmax.f32 %v8393, 0.0
    %v8406 = vmax.f32 %v8394, 0.0
    %v8407 = vmax.f32 %v8395, 0.0
    %v8408 = vmax.f32 %v8396, 0.0
    %v8409 = vmax.f32 %v8397, 0.0
    %v8410 = vmax.f32 %v8398, 0.0
    %v8411 = vmax.f32 %v8399, 0.0
    %v8412 = vmax.f32 %v8400, 0.0
    %v8413 = vmax.f32 %v8401, 0.0
    %v8414 = vpack.c.bf16 %v8403, %v8402
    %v8415 = vpack.c.bf16 %v8405, %v8404
    %v8416 = vpack.c.bf16 %v8407, %v8406
    %v8417 = vpack.c.bf16 %v8409, %v8408
    %v8418 = vpack.c.bf16 %v8411, %v8410
    %v8419 = vpack.c.bf16 %v8413, %v8412
    %v8420 = vld [vmem:[#allocation15] sm:$0xf]
    %v8421 = vld [vmem:[#allocation15 + $0x4] sm:$0xf]
    %v8422 = vld [vmem:[#allocation15 + $0x8] sm:$0xf]
    %v8423 = vld [vmem:[#allocation15 + $0xc] sm:$0xf]
    %v8424 = vld [vmem:[#allocation15 + $0x10] sm:$0xf]
    %v8425 = vld [vmem:[#allocation15 + $0x14] sm:$0xf]
    %v8426 = vld [vmem:[#allocation15 + $0x18] sm:$0xf]
    %v8427 = vld [vmem:[#allocation15 + $0x1c] sm:$0xf]
    %v8428 = vld [vmem:[#allocation15 + $0x20] sm:$0xf]
    %v8429 = vld [vmem:[#allocation15 + $0x24] sm:$0xf]
    %v8430 = vld [vmem:[#allocation15 + $0x28] sm:$0xf]
    %v8431 = vld [vmem:[#allocation15 + $0x2c] sm:$0xf]
    %v8432 = vld [vmem:[#allocation15 + $0x30] sm:$0xf]
    %v8433 = vld [vmem:[#allocation15 + $0x34] sm:$0xf]
    %v8434 = vld [vmem:[#allocation15 + $0x38] sm:$0xf]
    %v8435 = vld [vmem:[#allocation15 + $0x3c] sm:$0xf]
    %v8436 = vld [vmem:[%s9 + $0x1] sm:$0x1]
    %v8437 = vlaneseq
    %v8438 = vshrl.u32 %v8437, 7
    %v8439 = vsub.s32 0, %v8438
    %v8440 = vrot.slane %v8436, %v8439
    %v8457 = vunpack.c.l.b16 %v8420
    %v8458 = vunpack.c.l.b16 %v8421
    %v8459 = vunpack.c.l.b16 %v8422
    %v8460 = vunpack.c.l.b16 %v8423
    %v8461 = vunpack.c.l.b16 %v8424
    %v8462 = vunpack.c.l.b16 %v8425
    %v8463 = vunpack.c.l.b16 %v8426
    %v8464 = vunpack.c.l.b16 %v8427
    %v8465 = vunpack.c.l.b16 %v8428
    %v8466 = vunpack.c.l.b16 %v8429
    %v8467 = vunpack.c.l.b16 %v8430
    %v8468 = vunpack.c.l.b16 %v8431
    %v8469 = vunpack.c.l.b16 %v8432
    %v8470 = vunpack.c.l.b16 %v8433
    %v8471 = vunpack.c.l.b16 %v8434
    %v8472 = vunpack.c.l.b16 %v8435
    %v8473 = vpack.c.b16 %v8458, %v8457
    %v8474 = vpack.c.b16 %v8460, %v8459
    %v8475 = vpack.c.b16 %v8462, %v8461
    %v8476 = vpack.c.b16 %v8464, %v8463
    %v8477 = vpack.c.b16 %v8466, %v8465
    %v8478 = vpack.c.b16 %v8468, %v8467
    %v8479 = vpack.c.b16 %v8470, %v8469
    %v8480 = vpack.c.b16 %v8472, %v8471
    %8489 = vmatprep.subr.bf16.mxu0 0
    %8490 = vmatpush1.bf16.msra.mxu0 %v8480
    %8491 = vmatprep.subr.bf16.mxu0 0
    %8492 = vmatpush1.bf16.msra.mxu0 %v8479
    %8493 = vmatprep.subr.bf16.mxu0 0
    %8494 = vmatpush1.bf16.msra.mxu0 %v8478
    %8495 = vmatprep.subr.bf16.mxu0 0
    %8496 = vmatpush1.bf16.msra.mxu0 %v8477
    %8497 = vmatprep.subr.bf16.mxu0 0
    %8498 = vmatpush1.bf16.msra.mxu0 %v8476
    %8499 = vmatprep.subr.bf16.mxu0 0
    %8500 = vmatpush1.bf16.msra.mxu0 %v8475
    %8501 = vmatprep.subr.bf16.mxu0 0
    %8502 = vmatpush1.bf16.msra.mxu0 %v8474
    %8503 = vmatprep.subr.bf16.mxu0 0
    %8504 = vmatpush1.bf16.msra.mxu0 %v8473
    %8505 = vmatprep.subr.bf16.mxu0 0
    %8506 = vmatpush2.bf16.msra.mxu0 0
    %8507 = vmatprep.subr.bf16.mxu0 0
    %8508 = vmatpush2.bf16.msra.mxu0 0
    %8509 = vmatprep.subr.bf16.mxu0 0
    %8510 = vmatpush2.bf16.msra.mxu0 0
    %8511 = vmatprep.subr.bf16.mxu0 0
    %8512 = vmatpush2.bf16.msra.mxu0 0
    %8513 = vmatprep.subr.bf16.mxu0 0
    %8514 = vmatpush2.bf16.msra.mxu0 0
    %8515 = vmatprep.subr.bf16.mxu0 0
    %8516 = vmatpush2.bf16.msra.mxu0 0
    %8517 = vmatprep.subr.bf16.mxu0 0
    %8518 = vmatpush2.bf16.msra.mxu0 0
    %8519 = vmatprep.subr.bf16.mxu0 0
    %8520 = vmatpush2.bf16.msra.mxu0 0
    %8521 = vmatprep.mubr.bf16.mxu0 0
    %8522 = vmatmul.mubr.bf16.gmra.mxu0 %v8414
    %v8523 = vpop.f32.mrf.mxu0
    %v8524 = vadd.f32 %v8440, %v8523
    %v8525 = vpop.f32.mrf.mxu0
    %v8526 = vpop.f32.mrf.mxu0
    %v8527 = vadd.f32 %v8440, %v8526
    %v8528 = vpop.f32.mrf.mxu0
    %8529 = vmatprep.mubr.bf16.mxu0 0
    %8530 = vmatmul.mubr.bf16.gmra.mxu0 %v8415
    %v8531 = vpop.f32.mrf.mxu0
    %v8532 = vadd.f32 %v8440, %v8531
    %v8533 = vpop.f32.mrf.mxu0
    %v8534 = vpop.f32.mrf.mxu0
    %v8535 = vadd.f32 %v8440, %v8534
    %v8536 = vpop.f32.mrf.mxu0
    %8537 = vmatprep.mubr.bf16.mxu0 0
    %8538 = vmatmul.mubr.bf16.gmra.mxu0 %v8416
    %v8539 = vpop.f32.mrf.mxu0
    %v8540 = vadd.f32 %v8440, %v8539
    %v8541 = vpop.f32.mrf.mxu0
    %v8542 = vpop.f32.mrf.mxu0
    %v8543 = vadd.f32 %v8440, %v8542
    %v8544 = vpop.f32.mrf.mxu0
    %8545 = vmatprep.mubr.bf16.mxu0 0
    %8546 = vmatmul.mubr.bf16.gmra.mxu0 %v8417
    %v8547 = vpop.f32.mrf.mxu0
    %v8548 = vadd.f32 %v8440, %v8547
    %v8549 = vpop.f32.mrf.mxu0
    %v8550 = vpop.f32.mrf.mxu0
    %v8551 = vadd.f32 %v8440, %v8550
    %v8552 = vpop.f32.mrf.mxu0
    %8553 = vmatprep.mubr.bf16.mxu0 0
    %8554 = vmatmul.mubr.bf16.gmra.mxu0 %v8418
    %v8555 = vpop.f32.mrf.mxu0
    %v8556 = vadd.f32 %v8440, %v8555
    %v8557 = vpop.f32.mrf.mxu0
    %v8558 = vpop.f32.mrf.mxu0
    %v8559 = vadd.f32 %v8440, %v8558
    %v8560 = vpop.f32.mrf.mxu0
    %8561 = vmatprep.mubr.bf16.mxu0 0
    %8562 = vmatmul.mubr.bf16.gmra.mxu0 %v8419
    %v8563 = vpop.f32.mrf.mxu0
    %v8564 = vadd.f32 %v8440, %v8563
    %v8565 = vpop.f32.mrf.mxu0
    %v8566 = vpop.f32.mrf.mxu0
    %v8567 = vadd.f32 %v8440, %v8566
    %v8568 = vpop.f32.mrf.mxu0
    %8569 = vdwg.mxu0
    %v8570 = vlaneseq
    %v8571 = vshrl.u32 %v8570, 7
    %v8572 = vadd.s32 %v8571, 8
    %v8573 = vadd.s32 %v8571, 16
    %vm8574 = vcmp.lt.s32.totalorder %v8571, 16
    %vm8575 = vcmp.lt.s32.totalorder %v8572, 16
    %vm8576 = vcmp.lt.s32.totalorder %v8573, 16
    %v8577 = vsel %vm8574, 1, 0
    %v8578 = vsel %vm8575, 1, 0
    %v8579 = vsel %vm8576, 1, 0
    %vm8580 = vcmp.eq.s32.totalorder %v8577, 1
    %vm8581 = vcmp.eq.s32.totalorder %v8578, 1
    %vm8582 = vcmp.eq.s32.totalorder %v8579, 1
    %v8583 = vsel %vm8580, %v8524, -1e+30
    %v8584 = vsel %vm8581, %v8527, -1e+30
    %v8585 = vsel %vm8582, %v8532, -1e+30
    %v8586 = vsel %vm8580, %v8535, -1e+30
    %v8587 = vsel %vm8581, %v8540, -1e+30
    %v8588 = vsel %vm8582, %v8543, -1e+30
    %v8589 = vsel %vm8580, %v8548, -1e+30
    %v8590 = vsel %vm8581, %v8551, -1e+30
    %v8591 = vsel %vm8582, %v8556, -1e+30
    %v8592 = vsel %vm8580, %v8559, -1e+30
    %v8593 = vsel %vm8581, %v8564, -1e+30
    %v8594 = vsel %vm8582, %v8567, -1e+30
    %v8595 = vmax.f32 %v8583, %v8584
    %v8596 = vmax.f32 %v8595, %v8585
    %v8597 = vrot.slane %v8596, 4
    %v8598 = vmax.f32 %v8596, %v8597
    %v8599 = vrot.slane %v8598, 2
    %v8600 = vmax.f32 %v8598, %v8599
    %v8601 = vrot.slane %v8600, 1
    %v8602 = vmax.f32 %v8600, %v8601
    %v8603 = vmax.f32 %v8586, %v8587
    %v8604 = vmax.f32 %v8603, %v8588
    %v8605 = vrot.slane %v8604, 4
    %v8606 = vmax.f32 %v8604, %v8605
    %v8607 = vrot.slane %v8606, 2
    %v8608 = vmax.f32 %v8606, %v8607
    %v8609 = vrot.slane %v8608, 1
    %v8610 = vmax.f32 %v8608, %v8609
    %v8611 = vmax.f32 %v8589, %v8590
    %v8612 = vmax.f32 %v8611, %v8591
    %v8613 = vrot.slane %v8612, 4
    %v8614 = vmax.f32 %v8612, %v8613
    %v8615 = vrot.slane %v8614, 2
    %v8616 = vmax.f32 %v8614, %v8615
    %v8617 = vrot.slane %v8616, 1
    %v8618 = vmax.f32 %v8616, %v8617
    %v8619 = vmax.f32 %v8592, %v8593
    %v8620 = vmax.f32 %v8619, %v8594
    %v8621 = vrot.slane %v8620, 4
    %v8622 = vmax.f32 %v8620, %v8621
    %v8623 = vrot.slane %v8622, 2
    %v8624 = vmax.f32 %v8622, %v8623
    %v8625 = vrot.slane %v8624, 1
    %v8626 = vmax.f32 %v8624, %v8625
    %v8627 = vsub.f32 %v8583, %v8602
    %v8628 = vsub.f32 %v8584, %v8602
    %v8629 = vsub.f32 %v8585, %v8602
    %v8630 = vsub.f32 %v8586, %v8610
    %v8631 = vsub.f32 %v8587, %v8610
    %v8632 = vsub.f32 %v8588, %v8610
    %v8633 = vsub.f32 %v8589, %v8618
    %v8634 = vsub.f32 %v8590, %v8618
    %v8635 = vsub.f32 %v8591, %v8618
    %v8636 = vsub.f32 %v8592, %v8626
    %v8637 = vsub.f32 %v8593, %v8626
    %v8638 = vsub.f32 %v8594, %v8626
    %v8639 = vmul.f32 %v8627, 1.442695
    %v8640 = vpow.pop %v8639
    %v8641 = vmul.f32 %v8628, 1.442695
    %v8642 = vpow.pop %v8641
    %v8643 = vmul.f32 %v8629, 1.442695
    %v8644 = vpow.pop %v8643
    %v8645 = vmul.f32 %v8630, 1.442695
    %v8646 = vpow.pop %v8645
    %v8647 = vmul.f32 %v8631, 1.442695
    %v8648 = vpow.pop %v8647
    %v8649 = vmul.f32 %v8632, 1.442695
    %v8650 = vpow.pop %v8649
    %v8651 = vmul.f32 %v8633, 1.442695
    %v8652 = vpow.pop %v8651
    %v8653 = vmul.f32 %v8634, 1.442695
    %v8654 = vpow.pop %v8653
    %v8655 = vmul.f32 %v8635, 1.442695
    %v8656 = vpow.pop %v8655
    %v8657 = vmul.f32 %v8636, 1.442695
    %v8658 = vpow.pop %v8657
    %v8659 = vmul.f32 %v8637, 1.442695
    %v8660 = vpow.pop %v8659
    %v8661 = vmul.f32 %v8638, 1.442695
    %v8662 = vpow.pop %v8661
    %v8663 = vadd.f32 %v8640, %v8642
    %v8664 = vadd.f32 %v8663, %v8644
    %v8665 = vrot.slane %v8664, 4
    %v8666 = vadd.f32 %v8664, %v8665
    %v8667 = vrot.slane %v8666, 2
    %v8668 = vadd.f32 %v8666, %v8667
    %v8669 = vrot.slane %v8668, 1
    %v8670 = vadd.f32 %v8668, %v8669
    %v8671 = vadd.f32 %v8646, %v8648
    %v8672 = vadd.f32 %v8671, %v8650
    %v8673 = vrot.slane %v8672, 4
    %v8674 = vadd.f32 %v8672, %v8673
    %v8675 = vrot.slane %v8674, 2
    %v8676 = vadd.f32 %v8674, %v8675
    %v8677 = vrot.slane %v8676, 1
    %v8678 = vadd.f32 %v8676, %v8677
    %v8679 = vadd.f32 %v8652, %v8654
    %v8680 = vadd.f32 %v8679, %v8656
    %v8681 = vrot.slane %v8680, 4
    %v8682 = vadd.f32 %v8680, %v8681
    %v8683 = vrot.slane %v8682, 2
    %v8684 = vadd.f32 %v8682, %v8683
    %v8685 = vrot.slane %v8684, 1
    %v8686 = vadd.f32 %v8684, %v8685
    %v8687 = vadd.f32 %v8658, %v8660
    %v8688 = vadd.f32 %v8687, %v8662
    %v8689 = vrot.slane %v8688, 4
    %v8690 = vadd.f32 %v8688, %v8689
    %v8691 = vrot.slane %v8690, 2
    %v8692 = vadd.f32 %v8690, %v8691
    %v8693 = vrot.slane %v8692, 1
    %v8694 = vadd.f32 %v8692, %v8693
    %v8695 = vlog2.pop %v8670
    %v8696 = vmul.f32 %v8695, 0.6931472
    %v8697 = vlog2.pop %v8678
    %v8698 = vmul.f32 %v8697, 0.6931472
    %v8699 = vlog2.pop %v8686
    %v8700 = vmul.f32 %v8699, 0.6931472
    %v8701 = vlog2.pop %v8694
    %v8702 = vmul.f32 %v8701, 0.6931472
    %v8703 = vadd.f32 %v8696, %v8602
    %v8704 = vadd.f32 %v8698, %v8610
    %v8705 = vadd.f32 %v8700, %v8618
    %v8706 = vadd.f32 %v8702, %v8626
    %v8707 = vsub.f32 %v8583, %v8703
    %v8708 = vsub.f32 %v8584, %v8703
    %v8709 = vsub.f32 %v8585, %v8703
    %v8710 = vsub.f32 %v8586, %v8704
    %v8711 = vsub.f32 %v8587, %v8704
    %v8712 = vsub.f32 %v8588, %v8704
    %v8713 = vsub.f32 %v8589, %v8705
    %v8714 = vsub.f32 %v8590, %v8705
    %v8715 = vsub.f32 %v8591, %v8705
    %v8716 = vsub.f32 %v8592, %v8706
    %v8717 = vsub.f32 %v8593, %v8706
    %v8718 = vsub.f32 %v8594, %v8706
    %v8719 = vpack.c.bf16 %v8708, %v8707
    %v8720 = vpack.c.bf16 %v8709, %v8709
    %v8721 = vpack.c.bf16 %v8711, %v8710
    %v8722 = vpack.c.bf16 %v8712, %v8712
    %v8723 = vpack.c.bf16 %v8714, %v8713
    %v8724 = vpack.c.bf16 %v8715, %v8715
    %v8725 = vpack.c.bf16 %v8717, %v8716
    %v8726 = vpack.c.bf16 %v8718, %v8718
    %v8735 = vunpack.c.l.b16 %v8719
    %v8736 = vunpack.c.h.b16 %v8719
    %v8737 = vunpack.c.l.b16 %v8720
    %v8738 = vunpack.c.l.b16 %v8721
    %v8739 = vunpack.c.h.b16 %v8721
    %v8740 = vunpack.c.l.b16 %v8722
    %v8741 = vunpack.c.l.b16 %v8723
    %v8742 = vunpack.c.h.b16 %v8723
    %v8743 = vunpack.c.l.b16 %v8724
    %v8744 = vunpack.c.l.b16 %v8725
    %v8745 = vunpack.c.h.b16 %v8725
    %v8746 = vunpack.c.l.b16 %v8726
    %v8747 = vpack.c.b16 %v8735, %v8735
    %v8748 = vpack.c.b16 %v8736, %v8736
    %v8749 = vpack.c.b16 %v8737, %v8737
    %v8750 = vpack.c.b16 %v8738, %v8738
    %v8751 = vpack.c.b16 %v8739, %v8739
    %v8752 = vpack.c.b16 %v8740, %v8740
    %v8753 = vpack.c.b16 %v8741, %v8741
    %v8754 = vpack.c.b16 %v8742, %v8742
    %v8755 = vpack.c.b16 %v8743, %v8743
    %v8756 = vpack.c.b16 %v8744, %v8744
    %v8757 = vpack.c.b16 %v8745, %v8745
    %v8758 = vpack.c.b16 %v8746, %v8746
    %8771 = vst [vmem:[#allocation17] sm:$0xf] %v8747
    %8772 = vst [vmem:[#allocation17 + $0x4] sm:$0xf] %v8748
    %8773 = vst [vmem:[#allocation17 + $0x8] sm:$0xf] %v8749
    %8774 = vst [vmem:[#allocation17 + $0xc] sm:$0xf] %v8750
    %8775 = vst [vmem:[#allocation17 + $0x10] sm:$0xf] %v8751
    %8776 = vst [vmem:[#allocation17 + $0x14] sm:$0xf] %v8752
    %8777 = vst [vmem:[#allocation17 + $0x18] sm:$0xf] %v8753
    %8778 = vst [vmem:[#allocation17 + $0x1c] sm:$0xf] %v8754
    %8779 = vst [vmem:[#allocation17 + $0x20] sm:$0xf] %v8755
    %8780 = vst [vmem:[#allocation17 + $0x24] sm:$0xf] %v8756
    %8781 = vst [vmem:[#allocation17 + $0x28] sm:$0xf] %v8757
    %8782 = vst [vmem:[#allocation17 + $0x2c] sm:$0xf] %v8758
    // Predicated region
    $region74: #{tpu_custom_call.1} parent=1 // pred_check
      _
    $region75: #{tpu_custom_call.1} parent=1 // pred_check_branch
      %8784 = sbr.rel (0) target = $region77
    $region76: #{tpu_custom_call.1} parent=1 // pred_region
      %s8786 = ssub.s32 768, 768
      %8787 = vsyncadd [#allocation5], %s8786
      %s8788 = sshll.u32 [#allocation17], 4
      %s8789 = int_to_ptr.vmem [resolvable:$true] %s8788
      %8794 = dma.vmem_to_hbm [thread:$0]  %s8789, 768, %s10, [#allocation5], 64, 64, 4
    $region77: #{tpu_custom_call.1} parent=1 // pred_fallthru
      _
    // Predicated region
    $region78: #{tpu_custom_call.1} parent=1 // pred_check
      _
    $region79: #{tpu_custom_call.1} parent=1 // pred_check_branch
      %8796 = sbr.rel (0) target = $region81
    $region80: #{tpu_custom_call.1} parent=1 // pred_region
      %8797 = dma.done [#allocation5], 768
    $region81: #{tpu_custom_call.1} parent=1 // pred_fallthru
      _
    %8798 = vsyncpa [#allocation4], 1
    %8799 = vsyncpa [#allocation7], 1
    %8800 = vsyncpa [#allocation10], 1
    %8801 = vsyncpa [#allocation13], 1
    %8802 = vsyncpa [#allocation16], 1
    %8803 = vsyncpa [#allocation5], 1

</llo_original>
